<compile_context>
chip_gen: v7x
topology: tpu7x:2x2x1
jax: 0.10.0
libtpu: 0.0.40
codegen_flags: <defaults>
</compile_context>

<pallas_src>
import jax
import jax.numpy as jnp
from jax.experimental import pallas as pl
from jax.experimental.pallas import tpu as pltpu

KH = KW = 3  # all convs are 3x3, stride 1, valid padding


# ----------------------------- kernel helpers ------------------------------ #
def _conv3x3(x, w_ref, b_ref, *, relu):
    """Valid 3x3 conv + bias (+ optional ReLU) on an in-register NCHW value.

    x: (BB, Cin, H, W) f32 value.  w_ref: flattened (KH*KW*Cin*Cout,) SMEM ref in
    (dy, dx, cin, cout) row-major order.  b_ref: (Cout,) SMEM ref.
    Channels are tiny (<=4), so the conv is a scalar-weight broadcast FMA chain
    on the VPU (im2col/MXU would waste >98% of an MXU tile here).
    """
    BB, Cin, H, W = x.shape
    Cout = b_ref.shape[0]
    Ho, Wo = H - 2, W - 2
    accs = [jnp.full((BB, Ho, Wo), b_ref[co], jnp.float32) for co in range(Cout)]
    for ci in range(Cin):
        plane = x[:, ci, :, :]                    # (BB, H, W); leading-dim index is free
        for dy in range(KH):
            rows = plane[:, dy:dy + Ho, :]        # hoisted sublane window, reused over dx/co
            for dx in range(KW):
                patch = rows[:, :, dx:dx + Wo]    # lane window, reused over co
                base = ((dy * KW + dx) * Cin + ci) * Cout
                for co in range(Cout):
                    accs[co] = accs[co] + patch * w_ref[base + co]
    out = jnp.stack(accs, axis=1)                 # (BB, Cout, Ho, Wo): one dense tensor
    if relu:
        out = jnp.maximum(out, 0.0)
    return out


def _take_stride2(x, axis, k):
    """out[..., j, ...] = x[..., 2*j, ...] along `axis`, for j in [0, k).

    Built only from contiguous slices + iota/select (no strided loads, gathers
    or exotic reshapes): s_j = x[j : j+k] has s_j[j] == x[2j], so selecting
    position j from s_j for each j assembles the stride-2 downsample.
    """
    ax = axis % x.ndim
    out = jax.lax.slice_in_dim(x, 0, k, axis=ax)
    if k > 1:
        idx = jax.lax.broadcasted_iota(jnp.int32, out.shape, ax)
        for j in range(1, k):
            s = jax.lax.slice_in_dim(x, j, j + k, axis=ax)
            out = jnp.where(idx == j, s, out)
    return out


def _maxpool2x2(x):
    """MaxPool2d(kernel_size=2, stride=2) on an NCHW value; floors odd dims
    (matches PyTorch)."""
    BB, C, H, W = x.shape
    Ho, Wo = H // 2, W // 2
    mh = jnp.maximum(x[:, :, :H - 1, :], x[:, :, 1:, :])       # pairwise max along H
    mhw = jnp.maximum(mh[:, :, :, :W - 1], mh[:, :, :, 1:])    # pairwise max along W
    y = _take_stride2(mhw, axis=2, k=Ho)                       # keep rows 0,2,4,...
    y = _take_stride2(y, axis=3, k=Wo)                         # keep cols 0,2,4,...
    return y


def _cnn_kernel(x_ref, w1_ref, b1_ref, w2_ref, b2_ref, w3_ref, b3_ref, o_ref):
    # nn.Sequential(conv_input, ReLU, conv_middle, ReLU, MaxPool2d(2,2),
    #               conv_middle, ReLU, conv_final, MaxPool2d(2,2))
    x = x_ref[...]
    y = _conv3x3(x, w1_ref, b1_ref, relu=True)    # conv_input + ReLU
    y = _conv3x3(y, w2_ref, b2_ref, relu=True)    # conv_middle + ReLU
    y = _maxpool2x2(y)                            # MaxPool2d(2,2)  (fused, stays in vregs)
    y = _conv3x3(y, w2_ref, b2_ref, relu=True)    # conv_middle (shared weights) + ReLU
    y = _conv3x3(y, w3_ref, b3_ref, relu=False)   # conv_final (no ReLU)
    y = _maxpool2x2(y)                            # MaxPool2d(2,2)
    o_ref[...] = y.astype(o_ref.dtype)            # single dense store


# --------------------------------- wrapper --------------------------------- #
def cnn_forward(x_nchw, params):
    """Matches CNN.forward: conv stack then torch.flatten(x, 1, -1)."""
    cw1, cb1, cw2, cb2, cw3, cb3 = params   # weights (3,3,Cin,Cout), biases (Cout,)
    B, Cin, H, W = x_nchw.shape
    Cout = cw3.shape[-1]

    H1, W1 = H - 2, W - 2          # conv_input
    H2, W2 = H1 - 2, W1 - 2        # conv_middle
    H3, W3 = H2 // 2, W2 // 2      # maxpool (floors odd dims like PyTorch)
    H4, W4 = H3 - 2, W3 - 2        # conv_middle (again)
    H5, W5 = H4 - 2, W4 - 2        # conv_final
    H6, W6 = H5 // 2, W5 // 2      # maxpool

    f32 = jnp.float32
    BB = min(B, 8)                 # batch block per grid step (sized well under VMEM on v7x)
    grid = (pl.cdiv(B, BB),)
    smem = pl.BlockSpec(memory_space=pltpu.MemorySpace.SMEM)

    out = pl.pallas_call(
        _cnn_kernel,
        out_shape=jax.ShapeDtypeStruct((B, Cout, H6, W6), f32),
        grid=grid,
        in_specs=[
            pl.BlockSpec((BB, Cin, H, W), lambda b: (b, 0, 0, 0)),
            smem, smem, smem, smem, smem, smem,
        ],
        out_specs=pl.BlockSpec((BB, Cout, H6, W6), lambda b: (b, 0, 0, 0)),
        compiler_params=pltpu.CompilerParams(
            dimension_semantics=("parallel",)),   # both TCs on v7x
    )(x_nchw.astype(f32),
      cw1.astype(f32).reshape(-1), cb1.astype(f32),
      cw2.astype(f32).reshape(-1), cb2.astype(f32),
      cw3.astype(f32).reshape(-1), cb3.astype(f32))

    # kernel output is NCHW -> torch.flatten(x, 1, -1) is a plain reshape
    return out.reshape(B, -1)


# -------------------- deterministic parameter initialization --------------- #
def init_params(key, input_dim, output_dim):
    def conv_init(k, cin, cout):
        kw, kb = jax.random.split(k)
        fan_in = cin * KH * KW
        bound = 1.0 / (fan_in ** 0.5)          # PyTorch Conv2d default-style bound
        w = jax.random.uniform(kw, (KH, KW, cin, cout), jnp.float32, -bound, bound)
        b = jax.random.uniform(kb, (cout,), jnp.float32, -bound, bound)
        return w, b

    k1, k2, k3 = jax.random.split(key, 3)
    w1, b1 = conv_init(k1, input_dim, 3)
    w2, b2 = conv_init(k2, 3, 3)
    w3, b3 = conv_init(k3, 3, output_dim)
    return w1, b1, w2, b2, w3, b3


# --------------------------- pure-JAX reference ----------------------------- #
def ref_forward(x_nchw, params):
    w1, b1, w2, b2, w3, b3 = params
    dn = ("NHWC", "HWIO", "NHWC")
    x = jnp.transpose(x_nchw, (0, 2, 3, 1)).astype(jnp.float32)

    def conv(y, w, b, relu):
        y = jax.lax.conv_general_dilated(
            y, w, (1, 1), "VALID", dimension_numbers=dn,
            precision=jax.lax.Precision.HIGHEST) + b
        return jnp.maximum(y, 0.0) if relu else y

    def pool(y):
        return jax.lax.reduce_window(y, -jnp.inf, jax.lax.max,
                                     (1, 2, 2, 1), (1, 2, 2, 1), "VALID")

    y = conv(x, w1, b1, True)
    y = conv(y, w2, b2, True)
    y = pool(y)
    y = conv(y, w2, b2, True)
    y = conv(y, w3, b3, False)
    y = pool(y)
    y = jnp.transpose(y, (0, 3, 1, 2))
    return y.reshape(y.shape[0], -1)


if __name__ == "__main__":
    key = jax.random.PRNGKey(0)
    kx, kp = jax.random.split(key)
    input_dim, output_dim = 4, 2
    B, H, W = 2, 16, 16

    x = jax.random.normal(kx, (B, input_dim, H, W), jnp.float32)  # NCHW like PyTorch
    params = init_params(kp, input_dim, output_dim)

    out = cnn_forward(x, params)
    jax.block_until_ready(out)

    ref = ref_forward(x, params)
    assert out.shape == ref.shape == (B, output_dim * 1 * 1), (out.shape, ref.shape)
    assert jnp.allclose(out, ref, atol=1e-4, rtol=1e-4)

    print("KERNEL_OK")
</pallas_src>

<mosaic_0001>
module attributes {stable_mosaic.version = 11 : i64} {
  func.func @_cnn_kernel(%arg0: i32, %arg1: memref<2x4x16x16xf32, #tpu.memory_space<vmem>>, %arg2: memref<108xf32, #tpu.memory_space<smem>>, %arg3: memref<3xf32, #tpu.memory_space<smem>>, %arg4: memref<81xf32, #tpu.memory_space<smem>>, %arg5: memref<3xf32, #tpu.memory_space<smem>>, %arg6: memref<54xf32, #tpu.memory_space<smem>>, %arg7: memref<2xf32, #tpu.memory_space<smem>>, %arg8: memref<2x2x1x1xf32, #tpu.memory_space<vmem>>) attributes {dimension_semantics = [#tpu.dimension_semantics<parallel>], iteration_bounds = array<i64: 1>, scalar_prefetch = 0 : i64, scratch_operands = 0 : i64, tpu.core_type = #tpu.core_type<tc>, window_params = [{transform_indices = @transform_0, window_bounds = array<i64: 2, 4, 16, 16>}, {transform_indices = @transform_1, window_bounds = array<i64: 108>}, {transform_indices = @transform_2, window_bounds = array<i64: 3>}, {transform_indices = @transform_3, window_bounds = array<i64: 81>}, {transform_indices = @transform_4, window_bounds = array<i64: 3>}, {transform_indices = @transform_5, window_bounds = array<i64: 54>}, {transform_indices = @transform_6, window_bounds = array<i64: 2>}, {transform_indices = @transform_7, window_bounds = array<i64: 2, 2, 1, 1>}]} {
    %c0 = arith.constant 0 : index
    %c0_0 = arith.constant 0 : index
    %c0_1 = arith.constant 0 : index
    %c0_2 = arith.constant 0 : index
    %0 = vector.load %arg1[%c0, %c0_0, %c0_1, %c0_2] : memref<2x4x16x16xf32, #tpu.memory_space<vmem>>, vector<2x4x16x16xf32>
    %c0_3 = arith.constant 0 : index
    %1 = memref.load %arg3[%c0_3] : memref<3xf32, #tpu.memory_space<smem>>
    %2 = vector.broadcast %1 : f32 to vector<2x14x14xf32>
    %c1 = arith.constant 1 : index
    %3 = memref.load %arg3[%c1] : memref<3xf32, #tpu.memory_space<smem>>
    %4 = vector.broadcast %3 : f32 to vector<2x14x14xf32>
    %c2 = arith.constant 2 : index
    %5 = memref.load %arg3[%c2] : memref<3xf32, #tpu.memory_space<smem>>
    %6 = vector.broadcast %5 : f32 to vector<2x14x14xf32>
    %7 = vector.extract_strided_slice %0 {offsets = [0, 0, 0, 0], sizes = [2, 1, 16, 16], strides = [1, 1, 1, 1]} : vector<2x4x16x16xf32> to vector<2x1x16x16xf32>
    %8 = vector.shape_cast %7 : vector<2x1x16x16xf32> to vector<2x16x16xf32>
    %9 = vector.extract_strided_slice %8 {offsets = [0, 0, 0], sizes = [2, 14, 16], strides = [1, 1, 1]} : vector<2x16x16xf32> to vector<2x14x16xf32>
    %10 = vector.extract_strided_slice %9 {offsets = [0, 0, 0], sizes = [2, 14, 14], strides = [1, 1, 1]} : vector<2x14x16xf32> to vector<2x14x14xf32>
    %c0_4 = arith.constant 0 : index
    %11 = memref.load %arg2[%c0_4] : memref<108xf32, #tpu.memory_space<smem>>
    %12 = vector.broadcast %11 : f32 to vector<2x14x14xf32>
    %13 = arith.mulf %10, %12 : vector<2x14x14xf32>
    %14 = arith.addf %2, %13 : vector<2x14x14xf32>
    %c1_5 = arith.constant 1 : index
    %15 = memref.load %arg2[%c1_5] : memref<108xf32, #tpu.memory_space<smem>>
    %16 = vector.broadcast %15 : f32 to vector<2x14x14xf32>
    %17 = arith.mulf %10, %16 : vector<2x14x14xf32>
    %18 = arith.addf %4, %17 : vector<2x14x14xf32>
    %c2_6 = arith.constant 2 : index
    %19 = memref.load %arg2[%c2_6] : memref<108xf32, #tpu.memory_space<smem>>
    %20 = vector.broadcast %19 : f32 to vector<2x14x14xf32>
    %21 = arith.mulf %10, %20 : vector<2x14x14xf32>
    %22 = arith.addf %6, %21 : vector<2x14x14xf32>
    %23 = vector.extract_strided_slice %9 {offsets = [0, 0, 1], sizes = [2, 14, 14], strides = [1, 1, 1]} : vector<2x14x16xf32> to vector<2x14x14xf32>
    %c12 = arith.constant 12 : index
    %24 = memref.load %arg2[%c12] : memref<108xf32, #tpu.memory_space<smem>>
    %25 = vector.broadcast %24 : f32 to vector<2x14x14xf32>
    %26 = arith.mulf %23, %25 : vector<2x14x14xf32>
    %27 = arith.addf %14, %26 : vector<2x14x14xf32>
    %c13 = arith.constant 13 : index
    %28 = memref.load %arg2[%c13] : memref<108xf32, #tpu.memory_space<smem>>
    %29 = vector.broadcast %28 : f32 to vector<2x14x14xf32>
    %30 = arith.mulf %23, %29 : vector<2x14x14xf32>
    %31 = arith.addf %18, %30 : vector<2x14x14xf32>
    %c14 = arith.constant 14 : index
    %32 = memref.load %arg2[%c14] : memref<108xf32, #tpu.memory_space<smem>>
    %33 = vector.broadcast %32 : f32 to vector<2x14x14xf32>
    %34 = arith.mulf %23, %33 : vector<2x14x14xf32>
    %35 = arith.addf %22, %34 : vector<2x14x14xf32>
    %36 = vector.extract_strided_slice %9 {offsets = [0, 0, 2], sizes = [2, 14, 14], strides = [1, 1, 1]} : vector<2x14x16xf32> to vector<2x14x14xf32>
    %c24 = arith.constant 24 : index
    %37 = memref.load %arg2[%c24] : memref<108xf32, #tpu.memory_space<smem>>
    %38 = vector.broadcast %37 : f32 to vector<2x14x14xf32>
    %39 = arith.mulf %36, %38 : vector<2x14x14xf32>
    %40 = arith.addf %27, %39 : vector<2x14x14xf32>
    %c25 = arith.constant 25 : index
    %41 = memref.load %arg2[%c25] : memref<108xf32, #tpu.memory_space<smem>>
    %42 = vector.broadcast %41 : f32 to vector<2x14x14xf32>
    %43 = arith.mulf %36, %42 : vector<2x14x14xf32>
    %44 = arith.addf %31, %43 : vector<2x14x14xf32>
    %c26 = arith.constant 26 : index
    %45 = memref.load %arg2[%c26] : memref<108xf32, #tpu.memory_space<smem>>
    %46 = vector.broadcast %45 : f32 to vector<2x14x14xf32>
    %47 = arith.mulf %36, %46 : vector<2x14x14xf32>
    %48 = arith.addf %35, %47 : vector<2x14x14xf32>
    %49 = vector.extract_strided_slice %8 {offsets = [0, 1, 0], sizes = [2, 14, 16], strides = [1, 1, 1]} : vector<2x16x16xf32> to vector<2x14x16xf32>
    %50 = vector.extract_strided_slice %49 {offsets = [0, 0, 0], sizes = [2, 14, 14], strides = [1, 1, 1]} : vector<2x14x16xf32> to vector<2x14x14xf32>
    %c36 = arith.constant 36 : index
    %51 = memref.load %arg2[%c36] : memref<108xf32, #tpu.memory_space<smem>>
    %52 = vector.broadcast %51 : f32 to vector<2x14x14xf32>
    %53 = arith.mulf %50, %52 : vector<2x14x14xf32>
    %54 = arith.addf %40, %53 : vector<2x14x14xf32>
    %c37 = arith.constant 37 : index
    %55 = memref.load %arg2[%c37] : memref<108xf32, #tpu.memory_space<smem>>
    %56 = vector.broadcast %55 : f32 to vector<2x14x14xf32>
    %57 = arith.mulf %50, %56 : vector<2x14x14xf32>
    %58 = arith.addf %44, %57 : vector<2x14x14xf32>
    %c38 = arith.constant 38 : index
    %59 = memref.load %arg2[%c38] : memref<108xf32, #tpu.memory_space<smem>>
    %60 = vector.broadcast %59 : f32 to vector<2x14x14xf32>
    %61 = arith.mulf %50, %60 : vector<2x14x14xf32>
    %62 = arith.addf %48, %61 : vector<2x14x14xf32>
    %63 = vector.extract_strided_slice %49 {offsets = [0, 0, 1], sizes = [2, 14, 14], strides = [1, 1, 1]} : vector<2x14x16xf32> to vector<2x14x14xf32>
    %c48 = arith.constant 48 : index
    %64 = memref.load %arg2[%c48] : memref<108xf32, #tpu.memory_space<smem>>
    %65 = vector.broadcast %64 : f32 to vector<2x14x14xf32>
    %66 = arith.mulf %63, %65 : vector<2x14x14xf32>
    %67 = arith.addf %54, %66 : vector<2x14x14xf32>
    %c49 = arith.constant 49 : index
    %68 = memref.load %arg2[%c49] : memref<108xf32, #tpu.memory_space<smem>>
    %69 = vector.broadcast %68 : f32 to vector<2x14x14xf32>
    %70 = arith.mulf %63, %69 : vector<2x14x14xf32>
    %71 = arith.addf %58, %70 : vector<2x14x14xf32>
    %c50 = arith.constant 50 : index
    %72 = memref.load %arg2[%c50] : memref<108xf32, #tpu.memory_space<smem>>
    %73 = vector.broadcast %72 : f32 to vector<2x14x14xf32>
    %74 = arith.mulf %63, %73 : vector<2x14x14xf32>
    %75 = arith.addf %62, %74 : vector<2x14x14xf32>
    %76 = vector.extract_strided_slice %49 {offsets = [0, 0, 2], sizes = [2, 14, 14], strides = [1, 1, 1]} : vector<2x14x16xf32> to vector<2x14x14xf32>
    %c60 = arith.constant 60 : index
    %77 = memref.load %arg2[%c60] : memref<108xf32, #tpu.memory_space<smem>>
    %78 = vector.broadcast %77 : f32 to vector<2x14x14xf32>
    %79 = arith.mulf %76, %78 : vector<2x14x14xf32>
    %80 = arith.addf %67, %79 : vector<2x14x14xf32>
    %c61 = arith.constant 61 : index
    %81 = memref.load %arg2[%c61] : memref<108xf32, #tpu.memory_space<smem>>
    %82 = vector.broadcast %81 : f32 to vector<2x14x14xf32>
    %83 = arith.mulf %76, %82 : vector<2x14x14xf32>
    %84 = arith.addf %71, %83 : vector<2x14x14xf32>
    %c62 = arith.constant 62 : index
    %85 = memref.load %arg2[%c62] : memref<108xf32, #tpu.memory_space<smem>>
    %86 = vector.broadcast %85 : f32 to vector<2x14x14xf32>
    %87 = arith.mulf %76, %86 : vector<2x14x14xf32>
    %88 = arith.addf %75, %87 : vector<2x14x14xf32>
    %89 = vector.extract_strided_slice %8 {offsets = [0, 2, 0], sizes = [2, 14, 16], strides = [1, 1, 1]} : vector<2x16x16xf32> to vector<2x14x16xf32>
    %90 = vector.extract_strided_slice %89 {offsets = [0, 0, 0], sizes = [2, 14, 14], strides = [1, 1, 1]} : vector<2x14x16xf32> to vector<2x14x14xf32>
    %c72 = arith.constant 72 : index
    %91 = memref.load %arg2[%c72] : memref<108xf32, #tpu.memory_space<smem>>
    %92 = vector.broadcast %91 : f32 to vector<2x14x14xf32>
    %93 = arith.mulf %90, %92 : vector<2x14x14xf32>
    %94 = arith.addf %80, %93 : vector<2x14x14xf32>
    %c73 = arith.constant 73 : index
    %95 = memref.load %arg2[%c73] : memref<108xf32, #tpu.memory_space<smem>>
    %96 = vector.broadcast %95 : f32 to vector<2x14x14xf32>
    %97 = arith.mulf %90, %96 : vector<2x14x14xf32>
    %98 = arith.addf %84, %97 : vector<2x14x14xf32>
    %c74 = arith.constant 74 : index
    %99 = memref.load %arg2[%c74] : memref<108xf32, #tpu.memory_space<smem>>
    %100 = vector.broadcast %99 : f32 to vector<2x14x14xf32>
    %101 = arith.mulf %90, %100 : vector<2x14x14xf32>
    %102 = arith.addf %88, %101 : vector<2x14x14xf32>
    %103 = vector.extract_strided_slice %89 {offsets = [0, 0, 1], sizes = [2, 14, 14], strides = [1, 1, 1]} : vector<2x14x16xf32> to vector<2x14x14xf32>
    %c84 = arith.constant 84 : index
    %104 = memref.load %arg2[%c84] : memref<108xf32, #tpu.memory_space<smem>>
    %105 = vector.broadcast %104 : f32 to vector<2x14x14xf32>
    %106 = arith.mulf %103, %105 : vector<2x14x14xf32>
    %107 = arith.addf %94, %106 : vector<2x14x14xf32>
    %c85 = arith.constant 85 : index
    %108 = memref.load %arg2[%c85] : memref<108xf32, #tpu.memory_space<smem>>
    %109 = vector.broadcast %108 : f32 to vector<2x14x14xf32>
    %110 = arith.mulf %103, %109 : vector<2x14x14xf32>
    %111 = arith.addf %98, %110 : vector<2x14x14xf32>
    %c86 = arith.constant 86 : index
    %112 = memref.load %arg2[%c86] : memref<108xf32, #tpu.memory_space<smem>>
    %113 = vector.broadcast %112 : f32 to vector<2x14x14xf32>
    %114 = arith.mulf %103, %113 : vector<2x14x14xf32>
    %115 = arith.addf %102, %114 : vector<2x14x14xf32>
    %116 = vector.extract_strided_slice %89 {offsets = [0, 0, 2], sizes = [2, 14, 14], strides = [1, 1, 1]} : vector<2x14x16xf32> to vector<2x14x14xf32>
    %c96 = arith.constant 96 : index
    %117 = memref.load %arg2[%c96] : memref<108xf32, #tpu.memory_space<smem>>
    %118 = vector.broadcast %117 : f32 to vector<2x14x14xf32>
    %119 = arith.mulf %116, %118 : vector<2x14x14xf32>
    %120 = arith.addf %107, %119 : vector<2x14x14xf32>
    %c97 = arith.constant 97 : index
    %121 = memref.load %arg2[%c97] : memref<108xf32, #tpu.memory_space<smem>>
    %122 = vector.broadcast %121 : f32 to vector<2x14x14xf32>
    %123 = arith.mulf %116, %122 : vector<2x14x14xf32>
    %124 = arith.addf %111, %123 : vector<2x14x14xf32>
    %c98 = arith.constant 98 : index
    %125 = memref.load %arg2[%c98] : memref<108xf32, #tpu.memory_space<smem>>
    %126 = vector.broadcast %125 : f32 to vector<2x14x14xf32>
    %127 = arith.mulf %116, %126 : vector<2x14x14xf32>
    %128 = arith.addf %115, %127 : vector<2x14x14xf32>
    %129 = vector.extract_strided_slice %0 {offsets = [0, 1, 0, 0], sizes = [2, 1, 16, 16], strides = [1, 1, 1, 1]} : vector<2x4x16x16xf32> to vector<2x1x16x16xf32>
    %130 = vector.shape_cast %129 : vector<2x1x16x16xf32> to vector<2x16x16xf32>
    %131 = vector.extract_strided_slice %130 {offsets = [0, 0, 0], sizes = [2, 14, 16], strides = [1, 1, 1]} : vector<2x16x16xf32> to vector<2x14x16xf32>
    %132 = vector.extract_strided_slice %131 {offsets = [0, 0, 0], sizes = [2, 14, 14], strides = [1, 1, 1]} : vector<2x14x16xf32> to vector<2x14x14xf32>
    %c3 = arith.constant 3 : index
    %133 = memref.load %arg2[%c3] : memref<108xf32, #tpu.memory_space<smem>>
    %134 = vector.broadcast %133 : f32 to vector<2x14x14xf32>
    %135 = arith.mulf %132, %134 : vector<2x14x14xf32>
    %136 = arith.addf %120, %135 : vector<2x14x14xf32>
    %c4 = arith.constant 4 : index
    %137 = memref.load %arg2[%c4] : memref<108xf32, #tpu.memory_space<smem>>
    %138 = vector.broadcast %137 : f32 to vector<2x14x14xf32>
    %139 = arith.mulf %132, %138 : vector<2x14x14xf32>
    %140 = arith.addf %124, %139 : vector<2x14x14xf32>
    %c5 = arith.constant 5 : index
    %141 = memref.load %arg2[%c5] : memref<108xf32, #tpu.memory_space<smem>>
    %142 = vector.broadcast %141 : f32 to vector<2x14x14xf32>
    %143 = arith.mulf %132, %142 : vector<2x14x14xf32>
    %144 = arith.addf %128, %143 : vector<2x14x14xf32>
    %145 = vector.extract_strided_slice %131 {offsets = [0, 0, 1], sizes = [2, 14, 14], strides = [1, 1, 1]} : vector<2x14x16xf32> to vector<2x14x14xf32>
    %c15 = arith.constant 15 : index
    %146 = memref.load %arg2[%c15] : memref<108xf32, #tpu.memory_space<smem>>
    %147 = vector.broadcast %146 : f32 to vector<2x14x14xf32>
    %148 = arith.mulf %145, %147 : vector<2x14x14xf32>
    %149 = arith.addf %136, %148 : vector<2x14x14xf32>
    %c16 = arith.constant 16 : index
    %150 = memref.load %arg2[%c16] : memref<108xf32, #tpu.memory_space<smem>>
    %151 = vector.broadcast %150 : f32 to vector<2x14x14xf32>
    %152 = arith.mulf %145, %151 : vector<2x14x14xf32>
    %153 = arith.addf %140, %152 : vector<2x14x14xf32>
    %c17 = arith.constant 17 : index
    %154 = memref.load %arg2[%c17] : memref<108xf32, #tpu.memory_space<smem>>
    %155 = vector.broadcast %154 : f32 to vector<2x14x14xf32>
    %156 = arith.mulf %145, %155 : vector<2x14x14xf32>
    %157 = arith.addf %144, %156 : vector<2x14x14xf32>
    %158 = vector.extract_strided_slice %131 {offsets = [0, 0, 2], sizes = [2, 14, 14], strides = [1, 1, 1]} : vector<2x14x16xf32> to vector<2x14x14xf32>
    %c27 = arith.constant 27 : index
    %159 = memref.load %arg2[%c27] : memref<108xf32, #tpu.memory_space<smem>>
    %160 = vector.broadcast %159 : f32 to vector<2x14x14xf32>
    %161 = arith.mulf %158, %160 : vector<2x14x14xf32>
    %162 = arith.addf %149, %161 : vector<2x14x14xf32>
    %c28 = arith.constant 28 : index
    %163 = memref.load %arg2[%c28] : memref<108xf32, #tpu.memory_space<smem>>
    %164 = vector.broadcast %163 : f32 to vector<2x14x14xf32>
    %165 = arith.mulf %158, %164 : vector<2x14x14xf32>
    %166 = arith.addf %153, %165 : vector<2x14x14xf32>
    %c29 = arith.constant 29 : index
    %167 = memref.load %arg2[%c29] : memref<108xf32, #tpu.memory_space<smem>>
    %168 = vector.broadcast %167 : f32 to vector<2x14x14xf32>
    %169 = arith.mulf %158, %168 : vector<2x14x14xf32>
    %170 = arith.addf %157, %169 : vector<2x14x14xf32>
    %171 = vector.extract_strided_slice %130 {offsets = [0, 1, 0], sizes = [2, 14, 16], strides = [1, 1, 1]} : vector<2x16x16xf32> to vector<2x14x16xf32>
    %172 = vector.extract_strided_slice %171 {offsets = [0, 0, 0], sizes = [2, 14, 14], strides = [1, 1, 1]} : vector<2x14x16xf32> to vector<2x14x14xf32>
    %c39 = arith.constant 39 : index
    %173 = memref.load %arg2[%c39] : memref<108xf32, #tpu.memory_space<smem>>
    %174 = vector.broadcast %173 : f32 to vector<2x14x14xf32>
    %175 = arith.mulf %172, %174 : vector<2x14x14xf32>
    %176 = arith.addf %162, %175 : vector<2x14x14xf32>
    %c40 = arith.constant 40 : index
    %177 = memref.load %arg2[%c40] : memref<108xf32, #tpu.memory_space<smem>>
    %178 = vector.broadcast %177 : f32 to vector<2x14x14xf32>
    %179 = arith.mulf %172, %178 : vector<2x14x14xf32>
    %180 = arith.addf %166, %179 : vector<2x14x14xf32>
    %c41 = arith.constant 41 : index
    %181 = memref.load %arg2[%c41] : memref<108xf32, #tpu.memory_space<smem>>
    %182 = vector.broadcast %181 : f32 to vector<2x14x14xf32>
    %183 = arith.mulf %172, %182 : vector<2x14x14xf32>
    %184 = arith.addf %170, %183 : vector<2x14x14xf32>
    %185 = vector.extract_strided_slice %171 {offsets = [0, 0, 1], sizes = [2, 14, 14], strides = [1, 1, 1]} : vector<2x14x16xf32> to vector<2x14x14xf32>
    %c51 = arith.constant 51 : index
    %186 = memref.load %arg2[%c51] : memref<108xf32, #tpu.memory_space<smem>>
    %187 = vector.broadcast %186 : f32 to vector<2x14x14xf32>
    %188 = arith.mulf %185, %187 : vector<2x14x14xf32>
    %189 = arith.addf %176, %188 : vector<2x14x14xf32>
    %c52 = arith.constant 52 : index
    %190 = memref.load %arg2[%c52] : memref<108xf32, #tpu.memory_space<smem>>
    %191 = vector.broadcast %190 : f32 to vector<2x14x14xf32>
    %192 = arith.mulf %185, %191 : vector<2x14x14xf32>
    %193 = arith.addf %180, %192 : vector<2x14x14xf32>
    %c53 = arith.constant 53 : index
    %194 = memref.load %arg2[%c53] : memref<108xf32, #tpu.memory_space<smem>>
    %195 = vector.broadcast %194 : f32 to vector<2x14x14xf32>
    %196 = arith.mulf %185, %195 : vector<2x14x14xf32>
    %197 = arith.addf %184, %196 : vector<2x14x14xf32>
    %198 = vector.extract_strided_slice %171 {offsets = [0, 0, 2], sizes = [2, 14, 14], strides = [1, 1, 1]} : vector<2x14x16xf32> to vector<2x14x14xf32>
    %c63 = arith.constant 63 : index
    %199 = memref.load %arg2[%c63] : memref<108xf32, #tpu.memory_space<smem>>
    %200 = vector.broadcast %199 : f32 to vector<2x14x14xf32>
    %201 = arith.mulf %198, %200 : vector<2x14x14xf32>
    %202 = arith.addf %189, %201 : vector<2x14x14xf32>
    %c64 = arith.constant 64 : index
    %203 = memref.load %arg2[%c64] : memref<108xf32, #tpu.memory_space<smem>>
    %204 = vector.broadcast %203 : f32 to vector<2x14x14xf32>
    %205 = arith.mulf %198, %204 : vector<2x14x14xf32>
    %206 = arith.addf %193, %205 : vector<2x14x14xf32>
    %c65 = arith.constant 65 : index
    %207 = memref.load %arg2[%c65] : memref<108xf32, #tpu.memory_space<smem>>
    %208 = vector.broadcast %207 : f32 to vector<2x14x14xf32>
    %209 = arith.mulf %198, %208 : vector<2x14x14xf32>
    %210 = arith.addf %197, %209 : vector<2x14x14xf32>
    %211 = vector.extract_strided_slice %130 {offsets = [0, 2, 0], sizes = [2, 14, 16], strides = [1, 1, 1]} : vector<2x16x16xf32> to vector<2x14x16xf32>
    %212 = vector.extract_strided_slice %211 {offsets = [0, 0, 0], sizes = [2, 14, 14], strides = [1, 1, 1]} : vector<2x14x16xf32> to vector<2x14x14xf32>
    %c75 = arith.constant 75 : index
    %213 = memref.load %arg2[%c75] : memref<108xf32, #tpu.memory_space<smem>>
    %214 = vector.broadcast %213 : f32 to vector<2x14x14xf32>
    %215 = arith.mulf %212, %214 : vector<2x14x14xf32>
    %216 = arith.addf %202, %215 : vector<2x14x14xf32>
    %c76 = arith.constant 76 : index
    %217 = memref.load %arg2[%c76] : memref<108xf32, #tpu.memory_space<smem>>
    %218 = vector.broadcast %217 : f32 to vector<2x14x14xf32>
    %219 = arith.mulf %212, %218 : vector<2x14x14xf32>
    %220 = arith.addf %206, %219 : vector<2x14x14xf32>
    %c77 = arith.constant 77 : index
    %221 = memref.load %arg2[%c77] : memref<108xf32, #tpu.memory_space<smem>>
    %222 = vector.broadcast %221 : f32 to vector<2x14x14xf32>
    %223 = arith.mulf %212, %222 : vector<2x14x14xf32>
    %224 = arith.addf %210, %223 : vector<2x14x14xf32>
    %225 = vector.extract_strided_slice %211 {offsets = [0, 0, 1], sizes = [2, 14, 14], strides = [1, 1, 1]} : vector<2x14x16xf32> to vector<2x14x14xf32>
    %c87 = arith.constant 87 : index
    %226 = memref.load %arg2[%c87] : memref<108xf32, #tpu.memory_space<smem>>
    %227 = vector.broadcast %226 : f32 to vector<2x14x14xf32>
    %228 = arith.mulf %225, %227 : vector<2x14x14xf32>
    %229 = arith.addf %216, %228 : vector<2x14x14xf32>
    %c88 = arith.constant 88 : index
    %230 = memref.load %arg2[%c88] : memref<108xf32, #tpu.memory_space<smem>>
    %231 = vector.broadcast %230 : f32 to vector<2x14x14xf32>
    %232 = arith.mulf %225, %231 : vector<2x14x14xf32>
    %233 = arith.addf %220, %232 : vector<2x14x14xf32>
    %c89 = arith.constant 89 : index
    %234 = memref.load %arg2[%c89] : memref<108xf32, #tpu.memory_space<smem>>
    %235 = vector.broadcast %234 : f32 to vector<2x14x14xf32>
    %236 = arith.mulf %225, %235 : vector<2x14x14xf32>
    %237 = arith.addf %224, %236 : vector<2x14x14xf32>
    %238 = vector.extract_strided_slice %211 {offsets = [0, 0, 2], sizes = [2, 14, 14], strides = [1, 1, 1]} : vector<2x14x16xf32> to vector<2x14x14xf32>
    %c99 = arith.constant 99 : index
    %239 = memref.load %arg2[%c99] : memref<108xf32, #tpu.memory_space<smem>>
    %240 = vector.broadcast %239 : f32 to vector<2x14x14xf32>
    %241 = arith.mulf %238, %240 : vector<2x14x14xf32>
    %242 = arith.addf %229, %241 : vector<2x14x14xf32>
    %c100 = arith.constant 100 : index
    %243 = memref.load %arg2[%c100] : memref<108xf32, #tpu.memory_space<smem>>
    %244 = vector.broadcast %243 : f32 to vector<2x14x14xf32>
    %245 = arith.mulf %238, %244 : vector<2x14x14xf32>
    %246 = arith.addf %233, %245 : vector<2x14x14xf32>
    %c101 = arith.constant 101 : index
    %247 = memref.load %arg2[%c101] : memref<108xf32, #tpu.memory_space<smem>>
    %248 = vector.broadcast %247 : f32 to vector<2x14x14xf32>
    %249 = arith.mulf %238, %248 : vector<2x14x14xf32>
    %250 = arith.addf %237, %249 : vector<2x14x14xf32>
    %251 = vector.extract_strided_slice %0 {offsets = [0, 2, 0, 0], sizes = [2, 1, 16, 16], strides = [1, 1, 1, 1]} : vector<2x4x16x16xf32> to vector<2x1x16x16xf32>
    %252 = vector.shape_cast %251 : vector<2x1x16x16xf32> to vector<2x16x16xf32>
    %253 = vector.extract_strided_slice %252 {offsets = [0, 0, 0], sizes = [2, 14, 16], strides = [1, 1, 1]} : vector<2x16x16xf32> to vector<2x14x16xf32>
    %254 = vector.extract_strided_slice %253 {offsets = [0, 0, 0], sizes = [2, 14, 14], strides = [1, 1, 1]} : vector<2x14x16xf32> to vector<2x14x14xf32>
    %c6 = arith.constant 6 : index
    %255 = memref.load %arg2[%c6] : memref<108xf32, #tpu.memory_space<smem>>
    %256 = vector.broadcast %255 : f32 to vector<2x14x14xf32>
    %257 = arith.mulf %254, %256 : vector<2x14x14xf32>
    %258 = arith.addf %242, %257 : vector<2x14x14xf32>
    %c7 = arith.constant 7 : index
    %259 = memref.load %arg2[%c7] : memref<108xf32, #tpu.memory_space<smem>>
    %260 = vector.broadcast %259 : f32 to vector<2x14x14xf32>
    %261 = arith.mulf %254, %260 : vector<2x14x14xf32>
    %262 = arith.addf %246, %261 : vector<2x14x14xf32>
    %c8 = arith.constant 8 : index
    %263 = memref.load %arg2[%c8] : memref<108xf32, #tpu.memory_space<smem>>
    %264 = vector.broadcast %263 : f32 to vector<2x14x14xf32>
    %265 = arith.mulf %254, %264 : vector<2x14x14xf32>
    %266 = arith.addf %250, %265 : vector<2x14x14xf32>
    %267 = vector.extract_strided_slice %253 {offsets = [0, 0, 1], sizes = [2, 14, 14], strides = [1, 1, 1]} : vector<2x14x16xf32> to vector<2x14x14xf32>
    %c18 = arith.constant 18 : index
    %268 = memref.load %arg2[%c18] : memref<108xf32, #tpu.memory_space<smem>>
    %269 = vector.broadcast %268 : f32 to vector<2x14x14xf32>
    %270 = arith.mulf %267, %269 : vector<2x14x14xf32>
    %271 = arith.addf %258, %270 : vector<2x14x14xf32>
    %c19 = arith.constant 19 : index
    %272 = memref.load %arg2[%c19] : memref<108xf32, #tpu.memory_space<smem>>
    %273 = vector.broadcast %272 : f32 to vector<2x14x14xf32>
    %274 = arith.mulf %267, %273 : vector<2x14x14xf32>
    %275 = arith.addf %262, %274 : vector<2x14x14xf32>
    %c20 = arith.constant 20 : index
    %276 = memref.load %arg2[%c20] : memref<108xf32, #tpu.memory_space<smem>>
    %277 = vector.broadcast %276 : f32 to vector<2x14x14xf32>
    %278 = arith.mulf %267, %277 : vector<2x14x14xf32>
    %279 = arith.addf %266, %278 : vector<2x14x14xf32>
    %280 = vector.extract_strided_slice %253 {offsets = [0, 0, 2], sizes = [2, 14, 14], strides = [1, 1, 1]} : vector<2x14x16xf32> to vector<2x14x14xf32>
    %c30 = arith.constant 30 : index
    %281 = memref.load %arg2[%c30] : memref<108xf32, #tpu.memory_space<smem>>
    %282 = vector.broadcast %281 : f32 to vector<2x14x14xf32>
    %283 = arith.mulf %280, %282 : vector<2x14x14xf32>
    %284 = arith.addf %271, %283 : vector<2x14x14xf32>
    %c31 = arith.constant 31 : index
    %285 = memref.load %arg2[%c31] : memref<108xf32, #tpu.memory_space<smem>>
    %286 = vector.broadcast %285 : f32 to vector<2x14x14xf32>
    %287 = arith.mulf %280, %286 : vector<2x14x14xf32>
    %288 = arith.addf %275, %287 : vector<2x14x14xf32>
    %c32 = arith.constant 32 : index
    %289 = memref.load %arg2[%c32] : memref<108xf32, #tpu.memory_space<smem>>
    %290 = vector.broadcast %289 : f32 to vector<2x14x14xf32>
    %291 = arith.mulf %280, %290 : vector<2x14x14xf32>
    %292 = arith.addf %279, %291 : vector<2x14x14xf32>
    %293 = vector.extract_strided_slice %252 {offsets = [0, 1, 0], sizes = [2, 14, 16], strides = [1, 1, 1]} : vector<2x16x16xf32> to vector<2x14x16xf32>
    %294 = vector.extract_strided_slice %293 {offsets = [0, 0, 0], sizes = [2, 14, 14], strides = [1, 1, 1]} : vector<2x14x16xf32> to vector<2x14x14xf32>
    %c42 = arith.constant 42 : index
    %295 = memref.load %arg2[%c42] : memref<108xf32, #tpu.memory_space<smem>>
    %296 = vector.broadcast %295 : f32 to vector<2x14x14xf32>
    %297 = arith.mulf %294, %296 : vector<2x14x14xf32>
    %298 = arith.addf %284, %297 : vector<2x14x14xf32>
    %c43 = arith.constant 43 : index
    %299 = memref.load %arg2[%c43] : memref<108xf32, #tpu.memory_space<smem>>
    %300 = vector.broadcast %299 : f32 to vector<2x14x14xf32>
    %301 = arith.mulf %294, %300 : vector<2x14x14xf32>
    %302 = arith.addf %288, %301 : vector<2x14x14xf32>
    %c44 = arith.constant 44 : index
    %303 = memref.load %arg2[%c44] : memref<108xf32, #tpu.memory_space<smem>>
    %304 = vector.broadcast %303 : f32 to vector<2x14x14xf32>
    %305 = arith.mulf %294, %304 : vector<2x14x14xf32>
    %306 = arith.addf %292, %305 : vector<2x14x14xf32>
    %307 = vector.extract_strided_slice %293 {offsets = [0, 0, 1], sizes = [2, 14, 14], strides = [1, 1, 1]} : vector<2x14x16xf32> to vector<2x14x14xf32>
    %c54 = arith.constant 54 : index
    %308 = memref.load %arg2[%c54] : memref<108xf32, #tpu.memory_space<smem>>
    %309 = vector.broadcast %308 : f32 to vector<2x14x14xf32>
    %310 = arith.mulf %307, %309 : vector<2x14x14xf32>
    %311 = arith.addf %298, %310 : vector<2x14x14xf32>
    %c55 = arith.constant 55 : index
    %312 = memref.load %arg2[%c55] : memref<108xf32, #tpu.memory_space<smem>>
    %313 = vector.broadcast %312 : f32 to vector<2x14x14xf32>
    %314 = arith.mulf %307, %313 : vector<2x14x14xf32>
    %315 = arith.addf %302, %314 : vector<2x14x14xf32>
    %c56 = arith.constant 56 : index
    %316 = memref.load %arg2[%c56] : memref<108xf32, #tpu.memory_space<smem>>
    %317 = vector.broadcast %316 : f32 to vector<2x14x14xf32>
    %318 = arith.mulf %307, %317 : vector<2x14x14xf32>
    %319 = arith.addf %306, %318 : vector<2x14x14xf32>
    %320 = vector.extract_strided_slice %293 {offsets = [0, 0, 2], sizes = [2, 14, 14], strides = [1, 1, 1]} : vector<2x14x16xf32> to vector<2x14x14xf32>
    %c66 = arith.constant 66 : index
    %321 = memref.load %arg2[%c66] : memref<108xf32, #tpu.memory_space<smem>>
    %322 = vector.broadcast %321 : f32 to vector<2x14x14xf32>
    %323 = arith.mulf %320, %322 : vector<2x14x14xf32>
    %324 = arith.addf %311, %323 : vector<2x14x14xf32>
    %c67 = arith.constant 67 : index
    %325 = memref.load %arg2[%c67] : memref<108xf32, #tpu.memory_space<smem>>
    %326 = vector.broadcast %325 : f32 to vector<2x14x14xf32>
    %327 = arith.mulf %320, %326 : vector<2x14x14xf32>
    %328 = arith.addf %315, %327 : vector<2x14x14xf32>
    %c68 = arith.constant 68 : index
    %329 = memref.load %arg2[%c68] : memref<108xf32, #tpu.memory_space<smem>>
    %330 = vector.broadcast %329 : f32 to vector<2x14x14xf32>
    %331 = arith.mulf %320, %330 : vector<2x14x14xf32>
    %332 = arith.addf %319, %331 : vector<2x14x14xf32>
    %333 = vector.extract_strided_slice %252 {offsets = [0, 2, 0], sizes = [2, 14, 16], strides = [1, 1, 1]} : vector<2x16x16xf32> to vector<2x14x16xf32>
    %334 = vector.extract_strided_slice %333 {offsets = [0, 0, 0], sizes = [2, 14, 14], strides = [1, 1, 1]} : vector<2x14x16xf32> to vector<2x14x14xf32>
    %c78 = arith.constant 78 : index
    %335 = memref.load %arg2[%c78] : memref<108xf32, #tpu.memory_space<smem>>
    %336 = vector.broadcast %335 : f32 to vector<2x14x14xf32>
    %337 = arith.mulf %334, %336 : vector<2x14x14xf32>
    %338 = arith.addf %324, %337 : vector<2x14x14xf32>
    %c79 = arith.constant 79 : index
    %339 = memref.load %arg2[%c79] : memref<108xf32, #tpu.memory_space<smem>>
    %340 = vector.broadcast %339 : f32 to vector<2x14x14xf32>
    %341 = arith.mulf %334, %340 : vector<2x14x14xf32>
    %342 = arith.addf %328, %341 : vector<2x14x14xf32>
    %c80 = arith.constant 80 : index
    %343 = memref.load %arg2[%c80] : memref<108xf32, #tpu.memory_space<smem>>
    %344 = vector.broadcast %343 : f32 to vector<2x14x14xf32>
    %345 = arith.mulf %334, %344 : vector<2x14x14xf32>
    %346 = arith.addf %332, %345 : vector<2x14x14xf32>
    %347 = vector.extract_strided_slice %333 {offsets = [0, 0, 1], sizes = [2, 14, 14], strides = [1, 1, 1]} : vector<2x14x16xf32> to vector<2x14x14xf32>
    %c90 = arith.constant 90 : index
    %348 = memref.load %arg2[%c90] : memref<108xf32, #tpu.memory_space<smem>>
    %349 = vector.broadcast %348 : f32 to vector<2x14x14xf32>
    %350 = arith.mulf %347, %349 : vector<2x14x14xf32>
    %351 = arith.addf %338, %350 : vector<2x14x14xf32>
    %c91 = arith.constant 91 : index
    %352 = memref.load %arg2[%c91] : memref<108xf32, #tpu.memory_space<smem>>
    %353 = vector.broadcast %352 : f32 to vector<2x14x14xf32>
    %354 = arith.mulf %347, %353 : vector<2x14x14xf32>
    %355 = arith.addf %342, %354 : vector<2x14x14xf32>
    %c92 = arith.constant 92 : index
    %356 = memref.load %arg2[%c92] : memref<108xf32, #tpu.memory_space<smem>>
    %357 = vector.broadcast %356 : f32 to vector<2x14x14xf32>
    %358 = arith.mulf %347, %357 : vector<2x14x14xf32>
    %359 = arith.addf %346, %358 : vector<2x14x14xf32>
    %360 = vector.extract_strided_slice %333 {offsets = [0, 0, 2], sizes = [2, 14, 14], strides = [1, 1, 1]} : vector<2x14x16xf32> to vector<2x14x14xf32>
    %c102 = arith.constant 102 : index
    %361 = memref.load %arg2[%c102] : memref<108xf32, #tpu.memory_space<smem>>
    %362 = vector.broadcast %361 : f32 to vector<2x14x14xf32>
    %363 = arith.mulf %360, %362 : vector<2x14x14xf32>
    %364 = arith.addf %351, %363 : vector<2x14x14xf32>
    %c103 = arith.constant 103 : index
    %365 = memref.load %arg2[%c103] : memref<108xf32, #tpu.memory_space<smem>>
    %366 = vector.broadcast %365 : f32 to vector<2x14x14xf32>
    %367 = arith.mulf %360, %366 : vector<2x14x14xf32>
    %368 = arith.addf %355, %367 : vector<2x14x14xf32>
    %c104 = arith.constant 104 : index
    %369 = memref.load %arg2[%c104] : memref<108xf32, #tpu.memory_space<smem>>
    %370 = vector.broadcast %369 : f32 to vector<2x14x14xf32>
    %371 = arith.mulf %360, %370 : vector<2x14x14xf32>
    %372 = arith.addf %359, %371 : vector<2x14x14xf32>
    %373 = vector.extract_strided_slice %0 {offsets = [0, 3, 0, 0], sizes = [2, 1, 16, 16], strides = [1, 1, 1, 1]} : vector<2x4x16x16xf32> to vector<2x1x16x16xf32>
    %374 = vector.shape_cast %373 : vector<2x1x16x16xf32> to vector<2x16x16xf32>
    %375 = vector.extract_strided_slice %374 {offsets = [0, 0, 0], sizes = [2, 14, 16], strides = [1, 1, 1]} : vector<2x16x16xf32> to vector<2x14x16xf32>
    %376 = vector.extract_strided_slice %375 {offsets = [0, 0, 0], sizes = [2, 14, 14], strides = [1, 1, 1]} : vector<2x14x16xf32> to vector<2x14x14xf32>
    %c9 = arith.constant 9 : index
    %377 = memref.load %arg2[%c9] : memref<108xf32, #tpu.memory_space<smem>>
    %378 = vector.broadcast %377 : f32 to vector<2x14x14xf32>
    %379 = arith.mulf %376, %378 : vector<2x14x14xf32>
    %380 = arith.addf %364, %379 : vector<2x14x14xf32>
    %c10 = arith.constant 10 : index
    %381 = memref.load %arg2[%c10] : memref<108xf32, #tpu.memory_space<smem>>
    %382 = vector.broadcast %381 : f32 to vector<2x14x14xf32>
    %383 = arith.mulf %376, %382 : vector<2x14x14xf32>
    %384 = arith.addf %368, %383 : vector<2x14x14xf32>
    %c11 = arith.constant 11 : index
    %385 = memref.load %arg2[%c11] : memref<108xf32, #tpu.memory_space<smem>>
    %386 = vector.broadcast %385 : f32 to vector<2x14x14xf32>
    %387 = arith.mulf %376, %386 : vector<2x14x14xf32>
    %388 = arith.addf %372, %387 : vector<2x14x14xf32>
    %389 = vector.extract_strided_slice %375 {offsets = [0, 0, 1], sizes = [2, 14, 14], strides = [1, 1, 1]} : vector<2x14x16xf32> to vector<2x14x14xf32>
    %c21 = arith.constant 21 : index
    %390 = memref.load %arg2[%c21] : memref<108xf32, #tpu.memory_space<smem>>
    %391 = vector.broadcast %390 : f32 to vector<2x14x14xf32>
    %392 = arith.mulf %389, %391 : vector<2x14x14xf32>
    %393 = arith.addf %380, %392 : vector<2x14x14xf32>
    %c22 = arith.constant 22 : index
    %394 = memref.load %arg2[%c22] : memref<108xf32, #tpu.memory_space<smem>>
    %395 = vector.broadcast %394 : f32 to vector<2x14x14xf32>
    %396 = arith.mulf %389, %395 : vector<2x14x14xf32>
    %397 = arith.addf %384, %396 : vector<2x14x14xf32>
    %c23 = arith.constant 23 : index
    %398 = memref.load %arg2[%c23] : memref<108xf32, #tpu.memory_space<smem>>
    %399 = vector.broadcast %398 : f32 to vector<2x14x14xf32>
    %400 = arith.mulf %389, %399 : vector<2x14x14xf32>
    %401 = arith.addf %388, %400 : vector<2x14x14xf32>
    %402 = vector.extract_strided_slice %375 {offsets = [0, 0, 2], sizes = [2, 14, 14], strides = [1, 1, 1]} : vector<2x14x16xf32> to vector<2x14x14xf32>
    %c33 = arith.constant 33 : index
    %403 = memref.load %arg2[%c33] : memref<108xf32, #tpu.memory_space<smem>>
    %404 = vector.broadcast %403 : f32 to vector<2x14x14xf32>
    %405 = arith.mulf %402, %404 : vector<2x14x14xf32>
    %406 = arith.addf %393, %405 : vector<2x14x14xf32>
    %c34 = arith.constant 34 : index
    %407 = memref.load %arg2[%c34] : memref<108xf32, #tpu.memory_space<smem>>
    %408 = vector.broadcast %407 : f32 to vector<2x14x14xf32>
    %409 = arith.mulf %402, %408 : vector<2x14x14xf32>
    %410 = arith.addf %397, %409 : vector<2x14x14xf32>
    %c35 = arith.constant 35 : index
    %411 = memref.load %arg2[%c35] : memref<108xf32, #tpu.memory_space<smem>>
    %412 = vector.broadcast %411 : f32 to vector<2x14x14xf32>
    %413 = arith.mulf %402, %412 : vector<2x14x14xf32>
    %414 = arith.addf %401, %413 : vector<2x14x14xf32>
    %415 = vector.extract_strided_slice %374 {offsets = [0, 1, 0], sizes = [2, 14, 16], strides = [1, 1, 1]} : vector<2x16x16xf32> to vector<2x14x16xf32>
    %416 = vector.extract_strided_slice %415 {offsets = [0, 0, 0], sizes = [2, 14, 14], strides = [1, 1, 1]} : vector<2x14x16xf32> to vector<2x14x14xf32>
    %c45 = arith.constant 45 : index
    %417 = memref.load %arg2[%c45] : memref<108xf32, #tpu.memory_space<smem>>
    %418 = vector.broadcast %417 : f32 to vector<2x14x14xf32>
    %419 = arith.mulf %416, %418 : vector<2x14x14xf32>
    %420 = arith.addf %406, %419 : vector<2x14x14xf32>
    %c46 = arith.constant 46 : index
    %421 = memref.load %arg2[%c46] : memref<108xf32, #tpu.memory_space<smem>>
    %422 = vector.broadcast %421 : f32 to vector<2x14x14xf32>
    %423 = arith.mulf %416, %422 : vector<2x14x14xf32>
    %424 = arith.addf %410, %423 : vector<2x14x14xf32>
    %c47 = arith.constant 47 : index
    %425 = memref.load %arg2[%c47] : memref<108xf32, #tpu.memory_space<smem>>
    %426 = vector.broadcast %425 : f32 to vector<2x14x14xf32>
    %427 = arith.mulf %416, %426 : vector<2x14x14xf32>
    %428 = arith.addf %414, %427 : vector<2x14x14xf32>
    %429 = vector.extract_strided_slice %415 {offsets = [0, 0, 1], sizes = [2, 14, 14], strides = [1, 1, 1]} : vector<2x14x16xf32> to vector<2x14x14xf32>
    %c57 = arith.constant 57 : index
    %430 = memref.load %arg2[%c57] : memref<108xf32, #tpu.memory_space<smem>>
    %431 = vector.broadcast %430 : f32 to vector<2x14x14xf32>
    %432 = arith.mulf %429, %431 : vector<2x14x14xf32>
    %433 = arith.addf %420, %432 : vector<2x14x14xf32>
    %c58 = arith.constant 58 : index
    %434 = memref.load %arg2[%c58] : memref<108xf32, #tpu.memory_space<smem>>
    %435 = vector.broadcast %434 : f32 to vector<2x14x14xf32>
    %436 = arith.mulf %429, %435 : vector<2x14x14xf32>
    %437 = arith.addf %424, %436 : vector<2x14x14xf32>
    %c59 = arith.constant 59 : index
    %438 = memref.load %arg2[%c59] : memref<108xf32, #tpu.memory_space<smem>>
    %439 = vector.broadcast %438 : f32 to vector<2x14x14xf32>
    %440 = arith.mulf %429, %439 : vector<2x14x14xf32>
    %441 = arith.addf %428, %440 : vector<2x14x14xf32>
    %442 = vector.extract_strided_slice %415 {offsets = [0, 0, 2], sizes = [2, 14, 14], strides = [1, 1, 1]} : vector<2x14x16xf32> to vector<2x14x14xf32>
    %c69 = arith.constant 69 : index
    %443 = memref.load %arg2[%c69] : memref<108xf32, #tpu.memory_space<smem>>
    %444 = vector.broadcast %443 : f32 to vector<2x14x14xf32>
    %445 = arith.mulf %442, %444 : vector<2x14x14xf32>
    %446 = arith.addf %433, %445 : vector<2x14x14xf32>
    %c70 = arith.constant 70 : index
    %447 = memref.load %arg2[%c70] : memref<108xf32, #tpu.memory_space<smem>>
    %448 = vector.broadcast %447 : f32 to vector<2x14x14xf32>
    %449 = arith.mulf %442, %448 : vector<2x14x14xf32>
    %450 = arith.addf %437, %449 : vector<2x14x14xf32>
    %c71 = arith.constant 71 : index
    %451 = memref.load %arg2[%c71] : memref<108xf32, #tpu.memory_space<smem>>
    %452 = vector.broadcast %451 : f32 to vector<2x14x14xf32>
    %453 = arith.mulf %442, %452 : vector<2x14x14xf32>
    %454 = arith.addf %441, %453 : vector<2x14x14xf32>
    %455 = vector.extract_strided_slice %374 {offsets = [0, 2, 0], sizes = [2, 14, 16], strides = [1, 1, 1]} : vector<2x16x16xf32> to vector<2x14x16xf32>
    %456 = vector.extract_strided_slice %455 {offsets = [0, 0, 0], sizes = [2, 14, 14], strides = [1, 1, 1]} : vector<2x14x16xf32> to vector<2x14x14xf32>
    %c81 = arith.constant 81 : index
    %457 = memref.load %arg2[%c81] : memref<108xf32, #tpu.memory_space<smem>>
    %458 = vector.broadcast %457 : f32 to vector<2x14x14xf32>
    %459 = arith.mulf %456, %458 : vector<2x14x14xf32>
    %460 = arith.addf %446, %459 : vector<2x14x14xf32>
    %c82 = arith.constant 82 : index
    %461 = memref.load %arg2[%c82] : memref<108xf32, #tpu.memory_space<smem>>
    %462 = vector.broadcast %461 : f32 to vector<2x14x14xf32>
    %463 = arith.mulf %456, %462 : vector<2x14x14xf32>
    %464 = arith.addf %450, %463 : vector<2x14x14xf32>
    %c83 = arith.constant 83 : index
    %465 = memref.load %arg2[%c83] : memref<108xf32, #tpu.memory_space<smem>>
    %466 = vector.broadcast %465 : f32 to vector<2x14x14xf32>
    %467 = arith.mulf %456, %466 : vector<2x14x14xf32>
    %468 = arith.addf %454, %467 : vector<2x14x14xf32>
    %469 = vector.extract_strided_slice %455 {offsets = [0, 0, 1], sizes = [2, 14, 14], strides = [1, 1, 1]} : vector<2x14x16xf32> to vector<2x14x14xf32>
    %c93 = arith.constant 93 : index
    %470 = memref.load %arg2[%c93] : memref<108xf32, #tpu.memory_space<smem>>
    %471 = vector.broadcast %470 : f32 to vector<2x14x14xf32>
    %472 = arith.mulf %469, %471 : vector<2x14x14xf32>
    %473 = arith.addf %460, %472 : vector<2x14x14xf32>
    %c94 = arith.constant 94 : index
    %474 = memref.load %arg2[%c94] : memref<108xf32, #tpu.memory_space<smem>>
    %475 = vector.broadcast %474 : f32 to vector<2x14x14xf32>
    %476 = arith.mulf %469, %475 : vector<2x14x14xf32>
    %477 = arith.addf %464, %476 : vector<2x14x14xf32>
    %c95 = arith.constant 95 : index
    %478 = memref.load %arg2[%c95] : memref<108xf32, #tpu.memory_space<smem>>
    %479 = vector.broadcast %478 : f32 to vector<2x14x14xf32>
    %480 = arith.mulf %469, %479 : vector<2x14x14xf32>
    %481 = arith.addf %468, %480 : vector<2x14x14xf32>
    %482 = vector.extract_strided_slice %455 {offsets = [0, 0, 2], sizes = [2, 14, 14], strides = [1, 1, 1]} : vector<2x14x16xf32> to vector<2x14x14xf32>
    %c105 = arith.constant 105 : index
    %483 = memref.load %arg2[%c105] : memref<108xf32, #tpu.memory_space<smem>>
    %484 = vector.broadcast %483 : f32 to vector<2x14x14xf32>
    %485 = arith.mulf %482, %484 : vector<2x14x14xf32>
    %486 = arith.addf %473, %485 : vector<2x14x14xf32>
    %c106 = arith.constant 106 : index
    %487 = memref.load %arg2[%c106] : memref<108xf32, #tpu.memory_space<smem>>
    %488 = vector.broadcast %487 : f32 to vector<2x14x14xf32>
    %489 = arith.mulf %482, %488 : vector<2x14x14xf32>
    %490 = arith.addf %477, %489 : vector<2x14x14xf32>
    %c107 = arith.constant 107 : index
    %491 = memref.load %arg2[%c107] : memref<108xf32, #tpu.memory_space<smem>>
    %492 = vector.broadcast %491 : f32 to vector<2x14x14xf32>
    %493 = arith.mulf %482, %492 : vector<2x14x14xf32>
    %494 = arith.addf %481, %493 : vector<2x14x14xf32>
    %495 = vector.shape_cast %486 : vector<2x14x14xf32> to vector<2x1x14x14xf32>
    %496 = vector.shape_cast %490 : vector<2x14x14xf32> to vector<2x1x14x14xf32>
    %497 = vector.shape_cast %494 : vector<2x14x14xf32> to vector<2x1x14x14xf32>
    %498 = tpu.concatenate %495, %496, %497 in 1 : vector<2x1x14x14xf32>, vector<2x1x14x14xf32>, vector<2x1x14x14xf32> -> vector<2x3x14x14xf32>
    %cst = arith.constant 0.000000e+00 : f32
    %499 = vector.broadcast %cst : f32 to vector<2x3x14x14xf32>
    %500 = arith.maximumf %498, %499 : vector<2x3x14x14xf32>
    %c0_7 = arith.constant 0 : index
    %501 = memref.load %arg5[%c0_7] : memref<3xf32, #tpu.memory_space<smem>>
    %502 = vector.broadcast %501 : f32 to vector<2x12x12xf32>
    %c1_8 = arith.constant 1 : index
    %503 = memref.load %arg5[%c1_8] : memref<3xf32, #tpu.memory_space<smem>>
    %504 = vector.broadcast %503 : f32 to vector<2x12x12xf32>
    %c2_9 = arith.constant 2 : index
    %505 = memref.load %arg5[%c2_9] : memref<3xf32, #tpu.memory_space<smem>>
    %506 = vector.broadcast %505 : f32 to vector<2x12x12xf32>
    %507 = vector.extract_strided_slice %500 {offsets = [0, 0, 0, 0], sizes = [2, 1, 14, 14], strides = [1, 1, 1, 1]} : vector<2x3x14x14xf32> to vector<2x1x14x14xf32>
    %508 = vector.shape_cast %507 : vector<2x1x14x14xf32> to vector<2x14x14xf32>
    %509 = vector.extract_strided_slice %508 {offsets = [0, 0, 0], sizes = [2, 12, 14], strides = [1, 1, 1]} : vector<2x14x14xf32> to vector<2x12x14xf32>
    %510 = vector.extract_strided_slice %509 {offsets = [0, 0, 0], sizes = [2, 12, 12], strides = [1, 1, 1]} : vector<2x12x14xf32> to vector<2x12x12xf32>
    %c0_10 = arith.constant 0 : index
    %511 = memref.load %arg4[%c0_10] : memref<81xf32, #tpu.memory_space<smem>>
    %512 = vector.broadcast %511 : f32 to vector<2x12x12xf32>
    %513 = arith.mulf %510, %512 : vector<2x12x12xf32>
    %514 = arith.addf %502, %513 : vector<2x12x12xf32>
    %c1_11 = arith.constant 1 : index
    %515 = memref.load %arg4[%c1_11] : memref<81xf32, #tpu.memory_space<smem>>
    %516 = vector.broadcast %515 : f32 to vector<2x12x12xf32>
    %517 = arith.mulf %510, %516 : vector<2x12x12xf32>
    %518 = arith.addf %504, %517 : vector<2x12x12xf32>
    %c2_12 = arith.constant 2 : index
    %519 = memref.load %arg4[%c2_12] : memref<81xf32, #tpu.memory_space<smem>>
    %520 = vector.broadcast %519 : f32 to vector<2x12x12xf32>
    %521 = arith.mulf %510, %520 : vector<2x12x12xf32>
    %522 = arith.addf %506, %521 : vector<2x12x12xf32>
    %523 = vector.extract_strided_slice %509 {offsets = [0, 0, 1], sizes = [2, 12, 12], strides = [1, 1, 1]} : vector<2x12x14xf32> to vector<2x12x12xf32>
    %c9_13 = arith.constant 9 : index
    %524 = memref.load %arg4[%c9_13] : memref<81xf32, #tpu.memory_space<smem>>
    %525 = vector.broadcast %524 : f32 to vector<2x12x12xf32>
    %526 = arith.mulf %523, %525 : vector<2x12x12xf32>
    %527 = arith.addf %514, %526 : vector<2x12x12xf32>
    %c10_14 = arith.constant 10 : index
    %528 = memref.load %arg4[%c10_14] : memref<81xf32, #tpu.memory_space<smem>>
    %529 = vector.broadcast %528 : f32 to vector<2x12x12xf32>
    %530 = arith.mulf %523, %529 : vector<2x12x12xf32>
    %531 = arith.addf %518, %530 : vector<2x12x12xf32>
    %c11_15 = arith.constant 11 : index
    %532 = memref.load %arg4[%c11_15] : memref<81xf32, #tpu.memory_space<smem>>
    %533 = vector.broadcast %532 : f32 to vector<2x12x12xf32>
    %534 = arith.mulf %523, %533 : vector<2x12x12xf32>
    %535 = arith.addf %522, %534 : vector<2x12x12xf32>
    %536 = vector.extract_strided_slice %509 {offsets = [0, 0, 2], sizes = [2, 12, 12], strides = [1, 1, 1]} : vector<2x12x14xf32> to vector<2x12x12xf32>
    %c18_16 = arith.constant 18 : index
    %537 = memref.load %arg4[%c18_16] : memref<81xf32, #tpu.memory_space<smem>>
    %538 = vector.broadcast %537 : f32 to vector<2x12x12xf32>
    %539 = arith.mulf %536, %538 : vector<2x12x12xf32>
    %540 = arith.addf %527, %539 : vector<2x12x12xf32>
    %c19_17 = arith.constant 19 : index
    %541 = memref.load %arg4[%c19_17] : memref<81xf32, #tpu.memory_space<smem>>
    %542 = vector.broadcast %541 : f32 to vector<2x12x12xf32>
    %543 = arith.mulf %536, %542 : vector<2x12x12xf32>
    %544 = arith.addf %531, %543 : vector<2x12x12xf32>
    %c20_18 = arith.constant 20 : index
    %545 = memref.load %arg4[%c20_18] : memref<81xf32, #tpu.memory_space<smem>>
    %546 = vector.broadcast %545 : f32 to vector<2x12x12xf32>
    %547 = arith.mulf %536, %546 : vector<2x12x12xf32>
    %548 = arith.addf %535, %547 : vector<2x12x12xf32>
    %549 = vector.extract_strided_slice %508 {offsets = [0, 1, 0], sizes = [2, 12, 14], strides = [1, 1, 1]} : vector<2x14x14xf32> to vector<2x12x14xf32>
    %550 = vector.extract_strided_slice %549 {offsets = [0, 0, 0], sizes = [2, 12, 12], strides = [1, 1, 1]} : vector<2x12x14xf32> to vector<2x12x12xf32>
    %c27_19 = arith.constant 27 : index
    %551 = memref.load %arg4[%c27_19] : memref<81xf32, #tpu.memory_space<smem>>
    %552 = vector.broadcast %551 : f32 to vector<2x12x12xf32>
    %553 = arith.mulf %550, %552 : vector<2x12x12xf32>
    %554 = arith.addf %540, %553 : vector<2x12x12xf32>
    %c28_20 = arith.constant 28 : index
    %555 = memref.load %arg4[%c28_20] : memref<81xf32, #tpu.memory_space<smem>>
    %556 = vector.broadcast %555 : f32 to vector<2x12x12xf32>
    %557 = arith.mulf %550, %556 : vector<2x12x12xf32>
    %558 = arith.addf %544, %557 : vector<2x12x12xf32>
    %c29_21 = arith.constant 29 : index
    %559 = memref.load %arg4[%c29_21] : memref<81xf32, #tpu.memory_space<smem>>
    %560 = vector.broadcast %559 : f32 to vector<2x12x12xf32>
    %561 = arith.mulf %550, %560 : vector<2x12x12xf32>
    %562 = arith.addf %548, %561 : vector<2x12x12xf32>
    %563 = vector.extract_strided_slice %549 {offsets = [0, 0, 1], sizes = [2, 12, 12], strides = [1, 1, 1]} : vector<2x12x14xf32> to vector<2x12x12xf32>
    %c36_22 = arith.constant 36 : index
    %564 = memref.load %arg4[%c36_22] : memref<81xf32, #tpu.memory_space<smem>>
    %565 = vector.broadcast %564 : f32 to vector<2x12x12xf32>
    %566 = arith.mulf %563, %565 : vector<2x12x12xf32>
    %567 = arith.addf %554, %566 : vector<2x12x12xf32>
    %c37_23 = arith.constant 37 : index
    %568 = memref.load %arg4[%c37_23] : memref<81xf32, #tpu.memory_space<smem>>
    %569 = vector.broadcast %568 : f32 to vector<2x12x12xf32>
    %570 = arith.mulf %563, %569 : vector<2x12x12xf32>
    %571 = arith.addf %558, %570 : vector<2x12x12xf32>
    %c38_24 = arith.constant 38 : index
    %572 = memref.load %arg4[%c38_24] : memref<81xf32, #tpu.memory_space<smem>>
    %573 = vector.broadcast %572 : f32 to vector<2x12x12xf32>
    %574 = arith.mulf %563, %573 : vector<2x12x12xf32>
    %575 = arith.addf %562, %574 : vector<2x12x12xf32>
    %576 = vector.extract_strided_slice %549 {offsets = [0, 0, 2], sizes = [2, 12, 12], strides = [1, 1, 1]} : vector<2x12x14xf32> to vector<2x12x12xf32>
    %c45_25 = arith.constant 45 : index
    %577 = memref.load %arg4[%c45_25] : memref<81xf32, #tpu.memory_space<smem>>
    %578 = vector.broadcast %577 : f32 to vector<2x12x12xf32>
    %579 = arith.mulf %576, %578 : vector<2x12x12xf32>
    %580 = arith.addf %567, %579 : vector<2x12x12xf32>
    %c46_26 = arith.constant 46 : index
    %581 = memref.load %arg4[%c46_26] : memref<81xf32, #tpu.memory_space<smem>>
    %582 = vector.broadcast %581 : f32 to vector<2x12x12xf32>
    %583 = arith.mulf %576, %582 : vector<2x12x12xf32>
    %584 = arith.addf %571, %583 : vector<2x12x12xf32>
    %c47_27 = arith.constant 47 : index
    %585 = memref.load %arg4[%c47_27] : memref<81xf32, #tpu.memory_space<smem>>
    %586 = vector.broadcast %585 : f32 to vector<2x12x12xf32>
    %587 = arith.mulf %576, %586 : vector<2x12x12xf32>
    %588 = arith.addf %575, %587 : vector<2x12x12xf32>
    %589 = vector.extract_strided_slice %508 {offsets = [0, 2, 0], sizes = [2, 12, 14], strides = [1, 1, 1]} : vector<2x14x14xf32> to vector<2x12x14xf32>
    %590 = vector.extract_strided_slice %589 {offsets = [0, 0, 0], sizes = [2, 12, 12], strides = [1, 1, 1]} : vector<2x12x14xf32> to vector<2x12x12xf32>
    %c54_28 = arith.constant 54 : index
    %591 = memref.load %arg4[%c54_28] : memref<81xf32, #tpu.memory_space<smem>>
    %592 = vector.broadcast %591 : f32 to vector<2x12x12xf32>
    %593 = arith.mulf %590, %592 : vector<2x12x12xf32>
    %594 = arith.addf %580, %593 : vector<2x12x12xf32>
    %c55_29 = arith.constant 55 : index
    %595 = memref.load %arg4[%c55_29] : memref<81xf32, #tpu.memory_space<smem>>
    %596 = vector.broadcast %595 : f32 to vector<2x12x12xf32>
    %597 = arith.mulf %590, %596 : vector<2x12x12xf32>
    %598 = arith.addf %584, %597 : vector<2x12x12xf32>
    %c56_30 = arith.constant 56 : index
    %599 = memref.load %arg4[%c56_30] : memref<81xf32, #tpu.memory_space<smem>>
    %600 = vector.broadcast %599 : f32 to vector<2x12x12xf32>
    %601 = arith.mulf %590, %600 : vector<2x12x12xf32>
    %602 = arith.addf %588, %601 : vector<2x12x12xf32>
    %603 = vector.extract_strided_slice %589 {offsets = [0, 0, 1], sizes = [2, 12, 12], strides = [1, 1, 1]} : vector<2x12x14xf32> to vector<2x12x12xf32>
    %c63_31 = arith.constant 63 : index
    %604 = memref.load %arg4[%c63_31] : memref<81xf32, #tpu.memory_space<smem>>
    %605 = vector.broadcast %604 : f32 to vector<2x12x12xf32>
    %606 = arith.mulf %603, %605 : vector<2x12x12xf32>
    %607 = arith.addf %594, %606 : vector<2x12x12xf32>
    %c64_32 = arith.constant 64 : index
    %608 = memref.load %arg4[%c64_32] : memref<81xf32, #tpu.memory_space<smem>>
    %609 = vector.broadcast %608 : f32 to vector<2x12x12xf32>
    %610 = arith.mulf %603, %609 : vector<2x12x12xf32>
    %611 = arith.addf %598, %610 : vector<2x12x12xf32>
    %c65_33 = arith.constant 65 : index
    %612 = memref.load %arg4[%c65_33] : memref<81xf32, #tpu.memory_space<smem>>
    %613 = vector.broadcast %612 : f32 to vector<2x12x12xf32>
    %614 = arith.mulf %603, %613 : vector<2x12x12xf32>
    %615 = arith.addf %602, %614 : vector<2x12x12xf32>
    %616 = vector.extract_strided_slice %589 {offsets = [0, 0, 2], sizes = [2, 12, 12], strides = [1, 1, 1]} : vector<2x12x14xf32> to vector<2x12x12xf32>
    %c72_34 = arith.constant 72 : index
    %617 = memref.load %arg4[%c72_34] : memref<81xf32, #tpu.memory_space<smem>>
    %618 = vector.broadcast %617 : f32 to vector<2x12x12xf32>
    %619 = arith.mulf %616, %618 : vector<2x12x12xf32>
    %620 = arith.addf %607, %619 : vector<2x12x12xf32>
    %c73_35 = arith.constant 73 : index
    %621 = memref.load %arg4[%c73_35] : memref<81xf32, #tpu.memory_space<smem>>
    %622 = vector.broadcast %621 : f32 to vector<2x12x12xf32>
    %623 = arith.mulf %616, %622 : vector<2x12x12xf32>
    %624 = arith.addf %611, %623 : vector<2x12x12xf32>
    %c74_36 = arith.constant 74 : index
    %625 = memref.load %arg4[%c74_36] : memref<81xf32, #tpu.memory_space<smem>>
    %626 = vector.broadcast %625 : f32 to vector<2x12x12xf32>
    %627 = arith.mulf %616, %626 : vector<2x12x12xf32>
    %628 = arith.addf %615, %627 : vector<2x12x12xf32>
    %629 = vector.extract_strided_slice %500 {offsets = [0, 1, 0, 0], sizes = [2, 1, 14, 14], strides = [1, 1, 1, 1]} : vector<2x3x14x14xf32> to vector<2x1x14x14xf32>
    %630 = vector.shape_cast %629 : vector<2x1x14x14xf32> to vector<2x14x14xf32>
    %631 = vector.extract_strided_slice %630 {offsets = [0, 0, 0], sizes = [2, 12, 14], strides = [1, 1, 1]} : vector<2x14x14xf32> to vector<2x12x14xf32>
    %632 = vector.extract_strided_slice %631 {offsets = [0, 0, 0], sizes = [2, 12, 12], strides = [1, 1, 1]} : vector<2x12x14xf32> to vector<2x12x12xf32>
    %c3_37 = arith.constant 3 : index
    %633 = memref.load %arg4[%c3_37] : memref<81xf32, #tpu.memory_space<smem>>
    %634 = vector.broadcast %633 : f32 to vector<2x12x12xf32>
    %635 = arith.mulf %632, %634 : vector<2x12x12xf32>
    %636 = arith.addf %620, %635 : vector<2x12x12xf32>
    %c4_38 = arith.constant 4 : index
    %637 = memref.load %arg4[%c4_38] : memref<81xf32, #tpu.memory_space<smem>>
    %638 = vector.broadcast %637 : f32 to vector<2x12x12xf32>
    %639 = arith.mulf %632, %638 : vector<2x12x12xf32>
    %640 = arith.addf %624, %639 : vector<2x12x12xf32>
    %c5_39 = arith.constant 5 : index
    %641 = memref.load %arg4[%c5_39] : memref<81xf32, #tpu.memory_space<smem>>
    %642 = vector.broadcast %641 : f32 to vector<2x12x12xf32>
    %643 = arith.mulf %632, %642 : vector<2x12x12xf32>
    %644 = arith.addf %628, %643 : vector<2x12x12xf32>
    %645 = vector.extract_strided_slice %631 {offsets = [0, 0, 1], sizes = [2, 12, 12], strides = [1, 1, 1]} : vector<2x12x14xf32> to vector<2x12x12xf32>
    %c12_40 = arith.constant 12 : index
    %646 = memref.load %arg4[%c12_40] : memref<81xf32, #tpu.memory_space<smem>>
    %647 = vector.broadcast %646 : f32 to vector<2x12x12xf32>
    %648 = arith.mulf %645, %647 : vector<2x12x12xf32>
    %649 = arith.addf %636, %648 : vector<2x12x12xf32>
    %c13_41 = arith.constant 13 : index
    %650 = memref.load %arg4[%c13_41] : memref<81xf32, #tpu.memory_space<smem>>
    %651 = vector.broadcast %650 : f32 to vector<2x12x12xf32>
    %652 = arith.mulf %645, %651 : vector<2x12x12xf32>
    %653 = arith.addf %640, %652 : vector<2x12x12xf32>
    %c14_42 = arith.constant 14 : index
    %654 = memref.load %arg4[%c14_42] : memref<81xf32, #tpu.memory_space<smem>>
    %655 = vector.broadcast %654 : f32 to vector<2x12x12xf32>
    %656 = arith.mulf %645, %655 : vector<2x12x12xf32>
    %657 = arith.addf %644, %656 : vector<2x12x12xf32>
    %658 = vector.extract_strided_slice %631 {offsets = [0, 0, 2], sizes = [2, 12, 12], strides = [1, 1, 1]} : vector<2x12x14xf32> to vector<2x12x12xf32>
    %c21_43 = arith.constant 21 : index
    %659 = memref.load %arg4[%c21_43] : memref<81xf32, #tpu.memory_space<smem>>
    %660 = vector.broadcast %659 : f32 to vector<2x12x12xf32>
    %661 = arith.mulf %658, %660 : vector<2x12x12xf32>
    %662 = arith.addf %649, %661 : vector<2x12x12xf32>
    %c22_44 = arith.constant 22 : index
    %663 = memref.load %arg4[%c22_44] : memref<81xf32, #tpu.memory_space<smem>>
    %664 = vector.broadcast %663 : f32 to vector<2x12x12xf32>
    %665 = arith.mulf %658, %664 : vector<2x12x12xf32>
    %666 = arith.addf %653, %665 : vector<2x12x12xf32>
    %c23_45 = arith.constant 23 : index
    %667 = memref.load %arg4[%c23_45] : memref<81xf32, #tpu.memory_space<smem>>
    %668 = vector.broadcast %667 : f32 to vector<2x12x12xf32>
    %669 = arith.mulf %658, %668 : vector<2x12x12xf32>
    %670 = arith.addf %657, %669 : vector<2x12x12xf32>
    %671 = vector.extract_strided_slice %630 {offsets = [0, 1, 0], sizes = [2, 12, 14], strides = [1, 1, 1]} : vector<2x14x14xf32> to vector<2x12x14xf32>
    %672 = vector.extract_strided_slice %671 {offsets = [0, 0, 0], sizes = [2, 12, 12], strides = [1, 1, 1]} : vector<2x12x14xf32> to vector<2x12x12xf32>
    %c30_46 = arith.constant 30 : index
    %673 = memref.load %arg4[%c30_46] : memref<81xf32, #tpu.memory_space<smem>>
    %674 = vector.broadcast %673 : f32 to vector<2x12x12xf32>
    %675 = arith.mulf %672, %674 : vector<2x12x12xf32>
    %676 = arith.addf %662, %675 : vector<2x12x12xf32>
    %c31_47 = arith.constant 31 : index
    %677 = memref.load %arg4[%c31_47] : memref<81xf32, #tpu.memory_space<smem>>
    %678 = vector.broadcast %677 : f32 to vector<2x12x12xf32>
    %679 = arith.mulf %672, %678 : vector<2x12x12xf32>
    %680 = arith.addf %666, %679 : vector<2x12x12xf32>
    %c32_48 = arith.constant 32 : index
    %681 = memref.load %arg4[%c32_48] : memref<81xf32, #tpu.memory_space<smem>>
    %682 = vector.broadcast %681 : f32 to vector<2x12x12xf32>
    %683 = arith.mulf %672, %682 : vector<2x12x12xf32>
    %684 = arith.addf %670, %683 : vector<2x12x12xf32>
    %685 = vector.extract_strided_slice %671 {offsets = [0, 0, 1], sizes = [2, 12, 12], strides = [1, 1, 1]} : vector<2x12x14xf32> to vector<2x12x12xf32>
    %c39_49 = arith.constant 39 : index
    %686 = memref.load %arg4[%c39_49] : memref<81xf32, #tpu.memory_space<smem>>
    %687 = vector.broadcast %686 : f32 to vector<2x12x12xf32>
    %688 = arith.mulf %685, %687 : vector<2x12x12xf32>
    %689 = arith.addf %676, %688 : vector<2x12x12xf32>
    %c40_50 = arith.constant 40 : index
    %690 = memref.load %arg4[%c40_50] : memref<81xf32, #tpu.memory_space<smem>>
    %691 = vector.broadcast %690 : f32 to vector<2x12x12xf32>
    %692 = arith.mulf %685, %691 : vector<2x12x12xf32>
    %693 = arith.addf %680, %692 : vector<2x12x12xf32>
    %c41_51 = arith.constant 41 : index
    %694 = memref.load %arg4[%c41_51] : memref<81xf32, #tpu.memory_space<smem>>
    %695 = vector.broadcast %694 : f32 to vector<2x12x12xf32>
    %696 = arith.mulf %685, %695 : vector<2x12x12xf32>
    %697 = arith.addf %684, %696 : vector<2x12x12xf32>
    %698 = vector.extract_strided_slice %671 {offsets = [0, 0, 2], sizes = [2, 12, 12], strides = [1, 1, 1]} : vector<2x12x14xf32> to vector<2x12x12xf32>
    %c48_52 = arith.constant 48 : index
    %699 = memref.load %arg4[%c48_52] : memref<81xf32, #tpu.memory_space<smem>>
    %700 = vector.broadcast %699 : f32 to vector<2x12x12xf32>
    %701 = arith.mulf %698, %700 : vector<2x12x12xf32>
    %702 = arith.addf %689, %701 : vector<2x12x12xf32>
    %c49_53 = arith.constant 49 : index
    %703 = memref.load %arg4[%c49_53] : memref<81xf32, #tpu.memory_space<smem>>
    %704 = vector.broadcast %703 : f32 to vector<2x12x12xf32>
    %705 = arith.mulf %698, %704 : vector<2x12x12xf32>
    %706 = arith.addf %693, %705 : vector<2x12x12xf32>
    %c50_54 = arith.constant 50 : index
    %707 = memref.load %arg4[%c50_54] : memref<81xf32, #tpu.memory_space<smem>>
    %708 = vector.broadcast %707 : f32 to vector<2x12x12xf32>
    %709 = arith.mulf %698, %708 : vector<2x12x12xf32>
    %710 = arith.addf %697, %709 : vector<2x12x12xf32>
    %711 = vector.extract_strided_slice %630 {offsets = [0, 2, 0], sizes = [2, 12, 14], strides = [1, 1, 1]} : vector<2x14x14xf32> to vector<2x12x14xf32>
    %712 = vector.extract_strided_slice %711 {offsets = [0, 0, 0], sizes = [2, 12, 12], strides = [1, 1, 1]} : vector<2x12x14xf32> to vector<2x12x12xf32>
    %c57_55 = arith.constant 57 : index
    %713 = memref.load %arg4[%c57_55] : memref<81xf32, #tpu.memory_space<smem>>
    %714 = vector.broadcast %713 : f32 to vector<2x12x12xf32>
    %715 = arith.mulf %712, %714 : vector<2x12x12xf32>
    %716 = arith.addf %702, %715 : vector<2x12x12xf32>
    %c58_56 = arith.constant 58 : index
    %717 = memref.load %arg4[%c58_56] : memref<81xf32, #tpu.memory_space<smem>>
    %718 = vector.broadcast %717 : f32 to vector<2x12x12xf32>
    %719 = arith.mulf %712, %718 : vector<2x12x12xf32>
    %720 = arith.addf %706, %719 : vector<2x12x12xf32>
    %c59_57 = arith.constant 59 : index
    %721 = memref.load %arg4[%c59_57] : memref<81xf32, #tpu.memory_space<smem>>
    %722 = vector.broadcast %721 : f32 to vector<2x12x12xf32>
    %723 = arith.mulf %712, %722 : vector<2x12x12xf32>
    %724 = arith.addf %710, %723 : vector<2x12x12xf32>
    %725 = vector.extract_strided_slice %711 {offsets = [0, 0, 1], sizes = [2, 12, 12], strides = [1, 1, 1]} : vector<2x12x14xf32> to vector<2x12x12xf32>
    %c66_58 = arith.constant 66 : index
    %726 = memref.load %arg4[%c66_58] : memref<81xf32, #tpu.memory_space<smem>>
    %727 = vector.broadcast %726 : f32 to vector<2x12x12xf32>
    %728 = arith.mulf %725, %727 : vector<2x12x12xf32>
    %729 = arith.addf %716, %728 : vector<2x12x12xf32>
    %c67_59 = arith.constant 67 : index
    %730 = memref.load %arg4[%c67_59] : memref<81xf32, #tpu.memory_space<smem>>
    %731 = vector.broadcast %730 : f32 to vector<2x12x12xf32>
    %732 = arith.mulf %725, %731 : vector<2x12x12xf32>
    %733 = arith.addf %720, %732 : vector<2x12x12xf32>
    %c68_60 = arith.constant 68 : index
    %734 = memref.load %arg4[%c68_60] : memref<81xf32, #tpu.memory_space<smem>>
    %735 = vector.broadcast %734 : f32 to vector<2x12x12xf32>
    %736 = arith.mulf %725, %735 : vector<2x12x12xf32>
    %737 = arith.addf %724, %736 : vector<2x12x12xf32>
    %738 = vector.extract_strided_slice %711 {offsets = [0, 0, 2], sizes = [2, 12, 12], strides = [1, 1, 1]} : vector<2x12x14xf32> to vector<2x12x12xf32>
    %c75_61 = arith.constant 75 : index
    %739 = memref.load %arg4[%c75_61] : memref<81xf32, #tpu.memory_space<smem>>
    %740 = vector.broadcast %739 : f32 to vector<2x12x12xf32>
    %741 = arith.mulf %738, %740 : vector<2x12x12xf32>
    %742 = arith.addf %729, %741 : vector<2x12x12xf32>
    %c76_62 = arith.constant 76 : index
    %743 = memref.load %arg4[%c76_62] : memref<81xf32, #tpu.memory_space<smem>>
    %744 = vector.broadcast %743 : f32 to vector<2x12x12xf32>
    %745 = arith.mulf %738, %744 : vector<2x12x12xf32>
    %746 = arith.addf %733, %745 : vector<2x12x12xf32>
    %c77_63 = arith.constant 77 : index
    %747 = memref.load %arg4[%c77_63] : memref<81xf32, #tpu.memory_space<smem>>
    %748 = vector.broadcast %747 : f32 to vector<2x12x12xf32>
    %749 = arith.mulf %738, %748 : vector<2x12x12xf32>
    %750 = arith.addf %737, %749 : vector<2x12x12xf32>
    %751 = vector.extract_strided_slice %500 {offsets = [0, 2, 0, 0], sizes = [2, 1, 14, 14], strides = [1, 1, 1, 1]} : vector<2x3x14x14xf32> to vector<2x1x14x14xf32>
    %752 = vector.shape_cast %751 : vector<2x1x14x14xf32> to vector<2x14x14xf32>
    %753 = vector.extract_strided_slice %752 {offsets = [0, 0, 0], sizes = [2, 12, 14], strides = [1, 1, 1]} : vector<2x14x14xf32> to vector<2x12x14xf32>
    %754 = vector.extract_strided_slice %753 {offsets = [0, 0, 0], sizes = [2, 12, 12], strides = [1, 1, 1]} : vector<2x12x14xf32> to vector<2x12x12xf32>
    %c6_64 = arith.constant 6 : index
    %755 = memref.load %arg4[%c6_64] : memref<81xf32, #tpu.memory_space<smem>>
    %756 = vector.broadcast %755 : f32 to vector<2x12x12xf32>
    %757 = arith.mulf %754, %756 : vector<2x12x12xf32>
    %758 = arith.addf %742, %757 : vector<2x12x12xf32>
    %c7_65 = arith.constant 7 : index
    %759 = memref.load %arg4[%c7_65] : memref<81xf32, #tpu.memory_space<smem>>
    %760 = vector.broadcast %759 : f32 to vector<2x12x12xf32>
    %761 = arith.mulf %754, %760 : vector<2x12x12xf32>
    %762 = arith.addf %746, %761 : vector<2x12x12xf32>
    %c8_66 = arith.constant 8 : index
    %763 = memref.load %arg4[%c8_66] : memref<81xf32, #tpu.memory_space<smem>>
    %764 = vector.broadcast %763 : f32 to vector<2x12x12xf32>
    %765 = arith.mulf %754, %764 : vector<2x12x12xf32>
    %766 = arith.addf %750, %765 : vector<2x12x12xf32>
    %767 = vector.extract_strided_slice %753 {offsets = [0, 0, 1], sizes = [2, 12, 12], strides = [1, 1, 1]} : vector<2x12x14xf32> to vector<2x12x12xf32>
    %c15_67 = arith.constant 15 : index
    %768 = memref.load %arg4[%c15_67] : memref<81xf32, #tpu.memory_space<smem>>
    %769 = vector.broadcast %768 : f32 to vector<2x12x12xf32>
    %770 = arith.mulf %767, %769 : vector<2x12x12xf32>
    %771 = arith.addf %758, %770 : vector<2x12x12xf32>
    %c16_68 = arith.constant 16 : index
    %772 = memref.load %arg4[%c16_68] : memref<81xf32, #tpu.memory_space<smem>>
    %773 = vector.broadcast %772 : f32 to vector<2x12x12xf32>
    %774 = arith.mulf %767, %773 : vector<2x12x12xf32>
    %775 = arith.addf %762, %774 : vector<2x12x12xf32>
    %c17_69 = arith.constant 17 : index
    %776 = memref.load %arg4[%c17_69] : memref<81xf32, #tpu.memory_space<smem>>
    %777 = vector.broadcast %776 : f32 to vector<2x12x12xf32>
    %778 = arith.mulf %767, %777 : vector<2x12x12xf32>
    %779 = arith.addf %766, %778 : vector<2x12x12xf32>
    %780 = vector.extract_strided_slice %753 {offsets = [0, 0, 2], sizes = [2, 12, 12], strides = [1, 1, 1]} : vector<2x12x14xf32> to vector<2x12x12xf32>
    %c24_70 = arith.constant 24 : index
    %781 = memref.load %arg4[%c24_70] : memref<81xf32, #tpu.memory_space<smem>>
    %782 = vector.broadcast %781 : f32 to vector<2x12x12xf32>
    %783 = arith.mulf %780, %782 : vector<2x12x12xf32>
    %784 = arith.addf %771, %783 : vector<2x12x12xf32>
    %c25_71 = arith.constant 25 : index
    %785 = memref.load %arg4[%c25_71] : memref<81xf32, #tpu.memory_space<smem>>
    %786 = vector.broadcast %785 : f32 to vector<2x12x12xf32>
    %787 = arith.mulf %780, %786 : vector<2x12x12xf32>
    %788 = arith.addf %775, %787 : vector<2x12x12xf32>
    %c26_72 = arith.constant 26 : index
    %789 = memref.load %arg4[%c26_72] : memref<81xf32, #tpu.memory_space<smem>>
    %790 = vector.broadcast %789 : f32 to vector<2x12x12xf32>
    %791 = arith.mulf %780, %790 : vector<2x12x12xf32>
    %792 = arith.addf %779, %791 : vector<2x12x12xf32>
    %793 = vector.extract_strided_slice %752 {offsets = [0, 1, 0], sizes = [2, 12, 14], strides = [1, 1, 1]} : vector<2x14x14xf32> to vector<2x12x14xf32>
    %794 = vector.extract_strided_slice %793 {offsets = [0, 0, 0], sizes = [2, 12, 12], strides = [1, 1, 1]} : vector<2x12x14xf32> to vector<2x12x12xf32>
    %c33_73 = arith.constant 33 : index
    %795 = memref.load %arg4[%c33_73] : memref<81xf32, #tpu.memory_space<smem>>
    %796 = vector.broadcast %795 : f32 to vector<2x12x12xf32>
    %797 = arith.mulf %794, %796 : vector<2x12x12xf32>
    %798 = arith.addf %784, %797 : vector<2x12x12xf32>
    %c34_74 = arith.constant 34 : index
    %799 = memref.load %arg4[%c34_74] : memref<81xf32, #tpu.memory_space<smem>>
    %800 = vector.broadcast %799 : f32 to vector<2x12x12xf32>
    %801 = arith.mulf %794, %800 : vector<2x12x12xf32>
    %802 = arith.addf %788, %801 : vector<2x12x12xf32>
    %c35_75 = arith.constant 35 : index
    %803 = memref.load %arg4[%c35_75] : memref<81xf32, #tpu.memory_space<smem>>
    %804 = vector.broadcast %803 : f32 to vector<2x12x12xf32>
    %805 = arith.mulf %794, %804 : vector<2x12x12xf32>
    %806 = arith.addf %792, %805 : vector<2x12x12xf32>
    %807 = vector.extract_strided_slice %793 {offsets = [0, 0, 1], sizes = [2, 12, 12], strides = [1, 1, 1]} : vector<2x12x14xf32> to vector<2x12x12xf32>
    %c42_76 = arith.constant 42 : index
    %808 = memref.load %arg4[%c42_76] : memref<81xf32, #tpu.memory_space<smem>>
    %809 = vector.broadcast %808 : f32 to vector<2x12x12xf32>
    %810 = arith.mulf %807, %809 : vector<2x12x12xf32>
    %811 = arith.addf %798, %810 : vector<2x12x12xf32>
    %c43_77 = arith.constant 43 : index
    %812 = memref.load %arg4[%c43_77] : memref<81xf32, #tpu.memory_space<smem>>
    %813 = vector.broadcast %812 : f32 to vector<2x12x12xf32>
    %814 = arith.mulf %807, %813 : vector<2x12x12xf32>
    %815 = arith.addf %802, %814 : vector<2x12x12xf32>
    %c44_78 = arith.constant 44 : index
    %816 = memref.load %arg4[%c44_78] : memref<81xf32, #tpu.memory_space<smem>>
    %817 = vector.broadcast %816 : f32 to vector<2x12x12xf32>
    %818 = arith.mulf %807, %817 : vector<2x12x12xf32>
    %819 = arith.addf %806, %818 : vector<2x12x12xf32>
    %820 = vector.extract_strided_slice %793 {offsets = [0, 0, 2], sizes = [2, 12, 12], strides = [1, 1, 1]} : vector<2x12x14xf32> to vector<2x12x12xf32>
    %c51_79 = arith.constant 51 : index
    %821 = memref.load %arg4[%c51_79] : memref<81xf32, #tpu.memory_space<smem>>
    %822 = vector.broadcast %821 : f32 to vector<2x12x12xf32>
    %823 = arith.mulf %820, %822 : vector<2x12x12xf32>
    %824 = arith.addf %811, %823 : vector<2x12x12xf32>
    %c52_80 = arith.constant 52 : index
    %825 = memref.load %arg4[%c52_80] : memref<81xf32, #tpu.memory_space<smem>>
    %826 = vector.broadcast %825 : f32 to vector<2x12x12xf32>
    %827 = arith.mulf %820, %826 : vector<2x12x12xf32>
    %828 = arith.addf %815, %827 : vector<2x12x12xf32>
    %c53_81 = arith.constant 53 : index
    %829 = memref.load %arg4[%c53_81] : memref<81xf32, #tpu.memory_space<smem>>
    %830 = vector.broadcast %829 : f32 to vector<2x12x12xf32>
    %831 = arith.mulf %820, %830 : vector<2x12x12xf32>
    %832 = arith.addf %819, %831 : vector<2x12x12xf32>
    %833 = vector.extract_strided_slice %752 {offsets = [0, 2, 0], sizes = [2, 12, 14], strides = [1, 1, 1]} : vector<2x14x14xf32> to vector<2x12x14xf32>
    %834 = vector.extract_strided_slice %833 {offsets = [0, 0, 0], sizes = [2, 12, 12], strides = [1, 1, 1]} : vector<2x12x14xf32> to vector<2x12x12xf32>
    %c60_82 = arith.constant 60 : index
    %835 = memref.load %arg4[%c60_82] : memref<81xf32, #tpu.memory_space<smem>>
    %836 = vector.broadcast %835 : f32 to vector<2x12x12xf32>
    %837 = arith.mulf %834, %836 : vector<2x12x12xf32>
    %838 = arith.addf %824, %837 : vector<2x12x12xf32>
    %c61_83 = arith.constant 61 : index
    %839 = memref.load %arg4[%c61_83] : memref<81xf32, #tpu.memory_space<smem>>
    %840 = vector.broadcast %839 : f32 to vector<2x12x12xf32>
    %841 = arith.mulf %834, %840 : vector<2x12x12xf32>
    %842 = arith.addf %828, %841 : vector<2x12x12xf32>
    %c62_84 = arith.constant 62 : index
    %843 = memref.load %arg4[%c62_84] : memref<81xf32, #tpu.memory_space<smem>>
    %844 = vector.broadcast %843 : f32 to vector<2x12x12xf32>
    %845 = arith.mulf %834, %844 : vector<2x12x12xf32>
    %846 = arith.addf %832, %845 : vector<2x12x12xf32>
    %847 = vector.extract_strided_slice %833 {offsets = [0, 0, 1], sizes = [2, 12, 12], strides = [1, 1, 1]} : vector<2x12x14xf32> to vector<2x12x12xf32>
    %c69_85 = arith.constant 69 : index
    %848 = memref.load %arg4[%c69_85] : memref<81xf32, #tpu.memory_space<smem>>
    %849 = vector.broadcast %848 : f32 to vector<2x12x12xf32>
    %850 = arith.mulf %847, %849 : vector<2x12x12xf32>
    %851 = arith.addf %838, %850 : vector<2x12x12xf32>
    %c70_86 = arith.constant 70 : index
    %852 = memref.load %arg4[%c70_86] : memref<81xf32, #tpu.memory_space<smem>>
    %853 = vector.broadcast %852 : f32 to vector<2x12x12xf32>
    %854 = arith.mulf %847, %853 : vector<2x12x12xf32>
    %855 = arith.addf %842, %854 : vector<2x12x12xf32>
    %c71_87 = arith.constant 71 : index
    %856 = memref.load %arg4[%c71_87] : memref<81xf32, #tpu.memory_space<smem>>
    %857 = vector.broadcast %856 : f32 to vector<2x12x12xf32>
    %858 = arith.mulf %847, %857 : vector<2x12x12xf32>
    %859 = arith.addf %846, %858 : vector<2x12x12xf32>
    %860 = vector.extract_strided_slice %833 {offsets = [0, 0, 2], sizes = [2, 12, 12], strides = [1, 1, 1]} : vector<2x12x14xf32> to vector<2x12x12xf32>
    %c78_88 = arith.constant 78 : index
    %861 = memref.load %arg4[%c78_88] : memref<81xf32, #tpu.memory_space<smem>>
    %862 = vector.broadcast %861 : f32 to vector<2x12x12xf32>
    %863 = arith.mulf %860, %862 : vector<2x12x12xf32>
    %864 = arith.addf %851, %863 : vector<2x12x12xf32>
    %c79_89 = arith.constant 79 : index
    %865 = memref.load %arg4[%c79_89] : memref<81xf32, #tpu.memory_space<smem>>
    %866 = vector.broadcast %865 : f32 to vector<2x12x12xf32>
    %867 = arith.mulf %860, %866 : vector<2x12x12xf32>
    %868 = arith.addf %855, %867 : vector<2x12x12xf32>
    %c80_90 = arith.constant 80 : index
    %869 = memref.load %arg4[%c80_90] : memref<81xf32, #tpu.memory_space<smem>>
    %870 = vector.broadcast %869 : f32 to vector<2x12x12xf32>
    %871 = arith.mulf %860, %870 : vector<2x12x12xf32>
    %872 = arith.addf %859, %871 : vector<2x12x12xf32>
    %873 = vector.shape_cast %864 : vector<2x12x12xf32> to vector<2x1x12x12xf32>
    %874 = vector.shape_cast %868 : vector<2x12x12xf32> to vector<2x1x12x12xf32>
    %875 = vector.shape_cast %872 : vector<2x12x12xf32> to vector<2x1x12x12xf32>
    %876 = tpu.concatenate %873, %874, %875 in 1 : vector<2x1x12x12xf32>, vector<2x1x12x12xf32>, vector<2x1x12x12xf32> -> vector<2x3x12x12xf32>
    %cst_91 = arith.constant 0.000000e+00 : f32
    %877 = vector.broadcast %cst_91 : f32 to vector<2x3x12x12xf32>
    %878 = arith.maximumf %876, %877 : vector<2x3x12x12xf32>
    %879 = vector.extract_strided_slice %878 {offsets = [0, 0, 0, 0], sizes = [2, 3, 11, 12], strides = [1, 1, 1, 1]} : vector<2x3x12x12xf32> to vector<2x3x11x12xf32>
    %880 = vector.extract_strided_slice %878 {offsets = [0, 0, 1, 0], sizes = [2, 3, 11, 12], strides = [1, 1, 1, 1]} : vector<2x3x12x12xf32> to vector<2x3x11x12xf32>
    %881 = arith.maximumf %879, %880 : vector<2x3x11x12xf32>
    %882 = vector.extract_strided_slice %881 {offsets = [0, 0, 0, 0], sizes = [2, 3, 11, 11], strides = [1, 1, 1, 1]} : vector<2x3x11x12xf32> to vector<2x3x11x11xf32>
    %883 = vector.extract_strided_slice %881 {offsets = [0, 0, 0, 1], sizes = [2, 3, 11, 11], strides = [1, 1, 1, 1]} : vector<2x3x11x12xf32> to vector<2x3x11x11xf32>
    %884 = arith.maximumf %882, %883 : vector<2x3x11x11xf32>
    %885 = vector.extract_strided_slice %884 {offsets = [0, 0, 0, 0], sizes = [2, 3, 6, 11], strides = [1, 1, 1, 1]} : vector<2x3x11x11xf32> to vector<2x3x6x11xf32>
    %886 = tpu.iota {dimensions = array<i32: 2>} : vector<2x3x6x11xi32>
    %887 = vector.extract_strided_slice %884 {offsets = [0, 0, 1, 0], sizes = [2, 3, 6, 11], strides = [1, 1, 1, 1]} : vector<2x3x11x11xf32> to vector<2x3x6x11xf32>
    %c1_i32 = arith.constant 1 : i32
    %888 = vector.broadcast %c1_i32 : i32 to vector<2x3x6x11xi32>
    %889 = arith.cmpi eq, %886, %888 : vector<2x3x6x11xi32>
    %890 = arith.select %889, %887, %885 : vector<2x3x6x11xi1>, vector<2x3x6x11xf32>
    %891 = vector.extract_strided_slice %884 {offsets = [0, 0, 2, 0], sizes = [2, 3, 6, 11], strides = [1, 1, 1, 1]} : vector<2x3x11x11xf32> to vector<2x3x6x11xf32>
    %c2_i32 = arith.constant 2 : i32
    %892 = vector.broadcast %c2_i32 : i32 to vector<2x3x6x11xi32>
    %893 = arith.cmpi eq, %886, %892 : vector<2x3x6x11xi32>
    %894 = arith.select %893, %891, %890 : vector<2x3x6x11xi1>, vector<2x3x6x11xf32>
    %895 = vector.extract_strided_slice %884 {offsets = [0, 0, 3, 0], sizes = [2, 3, 6, 11], strides = [1, 1, 1, 1]} : vector<2x3x11x11xf32> to vector<2x3x6x11xf32>
    %c3_i32 = arith.constant 3 : i32
    %896 = vector.broadcast %c3_i32 : i32 to vector<2x3x6x11xi32>
    %897 = arith.cmpi eq, %886, %896 : vector<2x3x6x11xi32>
    %898 = arith.select %897, %895, %894 : vector<2x3x6x11xi1>, vector<2x3x6x11xf32>
    %899 = vector.extract_strided_slice %884 {offsets = [0, 0, 4, 0], sizes = [2, 3, 6, 11], strides = [1, 1, 1, 1]} : vector<2x3x11x11xf32> to vector<2x3x6x11xf32>
    %c4_i32 = arith.constant 4 : i32
    %900 = vector.broadcast %c4_i32 : i32 to vector<2x3x6x11xi32>
    %901 = arith.cmpi eq, %886, %900 : vector<2x3x6x11xi32>
    %902 = arith.select %901, %899, %898 : vector<2x3x6x11xi1>, vector<2x3x6x11xf32>
    %903 = vector.extract_strided_slice %884 {offsets = [0, 0, 5, 0], sizes = [2, 3, 6, 11], strides = [1, 1, 1, 1]} : vector<2x3x11x11xf32> to vector<2x3x6x11xf32>
    %c5_i32 = arith.constant 5 : i32
    %904 = vector.broadcast %c5_i32 : i32 to vector<2x3x6x11xi32>
    %905 = arith.cmpi eq, %886, %904 : vector<2x3x6x11xi32>
    %906 = arith.select %905, %903, %902 : vector<2x3x6x11xi1>, vector<2x3x6x11xf32>
    %907 = vector.extract_strided_slice %906 {offsets = [0, 0, 0, 0], sizes = [2, 3, 6, 6], strides = [1, 1, 1, 1]} : vector<2x3x6x11xf32> to vector<2x3x6x6xf32>
    %908 = tpu.iota {dimensions = array<i32: 3>} : vector<2x3x6x6xi32>
    %909 = vector.extract_strided_slice %906 {offsets = [0, 0, 0, 1], sizes = [2, 3, 6, 6], strides = [1, 1, 1, 1]} : vector<2x3x6x11xf32> to vector<2x3x6x6xf32>
    %c1_i32_92 = arith.constant 1 : i32
    %910 = vector.broadcast %c1_i32_92 : i32 to vector<2x3x6x6xi32>
    %911 = arith.cmpi eq, %908, %910 : vector<2x3x6x6xi32>
    %912 = arith.select %911, %909, %907 : vector<2x3x6x6xi1>, vector<2x3x6x6xf32>
    %913 = vector.extract_strided_slice %906 {offsets = [0, 0, 0, 2], sizes = [2, 3, 6, 6], strides = [1, 1, 1, 1]} : vector<2x3x6x11xf32> to vector<2x3x6x6xf32>
    %c2_i32_93 = arith.constant 2 : i32
    %914 = vector.broadcast %c2_i32_93 : i32 to vector<2x3x6x6xi32>
    %915 = arith.cmpi eq, %908, %914 : vector<2x3x6x6xi32>
    %916 = arith.select %915, %913, %912 : vector<2x3x6x6xi1>, vector<2x3x6x6xf32>
    %917 = vector.extract_strided_slice %906 {offsets = [0, 0, 0, 3], sizes = [2, 3, 6, 6], strides = [1, 1, 1, 1]} : vector<2x3x6x11xf32> to vector<2x3x6x6xf32>
    %c3_i32_94 = arith.constant 3 : i32
    %918 = vector.broadcast %c3_i32_94 : i32 to vector<2x3x6x6xi32>
    %919 = arith.cmpi eq, %908, %918 : vector<2x3x6x6xi32>
    %920 = arith.select %919, %917, %916 : vector<2x3x6x6xi1>, vector<2x3x6x6xf32>
    %921 = vector.extract_strided_slice %906 {offsets = [0, 0, 0, 4], sizes = [2, 3, 6, 6], strides = [1, 1, 1, 1]} : vector<2x3x6x11xf32> to vector<2x3x6x6xf32>
    %c4_i32_95 = arith.constant 4 : i32
    %922 = vector.broadcast %c4_i32_95 : i32 to vector<2x3x6x6xi32>
    %923 = arith.cmpi eq, %908, %922 : vector<2x3x6x6xi32>
    %924 = arith.select %923, %921, %920 : vector<2x3x6x6xi1>, vector<2x3x6x6xf32>
    %925 = vector.extract_strided_slice %906 {offsets = [0, 0, 0, 5], sizes = [2, 3, 6, 6], strides = [1, 1, 1, 1]} : vector<2x3x6x11xf32> to vector<2x3x6x6xf32>
    %c5_i32_96 = arith.constant 5 : i32
    %926 = vector.broadcast %c5_i32_96 : i32 to vector<2x3x6x6xi32>
    %927 = arith.cmpi eq, %908, %926 : vector<2x3x6x6xi32>
    %928 = arith.select %927, %925, %924 : vector<2x3x6x6xi1>, vector<2x3x6x6xf32>
    %c0_97 = arith.constant 0 : index
    %929 = memref.load %arg5[%c0_97] : memref<3xf32, #tpu.memory_space<smem>>
    %930 = vector.broadcast %929 : f32 to vector<2x4x4xf32>
    %c1_98 = arith.constant 1 : index
    %931 = memref.load %arg5[%c1_98] : memref<3xf32, #tpu.memory_space<smem>>
    %932 = vector.broadcast %931 : f32 to vector<2x4x4xf32>
    %c2_99 = arith.constant 2 : index
    %933 = memref.load %arg5[%c2_99] : memref<3xf32, #tpu.memory_space<smem>>
    %934 = vector.broadcast %933 : f32 to vector<2x4x4xf32>
    %935 = vector.extract_strided_slice %928 {offsets = [0, 0, 0, 0], sizes = [2, 1, 6, 6], strides = [1, 1, 1, 1]} : vector<2x3x6x6xf32> to vector<2x1x6x6xf32>
    %936 = vector.shape_cast %935 : vector<2x1x6x6xf32> to vector<2x6x6xf32>
    %937 = vector.extract_strided_slice %936 {offsets = [0, 0, 0], sizes = [2, 4, 6], strides = [1, 1, 1]} : vector<2x6x6xf32> to vector<2x4x6xf32>
    %938 = vector.extract_strided_slice %937 {offsets = [0, 0, 0], sizes = [2, 4, 4], strides = [1, 1, 1]} : vector<2x4x6xf32> to vector<2x4x4xf32>
    %c0_100 = arith.constant 0 : index
    %939 = memref.load %arg4[%c0_100] : memref<81xf32, #tpu.memory_space<smem>>
    %940 = vector.broadcast %939 : f32 to vector<2x4x4xf32>
    %941 = arith.mulf %938, %940 : vector<2x4x4xf32>
    %942 = arith.addf %930, %941 : vector<2x4x4xf32>
    %c1_101 = arith.constant 1 : index
    %943 = memref.load %arg4[%c1_101] : memref<81xf32, #tpu.memory_space<smem>>
    %944 = vector.broadcast %943 : f32 to vector<2x4x4xf32>
    %945 = arith.mulf %938, %944 : vector<2x4x4xf32>
    %946 = arith.addf %932, %945 : vector<2x4x4xf32>
    %c2_102 = arith.constant 2 : index
    %947 = memref.load %arg4[%c2_102] : memref<81xf32, #tpu.memory_space<smem>>
    %948 = vector.broadcast %947 : f32 to vector<2x4x4xf32>
    %949 = arith.mulf %938, %948 : vector<2x4x4xf32>
    %950 = arith.addf %934, %949 : vector<2x4x4xf32>
    %951 = vector.extract_strided_slice %937 {offsets = [0, 0, 1], sizes = [2, 4, 4], strides = [1, 1, 1]} : vector<2x4x6xf32> to vector<2x4x4xf32>
    %c9_103 = arith.constant 9 : index
    %952 = memref.load %arg4[%c9_103] : memref<81xf32, #tpu.memory_space<smem>>
    %953 = vector.broadcast %952 : f32 to vector<2x4x4xf32>
    %954 = arith.mulf %951, %953 : vector<2x4x4xf32>
    %955 = arith.addf %942, %954 : vector<2x4x4xf32>
    %c10_104 = arith.constant 10 : index
    %956 = memref.load %arg4[%c10_104] : memref<81xf32, #tpu.memory_space<smem>>
    %957 = vector.broadcast %956 : f32 to vector<2x4x4xf32>
    %958 = arith.mulf %951, %957 : vector<2x4x4xf32>
    %959 = arith.addf %946, %958 : vector<2x4x4xf32>
    %c11_105 = arith.constant 11 : index
    %960 = memref.load %arg4[%c11_105] : memref<81xf32, #tpu.memory_space<smem>>
    %961 = vector.broadcast %960 : f32 to vector<2x4x4xf32>
    %962 = arith.mulf %951, %961 : vector<2x4x4xf32>
    %963 = arith.addf %950, %962 : vector<2x4x4xf32>
    %964 = vector.extract_strided_slice %937 {offsets = [0, 0, 2], sizes = [2, 4, 4], strides = [1, 1, 1]} : vector<2x4x6xf32> to vector<2x4x4xf32>
    %c18_106 = arith.constant 18 : index
    %965 = memref.load %arg4[%c18_106] : memref<81xf32, #tpu.memory_space<smem>>
    %966 = vector.broadcast %965 : f32 to vector<2x4x4xf32>
    %967 = arith.mulf %964, %966 : vector<2x4x4xf32>
    %968 = arith.addf %955, %967 : vector<2x4x4xf32>
    %c19_107 = arith.constant 19 : index
    %969 = memref.load %arg4[%c19_107] : memref<81xf32, #tpu.memory_space<smem>>
    %970 = vector.broadcast %969 : f32 to vector<2x4x4xf32>
    %971 = arith.mulf %964, %970 : vector<2x4x4xf32>
    %972 = arith.addf %959, %971 : vector<2x4x4xf32>
    %c20_108 = arith.constant 20 : index
    %973 = memref.load %arg4[%c20_108] : memref<81xf32, #tpu.memory_space<smem>>
    %974 = vector.broadcast %973 : f32 to vector<2x4x4xf32>
    %975 = arith.mulf %964, %974 : vector<2x4x4xf32>
    %976 = arith.addf %963, %975 : vector<2x4x4xf32>
    %977 = vector.extract_strided_slice %936 {offsets = [0, 1, 0], sizes = [2, 4, 6], strides = [1, 1, 1]} : vector<2x6x6xf32> to vector<2x4x6xf32>
    %978 = vector.extract_strided_slice %977 {offsets = [0, 0, 0], sizes = [2, 4, 4], strides = [1, 1, 1]} : vector<2x4x6xf32> to vector<2x4x4xf32>
    %c27_109 = arith.constant 27 : index
    %979 = memref.load %arg4[%c27_109] : memref<81xf32, #tpu.memory_space<smem>>
    %980 = vector.broadcast %979 : f32 to vector<2x4x4xf32>
    %981 = arith.mulf %978, %980 : vector<2x4x4xf32>
    %982 = arith.addf %968, %981 : vector<2x4x4xf32>
    %c28_110 = arith.constant 28 : index
    %983 = memref.load %arg4[%c28_110] : memref<81xf32, #tpu.memory_space<smem>>
    %984 = vector.broadcast %983 : f32 to vector<2x4x4xf32>
    %985 = arith.mulf %978, %984 : vector<2x4x4xf32>
    %986 = arith.addf %972, %985 : vector<2x4x4xf32>
    %c29_111 = arith.constant 29 : index
    %987 = memref.load %arg4[%c29_111] : memref<81xf32, #tpu.memory_space<smem>>
    %988 = vector.broadcast %987 : f32 to vector<2x4x4xf32>
    %989 = arith.mulf %978, %988 : vector<2x4x4xf32>
    %990 = arith.addf %976, %989 : vector<2x4x4xf32>
    %991 = vector.extract_strided_slice %977 {offsets = [0, 0, 1], sizes = [2, 4, 4], strides = [1, 1, 1]} : vector<2x4x6xf32> to vector<2x4x4xf32>
    %c36_112 = arith.constant 36 : index
    %992 = memref.load %arg4[%c36_112] : memref<81xf32, #tpu.memory_space<smem>>
    %993 = vector.broadcast %992 : f32 to vector<2x4x4xf32>
    %994 = arith.mulf %991, %993 : vector<2x4x4xf32>
    %995 = arith.addf %982, %994 : vector<2x4x4xf32>
    %c37_113 = arith.constant 37 : index
    %996 = memref.load %arg4[%c37_113] : memref<81xf32, #tpu.memory_space<smem>>
    %997 = vector.broadcast %996 : f32 to vector<2x4x4xf32>
    %998 = arith.mulf %991, %997 : vector<2x4x4xf32>
    %999 = arith.addf %986, %998 : vector<2x4x4xf32>
    %c38_114 = arith.constant 38 : index
    %1000 = memref.load %arg4[%c38_114] : memref<81xf32, #tpu.memory_space<smem>>
    %1001 = vector.broadcast %1000 : f32 to vector<2x4x4xf32>
    %1002 = arith.mulf %991, %1001 : vector<2x4x4xf32>
    %1003 = arith.addf %990, %1002 : vector<2x4x4xf32>
    %1004 = vector.extract_strided_slice %977 {offsets = [0, 0, 2], sizes = [2, 4, 4], strides = [1, 1, 1]} : vector<2x4x6xf32> to vector<2x4x4xf32>
    %c45_115 = arith.constant 45 : index
    %1005 = memref.load %arg4[%c45_115] : memref<81xf32, #tpu.memory_space<smem>>
    %1006 = vector.broadcast %1005 : f32 to vector<2x4x4xf32>
    %1007 = arith.mulf %1004, %1006 : vector<2x4x4xf32>
    %1008 = arith.addf %995, %1007 : vector<2x4x4xf32>
    %c46_116 = arith.constant 46 : index
    %1009 = memref.load %arg4[%c46_116] : memref<81xf32, #tpu.memory_space<smem>>
    %1010 = vector.broadcast %1009 : f32 to vector<2x4x4xf32>
    %1011 = arith.mulf %1004, %1010 : vector<2x4x4xf32>
    %1012 = arith.addf %999, %1011 : vector<2x4x4xf32>
    %c47_117 = arith.constant 47 : index
    %1013 = memref.load %arg4[%c47_117] : memref<81xf32, #tpu.memory_space<smem>>
    %1014 = vector.broadcast %1013 : f32 to vector<2x4x4xf32>
    %1015 = arith.mulf %1004, %1014 : vector<2x4x4xf32>
    %1016 = arith.addf %1003, %1015 : vector<2x4x4xf32>
    %1017 = vector.extract_strided_slice %936 {offsets = [0, 2, 0], sizes = [2, 4, 6], strides = [1, 1, 1]} : vector<2x6x6xf32> to vector<2x4x6xf32>
    %1018 = vector.extract_strided_slice %1017 {offsets = [0, 0, 0], sizes = [2, 4, 4], strides = [1, 1, 1]} : vector<2x4x6xf32> to vector<2x4x4xf32>
    %c54_118 = arith.constant 54 : index
    %1019 = memref.load %arg4[%c54_118] : memref<81xf32, #tpu.memory_space<smem>>
    %1020 = vector.broadcast %1019 : f32 to vector<2x4x4xf32>
    %1021 = arith.mulf %1018, %1020 : vector<2x4x4xf32>
    %1022 = arith.addf %1008, %1021 : vector<2x4x4xf32>
    %c55_119 = arith.constant 55 : index
    %1023 = memref.load %arg4[%c55_119] : memref<81xf32, #tpu.memory_space<smem>>
    %1024 = vector.broadcast %1023 : f32 to vector<2x4x4xf32>
    %1025 = arith.mulf %1018, %1024 : vector<2x4x4xf32>
    %1026 = arith.addf %1012, %1025 : vector<2x4x4xf32>
    %c56_120 = arith.constant 56 : index
    %1027 = memref.load %arg4[%c56_120] : memref<81xf32, #tpu.memory_space<smem>>
    %1028 = vector.broadcast %1027 : f32 to vector<2x4x4xf32>
    %1029 = arith.mulf %1018, %1028 : vector<2x4x4xf32>
    %1030 = arith.addf %1016, %1029 : vector<2x4x4xf32>
    %1031 = vector.extract_strided_slice %1017 {offsets = [0, 0, 1], sizes = [2, 4, 4], strides = [1, 1, 1]} : vector<2x4x6xf32> to vector<2x4x4xf32>
    %c63_121 = arith.constant 63 : index
    %1032 = memref.load %arg4[%c63_121] : memref<81xf32, #tpu.memory_space<smem>>
    %1033 = vector.broadcast %1032 : f32 to vector<2x4x4xf32>
    %1034 = arith.mulf %1031, %1033 : vector<2x4x4xf32>
    %1035 = arith.addf %1022, %1034 : vector<2x4x4xf32>
    %c64_122 = arith.constant 64 : index
    %1036 = memref.load %arg4[%c64_122] : memref<81xf32, #tpu.memory_space<smem>>
    %1037 = vector.broadcast %1036 : f32 to vector<2x4x4xf32>
    %1038 = arith.mulf %1031, %1037 : vector<2x4x4xf32>
    %1039 = arith.addf %1026, %1038 : vector<2x4x4xf32>
    %c65_123 = arith.constant 65 : index
    %1040 = memref.load %arg4[%c65_123] : memref<81xf32, #tpu.memory_space<smem>>
    %1041 = vector.broadcast %1040 : f32 to vector<2x4x4xf32>
    %1042 = arith.mulf %1031, %1041 : vector<2x4x4xf32>
    %1043 = arith.addf %1030, %1042 : vector<2x4x4xf32>
    %1044 = vector.extract_strided_slice %1017 {offsets = [0, 0, 2], sizes = [2, 4, 4], strides = [1, 1, 1]} : vector<2x4x6xf32> to vector<2x4x4xf32>
    %c72_124 = arith.constant 72 : index
    %1045 = memref.load %arg4[%c72_124] : memref<81xf32, #tpu.memory_space<smem>>
    %1046 = vector.broadcast %1045 : f32 to vector<2x4x4xf32>
    %1047 = arith.mulf %1044, %1046 : vector<2x4x4xf32>
    %1048 = arith.addf %1035, %1047 : vector<2x4x4xf32>
    %c73_125 = arith.constant 73 : index
    %1049 = memref.load %arg4[%c73_125] : memref<81xf32, #tpu.memory_space<smem>>
    %1050 = vector.broadcast %1049 : f32 to vector<2x4x4xf32>
    %1051 = arith.mulf %1044, %1050 : vector<2x4x4xf32>
    %1052 = arith.addf %1039, %1051 : vector<2x4x4xf32>
    %c74_126 = arith.constant 74 : index
    %1053 = memref.load %arg4[%c74_126] : memref<81xf32, #tpu.memory_space<smem>>
    %1054 = vector.broadcast %1053 : f32 to vector<2x4x4xf32>
    %1055 = arith.mulf %1044, %1054 : vector<2x4x4xf32>
    %1056 = arith.addf %1043, %1055 : vector<2x4x4xf32>
    %1057 = vector.extract_strided_slice %928 {offsets = [0, 1, 0, 0], sizes = [2, 1, 6, 6], strides = [1, 1, 1, 1]} : vector<2x3x6x6xf32> to vector<2x1x6x6xf32>
    %1058 = vector.shape_cast %1057 : vector<2x1x6x6xf32> to vector<2x6x6xf32>
    %1059 = vector.extract_strided_slice %1058 {offsets = [0, 0, 0], sizes = [2, 4, 6], strides = [1, 1, 1]} : vector<2x6x6xf32> to vector<2x4x6xf32>
    %1060 = vector.extract_strided_slice %1059 {offsets = [0, 0, 0], sizes = [2, 4, 4], strides = [1, 1, 1]} : vector<2x4x6xf32> to vector<2x4x4xf32>
    %c3_127 = arith.constant 3 : index
    %1061 = memref.load %arg4[%c3_127] : memref<81xf32, #tpu.memory_space<smem>>
    %1062 = vector.broadcast %1061 : f32 to vector<2x4x4xf32>
    %1063 = arith.mulf %1060, %1062 : vector<2x4x4xf32>
    %1064 = arith.addf %1048, %1063 : vector<2x4x4xf32>
    %c4_128 = arith.constant 4 : index
    %1065 = memref.load %arg4[%c4_128] : memref<81xf32, #tpu.memory_space<smem>>
    %1066 = vector.broadcast %1065 : f32 to vector<2x4x4xf32>
    %1067 = arith.mulf %1060, %1066 : vector<2x4x4xf32>
    %1068 = arith.addf %1052, %1067 : vector<2x4x4xf32>
    %c5_129 = arith.constant 5 : index
    %1069 = memref.load %arg4[%c5_129] : memref<81xf32, #tpu.memory_space<smem>>
    %1070 = vector.broadcast %1069 : f32 to vector<2x4x4xf32>
    %1071 = arith.mulf %1060, %1070 : vector<2x4x4xf32>
    %1072 = arith.addf %1056, %1071 : vector<2x4x4xf32>
    %1073 = vector.extract_strided_slice %1059 {offsets = [0, 0, 1], sizes = [2, 4, 4], strides = [1, 1, 1]} : vector<2x4x6xf32> to vector<2x4x4xf32>
    %c12_130 = arith.constant 12 : index
    %1074 = memref.load %arg4[%c12_130] : memref<81xf32, #tpu.memory_space<smem>>
    %1075 = vector.broadcast %1074 : f32 to vector<2x4x4xf32>
    %1076 = arith.mulf %1073, %1075 : vector<2x4x4xf32>
    %1077 = arith.addf %1064, %1076 : vector<2x4x4xf32>
    %c13_131 = arith.constant 13 : index
    %1078 = memref.load %arg4[%c13_131] : memref<81xf32, #tpu.memory_space<smem>>
    %1079 = vector.broadcast %1078 : f32 to vector<2x4x4xf32>
    %1080 = arith.mulf %1073, %1079 : vector<2x4x4xf32>
    %1081 = arith.addf %1068, %1080 : vector<2x4x4xf32>
    %c14_132 = arith.constant 14 : index
    %1082 = memref.load %arg4[%c14_132] : memref<81xf32, #tpu.memory_space<smem>>
    %1083 = vector.broadcast %1082 : f32 to vector<2x4x4xf32>
    %1084 = arith.mulf %1073, %1083 : vector<2x4x4xf32>
    %1085 = arith.addf %1072, %1084 : vector<2x4x4xf32>
    %1086 = vector.extract_strided_slice %1059 {offsets = [0, 0, 2], sizes = [2, 4, 4], strides = [1, 1, 1]} : vector<2x4x6xf32> to vector<2x4x4xf32>
    %c21_133 = arith.constant 21 : index
    %1087 = memref.load %arg4[%c21_133] : memref<81xf32, #tpu.memory_space<smem>>
    %1088 = vector.broadcast %1087 : f32 to vector<2x4x4xf32>
    %1089 = arith.mulf %1086, %1088 : vector<2x4x4xf32>
    %1090 = arith.addf %1077, %1089 : vector<2x4x4xf32>
    %c22_134 = arith.constant 22 : index
    %1091 = memref.load %arg4[%c22_134] : memref<81xf32, #tpu.memory_space<smem>>
    %1092 = vector.broadcast %1091 : f32 to vector<2x4x4xf32>
    %1093 = arith.mulf %1086, %1092 : vector<2x4x4xf32>
    %1094 = arith.addf %1081, %1093 : vector<2x4x4xf32>
    %c23_135 = arith.constant 23 : index
    %1095 = memref.load %arg4[%c23_135] : memref<81xf32, #tpu.memory_space<smem>>
    %1096 = vector.broadcast %1095 : f32 to vector<2x4x4xf32>
    %1097 = arith.mulf %1086, %1096 : vector<2x4x4xf32>
    %1098 = arith.addf %1085, %1097 : vector<2x4x4xf32>
    %1099 = vector.extract_strided_slice %1058 {offsets = [0, 1, 0], sizes = [2, 4, 6], strides = [1, 1, 1]} : vector<2x6x6xf32> to vector<2x4x6xf32>
    %1100 = vector.extract_strided_slice %1099 {offsets = [0, 0, 0], sizes = [2, 4, 4], strides = [1, 1, 1]} : vector<2x4x6xf32> to vector<2x4x4xf32>
    %c30_136 = arith.constant 30 : index
    %1101 = memref.load %arg4[%c30_136] : memref<81xf32, #tpu.memory_space<smem>>
    %1102 = vector.broadcast %1101 : f32 to vector<2x4x4xf32>
    %1103 = arith.mulf %1100, %1102 : vector<2x4x4xf32>
    %1104 = arith.addf %1090, %1103 : vector<2x4x4xf32>
    %c31_137 = arith.constant 31 : index
    %1105 = memref.load %arg4[%c31_137] : memref<81xf32, #tpu.memory_space<smem>>
    %1106 = vector.broadcast %1105 : f32 to vector<2x4x4xf32>
    %1107 = arith.mulf %1100, %1106 : vector<2x4x4xf32>
    %1108 = arith.addf %1094, %1107 : vector<2x4x4xf32>
    %c32_138 = arith.constant 32 : index
    %1109 = memref.load %arg4[%c32_138] : memref<81xf32, #tpu.memory_space<smem>>
    %1110 = vector.broadcast %1109 : f32 to vector<2x4x4xf32>
    %1111 = arith.mulf %1100, %1110 : vector<2x4x4xf32>
    %1112 = arith.addf %1098, %1111 : vector<2x4x4xf32>
    %1113 = vector.extract_strided_slice %1099 {offsets = [0, 0, 1], sizes = [2, 4, 4], strides = [1, 1, 1]} : vector<2x4x6xf32> to vector<2x4x4xf32>
    %c39_139 = arith.constant 39 : index
    %1114 = memref.load %arg4[%c39_139] : memref<81xf32, #tpu.memory_space<smem>>
    %1115 = vector.broadcast %1114 : f32 to vector<2x4x4xf32>
    %1116 = arith.mulf %1113, %1115 : vector<2x4x4xf32>
    %1117 = arith.addf %1104, %1116 : vector<2x4x4xf32>
    %c40_140 = arith.constant 40 : index
    %1118 = memref.load %arg4[%c40_140] : memref<81xf32, #tpu.memory_space<smem>>
    %1119 = vector.broadcast %1118 : f32 to vector<2x4x4xf32>
    %1120 = arith.mulf %1113, %1119 : vector<2x4x4xf32>
    %1121 = arith.addf %1108, %1120 : vector<2x4x4xf32>
    %c41_141 = arith.constant 41 : index
    %1122 = memref.load %arg4[%c41_141] : memref<81xf32, #tpu.memory_space<smem>>
    %1123 = vector.broadcast %1122 : f32 to vector<2x4x4xf32>
    %1124 = arith.mulf %1113, %1123 : vector<2x4x4xf32>
    %1125 = arith.addf %1112, %1124 : vector<2x4x4xf32>
    %1126 = vector.extract_strided_slice %1099 {offsets = [0, 0, 2], sizes = [2, 4, 4], strides = [1, 1, 1]} : vector<2x4x6xf32> to vector<2x4x4xf32>
    %c48_142 = arith.constant 48 : index
    %1127 = memref.load %arg4[%c48_142] : memref<81xf32, #tpu.memory_space<smem>>
    %1128 = vector.broadcast %1127 : f32 to vector<2x4x4xf32>
    %1129 = arith.mulf %1126, %1128 : vector<2x4x4xf32>
    %1130 = arith.addf %1117, %1129 : vector<2x4x4xf32>
    %c49_143 = arith.constant 49 : index
    %1131 = memref.load %arg4[%c49_143] : memref<81xf32, #tpu.memory_space<smem>>
    %1132 = vector.broadcast %1131 : f32 to vector<2x4x4xf32>
    %1133 = arith.mulf %1126, %1132 : vector<2x4x4xf32>
    %1134 = arith.addf %1121, %1133 : vector<2x4x4xf32>
    %c50_144 = arith.constant 50 : index
    %1135 = memref.load %arg4[%c50_144] : memref<81xf32, #tpu.memory_space<smem>>
    %1136 = vector.broadcast %1135 : f32 to vector<2x4x4xf32>
    %1137 = arith.mulf %1126, %1136 : vector<2x4x4xf32>
    %1138 = arith.addf %1125, %1137 : vector<2x4x4xf32>
    %1139 = vector.extract_strided_slice %1058 {offsets = [0, 2, 0], sizes = [2, 4, 6], strides = [1, 1, 1]} : vector<2x6x6xf32> to vector<2x4x6xf32>
    %1140 = vector.extract_strided_slice %1139 {offsets = [0, 0, 0], sizes = [2, 4, 4], strides = [1, 1, 1]} : vector<2x4x6xf32> to vector<2x4x4xf32>
    %c57_145 = arith.constant 57 : index
    %1141 = memref.load %arg4[%c57_145] : memref<81xf32, #tpu.memory_space<smem>>
    %1142 = vector.broadcast %1141 : f32 to vector<2x4x4xf32>
    %1143 = arith.mulf %1140, %1142 : vector<2x4x4xf32>
    %1144 = arith.addf %1130, %1143 : vector<2x4x4xf32>
    %c58_146 = arith.constant 58 : index
    %1145 = memref.load %arg4[%c58_146] : memref<81xf32, #tpu.memory_space<smem>>
    %1146 = vector.broadcast %1145 : f32 to vector<2x4x4xf32>
    %1147 = arith.mulf %1140, %1146 : vector<2x4x4xf32>
    %1148 = arith.addf %1134, %1147 : vector<2x4x4xf32>
    %c59_147 = arith.constant 59 : index
    %1149 = memref.load %arg4[%c59_147] : memref<81xf32, #tpu.memory_space<smem>>
    %1150 = vector.broadcast %1149 : f32 to vector<2x4x4xf32>
    %1151 = arith.mulf %1140, %1150 : vector<2x4x4xf32>
    %1152 = arith.addf %1138, %1151 : vector<2x4x4xf32>
    %1153 = vector.extract_strided_slice %1139 {offsets = [0, 0, 1], sizes = [2, 4, 4], strides = [1, 1, 1]} : vector<2x4x6xf32> to vector<2x4x4xf32>
    %c66_148 = arith.constant 66 : index
    %1154 = memref.load %arg4[%c66_148] : memref<81xf32, #tpu.memory_space<smem>>
    %1155 = vector.broadcast %1154 : f32 to vector<2x4x4xf32>
    %1156 = arith.mulf %1153, %1155 : vector<2x4x4xf32>
    %1157 = arith.addf %1144, %1156 : vector<2x4x4xf32>
    %c67_149 = arith.constant 67 : index
    %1158 = memref.load %arg4[%c67_149] : memref<81xf32, #tpu.memory_space<smem>>
    %1159 = vector.broadcast %1158 : f32 to vector<2x4x4xf32>
    %1160 = arith.mulf %1153, %1159 : vector<2x4x4xf32>
    %1161 = arith.addf %1148, %1160 : vector<2x4x4xf32>
    %c68_150 = arith.constant 68 : index
    %1162 = memref.load %arg4[%c68_150] : memref<81xf32, #tpu.memory_space<smem>>
    %1163 = vector.broadcast %1162 : f32 to vector<2x4x4xf32>
    %1164 = arith.mulf %1153, %1163 : vector<2x4x4xf32>
    %1165 = arith.addf %1152, %1164 : vector<2x4x4xf32>
    %1166 = vector.extract_strided_slice %1139 {offsets = [0, 0, 2], sizes = [2, 4, 4], strides = [1, 1, 1]} : vector<2x4x6xf32> to vector<2x4x4xf32>
    %c75_151 = arith.constant 75 : index
    %1167 = memref.load %arg4[%c75_151] : memref<81xf32, #tpu.memory_space<smem>>
    %1168 = vector.broadcast %1167 : f32 to vector<2x4x4xf32>
    %1169 = arith.mulf %1166, %1168 : vector<2x4x4xf32>
    %1170 = arith.addf %1157, %1169 : vector<2x4x4xf32>
    %c76_152 = arith.constant 76 : index
    %1171 = memref.load %arg4[%c76_152] : memref<81xf32, #tpu.memory_space<smem>>
    %1172 = vector.broadcast %1171 : f32 to vector<2x4x4xf32>
    %1173 = arith.mulf %1166, %1172 : vector<2x4x4xf32>
    %1174 = arith.addf %1161, %1173 : vector<2x4x4xf32>
    %c77_153 = arith.constant 77 : index
    %1175 = memref.load %arg4[%c77_153] : memref<81xf32, #tpu.memory_space<smem>>
    %1176 = vector.broadcast %1175 : f32 to vector<2x4x4xf32>
    %1177 = arith.mulf %1166, %1176 : vector<2x4x4xf32>
    %1178 = arith.addf %1165, %1177 : vector<2x4x4xf32>
    %1179 = vector.extract_strided_slice %928 {offsets = [0, 2, 0, 0], sizes = [2, 1, 6, 6], strides = [1, 1, 1, 1]} : vector<2x3x6x6xf32> to vector<2x1x6x6xf32>
    %1180 = vector.shape_cast %1179 : vector<2x1x6x6xf32> to vector<2x6x6xf32>
    %1181 = vector.extract_strided_slice %1180 {offsets = [0, 0, 0], sizes = [2, 4, 6], strides = [1, 1, 1]} : vector<2x6x6xf32> to vector<2x4x6xf32>
    %1182 = vector.extract_strided_slice %1181 {offsets = [0, 0, 0], sizes = [2, 4, 4], strides = [1, 1, 1]} : vector<2x4x6xf32> to vector<2x4x4xf32>
    %c6_154 = arith.constant 6 : index
    %1183 = memref.load %arg4[%c6_154] : memref<81xf32, #tpu.memory_space<smem>>
    %1184 = vector.broadcast %1183 : f32 to vector<2x4x4xf32>
    %1185 = arith.mulf %1182, %1184 : vector<2x4x4xf32>
    %1186 = arith.addf %1170, %1185 : vector<2x4x4xf32>
    %c7_155 = arith.constant 7 : index
    %1187 = memref.load %arg4[%c7_155] : memref<81xf32, #tpu.memory_space<smem>>
    %1188 = vector.broadcast %1187 : f32 to vector<2x4x4xf32>
    %1189 = arith.mulf %1182, %1188 : vector<2x4x4xf32>
    %1190 = arith.addf %1174, %1189 : vector<2x4x4xf32>
    %c8_156 = arith.constant 8 : index
    %1191 = memref.load %arg4[%c8_156] : memref<81xf32, #tpu.memory_space<smem>>
    %1192 = vector.broadcast %1191 : f32 to vector<2x4x4xf32>
    %1193 = arith.mulf %1182, %1192 : vector<2x4x4xf32>
    %1194 = arith.addf %1178, %1193 : vector<2x4x4xf32>
    %1195 = vector.extract_strided_slice %1181 {offsets = [0, 0, 1], sizes = [2, 4, 4], strides = [1, 1, 1]} : vector<2x4x6xf32> to vector<2x4x4xf32>
    %c15_157 = arith.constant 15 : index
    %1196 = memref.load %arg4[%c15_157] : memref<81xf32, #tpu.memory_space<smem>>
    %1197 = vector.broadcast %1196 : f32 to vector<2x4x4xf32>
    %1198 = arith.mulf %1195, %1197 : vector<2x4x4xf32>
    %1199 = arith.addf %1186, %1198 : vector<2x4x4xf32>
    %c16_158 = arith.constant 16 : index
    %1200 = memref.load %arg4[%c16_158] : memref<81xf32, #tpu.memory_space<smem>>
    %1201 = vector.broadcast %1200 : f32 to vector<2x4x4xf32>
    %1202 = arith.mulf %1195, %1201 : vector<2x4x4xf32>
    %1203 = arith.addf %1190, %1202 : vector<2x4x4xf32>
    %c17_159 = arith.constant 17 : index
    %1204 = memref.load %arg4[%c17_159] : memref<81xf32, #tpu.memory_space<smem>>
    %1205 = vector.broadcast %1204 : f32 to vector<2x4x4xf32>
    %1206 = arith.mulf %1195, %1205 : vector<2x4x4xf32>
    %1207 = arith.addf %1194, %1206 : vector<2x4x4xf32>
    %1208 = vector.extract_strided_slice %1181 {offsets = [0, 0, 2], sizes = [2, 4, 4], strides = [1, 1, 1]} : vector<2x4x6xf32> to vector<2x4x4xf32>
    %c24_160 = arith.constant 24 : index
    %1209 = memref.load %arg4[%c24_160] : memref<81xf32, #tpu.memory_space<smem>>
    %1210 = vector.broadcast %1209 : f32 to vector<2x4x4xf32>
    %1211 = arith.mulf %1208, %1210 : vector<2x4x4xf32>
    %1212 = arith.addf %1199, %1211 : vector<2x4x4xf32>
    %c25_161 = arith.constant 25 : index
    %1213 = memref.load %arg4[%c25_161] : memref<81xf32, #tpu.memory_space<smem>>
    %1214 = vector.broadcast %1213 : f32 to vector<2x4x4xf32>
    %1215 = arith.mulf %1208, %1214 : vector<2x4x4xf32>
    %1216 = arith.addf %1203, %1215 : vector<2x4x4xf32>
    %c26_162 = arith.constant 26 : index
    %1217 = memref.load %arg4[%c26_162] : memref<81xf32, #tpu.memory_space<smem>>
    %1218 = vector.broadcast %1217 : f32 to vector<2x4x4xf32>
    %1219 = arith.mulf %1208, %1218 : vector<2x4x4xf32>
    %1220 = arith.addf %1207, %1219 : vector<2x4x4xf32>
    %1221 = vector.extract_strided_slice %1180 {offsets = [0, 1, 0], sizes = [2, 4, 6], strides = [1, 1, 1]} : vector<2x6x6xf32> to vector<2x4x6xf32>
    %1222 = vector.extract_strided_slice %1221 {offsets = [0, 0, 0], sizes = [2, 4, 4], strides = [1, 1, 1]} : vector<2x4x6xf32> to vector<2x4x4xf32>
    %c33_163 = arith.constant 33 : index
    %1223 = memref.load %arg4[%c33_163] : memref<81xf32, #tpu.memory_space<smem>>
    %1224 = vector.broadcast %1223 : f32 to vector<2x4x4xf32>
    %1225 = arith.mulf %1222, %1224 : vector<2x4x4xf32>
    %1226 = arith.addf %1212, %1225 : vector<2x4x4xf32>
    %c34_164 = arith.constant 34 : index
    %1227 = memref.load %arg4[%c34_164] : memref<81xf32, #tpu.memory_space<smem>>
    %1228 = vector.broadcast %1227 : f32 to vector<2x4x4xf32>
    %1229 = arith.mulf %1222, %1228 : vector<2x4x4xf32>
    %1230 = arith.addf %1216, %1229 : vector<2x4x4xf32>
    %c35_165 = arith.constant 35 : index
    %1231 = memref.load %arg4[%c35_165] : memref<81xf32, #tpu.memory_space<smem>>
    %1232 = vector.broadcast %1231 : f32 to vector<2x4x4xf32>
    %1233 = arith.mulf %1222, %1232 : vector<2x4x4xf32>
    %1234 = arith.addf %1220, %1233 : vector<2x4x4xf32>
    %1235 = vector.extract_strided_slice %1221 {offsets = [0, 0, 1], sizes = [2, 4, 4], strides = [1, 1, 1]} : vector<2x4x6xf32> to vector<2x4x4xf32>
    %c42_166 = arith.constant 42 : index
    %1236 = memref.load %arg4[%c42_166] : memref<81xf32, #tpu.memory_space<smem>>
    %1237 = vector.broadcast %1236 : f32 to vector<2x4x4xf32>
    %1238 = arith.mulf %1235, %1237 : vector<2x4x4xf32>
    %1239 = arith.addf %1226, %1238 : vector<2x4x4xf32>
    %c43_167 = arith.constant 43 : index
    %1240 = memref.load %arg4[%c43_167] : memref<81xf32, #tpu.memory_space<smem>>
    %1241 = vector.broadcast %1240 : f32 to vector<2x4x4xf32>
    %1242 = arith.mulf %1235, %1241 : vector<2x4x4xf32>
    %1243 = arith.addf %1230, %1242 : vector<2x4x4xf32>
    %c44_168 = arith.constant 44 : index
    %1244 = memref.load %arg4[%c44_168] : memref<81xf32, #tpu.memory_space<smem>>
    %1245 = vector.broadcast %1244 : f32 to vector<2x4x4xf32>
    %1246 = arith.mulf %1235, %1245 : vector<2x4x4xf32>
    %1247 = arith.addf %1234, %1246 : vector<2x4x4xf32>
    %1248 = vector.extract_strided_slice %1221 {offsets = [0, 0, 2], sizes = [2, 4, 4], strides = [1, 1, 1]} : vector<2x4x6xf32> to vector<2x4x4xf32>
    %c51_169 = arith.constant 51 : index
    %1249 = memref.load %arg4[%c51_169] : memref<81xf32, #tpu.memory_space<smem>>
    %1250 = vector.broadcast %1249 : f32 to vector<2x4x4xf32>
    %1251 = arith.mulf %1248, %1250 : vector<2x4x4xf32>
    %1252 = arith.addf %1239, %1251 : vector<2x4x4xf32>
    %c52_170 = arith.constant 52 : index
    %1253 = memref.load %arg4[%c52_170] : memref<81xf32, #tpu.memory_space<smem>>
    %1254 = vector.broadcast %1253 : f32 to vector<2x4x4xf32>
    %1255 = arith.mulf %1248, %1254 : vector<2x4x4xf32>
    %1256 = arith.addf %1243, %1255 : vector<2x4x4xf32>
    %c53_171 = arith.constant 53 : index
    %1257 = memref.load %arg4[%c53_171] : memref<81xf32, #tpu.memory_space<smem>>
    %1258 = vector.broadcast %1257 : f32 to vector<2x4x4xf32>
    %1259 = arith.mulf %1248, %1258 : vector<2x4x4xf32>
    %1260 = arith.addf %1247, %1259 : vector<2x4x4xf32>
    %1261 = vector.extract_strided_slice %1180 {offsets = [0, 2, 0], sizes = [2, 4, 6], strides = [1, 1, 1]} : vector<2x6x6xf32> to vector<2x4x6xf32>
    %1262 = vector.extract_strided_slice %1261 {offsets = [0, 0, 0], sizes = [2, 4, 4], strides = [1, 1, 1]} : vector<2x4x6xf32> to vector<2x4x4xf32>
    %c60_172 = arith.constant 60 : index
    %1263 = memref.load %arg4[%c60_172] : memref<81xf32, #tpu.memory_space<smem>>
    %1264 = vector.broadcast %1263 : f32 to vector<2x4x4xf32>
    %1265 = arith.mulf %1262, %1264 : vector<2x4x4xf32>
    %1266 = arith.addf %1252, %1265 : vector<2x4x4xf32>
    %c61_173 = arith.constant 61 : index
    %1267 = memref.load %arg4[%c61_173] : memref<81xf32, #tpu.memory_space<smem>>
    %1268 = vector.broadcast %1267 : f32 to vector<2x4x4xf32>
    %1269 = arith.mulf %1262, %1268 : vector<2x4x4xf32>
    %1270 = arith.addf %1256, %1269 : vector<2x4x4xf32>
    %c62_174 = arith.constant 62 : index
    %1271 = memref.load %arg4[%c62_174] : memref<81xf32, #tpu.memory_space<smem>>
    %1272 = vector.broadcast %1271 : f32 to vector<2x4x4xf32>
    %1273 = arith.mulf %1262, %1272 : vector<2x4x4xf32>
    %1274 = arith.addf %1260, %1273 : vector<2x4x4xf32>
    %1275 = vector.extract_strided_slice %1261 {offsets = [0, 0, 1], sizes = [2, 4, 4], strides = [1, 1, 1]} : vector<2x4x6xf32> to vector<2x4x4xf32>
    %c69_175 = arith.constant 69 : index
    %1276 = memref.load %arg4[%c69_175] : memref<81xf32, #tpu.memory_space<smem>>
    %1277 = vector.broadcast %1276 : f32 to vector<2x4x4xf32>
    %1278 = arith.mulf %1275, %1277 : vector<2x4x4xf32>
    %1279 = arith.addf %1266, %1278 : vector<2x4x4xf32>
    %c70_176 = arith.constant 70 : index
    %1280 = memref.load %arg4[%c70_176] : memref<81xf32, #tpu.memory_space<smem>>
    %1281 = vector.broadcast %1280 : f32 to vector<2x4x4xf32>
    %1282 = arith.mulf %1275, %1281 : vector<2x4x4xf32>
    %1283 = arith.addf %1270, %1282 : vector<2x4x4xf32>
    %c71_177 = arith.constant 71 : index
    %1284 = memref.load %arg4[%c71_177] : memref<81xf32, #tpu.memory_space<smem>>
    %1285 = vector.broadcast %1284 : f32 to vector<2x4x4xf32>
    %1286 = arith.mulf %1275, %1285 : vector<2x4x4xf32>
    %1287 = arith.addf %1274, %1286 : vector<2x4x4xf32>
    %1288 = vector.extract_strided_slice %1261 {offsets = [0, 0, 2], sizes = [2, 4, 4], strides = [1, 1, 1]} : vector<2x4x6xf32> to vector<2x4x4xf32>
    %c78_178 = arith.constant 78 : index
    %1289 = memref.load %arg4[%c78_178] : memref<81xf32, #tpu.memory_space<smem>>
    %1290 = vector.broadcast %1289 : f32 to vector<2x4x4xf32>
    %1291 = arith.mulf %1288, %1290 : vector<2x4x4xf32>
    %1292 = arith.addf %1279, %1291 : vector<2x4x4xf32>
    %c79_179 = arith.constant 79 : index
    %1293 = memref.load %arg4[%c79_179] : memref<81xf32, #tpu.memory_space<smem>>
    %1294 = vector.broadcast %1293 : f32 to vector<2x4x4xf32>
    %1295 = arith.mulf %1288, %1294 : vector<2x4x4xf32>
    %1296 = arith.addf %1283, %1295 : vector<2x4x4xf32>
    %c80_180 = arith.constant 80 : index
    %1297 = memref.load %arg4[%c80_180] : memref<81xf32, #tpu.memory_space<smem>>
    %1298 = vector.broadcast %1297 : f32 to vector<2x4x4xf32>
    %1299 = arith.mulf %1288, %1298 : vector<2x4x4xf32>
    %1300 = arith.addf %1287, %1299 : vector<2x4x4xf32>
    %1301 = vector.shape_cast %1292 : vector<2x4x4xf32> to vector<2x1x4x4xf32>
    %1302 = vector.shape_cast %1296 : vector<2x4x4xf32> to vector<2x1x4x4xf32>
    %1303 = vector.shape_cast %1300 : vector<2x4x4xf32> to vector<2x1x4x4xf32>
    %1304 = tpu.concatenate %1301, %1302, %1303 in 1 : vector<2x1x4x4xf32>, vector<2x1x4x4xf32>, vector<2x1x4x4xf32> -> vector<2x3x4x4xf32>
    %cst_181 = arith.constant 0.000000e+00 : f32
    %1305 = vector.broadcast %cst_181 : f32 to vector<2x3x4x4xf32>
    %1306 = arith.maximumf %1304, %1305 : vector<2x3x4x4xf32>
    %c0_182 = arith.constant 0 : index
    %1307 = memref.load %arg7[%c0_182] : memref<2xf32, #tpu.memory_space<smem>>
    %1308 = vector.broadcast %1307 : f32 to vector<2x2x2xf32>
    %c1_183 = arith.constant 1 : index
    %1309 = memref.load %arg7[%c1_183] : memref<2xf32, #tpu.memory_space<smem>>
    %1310 = vector.broadcast %1309 : f32 to vector<2x2x2xf32>
    %1311 = vector.extract_strided_slice %1306 {offsets = [0, 0, 0, 0], sizes = [2, 1, 4, 4], strides = [1, 1, 1, 1]} : vector<2x3x4x4xf32> to vector<2x1x4x4xf32>
    %1312 = vector.shape_cast %1311 : vector<2x1x4x4xf32> to vector<2x4x4xf32>
    %1313 = vector.extract_strided_slice %1312 {offsets = [0, 0, 0], sizes = [2, 2, 4], strides = [1, 1, 1]} : vector<2x4x4xf32> to vector<2x2x4xf32>
    %1314 = vector.extract_strided_slice %1313 {offsets = [0, 0, 0], sizes = [2, 2, 2], strides = [1, 1, 1]} : vector<2x2x4xf32> to vector<2x2x2xf32>
    %c0_184 = arith.constant 0 : index
    %1315 = memref.load %arg6[%c0_184] : memref<54xf32, #tpu.memory_space<smem>>
    %1316 = vector.broadcast %1315 : f32 to vector<2x2x2xf32>
    %1317 = arith.mulf %1314, %1316 : vector<2x2x2xf32>
    %1318 = arith.addf %1308, %1317 : vector<2x2x2xf32>
    %c1_185 = arith.constant 1 : index
    %1319 = memref.load %arg6[%c1_185] : memref<54xf32, #tpu.memory_space<smem>>
    %1320 = vector.broadcast %1319 : f32 to vector<2x2x2xf32>
    %1321 = arith.mulf %1314, %1320 : vector<2x2x2xf32>
    %1322 = arith.addf %1310, %1321 : vector<2x2x2xf32>
    %1323 = vector.extract_strided_slice %1313 {offsets = [0, 0, 1], sizes = [2, 2, 2], strides = [1, 1, 1]} : vector<2x2x4xf32> to vector<2x2x2xf32>
    %c6_186 = arith.constant 6 : index
    %1324 = memref.load %arg6[%c6_186] : memref<54xf32, #tpu.memory_space<smem>>
    %1325 = vector.broadcast %1324 : f32 to vector<2x2x2xf32>
    %1326 = arith.mulf %1323, %1325 : vector<2x2x2xf32>
    %1327 = arith.addf %1318, %1326 : vector<2x2x2xf32>
    %c7_187 = arith.constant 7 : index
    %1328 = memref.load %arg6[%c7_187] : memref<54xf32, #tpu.memory_space<smem>>
    %1329 = vector.broadcast %1328 : f32 to vector<2x2x2xf32>
    %1330 = arith.mulf %1323, %1329 : vector<2x2x2xf32>
    %1331 = arith.addf %1322, %1330 : vector<2x2x2xf32>
    %1332 = vector.extract_strided_slice %1313 {offsets = [0, 0, 2], sizes = [2, 2, 2], strides = [1, 1, 1]} : vector<2x2x4xf32> to vector<2x2x2xf32>
    %c12_188 = arith.constant 12 : index
    %1333 = memref.load %arg6[%c12_188] : memref<54xf32, #tpu.memory_space<smem>>
    %1334 = vector.broadcast %1333 : f32 to vector<2x2x2xf32>
    %1335 = arith.mulf %1332, %1334 : vector<2x2x2xf32>
    %1336 = arith.addf %1327, %1335 : vector<2x2x2xf32>
    %c13_189 = arith.constant 13 : index
    %1337 = memref.load %arg6[%c13_189] : memref<54xf32, #tpu.memory_space<smem>>
    %1338 = vector.broadcast %1337 : f32 to vector<2x2x2xf32>
    %1339 = arith.mulf %1332, %1338 : vector<2x2x2xf32>
    %1340 = arith.addf %1331, %1339 : vector<2x2x2xf32>
    %1341 = vector.extract_strided_slice %1312 {offsets = [0, 1, 0], sizes = [2, 2, 4], strides = [1, 1, 1]} : vector<2x4x4xf32> to vector<2x2x4xf32>
    %1342 = vector.extract_strided_slice %1341 {offsets = [0, 0, 0], sizes = [2, 2, 2], strides = [1, 1, 1]} : vector<2x2x4xf32> to vector<2x2x2xf32>
    %c18_190 = arith.constant 18 : index
    %1343 = memref.load %arg6[%c18_190] : memref<54xf32, #tpu.memory_space<smem>>
    %1344 = vector.broadcast %1343 : f32 to vector<2x2x2xf32>
    %1345 = arith.mulf %1342, %1344 : vector<2x2x2xf32>
    %1346 = arith.addf %1336, %1345 : vector<2x2x2xf32>
    %c19_191 = arith.constant 19 : index
    %1347 = memref.load %arg6[%c19_191] : memref<54xf32, #tpu.memory_space<smem>>
    %1348 = vector.broadcast %1347 : f32 to vector<2x2x2xf32>
    %1349 = arith.mulf %1342, %1348 : vector<2x2x2xf32>
    %1350 = arith.addf %1340, %1349 : vector<2x2x2xf32>
    %1351 = vector.extract_strided_slice %1341 {offsets = [0, 0, 1], sizes = [2, 2, 2], strides = [1, 1, 1]} : vector<2x2x4xf32> to vector<2x2x2xf32>
    %c24_192 = arith.constant 24 : index
    %1352 = memref.load %arg6[%c24_192] : memref<54xf32, #tpu.memory_space<smem>>
    %1353 = vector.broadcast %1352 : f32 to vector<2x2x2xf32>
    %1354 = arith.mulf %1351, %1353 : vector<2x2x2xf32>
    %1355 = arith.addf %1346, %1354 : vector<2x2x2xf32>
    %c25_193 = arith.constant 25 : index
    %1356 = memref.load %arg6[%c25_193] : memref<54xf32, #tpu.memory_space<smem>>
    %1357 = vector.broadcast %1356 : f32 to vector<2x2x2xf32>
    %1358 = arith.mulf %1351, %1357 : vector<2x2x2xf32>
    %1359 = arith.addf %1350, %1358 : vector<2x2x2xf32>
    %1360 = vector.extract_strided_slice %1341 {offsets = [0, 0, 2], sizes = [2, 2, 2], strides = [1, 1, 1]} : vector<2x2x4xf32> to vector<2x2x2xf32>
    %c30_194 = arith.constant 30 : index
    %1361 = memref.load %arg6[%c30_194] : memref<54xf32, #tpu.memory_space<smem>>
    %1362 = vector.broadcast %1361 : f32 to vector<2x2x2xf32>
    %1363 = arith.mulf %1360, %1362 : vector<2x2x2xf32>
    %1364 = arith.addf %1355, %1363 : vector<2x2x2xf32>
    %c31_195 = arith.constant 31 : index
    %1365 = memref.load %arg6[%c31_195] : memref<54xf32, #tpu.memory_space<smem>>
    %1366 = vector.broadcast %1365 : f32 to vector<2x2x2xf32>
    %1367 = arith.mulf %1360, %1366 : vector<2x2x2xf32>
    %1368 = arith.addf %1359, %1367 : vector<2x2x2xf32>
    %1369 = vector.extract_strided_slice %1312 {offsets = [0, 2, 0], sizes = [2, 2, 4], strides = [1, 1, 1]} : vector<2x4x4xf32> to vector<2x2x4xf32>
    %1370 = vector.extract_strided_slice %1369 {offsets = [0, 0, 0], sizes = [2, 2, 2], strides = [1, 1, 1]} : vector<2x2x4xf32> to vector<2x2x2xf32>
    %c36_196 = arith.constant 36 : index
    %1371 = memref.load %arg6[%c36_196] : memref<54xf32, #tpu.memory_space<smem>>
    %1372 = vector.broadcast %1371 : f32 to vector<2x2x2xf32>
    %1373 = arith.mulf %1370, %1372 : vector<2x2x2xf32>
    %1374 = arith.addf %1364, %1373 : vector<2x2x2xf32>
    %c37_197 = arith.constant 37 : index
    %1375 = memref.load %arg6[%c37_197] : memref<54xf32, #tpu.memory_space<smem>>
    %1376 = vector.broadcast %1375 : f32 to vector<2x2x2xf32>
    %1377 = arith.mulf %1370, %1376 : vector<2x2x2xf32>
    %1378 = arith.addf %1368, %1377 : vector<2x2x2xf32>
    %1379 = vector.extract_strided_slice %1369 {offsets = [0, 0, 1], sizes = [2, 2, 2], strides = [1, 1, 1]} : vector<2x2x4xf32> to vector<2x2x2xf32>
    %c42_198 = arith.constant 42 : index
    %1380 = memref.load %arg6[%c42_198] : memref<54xf32, #tpu.memory_space<smem>>
    %1381 = vector.broadcast %1380 : f32 to vector<2x2x2xf32>
    %1382 = arith.mulf %1379, %1381 : vector<2x2x2xf32>
    %1383 = arith.addf %1374, %1382 : vector<2x2x2xf32>
    %c43_199 = arith.constant 43 : index
    %1384 = memref.load %arg6[%c43_199] : memref<54xf32, #tpu.memory_space<smem>>
    %1385 = vector.broadcast %1384 : f32 to vector<2x2x2xf32>
    %1386 = arith.mulf %1379, %1385 : vector<2x2x2xf32>
    %1387 = arith.addf %1378, %1386 : vector<2x2x2xf32>
    %1388 = vector.extract_strided_slice %1369 {offsets = [0, 0, 2], sizes = [2, 2, 2], strides = [1, 1, 1]} : vector<2x2x4xf32> to vector<2x2x2xf32>
    %c48_200 = arith.constant 48 : index
    %1389 = memref.load %arg6[%c48_200] : memref<54xf32, #tpu.memory_space<smem>>
    %1390 = vector.broadcast %1389 : f32 to vector<2x2x2xf32>
    %1391 = arith.mulf %1388, %1390 : vector<2x2x2xf32>
    %1392 = arith.addf %1383, %1391 : vector<2x2x2xf32>
    %c49_201 = arith.constant 49 : index
    %1393 = memref.load %arg6[%c49_201] : memref<54xf32, #tpu.memory_space<smem>>
    %1394 = vector.broadcast %1393 : f32 to vector<2x2x2xf32>
    %1395 = arith.mulf %1388, %1394 : vector<2x2x2xf32>
    %1396 = arith.addf %1387, %1395 : vector<2x2x2xf32>
    %1397 = vector.extract_strided_slice %1306 {offsets = [0, 1, 0, 0], sizes = [2, 1, 4, 4], strides = [1, 1, 1, 1]} : vector<2x3x4x4xf32> to vector<2x1x4x4xf32>
    %1398 = vector.shape_cast %1397 : vector<2x1x4x4xf32> to vector<2x4x4xf32>
    %1399 = vector.extract_strided_slice %1398 {offsets = [0, 0, 0], sizes = [2, 2, 4], strides = [1, 1, 1]} : vector<2x4x4xf32> to vector<2x2x4xf32>
    %1400 = vector.extract_strided_slice %1399 {offsets = [0, 0, 0], sizes = [2, 2, 2], strides = [1, 1, 1]} : vector<2x2x4xf32> to vector<2x2x2xf32>
    %c2_202 = arith.constant 2 : index
    %1401 = memref.load %arg6[%c2_202] : memref<54xf32, #tpu.memory_space<smem>>
    %1402 = vector.broadcast %1401 : f32 to vector<2x2x2xf32>
    %1403 = arith.mulf %1400, %1402 : vector<2x2x2xf32>
    %1404 = arith.addf %1392, %1403 : vector<2x2x2xf32>
    %c3_203 = arith.constant 3 : index
    %1405 = memref.load %arg6[%c3_203] : memref<54xf32, #tpu.memory_space<smem>>
    %1406 = vector.broadcast %1405 : f32 to vector<2x2x2xf32>
    %1407 = arith.mulf %1400, %1406 : vector<2x2x2xf32>
    %1408 = arith.addf %1396, %1407 : vector<2x2x2xf32>
    %1409 = vector.extract_strided_slice %1399 {offsets = [0, 0, 1], sizes = [2, 2, 2], strides = [1, 1, 1]} : vector<2x2x4xf32> to vector<2x2x2xf32>
    %c8_204 = arith.constant 8 : index
    %1410 = memref.load %arg6[%c8_204] : memref<54xf32, #tpu.memory_space<smem>>
    %1411 = vector.broadcast %1410 : f32 to vector<2x2x2xf32>
    %1412 = arith.mulf %1409, %1411 : vector<2x2x2xf32>
    %1413 = arith.addf %1404, %1412 : vector<2x2x2xf32>
    %c9_205 = arith.constant 9 : index
    %1414 = memref.load %arg6[%c9_205] : memref<54xf32, #tpu.memory_space<smem>>
    %1415 = vector.broadcast %1414 : f32 to vector<2x2x2xf32>
    %1416 = arith.mulf %1409, %1415 : vector<2x2x2xf32>
    %1417 = arith.addf %1408, %1416 : vector<2x2x2xf32>
    %1418 = vector.extract_strided_slice %1399 {offsets = [0, 0, 2], sizes = [2, 2, 2], strides = [1, 1, 1]} : vector<2x2x4xf32> to vector<2x2x2xf32>
    %c14_206 = arith.constant 14 : index
    %1419 = memref.load %arg6[%c14_206] : memref<54xf32, #tpu.memory_space<smem>>
    %1420 = vector.broadcast %1419 : f32 to vector<2x2x2xf32>
    %1421 = arith.mulf %1418, %1420 : vector<2x2x2xf32>
    %1422 = arith.addf %1413, %1421 : vector<2x2x2xf32>
    %c15_207 = arith.constant 15 : index
    %1423 = memref.load %arg6[%c15_207] : memref<54xf32, #tpu.memory_space<smem>>
    %1424 = vector.broadcast %1423 : f32 to vector<2x2x2xf32>
    %1425 = arith.mulf %1418, %1424 : vector<2x2x2xf32>
    %1426 = arith.addf %1417, %1425 : vector<2x2x2xf32>
    %1427 = vector.extract_strided_slice %1398 {offsets = [0, 1, 0], sizes = [2, 2, 4], strides = [1, 1, 1]} : vector<2x4x4xf32> to vector<2x2x4xf32>
    %1428 = vector.extract_strided_slice %1427 {offsets = [0, 0, 0], sizes = [2, 2, 2], strides = [1, 1, 1]} : vector<2x2x4xf32> to vector<2x2x2xf32>
    %c20_208 = arith.constant 20 : index
    %1429 = memref.load %arg6[%c20_208] : memref<54xf32, #tpu.memory_space<smem>>
    %1430 = vector.broadcast %1429 : f32 to vector<2x2x2xf32>
    %1431 = arith.mulf %1428, %1430 : vector<2x2x2xf32>
    %1432 = arith.addf %1422, %1431 : vector<2x2x2xf32>
    %c21_209 = arith.constant 21 : index
    %1433 = memref.load %arg6[%c21_209] : memref<54xf32, #tpu.memory_space<smem>>
    %1434 = vector.broadcast %1433 : f32 to vector<2x2x2xf32>
    %1435 = arith.mulf %1428, %1434 : vector<2x2x2xf32>
    %1436 = arith.addf %1426, %1435 : vector<2x2x2xf32>
    %1437 = vector.extract_strided_slice %1427 {offsets = [0, 0, 1], sizes = [2, 2, 2], strides = [1, 1, 1]} : vector<2x2x4xf32> to vector<2x2x2xf32>
    %c26_210 = arith.constant 26 : index
    %1438 = memref.load %arg6[%c26_210] : memref<54xf32, #tpu.memory_space<smem>>
    %1439 = vector.broadcast %1438 : f32 to vector<2x2x2xf32>
    %1440 = arith.mulf %1437, %1439 : vector<2x2x2xf32>
    %1441 = arith.addf %1432, %1440 : vector<2x2x2xf32>
    %c27_211 = arith.constant 27 : index
    %1442 = memref.load %arg6[%c27_211] : memref<54xf32, #tpu.memory_space<smem>>
    %1443 = vector.broadcast %1442 : f32 to vector<2x2x2xf32>
    %1444 = arith.mulf %1437, %1443 : vector<2x2x2xf32>
    %1445 = arith.addf %1436, %1444 : vector<2x2x2xf32>
    %1446 = vector.extract_strided_slice %1427 {offsets = [0, 0, 2], sizes = [2, 2, 2], strides = [1, 1, 1]} : vector<2x2x4xf32> to vector<2x2x2xf32>
    %c32_212 = arith.constant 32 : index
    %1447 = memref.load %arg6[%c32_212] : memref<54xf32, #tpu.memory_space<smem>>
    %1448 = vector.broadcast %1447 : f32 to vector<2x2x2xf32>
    %1449 = arith.mulf %1446, %1448 : vector<2x2x2xf32>
    %1450 = arith.addf %1441, %1449 : vector<2x2x2xf32>
    %c33_213 = arith.constant 33 : index
    %1451 = memref.load %arg6[%c33_213] : memref<54xf32, #tpu.memory_space<smem>>
    %1452 = vector.broadcast %1451 : f32 to vector<2x2x2xf32>
    %1453 = arith.mulf %1446, %1452 : vector<2x2x2xf32>
    %1454 = arith.addf %1445, %1453 : vector<2x2x2xf32>
    %1455 = vector.extract_strided_slice %1398 {offsets = [0, 2, 0], sizes = [2, 2, 4], strides = [1, 1, 1]} : vector<2x4x4xf32> to vector<2x2x4xf32>
    %1456 = vector.extract_strided_slice %1455 {offsets = [0, 0, 0], sizes = [2, 2, 2], strides = [1, 1, 1]} : vector<2x2x4xf32> to vector<2x2x2xf32>
    %c38_214 = arith.constant 38 : index
    %1457 = memref.load %arg6[%c38_214] : memref<54xf32, #tpu.memory_space<smem>>
    %1458 = vector.broadcast %1457 : f32 to vector<2x2x2xf32>
    %1459 = arith.mulf %1456, %1458 : vector<2x2x2xf32>
    %1460 = arith.addf %1450, %1459 : vector<2x2x2xf32>
    %c39_215 = arith.constant 39 : index
    %1461 = memref.load %arg6[%c39_215] : memref<54xf32, #tpu.memory_space<smem>>
    %1462 = vector.broadcast %1461 : f32 to vector<2x2x2xf32>
    %1463 = arith.mulf %1456, %1462 : vector<2x2x2xf32>
    %1464 = arith.addf %1454, %1463 : vector<2x2x2xf32>
    %1465 = vector.extract_strided_slice %1455 {offsets = [0, 0, 1], sizes = [2, 2, 2], strides = [1, 1, 1]} : vector<2x2x4xf32> to vector<2x2x2xf32>
    %c44_216 = arith.constant 44 : index
    %1466 = memref.load %arg6[%c44_216] : memref<54xf32, #tpu.memory_space<smem>>
    %1467 = vector.broadcast %1466 : f32 to vector<2x2x2xf32>
    %1468 = arith.mulf %1465, %1467 : vector<2x2x2xf32>
    %1469 = arith.addf %1460, %1468 : vector<2x2x2xf32>
    %c45_217 = arith.constant 45 : index
    %1470 = memref.load %arg6[%c45_217] : memref<54xf32, #tpu.memory_space<smem>>
    %1471 = vector.broadcast %1470 : f32 to vector<2x2x2xf32>
    %1472 = arith.mulf %1465, %1471 : vector<2x2x2xf32>
    %1473 = arith.addf %1464, %1472 : vector<2x2x2xf32>
    %1474 = vector.extract_strided_slice %1455 {offsets = [0, 0, 2], sizes = [2, 2, 2], strides = [1, 1, 1]} : vector<2x2x4xf32> to vector<2x2x2xf32>
    %c50_218 = arith.constant 50 : index
    %1475 = memref.load %arg6[%c50_218] : memref<54xf32, #tpu.memory_space<smem>>
    %1476 = vector.broadcast %1475 : f32 to vector<2x2x2xf32>
    %1477 = arith.mulf %1474, %1476 : vector<2x2x2xf32>
    %1478 = arith.addf %1469, %1477 : vector<2x2x2xf32>
    %c51_219 = arith.constant 51 : index
    %1479 = memref.load %arg6[%c51_219] : memref<54xf32, #tpu.memory_space<smem>>
    %1480 = vector.broadcast %1479 : f32 to vector<2x2x2xf32>
    %1481 = arith.mulf %1474, %1480 : vector<2x2x2xf32>
    %1482 = arith.addf %1473, %1481 : vector<2x2x2xf32>
    %1483 = vector.extract_strided_slice %1306 {offsets = [0, 2, 0, 0], sizes = [2, 1, 4, 4], strides = [1, 1, 1, 1]} : vector<2x3x4x4xf32> to vector<2x1x4x4xf32>
    %1484 = vector.shape_cast %1483 : vector<2x1x4x4xf32> to vector<2x4x4xf32>
    %1485 = vector.extract_strided_slice %1484 {offsets = [0, 0, 0], sizes = [2, 2, 4], strides = [1, 1, 1]} : vector<2x4x4xf32> to vector<2x2x4xf32>
    %1486 = vector.extract_strided_slice %1485 {offsets = [0, 0, 0], sizes = [2, 2, 2], strides = [1, 1, 1]} : vector<2x2x4xf32> to vector<2x2x2xf32>
    %c4_220 = arith.constant 4 : index
    %1487 = memref.load %arg6[%c4_220] : memref<54xf32, #tpu.memory_space<smem>>
    %1488 = vector.broadcast %1487 : f32 to vector<2x2x2xf32>
    %1489 = arith.mulf %1486, %1488 : vector<2x2x2xf32>
    %1490 = arith.addf %1478, %1489 : vector<2x2x2xf32>
    %c5_221 = arith.constant 5 : index
    %1491 = memref.load %arg6[%c5_221] : memref<54xf32, #tpu.memory_space<smem>>
    %1492 = vector.broadcast %1491 : f32 to vector<2x2x2xf32>
    %1493 = arith.mulf %1486, %1492 : vector<2x2x2xf32>
    %1494 = arith.addf %1482, %1493 : vector<2x2x2xf32>
    %1495 = vector.extract_strided_slice %1485 {offsets = [0, 0, 1], sizes = [2, 2, 2], strides = [1, 1, 1]} : vector<2x2x4xf32> to vector<2x2x2xf32>
    %c10_222 = arith.constant 10 : index
    %1496 = memref.load %arg6[%c10_222] : memref<54xf32, #tpu.memory_space<smem>>
    %1497 = vector.broadcast %1496 : f32 to vector<2x2x2xf32>
    %1498 = arith.mulf %1495, %1497 : vector<2x2x2xf32>
    %1499 = arith.addf %1490, %1498 : vector<2x2x2xf32>
    %c11_223 = arith.constant 11 : index
    %1500 = memref.load %arg6[%c11_223] : memref<54xf32, #tpu.memory_space<smem>>
    %1501 = vector.broadcast %1500 : f32 to vector<2x2x2xf32>
    %1502 = arith.mulf %1495, %1501 : vector<2x2x2xf32>
    %1503 = arith.addf %1494, %1502 : vector<2x2x2xf32>
    %1504 = vector.extract_strided_slice %1485 {offsets = [0, 0, 2], sizes = [2, 2, 2], strides = [1, 1, 1]} : vector<2x2x4xf32> to vector<2x2x2xf32>
    %c16_224 = arith.constant 16 : index
    %1505 = memref.load %arg6[%c16_224] : memref<54xf32, #tpu.memory_space<smem>>
    %1506 = vector.broadcast %1505 : f32 to vector<2x2x2xf32>
    %1507 = arith.mulf %1504, %1506 : vector<2x2x2xf32>
    %1508 = arith.addf %1499, %1507 : vector<2x2x2xf32>
    %c17_225 = arith.constant 17 : index
    %1509 = memref.load %arg6[%c17_225] : memref<54xf32, #tpu.memory_space<smem>>
    %1510 = vector.broadcast %1509 : f32 to vector<2x2x2xf32>
    %1511 = arith.mulf %1504, %1510 : vector<2x2x2xf32>
    %1512 = arith.addf %1503, %1511 : vector<2x2x2xf32>
    %1513 = vector.extract_strided_slice %1484 {offsets = [0, 1, 0], sizes = [2, 2, 4], strides = [1, 1, 1]} : vector<2x4x4xf32> to vector<2x2x4xf32>
    %1514 = vector.extract_strided_slice %1513 {offsets = [0, 0, 0], sizes = [2, 2, 2], strides = [1, 1, 1]} : vector<2x2x4xf32> to vector<2x2x2xf32>
    %c22_226 = arith.constant 22 : index
    %1515 = memref.load %arg6[%c22_226] : memref<54xf32, #tpu.memory_space<smem>>
    %1516 = vector.broadcast %1515 : f32 to vector<2x2x2xf32>
    %1517 = arith.mulf %1514, %1516 : vector<2x2x2xf32>
    %1518 = arith.addf %1508, %1517 : vector<2x2x2xf32>
    %c23_227 = arith.constant 23 : index
    %1519 = memref.load %arg6[%c23_227] : memref<54xf32, #tpu.memory_space<smem>>
    %1520 = vector.broadcast %1519 : f32 to vector<2x2x2xf32>
    %1521 = arith.mulf %1514, %1520 : vector<2x2x2xf32>
    %1522 = arith.addf %1512, %1521 : vector<2x2x2xf32>
    %1523 = vector.extract_strided_slice %1513 {offsets = [0, 0, 1], sizes = [2, 2, 2], strides = [1, 1, 1]} : vector<2x2x4xf32> to vector<2x2x2xf32>
    %c28_228 = arith.constant 28 : index
    %1524 = memref.load %arg6[%c28_228] : memref<54xf32, #tpu.memory_space<smem>>
    %1525 = vector.broadcast %1524 : f32 to vector<2x2x2xf32>
    %1526 = arith.mulf %1523, %1525 : vector<2x2x2xf32>
    %1527 = arith.addf %1518, %1526 : vector<2x2x2xf32>
    %c29_229 = arith.constant 29 : index
    %1528 = memref.load %arg6[%c29_229] : memref<54xf32, #tpu.memory_space<smem>>
    %1529 = vector.broadcast %1528 : f32 to vector<2x2x2xf32>
    %1530 = arith.mulf %1523, %1529 : vector<2x2x2xf32>
    %1531 = arith.addf %1522, %1530 : vector<2x2x2xf32>
    %1532 = vector.extract_strided_slice %1513 {offsets = [0, 0, 2], sizes = [2, 2, 2], strides = [1, 1, 1]} : vector<2x2x4xf32> to vector<2x2x2xf32>
    %c34_230 = arith.constant 34 : index
    %1533 = memref.load %arg6[%c34_230] : memref<54xf32, #tpu.memory_space<smem>>
    %1534 = vector.broadcast %1533 : f32 to vector<2x2x2xf32>
    %1535 = arith.mulf %1532, %1534 : vector<2x2x2xf32>
    %1536 = arith.addf %1527, %1535 : vector<2x2x2xf32>
    %c35_231 = arith.constant 35 : index
    %1537 = memref.load %arg6[%c35_231] : memref<54xf32, #tpu.memory_space<smem>>
    %1538 = vector.broadcast %1537 : f32 to vector<2x2x2xf32>
    %1539 = arith.mulf %1532, %1538 : vector<2x2x2xf32>
    %1540 = arith.addf %1531, %1539 : vector<2x2x2xf32>
    %1541 = vector.extract_strided_slice %1484 {offsets = [0, 2, 0], sizes = [2, 2, 4], strides = [1, 1, 1]} : vector<2x4x4xf32> to vector<2x2x4xf32>
    %1542 = vector.extract_strided_slice %1541 {offsets = [0, 0, 0], sizes = [2, 2, 2], strides = [1, 1, 1]} : vector<2x2x4xf32> to vector<2x2x2xf32>
    %c40_232 = arith.constant 40 : index
    %1543 = memref.load %arg6[%c40_232] : memref<54xf32, #tpu.memory_space<smem>>
    %1544 = vector.broadcast %1543 : f32 to vector<2x2x2xf32>
    %1545 = arith.mulf %1542, %1544 : vector<2x2x2xf32>
    %1546 = arith.addf %1536, %1545 : vector<2x2x2xf32>
    %c41_233 = arith.constant 41 : index
    %1547 = memref.load %arg6[%c41_233] : memref<54xf32, #tpu.memory_space<smem>>
    %1548 = vector.broadcast %1547 : f32 to vector<2x2x2xf32>
    %1549 = arith.mulf %1542, %1548 : vector<2x2x2xf32>
    %1550 = arith.addf %1540, %1549 : vector<2x2x2xf32>
    %1551 = vector.extract_strided_slice %1541 {offsets = [0, 0, 1], sizes = [2, 2, 2], strides = [1, 1, 1]} : vector<2x2x4xf32> to vector<2x2x2xf32>
    %c46_234 = arith.constant 46 : index
    %1552 = memref.load %arg6[%c46_234] : memref<54xf32, #tpu.memory_space<smem>>
    %1553 = vector.broadcast %1552 : f32 to vector<2x2x2xf32>
    %1554 = arith.mulf %1551, %1553 : vector<2x2x2xf32>
    %1555 = arith.addf %1546, %1554 : vector<2x2x2xf32>
    %c47_235 = arith.constant 47 : index
    %1556 = memref.load %arg6[%c47_235] : memref<54xf32, #tpu.memory_space<smem>>
    %1557 = vector.broadcast %1556 : f32 to vector<2x2x2xf32>
    %1558 = arith.mulf %1551, %1557 : vector<2x2x2xf32>
    %1559 = arith.addf %1550, %1558 : vector<2x2x2xf32>
    %1560 = vector.extract_strided_slice %1541 {offsets = [0, 0, 2], sizes = [2, 2, 2], strides = [1, 1, 1]} : vector<2x2x4xf32> to vector<2x2x2xf32>
    %c52_236 = arith.constant 52 : index
    %1561 = memref.load %arg6[%c52_236] : memref<54xf32, #tpu.memory_space<smem>>
    %1562 = vector.broadcast %1561 : f32 to vector<2x2x2xf32>
    %1563 = arith.mulf %1560, %1562 : vector<2x2x2xf32>
    %1564 = arith.addf %1555, %1563 : vector<2x2x2xf32>
    %c53_237 = arith.constant 53 : index
    %1565 = memref.load %arg6[%c53_237] : memref<54xf32, #tpu.memory_space<smem>>
    %1566 = vector.broadcast %1565 : f32 to vector<2x2x2xf32>
    %1567 = arith.mulf %1560, %1566 : vector<2x2x2xf32>
    %1568 = arith.addf %1559, %1567 : vector<2x2x2xf32>
    %1569 = vector.shape_cast %1564 : vector<2x2x2xf32> to vector<2x1x2x2xf32>
    %1570 = vector.shape_cast %1568 : vector<2x2x2xf32> to vector<2x1x2x2xf32>
    %1571 = tpu.concatenate %1569, %1570 in 1 : vector<2x1x2x2xf32>, vector<2x1x2x2xf32> -> vector<2x2x2x2xf32>
    %1572 = vector.extract_strided_slice %1571 {offsets = [0, 0, 0, 0], sizes = [2, 2, 1, 2], strides = [1, 1, 1, 1]} : vector<2x2x2x2xf32> to vector<2x2x1x2xf32>
    %1573 = vector.extract_strided_slice %1571 {offsets = [0, 0, 1, 0], sizes = [2, 2, 1, 2], strides = [1, 1, 1, 1]} : vector<2x2x2x2xf32> to vector<2x2x1x2xf32>
    %1574 = arith.maximumf %1572, %1573 : vector<2x2x1x2xf32>
    %1575 = vector.extract_strided_slice %1574 {offsets = [0, 0, 0, 0], sizes = [2, 2, 1, 1], strides = [1, 1, 1, 1]} : vector<2x2x1x2xf32> to vector<2x2x1x1xf32>
    %1576 = vector.extract_strided_slice %1574 {offsets = [0, 0, 0, 1], sizes = [2, 2, 1, 1], strides = [1, 1, 1, 1]} : vector<2x2x1x2xf32> to vector<2x2x1x1xf32>
    %1577 = arith.maximumf %1575, %1576 : vector<2x2x1x1xf32>
    %1578 = vector.extract_strided_slice %1577 {offsets = [0, 0, 0, 0], sizes = [2, 2, 1, 1], strides = [1, 1, 1, 1]} : vector<2x2x1x1xf32> to vector<2x2x1x1xf32>
    %1579 = vector.extract_strided_slice %1578 {offsets = [0, 0, 0, 0], sizes = [2, 2, 1, 1], strides = [1, 1, 1, 1]} : vector<2x2x1x1xf32> to vector<2x2x1x1xf32>
    %c0_238 = arith.constant 0 : index
    %c0_239 = arith.constant 0 : index
    %c0_240 = arith.constant 0 : index
    %c0_241 = arith.constant 0 : index
    %1580 = vector.load %arg8[%c0_238, %c0_239, %c0_240, %c0_241] : memref<2x2x1x1xf32, #tpu.memory_space<vmem>>, vector<2x2x1x1xf32>
    tpu.vector_store %arg8[%c0_238, %c0_239, %c0_240, %c0_241], %1579 {strides = array<i32>} : memref<2x2x1x1xf32, #tpu.memory_space<vmem>>, vector<2x2x1x1xf32>,
    return
  }
  func.func @transform_0(%arg0: i32) -> (i32, i32, i32, i32) {
    %c0_i32 = arith.constant 0 : i32
    %c0_i32_0 = arith.constant 0 : i32
    %c0_i32_1 = arith.constant 0 : i32
    %c0_i32_2 = arith.constant 0 : i32
    return %arg0, %c0_i32, %c0_i32_0, %c0_i32_1 : i32, i32, i32, i32
  }
  func.func @transform_1(%arg0: i32) -> i32 {
    %c0_i32 = arith.constant 0 : i32
    %c0_i32_0 = arith.constant 0 : i32
    return %c0_i32 : i32
  }
  func.func @transform_2(%arg0: i32) -> i32 {
    %c0_i32 = arith.constant 0 : i32
    %c0_i32_0 = arith.constant 0 : i32
    return %c0_i32 : i32
  }
  func.func @transform_3(%arg0: i32) -> i32 {
    %c0_i32 = arith.constant 0 : i32
    %c0_i32_0 = arith.constant 0 : i32
    return %c0_i32 : i32
  }
  func.func @transform_4(%arg0: i32) -> i32 {
    %c0_i32 = arith.constant 0 : i32
    %c0_i32_0 = arith.constant 0 : i32
    return %c0_i32 : i32
  }
  func.func @transform_5(%arg0: i32) -> i32 {
    %c0_i32 = arith.constant 0 : i32
    %c0_i32_0 = arith.constant 0 : i32
    return %c0_i32 : i32
  }
  func.func @transform_6(%arg0: i32) -> i32 {
    %c0_i32 = arith.constant 0 : i32
    %c0_i32_0 = arith.constant 0 : i32
    return %c0_i32 : i32
  }
  func.func @transform_7(%arg0: i32) -> (i32, i32, i32, i32) {
    %c0_i32 = arith.constant 0 : i32
    %c0_i32_0 = arith.constant 0 : i32
    %c0_i32_1 = arith.constant 0 : i32
    %c0_i32_2 = arith.constant 0 : i32
    return %arg0, %c0_i32, %c0_i32_0, %c0_i32_1 : i32, i32, i32, i32
  }
}

</mosaic_0001>

<llo_original>
// kernel: tpu_custom_call.1
$region0: #{tpu_custom_call.1}
  #allocation0 [shape = 'u32[]', space=smem, size = 0x4, offset = 0x4, fixed_abs, tag = 'smem constant byte address 0x4 - core index']
  #allocation1 [shape = 'u32[144,128]{1,0:T(1,128)}', space=vmem, size = 0x12000, scoped, tag = 'internal scratch']
  %s0 = inlined_call_operand.hbm [shape: f32[2,4,16,16], index: 0, kind: input, shape index: {}]
  %s1 = inlined_call_operand.vmem [shape: f32[108], index: 1, kind: input, shape index: {}]
  %s2 = inlined_call_operand.vmem [shape: f32[3], index: 2, kind: input, shape index: {}]
  %s3 = inlined_call_operand.vmem [shape: f32[81], index: 3, kind: input, shape index: {}]
  %s4 = inlined_call_operand.vmem [shape: f32[3], index: 4, kind: input, shape index: {}]
  %s5 = inlined_call_operand.vmem [shape: f32[54], index: 5, kind: input, shape index: {}]
  %s6 = inlined_call_operand.vmem [shape: f32[2], index: 6, kind: input, shape index: {}]
  %s7 = inlined_call_operand.vmem [shape: f32[2,2,1,1], index: 7, kind: output, shape index: {}]
  %s8 = sld [smem:[#allocation0]]
  $region66: #{tpu_custom_call.1} parent=0
    _
  %s10 = ssub.s32 1, %s8
  %s11 = scalar_select 0, %s10, %s8
  $region1: #{tpu_custom_call.1} parent=0
    #allocation2 [shape = 'u8[65536]{0}', space=vmem, size = 0x10000, scoped, tag = 'input window, operand 0, single buffered']
    #allocation3 [shape = 's32[1]{0}', space=sflag, size = 0x4, scoped, tag = 'scoped memory for tpu_custom_call.1']
    #allocation4 [shape = 's32[1]{0}', space=sflag, size = 0x4, scoped, tag = 'scoped memory for tpu_custom_call.1']
    #allocation5 [shape = 'u8[512]{0}', space=smem, size = 0x200, scoped, tag = 'input window, operand 1, single buffered']
    #allocation6 [shape = 'u8[512]{0}', space=smem, size = 0x200, scoped, tag = 'input window, operand 2, single buffered']
    #allocation7 [shape = 's32[1]{0}', space=sflag, size = 0x4, scoped, tag = 'scoped memory for tpu_custom_call.1']
    #allocation8 [shape = 'u8[512]{0}', space=smem, size = 0x200, scoped, tag = 'input window, operand 3, single buffered']
    #allocation9 [shape = 'u8[512]{0}', space=smem, size = 0x200, scoped, tag = 'input window, operand 4, single buffered']
    #allocation10 [shape = 's32[1]{0}', space=sflag, size = 0x4, scoped, tag = 'scoped memory for tpu_custom_call.1']
    #allocation11 [shape = 'u8[512]{0}', space=smem, size = 0x200, scoped, tag = 'input window, operand 5, single buffered']
    #allocation12 [shape = 'u8[512]{0}', space=smem, size = 0x200, scoped, tag = 'input window, operand 6, single buffered']
    #allocation13 [shape = 's32[1]{0}', space=sflag, size = 0x4, scoped, tag = 'scoped memory for tpu_custom_call.1']
    %12 = vsyncpa [#allocation3], 0
    %13 = vsyncpa [#allocation4], 0
    %14 = vsyncpa [#allocation7], 0
    %15 = vsyncpa [#allocation10], 0
    %16 = vsyncpa [#allocation13], 0
    // Predicated region
    $region2: #{tpu_custom_call.1} parent=1 // pred_check
      _
    $region3: #{tpu_custom_call.1} parent=1 // pred_check_branch
      %18 = sbr.rel (0) target = $region5
    $region4: #{tpu_custom_call.1} parent=1 // pred_region
      %s20 = ssub.s32 2048, 2048
      %21 = vsyncadd [#allocation3], %s20
      %s22 = sshll.u32 [#allocation2], 4
      %s23 = int_to_ptr.vmem [resolvable:$true] %s22
      %28 = dma.hbm_to_vmem [thread:$0]  %s0, 2048, %s23, [#allocation3], 128, 128, 8
    $region5: #{tpu_custom_call.1} parent=1 // pred_fallthru
      _
    // Predicated region
    $region6: #{tpu_custom_call.1} parent=1 // pred_check
      _
    $region7: #{tpu_custom_call.1} parent=1 // pred_check_branch
      %30 = sbr.rel (0) target = $region9
    $region8: #{tpu_custom_call.1} parent=1 // pred_region
      %s32 = ssub.s32 16, 16
      %33 = vsyncadd [#allocation4], %s32
      %s35 = sshll.u32 %s1, 4
      %s36 = int_to_ptr.vmem [resolvable:$true] %s35
      %38 = dma.vmem_to_smem %s36, 16, [#allocation5], [#allocation4]
    $region9: #{tpu_custom_call.1} parent=1 // pred_fallthru
      _
    // Predicated region
    $region10: #{tpu_custom_call.1} parent=1 // pred_check
      _
    $region11: #{tpu_custom_call.1} parent=1 // pred_check_branch
      %40 = sbr.rel (0) target = $region13
    $region12: #{tpu_custom_call.1} parent=1 // pred_region
      %s42 = ssub.s32 16, 16
      %43 = vsyncadd [#allocation7], %s42
      %s45 = sshll.u32 %s2, 4
      %s46 = int_to_ptr.vmem [resolvable:$true] %s45
      %48 = dma.vmem_to_smem %s46, 16, [#allocation6], [#allocation7]
    $region13: #{tpu_custom_call.1} parent=1 // pred_fallthru
      _
    // Predicated region
    $region14: #{tpu_custom_call.1} parent=1 // pred_check
      _
    $region15: #{tpu_custom_call.1} parent=1 // pred_check_branch
      %50 = sbr.rel (0) target = $region17
    $region16: #{tpu_custom_call.1} parent=1 // pred_region
      %s52 = ssub.s32 16, 16
      %53 = vsyncadd [#allocation7], %s52
      %s55 = sshll.u32 %s3, 4
      %s56 = int_to_ptr.vmem [resolvable:$true] %s55
      %58 = dma.vmem_to_smem %s56, 16, [#allocation8], [#allocation7]
    $region17: #{tpu_custom_call.1} parent=1 // pred_fallthru
      _
    // Predicated region
    $region18: #{tpu_custom_call.1} parent=1 // pred_check
      _
    $region19: #{tpu_custom_call.1} parent=1 // pred_check_branch
      %60 = sbr.rel (0) target = $region21
    $region20: #{tpu_custom_call.1} parent=1 // pred_region
      %s62 = ssub.s32 16, 16
      %63 = vsyncadd [#allocation10], %s62
      %s65 = sshll.u32 %s4, 4
      %s66 = int_to_ptr.vmem [resolvable:$true] %s65
      %68 = dma.vmem_to_smem %s66, 16, [#allocation9], [#allocation10]
    $region21: #{tpu_custom_call.1} parent=1 // pred_fallthru
      _
    // Predicated region
    $region22: #{tpu_custom_call.1} parent=1 // pred_check
      _
    $region23: #{tpu_custom_call.1} parent=1 // pred_check_branch
      %70 = sbr.rel (0) target = $region25
    $region24: #{tpu_custom_call.1} parent=1 // pred_region
      %s72 = ssub.s32 16, 16
      %73 = vsyncadd [#allocation10], %s72
      %s75 = sshll.u32 %s5, 4
      %s76 = int_to_ptr.vmem [resolvable:$true] %s75
      %78 = dma.vmem_to_smem %s76, 16, [#allocation11], [#allocation10]
    $region25: #{tpu_custom_call.1} parent=1 // pred_fallthru
      _
    // Predicated region
    $region26: #{tpu_custom_call.1} parent=1 // pred_check
      _
    $region27: #{tpu_custom_call.1} parent=1 // pred_check_branch
      %80 = sbr.rel (0) target = $region29
    $region28: #{tpu_custom_call.1} parent=1 // pred_region
      %s82 = ssub.s32 16, 16
      %83 = vsyncadd [#allocation13], %s82
      %s85 = sshll.u32 %s6, 4
      %s86 = int_to_ptr.vmem [resolvable:$true] %s85
      %88 = dma.vmem_to_smem %s86, 16, [#allocation12], [#allocation13]
    $region29: #{tpu_custom_call.1} parent=1 // pred_fallthru
      _
    // Predicated region
    $region30: #{tpu_custom_call.1} parent=1 // pred_check
      _
    $region31: #{tpu_custom_call.1} parent=1 // pred_check_branch
      %90 = sbr.rel (0) target = $region33
    $region32: #{tpu_custom_call.1} parent=1 // pred_region
      %91 = dma.done [#allocation3], 2048
    $region33: #{tpu_custom_call.1} parent=1 // pred_fallthru
      _
    // Predicated region
    $region34: #{tpu_custom_call.1} parent=1 // pred_check
      _
    $region35: #{tpu_custom_call.1} parent=1 // pred_check_branch
      %93 = sbr.rel (0) target = $region37
    $region36: #{tpu_custom_call.1} parent=1 // pred_region
      %94 = dma.done [#allocation4], 16
    $region37: #{tpu_custom_call.1} parent=1 // pred_fallthru
      _
    // Predicated region
    $region38: #{tpu_custom_call.1} parent=1 // pred_check
      _
    $region39: #{tpu_custom_call.1} parent=1 // pred_check_branch
      %96 = sbr.rel (0) target = $region41
    $region40: #{tpu_custom_call.1} parent=1 // pred_region
      %97 = dma.done [#allocation7], 16
    $region41: #{tpu_custom_call.1} parent=1 // pred_fallthru
      _
    // Predicated region
    $region42: #{tpu_custom_call.1} parent=1 // pred_check
      _
    $region43: #{tpu_custom_call.1} parent=1 // pred_check_branch
      %99 = sbr.rel (0) target = $region45
    $region44: #{tpu_custom_call.1} parent=1 // pred_region
      %100 = dma.done [#allocation7], 16
    $region45: #{tpu_custom_call.1} parent=1 // pred_fallthru
      _
    // Predicated region
    $region46: #{tpu_custom_call.1} parent=1 // pred_check
      _
    $region47: #{tpu_custom_call.1} parent=1 // pred_check_branch
      %102 = sbr.rel (0) target = $region49
    $region48: #{tpu_custom_call.1} parent=1 // pred_region
      %103 = dma.done [#allocation10], 16
    $region49: #{tpu_custom_call.1} parent=1 // pred_fallthru
      _
    // Predicated region
    $region50: #{tpu_custom_call.1} parent=1 // pred_check
      _
    $region51: #{tpu_custom_call.1} parent=1 // pred_check_branch
      %105 = sbr.rel (0) target = $region53
    $region52: #{tpu_custom_call.1} parent=1 // pred_region
      %106 = dma.done [#allocation10], 16
    $region53: #{tpu_custom_call.1} parent=1 // pred_fallthru
      _
    // Predicated region
    $region54: #{tpu_custom_call.1} parent=1 // pred_check
      _
    $region55: #{tpu_custom_call.1} parent=1 // pred_check_branch
      %108 = sbr.rel (0) target = $region57
    $region56: #{tpu_custom_call.1} parent=1 // pred_region
      %109 = dma.done [#allocation13], 16
    $region57: #{tpu_custom_call.1} parent=1 // pred_fallthru
      _
    %110 = sfence
    %v111 = vld [vmem:[#allocation2] sm:$0xff]
    %v112 = vld [vmem:[#allocation2 + $0x8] sm:$0xff]
    %v113 = vld [vmem:[#allocation2 + $0x10] sm:$0xff]
    %v114 = vld [vmem:[#allocation2 + $0x18] sm:$0xff]
    %v115 = vld [vmem:[#allocation2 + $0x20] sm:$0xff]
    %v116 = vld [vmem:[#allocation2 + $0x28] sm:$0xff]
    %v117 = vld [vmem:[#allocation2 + $0x30] sm:$0xff]
    %v118 = vld [vmem:[#allocation2 + $0x38] sm:$0xff]
    %v119 = vld [vmem:[#allocation2 + $0x40] sm:$0xff]
    %v120 = vld [vmem:[#allocation2 + $0x48] sm:$0xff]
    %v121 = vld [vmem:[#allocation2 + $0x50] sm:$0xff]
    %v122 = vld [vmem:[#allocation2 + $0x58] sm:$0xff]
    %v123 = vld [vmem:[#allocation2 + $0x60] sm:$0xff]
    %v124 = vld [vmem:[#allocation2 + $0x68] sm:$0xff]
    %v125 = vld [vmem:[#allocation2 + $0x70] sm:$0xff]
    %v126 = vld [vmem:[#allocation2 + $0x78] sm:$0xff]
    %s127 = sld [smem:[#allocation6]]
    %v128 = vstv %s127
    %s129 = sld [smem:[#allocation6 + $0x1]]
    %v130 = vstv %s129
    %s131 = sld [smem:[#allocation6 + $0x2]]
    %v132 = vstv %s131
    %s133 = sld [smem:[#allocation5]]
    %v134 = vstv %s133
    %v135 = vmul.f32 %v111, %v134
    %v136 = vmul.f32 %v112, %v134
    %v137 = vmul.f32 %v119, %v134
    %v138 = vmul.f32 %v120, %v134
    %v139 = vadd.f32 %v128, %v135
    %v140 = vadd.f32 %v128, %v136
    %v141 = vadd.f32 %v128, %v137
    %v142 = vadd.f32 %v128, %v138
    %s143 = sld [smem:[#allocation5 + $0x1]]
    %v144 = vstv %s143
    %v145 = vmul.f32 %v111, %v144
    %v146 = vmul.f32 %v112, %v144
    %v147 = vmul.f32 %v119, %v144
    %v148 = vmul.f32 %v120, %v144
    %v149 = vadd.f32 %v130, %v145
    %v150 = vadd.f32 %v130, %v146
    %v151 = vadd.f32 %v130, %v147
    %v152 = vadd.f32 %v130, %v148
    %s153 = sld [smem:[#allocation5 + $0x2]]
    %v154 = vstv %s153
    %v155 = vmul.f32 %v111, %v154
    %v156 = vmul.f32 %v112, %v154
    %v157 = vmul.f32 %v119, %v154
    %v158 = vmul.f32 %v120, %v154
    %v159 = vadd.f32 %v132, %v155
    %v160 = vadd.f32 %v132, %v156
    %v161 = vadd.f32 %v132, %v157
    %v162 = vadd.f32 %v132, %v158
    %s163 = sld [smem:[#allocation5 + $0xc]]
    %v164 = vstv %s163
    %v165 = vmul.f32 %v111, %v164
    %v166 = vmul.f32 %v112, %v164
    %v167 = vmul.f32 %v119, %v164
    %v168 = vmul.f32 %v120, %v164
    %173 = vrot.lane.b32.xlu0 %v165, 127
    %v174 = vpop.permute.xlu0 %173
    %175 = vrot.lane.b32.xlu0 %v166, 127
    %v176 = vpop.permute.xlu0 %175
    %177 = vrot.lane.b32.xlu0 %v167, 127
    %v178 = vpop.permute.xlu0 %177
    %179 = vrot.lane.b32.xlu0 %v168, 127
    %v180 = vpop.permute.xlu0 %179
    %v185 = vadd.f32 %v139, %v174
    %v186 = vadd.f32 %v140, %v176
    %v187 = vadd.f32 %v141, %v178
    %v188 = vadd.f32 %v142, %v180
    %s189 = sld [smem:[#allocation5 + $0xd]]
    %v190 = vstv %s189
    %v191 = vmul.f32 %v111, %v190
    %v192 = vmul.f32 %v112, %v190
    %v193 = vmul.f32 %v119, %v190
    %v194 = vmul.f32 %v120, %v190
    %199 = vrot.lane.b32.xlu0 %v191, 127
    %v200 = vpop.permute.xlu0 %199
    %201 = vrot.lane.b32.xlu0 %v192, 127
    %v202 = vpop.permute.xlu0 %201
    %203 = vrot.lane.b32.xlu0 %v193, 127
    %v204 = vpop.permute.xlu0 %203
    %205 = vrot.lane.b32.xlu0 %v194, 127
    %v206 = vpop.permute.xlu0 %205
    %v211 = vadd.f32 %v149, %v200
    %v212 = vadd.f32 %v150, %v202
    %v213 = vadd.f32 %v151, %v204
    %v214 = vadd.f32 %v152, %v206
    %s215 = sld [smem:[#allocation5 + $0xe]]
    %v216 = vstv %s215
    %v217 = vmul.f32 %v111, %v216
    %v218 = vmul.f32 %v112, %v216
    %v219 = vmul.f32 %v119, %v216
    %v220 = vmul.f32 %v120, %v216
    %225 = vrot.lane.b32.xlu0 %v217, 127
    %v226 = vpop.permute.xlu0 %225
    %227 = vrot.lane.b32.xlu0 %v218, 127
    %v228 = vpop.permute.xlu0 %227
    %229 = vrot.lane.b32.xlu0 %v219, 127
    %v230 = vpop.permute.xlu0 %229
    %231 = vrot.lane.b32.xlu0 %v220, 127
    %v232 = vpop.permute.xlu0 %231
    %v237 = vadd.f32 %v159, %v226
    %v238 = vadd.f32 %v160, %v228
    %v239 = vadd.f32 %v161, %v230
    %v240 = vadd.f32 %v162, %v232
    %s241 = sld [smem:[#allocation5 + $0x18]]
    %v242 = vstv %s241
    %v243 = vmul.f32 %v111, %v242
    %v244 = vmul.f32 %v112, %v242
    %v245 = vmul.f32 %v119, %v242
    %v246 = vmul.f32 %v120, %v242
    %251 = vrot.lane.b32.xlu0 %v243, 126
    %v252 = vpop.permute.xlu0 %251
    %253 = vrot.lane.b32.xlu0 %v244, 126
    %v254 = vpop.permute.xlu0 %253
    %255 = vrot.lane.b32.xlu0 %v245, 126
    %v256 = vpop.permute.xlu0 %255
    %257 = vrot.lane.b32.xlu0 %v246, 126
    %v258 = vpop.permute.xlu0 %257
    %v263 = vadd.f32 %v185, %v252
    %v264 = vadd.f32 %v186, %v254
    %v265 = vadd.f32 %v187, %v256
    %v266 = vadd.f32 %v188, %v258
    %s267 = sld [smem:[#allocation5 + $0x19]]
    %v268 = vstv %s267
    %v269 = vmul.f32 %v111, %v268
    %v270 = vmul.f32 %v112, %v268
    %v271 = vmul.f32 %v119, %v268
    %v272 = vmul.f32 %v120, %v268
    %277 = vrot.lane.b32.xlu0 %v269, 126
    %v278 = vpop.permute.xlu0 %277
    %279 = vrot.lane.b32.xlu0 %v270, 126
    %v280 = vpop.permute.xlu0 %279
    %281 = vrot.lane.b32.xlu0 %v271, 126
    %v282 = vpop.permute.xlu0 %281
    %283 = vrot.lane.b32.xlu0 %v272, 126
    %v284 = vpop.permute.xlu0 %283
    %v289 = vadd.f32 %v211, %v278
    %v290 = vadd.f32 %v212, %v280
    %v291 = vadd.f32 %v213, %v282
    %v292 = vadd.f32 %v214, %v284
    %s293 = sld [smem:[#allocation5 + $0x1a]]
    %v294 = vstv %s293
    %v295 = vmul.f32 %v111, %v294
    %v296 = vmul.f32 %v112, %v294
    %v297 = vmul.f32 %v119, %v294
    %v298 = vmul.f32 %v120, %v294
    %303 = vrot.lane.b32.xlu0 %v295, 126
    %v304 = vpop.permute.xlu0 %303
    %305 = vrot.lane.b32.xlu0 %v296, 126
    %v306 = vpop.permute.xlu0 %305
    %307 = vrot.lane.b32.xlu0 %v297, 126
    %v308 = vpop.permute.xlu0 %307
    %309 = vrot.lane.b32.xlu0 %v298, 126
    %v310 = vpop.permute.xlu0 %309
    %v315 = vadd.f32 %v237, %v304
    %v316 = vadd.f32 %v238, %v306
    %v317 = vadd.f32 %v239, %v308
    %v318 = vadd.f32 %v240, %v310
    %s319 = sld [smem:[#allocation5 + $0x24]]
    %v320 = vstv %s319
    %v321 = vmul.f32 %v111, %v320
    %v322 = vmul.f32 %v112, %v320
    %v323 = vmul.f32 %v119, %v320
    %v324 = vmul.f32 %v120, %v320
    %vm329 = vcmask 1046528
    %v330 = vrot.slane %v321, 1
    %v331 = vrot.slane %v322, 1
    %v332 = vsel %vm329, %v330, %v331
    %v333 = vrot.slane %v323, 1
    %v334 = vrot.slane %v324, 1
    %v335 = vsel %vm329, %v333, %v334
    %v340 = vadd.f32 %v263, %v332
    %v341 = vadd.f32 %v264, %v331
    %v342 = vadd.f32 %v265, %v335
    %v343 = vadd.f32 %v266, %v334
    %s344 = sld [smem:[#allocation5 + $0x25]]
    %v345 = vstv %s344
    %v346 = vmul.f32 %v111, %v345
    %v347 = vmul.f32 %v112, %v345
    %v348 = vmul.f32 %v119, %v345
    %v349 = vmul.f32 %v120, %v345
    %v354 = vrot.slane %v346, 1
    %v355 = vrot.slane %v347, 1
    %v356 = vsel %vm329, %v354, %v355
    %v357 = vrot.slane %v348, 1
    %v358 = vrot.slane %v349, 1
    %v359 = vsel %vm329, %v357, %v358
    %v364 = vadd.f32 %v289, %v356
    %v365 = vadd.f32 %v290, %v355
    %v366 = vadd.f32 %v291, %v359
    %v367 = vadd.f32 %v292, %v358
    %s368 = sld [smem:[#allocation5 + $0x26]]
    %v369 = vstv %s368
    %v370 = vmul.f32 %v111, %v369
    %v371 = vmul.f32 %v112, %v369
    %v372 = vmul.f32 %v119, %v369
    %v373 = vmul.f32 %v120, %v369
    %v378 = vrot.slane %v370, 1
    %v379 = vrot.slane %v371, 1
    %v380 = vsel %vm329, %v378, %v379
    %v381 = vrot.slane %v372, 1
    %v382 = vrot.slane %v373, 1
    %v383 = vsel %vm329, %v381, %v382
    %v388 = vadd.f32 %v315, %v380
    %v389 = vadd.f32 %v316, %v379
    %v390 = vadd.f32 %v317, %v383
    %v391 = vadd.f32 %v318, %v382
    %s392 = sld [smem:[#allocation5 + $0x30]]
    %v393 = vstv %s392
    %v394 = vmul.f32 %v111, %v393
    %v395 = vmul.f32 %v112, %v393
    %v396 = vmul.f32 %v119, %v393
    %v397 = vmul.f32 %v120, %v393
    %v402 = vrot.slane %v394, 1
    %v403 = vrot.slane %v395, 1
    %v404 = vsel %vm329, %v402, %v403
    %v405 = vrot.slane %v396, 1
    %v406 = vrot.slane %v397, 1
    %v407 = vsel %vm329, %v405, %v406
    %408 = vrot.lane.b32.xlu0 %v404, 127
    %v409 = vpop.permute.xlu0 %408
    %410 = vrot.lane.b32.xlu0 %v403, 127
    %v411 = vpop.permute.xlu0 %410
    %412 = vrot.lane.b32.xlu0 %v407, 127
    %v413 = vpop.permute.xlu0 %412
    %414 = vrot.lane.b32.xlu0 %v406, 127
    %v415 = vpop.permute.xlu0 %414
    %v420 = vadd.f32 %v340, %v409
    %v421 = vadd.f32 %v341, %v411
    %v422 = vadd.f32 %v342, %v413
    %v423 = vadd.f32 %v343, %v415
    %s424 = sld [smem:[#allocation5 + $0x31]]
    %v425 = vstv %s424
    %v426 = vmul.f32 %v111, %v425
    %v427 = vmul.f32 %v112, %v425
    %v428 = vmul.f32 %v119, %v425
    %v429 = vmul.f32 %v120, %v425
    %v434 = vrot.slane %v426, 1
    %v435 = vrot.slane %v427, 1
    %v436 = vsel %vm329, %v434, %v435
    %v437 = vrot.slane %v428, 1
    %v438 = vrot.slane %v429, 1
    %v439 = vsel %vm329, %v437, %v438
    %440 = vrot.lane.b32.xlu0 %v436, 127
    %v441 = vpop.permute.xlu0 %440
    %442 = vrot.lane.b32.xlu0 %v435, 127
    %v443 = vpop.permute.xlu0 %442
    %444 = vrot.lane.b32.xlu0 %v439, 127
    %v445 = vpop.permute.xlu0 %444
    %446 = vrot.lane.b32.xlu0 %v438, 127
    %v447 = vpop.permute.xlu0 %446
    %v452 = vadd.f32 %v364, %v441
    %v453 = vadd.f32 %v365, %v443
    %v454 = vadd.f32 %v366, %v445
    %v455 = vadd.f32 %v367, %v447
    %s456 = sld [smem:[#allocation5 + $0x32]]
    %v457 = vstv %s456
    %v458 = vmul.f32 %v111, %v457
    %v459 = vmul.f32 %v112, %v457
    %v460 = vmul.f32 %v119, %v457
    %v461 = vmul.f32 %v120, %v457
    %v466 = vrot.slane %v458, 1
    %v467 = vrot.slane %v459, 1
    %v468 = vsel %vm329, %v466, %v467
    %v469 = vrot.slane %v460, 1
    %v470 = vrot.slane %v461, 1
    %v471 = vsel %vm329, %v469, %v470
    %472 = vrot.lane.b32.xlu0 %v468, 127
    %v473 = vpop.permute.xlu0 %472
    %474 = vrot.lane.b32.xlu0 %v467, 127
    %v475 = vpop.permute.xlu0 %474
    %476 = vrot.lane.b32.xlu0 %v471, 127
    %v477 = vpop.permute.xlu0 %476
    %478 = vrot.lane.b32.xlu0 %v470, 127
    %v479 = vpop.permute.xlu0 %478
    %v484 = vadd.f32 %v388, %v473
    %v485 = vadd.f32 %v389, %v475
    %v486 = vadd.f32 %v390, %v477
    %v487 = vadd.f32 %v391, %v479
    %s488 = sld [smem:[#allocation5 + $0x3c]]
    %v489 = vstv %s488
    %v490 = vmul.f32 %v111, %v489
    %v491 = vmul.f32 %v112, %v489
    %v492 = vmul.f32 %v119, %v489
    %v493 = vmul.f32 %v120, %v489
    %v498 = vrot.slane %v490, 1
    %v499 = vrot.slane %v491, 1
    %v500 = vsel %vm329, %v498, %v499
    %v501 = vrot.slane %v492, 1
    %v502 = vrot.slane %v493, 1
    %v503 = vsel %vm329, %v501, %v502
    %504 = vrot.lane.b32.xlu0 %v500, 126
    %v505 = vpop.permute.xlu0 %504
    %506 = vrot.lane.b32.xlu0 %v499, 126
    %v507 = vpop.permute.xlu0 %506
    %508 = vrot.lane.b32.xlu0 %v503, 126
    %v509 = vpop.permute.xlu0 %508
    %510 = vrot.lane.b32.xlu0 %v502, 126
    %v511 = vpop.permute.xlu0 %510
    %v516 = vadd.f32 %v420, %v505
    %v517 = vadd.f32 %v421, %v507
    %v518 = vadd.f32 %v422, %v509
    %v519 = vadd.f32 %v423, %v511
    %s520 = sld [smem:[#allocation5 + $0x3d]]
    %v521 = vstv %s520
    %v522 = vmul.f32 %v111, %v521
    %v523 = vmul.f32 %v112, %v521
    %v524 = vmul.f32 %v119, %v521
    %v525 = vmul.f32 %v120, %v521
    %v530 = vrot.slane %v522, 1
    %v531 = vrot.slane %v523, 1
    %v532 = vsel %vm329, %v530, %v531
    %v533 = vrot.slane %v524, 1
    %v534 = vrot.slane %v525, 1
    %v535 = vsel %vm329, %v533, %v534
    %536 = vrot.lane.b32.xlu0 %v532, 126
    %v537 = vpop.permute.xlu0 %536
    %538 = vrot.lane.b32.xlu0 %v531, 126
    %v539 = vpop.permute.xlu0 %538
    %540 = vrot.lane.b32.xlu0 %v535, 126
    %v541 = vpop.permute.xlu0 %540
    %542 = vrot.lane.b32.xlu0 %v534, 126
    %v543 = vpop.permute.xlu0 %542
    %v548 = vadd.f32 %v452, %v537
    %v549 = vadd.f32 %v453, %v539
    %v550 = vadd.f32 %v454, %v541
    %v551 = vadd.f32 %v455, %v543
    %s552 = sld [smem:[#allocation5 + $0x3e]]
    %v553 = vstv %s552
    %v554 = vmul.f32 %v111, %v553
    %v555 = vmul.f32 %v112, %v553
    %v556 = vmul.f32 %v119, %v553
    %v557 = vmul.f32 %v120, %v553
    %v562 = vrot.slane %v554, 1
    %v563 = vrot.slane %v555, 1
    %v564 = vsel %vm329, %v562, %v563
    %v565 = vrot.slane %v556, 1
    %v566 = vrot.slane %v557, 1
    %v567 = vsel %vm329, %v565, %v566
    %568 = vrot.lane.b32.xlu0 %v564, 126
    %v569 = vpop.permute.xlu0 %568
    %570 = vrot.lane.b32.xlu0 %v563, 126
    %v571 = vpop.permute.xlu0 %570
    %572 = vrot.lane.b32.xlu0 %v567, 126
    %v573 = vpop.permute.xlu0 %572
    %574 = vrot.lane.b32.xlu0 %v566, 126
    %v575 = vpop.permute.xlu0 %574
    %v580 = vadd.f32 %v484, %v569
    %v581 = vadd.f32 %v485, %v571
    %v582 = vadd.f32 %v486, %v573
    %v583 = vadd.f32 %v487, %v575
    %s584 = sld [smem:[#allocation5 + $0x48]]
    %v585 = vstv %s584
    %v586 = vmul.f32 %v111, %v585
    %v587 = vmul.f32 %v112, %v585
    %v588 = vmul.f32 %v119, %v585
    %v589 = vmul.f32 %v120, %v585
    %vm594 = vcmask 1045504
    %v595 = vrot.slane %v586, 2
    %v596 = vrot.slane %v587, 2
    %v597 = vsel %vm594, %v595, %v596
    %v598 = vrot.slane %v588, 2
    %v599 = vrot.slane %v589, 2
    %v600 = vsel %vm594, %v598, %v599
    %v605 = vadd.f32 %v516, %v597
    %v606 = vadd.f32 %v517, %v596
    %v607 = vadd.f32 %v518, %v600
    %v608 = vadd.f32 %v519, %v599
    %s609 = sld [smem:[#allocation5 + $0x49]]
    %v610 = vstv %s609
    %v611 = vmul.f32 %v111, %v610
    %v612 = vmul.f32 %v112, %v610
    %v613 = vmul.f32 %v119, %v610
    %v614 = vmul.f32 %v120, %v610
    %v619 = vrot.slane %v611, 2
    %v620 = vrot.slane %v612, 2
    %v621 = vsel %vm594, %v619, %v620
    %v622 = vrot.slane %v613, 2
    %v623 = vrot.slane %v614, 2
    %v624 = vsel %vm594, %v622, %v623
    %v629 = vadd.f32 %v548, %v621
    %v630 = vadd.f32 %v549, %v620
    %v631 = vadd.f32 %v550, %v624
    %v632 = vadd.f32 %v551, %v623
    %s633 = sld [smem:[#allocation5 + $0x4a]]
    %v634 = vstv %s633
    %v635 = vmul.f32 %v111, %v634
    %v636 = vmul.f32 %v112, %v634
    %v637 = vmul.f32 %v119, %v634
    %v638 = vmul.f32 %v120, %v634
    %v643 = vrot.slane %v635, 2
    %v644 = vrot.slane %v636, 2
    %v645 = vsel %vm594, %v643, %v644
    %v646 = vrot.slane %v637, 2
    %v647 = vrot.slane %v638, 2
    %v648 = vsel %vm594, %v646, %v647
    %v653 = vadd.f32 %v580, %v645
    %v654 = vadd.f32 %v581, %v644
    %v655 = vadd.f32 %v582, %v648
    %v656 = vadd.f32 %v583, %v647
    %s657 = sld [smem:[#allocation5 + $0x54]]
    %v658 = vstv %s657
    %v659 = vmul.f32 %v111, %v658
    %v660 = vmul.f32 %v112, %v658
    %v661 = vmul.f32 %v119, %v658
    %v662 = vmul.f32 %v120, %v658
    %v667 = vrot.slane %v659, 2
    %v668 = vrot.slane %v660, 2
    %v669 = vsel %vm594, %v667, %v668
    %v670 = vrot.slane %v661, 2
    %v671 = vrot.slane %v662, 2
    %v672 = vsel %vm594, %v670, %v671
    %673 = vrot.lane.b32.xlu0 %v669, 127
    %v674 = vpop.permute.xlu0 %673
    %675 = vrot.lane.b32.xlu0 %v668, 127
    %v676 = vpop.permute.xlu0 %675
    %677 = vrot.lane.b32.xlu0 %v672, 127
    %v678 = vpop.permute.xlu0 %677
    %679 = vrot.lane.b32.xlu0 %v671, 127
    %v680 = vpop.permute.xlu0 %679
    %v685 = vadd.f32 %v605, %v674
    %v686 = vadd.f32 %v606, %v676
    %v687 = vadd.f32 %v607, %v678
    %v688 = vadd.f32 %v608, %v680
    %s689 = sld [smem:[#allocation5 + $0x55]]
    %v690 = vstv %s689
    %v691 = vmul.f32 %v111, %v690
    %v692 = vmul.f32 %v112, %v690
    %v693 = vmul.f32 %v119, %v690
    %v694 = vmul.f32 %v120, %v690
    %v699 = vrot.slane %v691, 2
    %v700 = vrot.slane %v692, 2
    %v701 = vsel %vm594, %v699, %v700
    %v702 = vrot.slane %v693, 2
    %v703 = vrot.slane %v694, 2
    %v704 = vsel %vm594, %v702, %v703
    %705 = vrot.lane.b32.xlu0 %v701, 127
    %v706 = vpop.permute.xlu0 %705
    %707 = vrot.lane.b32.xlu0 %v700, 127
    %v708 = vpop.permute.xlu0 %707
    %709 = vrot.lane.b32.xlu0 %v704, 127
    %v710 = vpop.permute.xlu0 %709
    %711 = vrot.lane.b32.xlu0 %v703, 127
    %v712 = vpop.permute.xlu0 %711
    %v717 = vadd.f32 %v629, %v706
    %v718 = vadd.f32 %v630, %v708
    %v719 = vadd.f32 %v631, %v710
    %v720 = vadd.f32 %v632, %v712
    %s721 = sld [smem:[#allocation5 + $0x56]]
    %v722 = vstv %s721
    %v723 = vmul.f32 %v111, %v722
    %v724 = vmul.f32 %v112, %v722
    %v725 = vmul.f32 %v119, %v722
    %v726 = vmul.f32 %v120, %v722
    %v731 = vrot.slane %v723, 2
    %v732 = vrot.slane %v724, 2
    %v733 = vsel %vm594, %v731, %v732
    %v734 = vrot.slane %v725, 2
    %v735 = vrot.slane %v726, 2
    %v736 = vsel %vm594, %v734, %v735
    %737 = vrot.lane.b32.xlu0 %v733, 127
    %v738 = vpop.permute.xlu0 %737
    %739 = vrot.lane.b32.xlu0 %v732, 127
    %v740 = vpop.permute.xlu0 %739
    %741 = vrot.lane.b32.xlu0 %v736, 127
    %v742 = vpop.permute.xlu0 %741
    %743 = vrot.lane.b32.xlu0 %v735, 127
    %v744 = vpop.permute.xlu0 %743
    %v749 = vadd.f32 %v653, %v738
    %v750 = vadd.f32 %v654, %v740
    %v751 = vadd.f32 %v655, %v742
    %v752 = vadd.f32 %v656, %v744
    %s753 = sld [smem:[#allocation5 + $0x60]]
    %v754 = vstv %s753
    %v755 = vmul.f32 %v111, %v754
    %v756 = vmul.f32 %v112, %v754
    %v757 = vmul.f32 %v119, %v754
    %v758 = vmul.f32 %v120, %v754
    %v763 = vrot.slane %v755, 2
    %v764 = vrot.slane %v756, 2
    %v765 = vsel %vm594, %v763, %v764
    %v766 = vrot.slane %v757, 2
    %v767 = vrot.slane %v758, 2
    %v768 = vsel %vm594, %v766, %v767
    %769 = vrot.lane.b32.xlu0 %v765, 126
    %v770 = vpop.permute.xlu0 %769
    %771 = vrot.lane.b32.xlu0 %v764, 126
    %v772 = vpop.permute.xlu0 %771
    %773 = vrot.lane.b32.xlu0 %v768, 126
    %v774 = vpop.permute.xlu0 %773
    %775 = vrot.lane.b32.xlu0 %v767, 126
    %v776 = vpop.permute.xlu0 %775
    %v781 = vadd.f32 %v685, %v770
    %v782 = vadd.f32 %v686, %v772
    %v783 = vadd.f32 %v687, %v774
    %v784 = vadd.f32 %v688, %v776
    %s785 = sld [smem:[#allocation5 + $0x61]]
    %v786 = vstv %s785
    %v787 = vmul.f32 %v111, %v786
    %v788 = vmul.f32 %v112, %v786
    %v789 = vmul.f32 %v119, %v786
    %v790 = vmul.f32 %v120, %v786
    %v795 = vrot.slane %v787, 2
    %v796 = vrot.slane %v788, 2
    %v797 = vsel %vm594, %v795, %v796
    %v798 = vrot.slane %v789, 2
    %v799 = vrot.slane %v790, 2
    %v800 = vsel %vm594, %v798, %v799
    %801 = vrot.lane.b32.xlu0 %v797, 126
    %v802 = vpop.permute.xlu0 %801
    %803 = vrot.lane.b32.xlu0 %v796, 126
    %v804 = vpop.permute.xlu0 %803
    %805 = vrot.lane.b32.xlu0 %v800, 126
    %v806 = vpop.permute.xlu0 %805
    %807 = vrot.lane.b32.xlu0 %v799, 126
    %v808 = vpop.permute.xlu0 %807
    %v813 = vadd.f32 %v717, %v802
    %v814 = vadd.f32 %v718, %v804
    %v815 = vadd.f32 %v719, %v806
    %v816 = vadd.f32 %v720, %v808
    %s817 = sld [smem:[#allocation5 + $0x62]]
    %v818 = vstv %s817
    %v819 = vmul.f32 %v111, %v818
    %v820 = vmul.f32 %v112, %v818
    %v821 = vmul.f32 %v119, %v818
    %v822 = vmul.f32 %v120, %v818
    %v827 = vrot.slane %v819, 2
    %v828 = vrot.slane %v820, 2
    %v829 = vsel %vm594, %v827, %v828
    %v830 = vrot.slane %v821, 2
    %v831 = vrot.slane %v822, 2
    %v832 = vsel %vm594, %v830, %v831
    %833 = vrot.lane.b32.xlu0 %v829, 126
    %v834 = vpop.permute.xlu0 %833
    %835 = vrot.lane.b32.xlu0 %v828, 126
    %v836 = vpop.permute.xlu0 %835
    %837 = vrot.lane.b32.xlu0 %v832, 126
    %v838 = vpop.permute.xlu0 %837
    %839 = vrot.lane.b32.xlu0 %v831, 126
    %v840 = vpop.permute.xlu0 %839
    %v845 = vadd.f32 %v749, %v834
    %v846 = vadd.f32 %v750, %v836
    %v847 = vadd.f32 %v751, %v838
    %v848 = vadd.f32 %v752, %v840
    %s849 = sld [smem:[#allocation5 + $0x3]]
    %v850 = vstv %s849
    %v851 = vmul.f32 %v113, %v850
    %v852 = vmul.f32 %v114, %v850
    %v853 = vmul.f32 %v121, %v850
    %v854 = vmul.f32 %v122, %v850
    %v855 = vadd.f32 %v781, %v851
    %v856 = vadd.f32 %v782, %v852
    %v857 = vadd.f32 %v783, %v853
    %v858 = vadd.f32 %v784, %v854
    %s859 = sld [smem:[#allocation5 + $0x4]]
    %v860 = vstv %s859
    %v861 = vmul.f32 %v113, %v860
    %v862 = vmul.f32 %v114, %v860
    %v863 = vmul.f32 %v121, %v860
    %v864 = vmul.f32 %v122, %v860
    %v865 = vadd.f32 %v813, %v861
    %v866 = vadd.f32 %v814, %v862
    %v867 = vadd.f32 %v815, %v863
    %v868 = vadd.f32 %v816, %v864
    %s869 = sld [smem:[#allocation5 + $0x5]]
    %v870 = vstv %s869
    %v871 = vmul.f32 %v113, %v870
    %v872 = vmul.f32 %v114, %v870
    %v873 = vmul.f32 %v121, %v870
    %v874 = vmul.f32 %v122, %v870
    %v875 = vadd.f32 %v845, %v871
    %v876 = vadd.f32 %v846, %v872
    %v877 = vadd.f32 %v847, %v873
    %v878 = vadd.f32 %v848, %v874
    %s879 = sld [smem:[#allocation5 + $0xf]]
    %v880 = vstv %s879
    %v881 = vmul.f32 %v113, %v880
    %v882 = vmul.f32 %v114, %v880
    %v883 = vmul.f32 %v121, %v880
    %v884 = vmul.f32 %v122, %v880
    %889 = vrot.lane.b32.xlu0 %v881, 127
    %v890 = vpop.permute.xlu0 %889
    %891 = vrot.lane.b32.xlu0 %v882, 127
    %v892 = vpop.permute.xlu0 %891
    %893 = vrot.lane.b32.xlu0 %v883, 127
    %v894 = vpop.permute.xlu0 %893
    %895 = vrot.lane.b32.xlu0 %v884, 127
    %v896 = vpop.permute.xlu0 %895
    %v901 = vadd.f32 %v855, %v890
    %v902 = vadd.f32 %v856, %v892
    %v903 = vadd.f32 %v857, %v894
    %v904 = vadd.f32 %v858, %v896
    %s905 = sld [smem:[#allocation5 + $0x10]]
    %v906 = vstv %s905
    %v907 = vmul.f32 %v113, %v906
    %v908 = vmul.f32 %v114, %v906
    %v909 = vmul.f32 %v121, %v906
    %v910 = vmul.f32 %v122, %v906
    %915 = vrot.lane.b32.xlu0 %v907, 127
    %v916 = vpop.permute.xlu0 %915
    %917 = vrot.lane.b32.xlu0 %v908, 127
    %v918 = vpop.permute.xlu0 %917
    %919 = vrot.lane.b32.xlu0 %v909, 127
    %v920 = vpop.permute.xlu0 %919
    %921 = vrot.lane.b32.xlu0 %v910, 127
    %v922 = vpop.permute.xlu0 %921
    %v927 = vadd.f32 %v865, %v916
    %v928 = vadd.f32 %v866, %v918
    %v929 = vadd.f32 %v867, %v920
    %v930 = vadd.f32 %v868, %v922
    %s931 = sld [smem:[#allocation5 + $0x11]]
    %v932 = vstv %s931
    %v933 = vmul.f32 %v113, %v932
    %v934 = vmul.f32 %v114, %v932
    %v935 = vmul.f32 %v121, %v932
    %v936 = vmul.f32 %v122, %v932
    %941 = vrot.lane.b32.xlu0 %v933, 127
    %v942 = vpop.permute.xlu0 %941
    %943 = vrot.lane.b32.xlu0 %v934, 127
    %v944 = vpop.permute.xlu0 %943
    %945 = vrot.lane.b32.xlu0 %v935, 127
    %v946 = vpop.permute.xlu0 %945
    %947 = vrot.lane.b32.xlu0 %v936, 127
    %v948 = vpop.permute.xlu0 %947
    %v953 = vadd.f32 %v875, %v942
    %v954 = vadd.f32 %v876, %v944
    %v955 = vadd.f32 %v877, %v946
    %v956 = vadd.f32 %v878, %v948
    %s957 = sld [smem:[#allocation5 + $0x1b]]
    %v958 = vstv %s957
    %v959 = vmul.f32 %v113, %v958
    %v960 = vmul.f32 %v114, %v958
    %v961 = vmul.f32 %v121, %v958
    %v962 = vmul.f32 %v122, %v958
    %967 = vrot.lane.b32.xlu0 %v959, 126
    %v968 = vpop.permute.xlu0 %967
    %969 = vrot.lane.b32.xlu0 %v960, 126
    %v970 = vpop.permute.xlu0 %969
    %971 = vrot.lane.b32.xlu0 %v961, 126
    %v972 = vpop.permute.xlu0 %971
    %973 = vrot.lane.b32.xlu0 %v962, 126
    %v974 = vpop.permute.xlu0 %973
    %v979 = vadd.f32 %v901, %v968
    %v980 = vadd.f32 %v902, %v970
    %v981 = vadd.f32 %v903, %v972
    %v982 = vadd.f32 %v904, %v974
    %s983 = sld [smem:[#allocation5 + $0x1c]]
    %v984 = vstv %s983
    %v985 = vmul.f32 %v113, %v984
    %v986 = vmul.f32 %v114, %v984
    %v987 = vmul.f32 %v121, %v984
    %v988 = vmul.f32 %v122, %v984
    %993 = vrot.lane.b32.xlu0 %v985, 126
    %v994 = vpop.permute.xlu0 %993
    %995 = vrot.lane.b32.xlu0 %v986, 126
    %v996 = vpop.permute.xlu0 %995
    %997 = vrot.lane.b32.xlu0 %v987, 126
    %v998 = vpop.permute.xlu0 %997
    %999 = vrot.lane.b32.xlu0 %v988, 126
    %v1000 = vpop.permute.xlu0 %999
    %v1005 = vadd.f32 %v927, %v994
    %v1006 = vadd.f32 %v928, %v996
    %v1007 = vadd.f32 %v929, %v998
    %v1008 = vadd.f32 %v930, %v1000
    %s1009 = sld [smem:[#allocation5 + $0x1d]]
    %v1010 = vstv %s1009
    %v1011 = vmul.f32 %v113, %v1010
    %v1012 = vmul.f32 %v114, %v1010
    %v1013 = vmul.f32 %v121, %v1010
    %v1014 = vmul.f32 %v122, %v1010
    %1019 = vrot.lane.b32.xlu0 %v1011, 126
    %v1020 = vpop.permute.xlu0 %1019
    %1021 = vrot.lane.b32.xlu0 %v1012, 126
    %v1022 = vpop.permute.xlu0 %1021
    %1023 = vrot.lane.b32.xlu0 %v1013, 126
    %v1024 = vpop.permute.xlu0 %1023
    %1025 = vrot.lane.b32.xlu0 %v1014, 126
    %v1026 = vpop.permute.xlu0 %1025
    %v1031 = vadd.f32 %v953, %v1020
    %v1032 = vadd.f32 %v954, %v1022
    %v1033 = vadd.f32 %v955, %v1024
    %v1034 = vadd.f32 %v956, %v1026
    %s1035 = sld [smem:[#allocation5 + $0x27]]
    %v1036 = vstv %s1035
    %v1037 = vmul.f32 %v113, %v1036
    %v1038 = vmul.f32 %v114, %v1036
    %v1039 = vmul.f32 %v121, %v1036
    %v1040 = vmul.f32 %v122, %v1036
    %v1045 = vrot.slane %v1037, 1
    %v1046 = vrot.slane %v1038, 1
    %v1047 = vsel %vm329, %v1045, %v1046
    %v1048 = vrot.slane %v1039, 1
    %v1049 = vrot.slane %v1040, 1
    %v1050 = vsel %vm329, %v1048, %v1049
    %v1055 = vadd.f32 %v979, %v1047
    %v1056 = vadd.f32 %v980, %v1046
    %v1057 = vadd.f32 %v981, %v1050
    %v1058 = vadd.f32 %v982, %v1049
    %s1059 = sld [smem:[#allocation5 + $0x28]]
    %v1060 = vstv %s1059
    %v1061 = vmul.f32 %v113, %v1060
    %v1062 = vmul.f32 %v114, %v1060
    %v1063 = vmul.f32 %v121, %v1060
    %v1064 = vmul.f32 %v122, %v1060
    %v1069 = vrot.slane %v1061, 1
    %v1070 = vrot.slane %v1062, 1
    %v1071 = vsel %vm329, %v1069, %v1070
    %v1072 = vrot.slane %v1063, 1
    %v1073 = vrot.slane %v1064, 1
    %v1074 = vsel %vm329, %v1072, %v1073
    %v1079 = vadd.f32 %v1005, %v1071
    %v1080 = vadd.f32 %v1006, %v1070
    %v1081 = vadd.f32 %v1007, %v1074
    %v1082 = vadd.f32 %v1008, %v1073
    %s1083 = sld [smem:[#allocation5 + $0x29]]
    %v1084 = vstv %s1083
    %v1085 = vmul.f32 %v113, %v1084
    %v1086 = vmul.f32 %v114, %v1084
    %v1087 = vmul.f32 %v121, %v1084
    %v1088 = vmul.f32 %v122, %v1084
    %v1093 = vrot.slane %v1085, 1
    %v1094 = vrot.slane %v1086, 1
    %v1095 = vsel %vm329, %v1093, %v1094
    %v1096 = vrot.slane %v1087, 1
    %v1097 = vrot.slane %v1088, 1
    %v1098 = vsel %vm329, %v1096, %v1097
    %v1103 = vadd.f32 %v1031, %v1095
    %v1104 = vadd.f32 %v1032, %v1094
    %v1105 = vadd.f32 %v1033, %v1098
    %v1106 = vadd.f32 %v1034, %v1097
    %s1107 = sld [smem:[#allocation5 + $0x33]]
    %v1108 = vstv %s1107
    %v1109 = vmul.f32 %v113, %v1108
    %v1110 = vmul.f32 %v114, %v1108
    %v1111 = vmul.f32 %v121, %v1108
    %v1112 = vmul.f32 %v122, %v1108
    %v1117 = vrot.slane %v1109, 1
    %v1118 = vrot.slane %v1110, 1
    %v1119 = vsel %vm329, %v1117, %v1118
    %v1120 = vrot.slane %v1111, 1
    %v1121 = vrot.slane %v1112, 1
    %v1122 = vsel %vm329, %v1120, %v1121
    %1123 = vrot.lane.b32.xlu0 %v1119, 127
    %v1124 = vpop.permute.xlu0 %1123
    %1125 = vrot.lane.b32.xlu0 %v1118, 127
    %v1126 = vpop.permute.xlu0 %1125
    %1127 = vrot.lane.b32.xlu0 %v1122, 127
    %v1128 = vpop.permute.xlu0 %1127
    %1129 = vrot.lane.b32.xlu0 %v1121, 127
    %v1130 = vpop.permute.xlu0 %1129
    %v1135 = vadd.f32 %v1055, %v1124
    %v1136 = vadd.f32 %v1056, %v1126
    %v1137 = vadd.f32 %v1057, %v1128
    %v1138 = vadd.f32 %v1058, %v1130
    %s1139 = sld [smem:[#allocation5 + $0x34]]
    %v1140 = vstv %s1139
    %v1141 = vmul.f32 %v113, %v1140
    %v1142 = vmul.f32 %v114, %v1140
    %v1143 = vmul.f32 %v121, %v1140
    %v1144 = vmul.f32 %v122, %v1140
    %v1149 = vrot.slane %v1141, 1
    %v1150 = vrot.slane %v1142, 1
    %v1151 = vsel %vm329, %v1149, %v1150
    %v1152 = vrot.slane %v1143, 1
    %v1153 = vrot.slane %v1144, 1
    %v1154 = vsel %vm329, %v1152, %v1153
    %1155 = vrot.lane.b32.xlu0 %v1151, 127
    %v1156 = vpop.permute.xlu0 %1155
    %1157 = vrot.lane.b32.xlu0 %v1150, 127
    %v1158 = vpop.permute.xlu0 %1157
    %1159 = vrot.lane.b32.xlu0 %v1154, 127
    %v1160 = vpop.permute.xlu0 %1159
    %1161 = vrot.lane.b32.xlu0 %v1153, 127
    %v1162 = vpop.permute.xlu0 %1161
    %v1167 = vadd.f32 %v1079, %v1156
    %v1168 = vadd.f32 %v1080, %v1158
    %v1169 = vadd.f32 %v1081, %v1160
    %v1170 = vadd.f32 %v1082, %v1162
    %s1171 = sld [smem:[#allocation5 + $0x35]]
    %v1172 = vstv %s1171
    %v1173 = vmul.f32 %v113, %v1172
    %v1174 = vmul.f32 %v114, %v1172
    %v1175 = vmul.f32 %v121, %v1172
    %v1176 = vmul.f32 %v122, %v1172
    %v1181 = vrot.slane %v1173, 1
    %v1182 = vrot.slane %v1174, 1
    %v1183 = vsel %vm329, %v1181, %v1182
    %v1184 = vrot.slane %v1175, 1
    %v1185 = vrot.slane %v1176, 1
    %v1186 = vsel %vm329, %v1184, %v1185
    %1187 = vrot.lane.b32.xlu0 %v1183, 127
    %v1188 = vpop.permute.xlu0 %1187
    %1189 = vrot.lane.b32.xlu0 %v1182, 127
    %v1190 = vpop.permute.xlu0 %1189
    %1191 = vrot.lane.b32.xlu0 %v1186, 127
    %v1192 = vpop.permute.xlu0 %1191
    %1193 = vrot.lane.b32.xlu0 %v1185, 127
    %v1194 = vpop.permute.xlu0 %1193
    %v1199 = vadd.f32 %v1103, %v1188
    %v1200 = vadd.f32 %v1104, %v1190
    %v1201 = vadd.f32 %v1105, %v1192
    %v1202 = vadd.f32 %v1106, %v1194
    %s1203 = sld [smem:[#allocation5 + $0x3f]]
    %v1204 = vstv %s1203
    %v1205 = vmul.f32 %v113, %v1204
    %v1206 = vmul.f32 %v114, %v1204
    %v1207 = vmul.f32 %v121, %v1204
    %v1208 = vmul.f32 %v122, %v1204
    %v1213 = vrot.slane %v1205, 1
    %v1214 = vrot.slane %v1206, 1
    %v1215 = vsel %vm329, %v1213, %v1214
    %v1216 = vrot.slane %v1207, 1
    %v1217 = vrot.slane %v1208, 1
    %v1218 = vsel %vm329, %v1216, %v1217
    %1219 = vrot.lane.b32.xlu0 %v1215, 126
    %v1220 = vpop.permute.xlu0 %1219
    %1221 = vrot.lane.b32.xlu0 %v1214, 126
    %v1222 = vpop.permute.xlu0 %1221
    %1223 = vrot.lane.b32.xlu0 %v1218, 126
    %v1224 = vpop.permute.xlu0 %1223
    %1225 = vrot.lane.b32.xlu0 %v1217, 126
    %v1226 = vpop.permute.xlu0 %1225
    %v1231 = vadd.f32 %v1135, %v1220
    %v1232 = vadd.f32 %v1136, %v1222
    %v1233 = vadd.f32 %v1137, %v1224
    %v1234 = vadd.f32 %v1138, %v1226
    %s1235 = sld [smem:[#allocation5 + $0x40]]
    %v1236 = vstv %s1235
    %v1237 = vmul.f32 %v113, %v1236
    %v1238 = vmul.f32 %v114, %v1236
    %v1239 = vmul.f32 %v121, %v1236
    %v1240 = vmul.f32 %v122, %v1236
    %v1245 = vrot.slane %v1237, 1
    %v1246 = vrot.slane %v1238, 1
    %v1247 = vsel %vm329, %v1245, %v1246
    %v1248 = vrot.slane %v1239, 1
    %v1249 = vrot.slane %v1240, 1
    %v1250 = vsel %vm329, %v1248, %v1249
    %1251 = vrot.lane.b32.xlu0 %v1247, 126
    %v1252 = vpop.permute.xlu0 %1251
    %1253 = vrot.lane.b32.xlu0 %v1246, 126
    %v1254 = vpop.permute.xlu0 %1253
    %1255 = vrot.lane.b32.xlu0 %v1250, 126
    %v1256 = vpop.permute.xlu0 %1255
    %1257 = vrot.lane.b32.xlu0 %v1249, 126
    %v1258 = vpop.permute.xlu0 %1257
    %v1263 = vadd.f32 %v1167, %v1252
    %v1264 = vadd.f32 %v1168, %v1254
    %v1265 = vadd.f32 %v1169, %v1256
    %v1266 = vadd.f32 %v1170, %v1258
    %s1267 = sld [smem:[#allocation5 + $0x41]]
    %v1268 = vstv %s1267
    %v1269 = vmul.f32 %v113, %v1268
    %v1270 = vmul.f32 %v114, %v1268
    %v1271 = vmul.f32 %v121, %v1268
    %v1272 = vmul.f32 %v122, %v1268
    %v1277 = vrot.slane %v1269, 1
    %v1278 = vrot.slane %v1270, 1
    %v1279 = vsel %vm329, %v1277, %v1278
    %v1280 = vrot.slane %v1271, 1
    %v1281 = vrot.slane %v1272, 1
    %v1282 = vsel %vm329, %v1280, %v1281
    %1283 = vrot.lane.b32.xlu0 %v1279, 126
    %v1284 = vpop.permute.xlu0 %1283
    %1285 = vrot.lane.b32.xlu0 %v1278, 126
    %v1286 = vpop.permute.xlu0 %1285
    %1287 = vrot.lane.b32.xlu0 %v1282, 126
    %v1288 = vpop.permute.xlu0 %1287
    %1289 = vrot.lane.b32.xlu0 %v1281, 126
    %v1290 = vpop.permute.xlu0 %1289
    %v1295 = vadd.f32 %v1199, %v1284
    %v1296 = vadd.f32 %v1200, %v1286
    %v1297 = vadd.f32 %v1201, %v1288
    %v1298 = vadd.f32 %v1202, %v1290
    %s1299 = sld [smem:[#allocation5 + $0x4b]]
    %v1300 = vstv %s1299
    %v1301 = vmul.f32 %v113, %v1300
    %v1302 = vmul.f32 %v114, %v1300
    %v1303 = vmul.f32 %v121, %v1300
    %v1304 = vmul.f32 %v122, %v1300
    %v1309 = vrot.slane %v1301, 2
    %v1310 = vrot.slane %v1302, 2
    %v1311 = vsel %vm594, %v1309, %v1310
    %v1312 = vrot.slane %v1303, 2
    %v1313 = vrot.slane %v1304, 2
    %v1314 = vsel %vm594, %v1312, %v1313
    %v1319 = vadd.f32 %v1231, %v1311
    %v1320 = vadd.f32 %v1232, %v1310
    %v1321 = vadd.f32 %v1233, %v1314
    %v1322 = vadd.f32 %v1234, %v1313
    %s1323 = sld [smem:[#allocation5 + $0x4c]]
    %v1324 = vstv %s1323
    %v1325 = vmul.f32 %v113, %v1324
    %v1326 = vmul.f32 %v114, %v1324
    %v1327 = vmul.f32 %v121, %v1324
    %v1328 = vmul.f32 %v122, %v1324
    %v1333 = vrot.slane %v1325, 2
    %v1334 = vrot.slane %v1326, 2
    %v1335 = vsel %vm594, %v1333, %v1334
    %v1336 = vrot.slane %v1327, 2
    %v1337 = vrot.slane %v1328, 2
    %v1338 = vsel %vm594, %v1336, %v1337
    %v1343 = vadd.f32 %v1263, %v1335
    %v1344 = vadd.f32 %v1264, %v1334
    %v1345 = vadd.f32 %v1265, %v1338
    %v1346 = vadd.f32 %v1266, %v1337
    %s1347 = sld [smem:[#allocation5 + $0x4d]]
    %v1348 = vstv %s1347
    %v1349 = vmul.f32 %v113, %v1348
    %v1350 = vmul.f32 %v114, %v1348
    %v1351 = vmul.f32 %v121, %v1348
    %v1352 = vmul.f32 %v122, %v1348
    %v1357 = vrot.slane %v1349, 2
    %v1358 = vrot.slane %v1350, 2
    %v1359 = vsel %vm594, %v1357, %v1358
    %v1360 = vrot.slane %v1351, 2
    %v1361 = vrot.slane %v1352, 2
    %v1362 = vsel %vm594, %v1360, %v1361
    %v1367 = vadd.f32 %v1295, %v1359
    %v1368 = vadd.f32 %v1296, %v1358
    %v1369 = vadd.f32 %v1297, %v1362
    %v1370 = vadd.f32 %v1298, %v1361
    %s1371 = sld [smem:[#allocation5 + $0x57]]
    %v1372 = vstv %s1371
    %v1373 = vmul.f32 %v113, %v1372
    %v1374 = vmul.f32 %v114, %v1372
    %v1375 = vmul.f32 %v121, %v1372
    %v1376 = vmul.f32 %v122, %v1372
    %v1381 = vrot.slane %v1373, 2
    %v1382 = vrot.slane %v1374, 2
    %v1383 = vsel %vm594, %v1381, %v1382
    %v1384 = vrot.slane %v1375, 2
    %v1385 = vrot.slane %v1376, 2
    %v1386 = vsel %vm594, %v1384, %v1385
    %1387 = vrot.lane.b32.xlu0 %v1383, 127
    %v1388 = vpop.permute.xlu0 %1387
    %1389 = vrot.lane.b32.xlu0 %v1382, 127
    %v1390 = vpop.permute.xlu0 %1389
    %1391 = vrot.lane.b32.xlu0 %v1386, 127
    %v1392 = vpop.permute.xlu0 %1391
    %1393 = vrot.lane.b32.xlu0 %v1385, 127
    %v1394 = vpop.permute.xlu0 %1393
    %v1399 = vadd.f32 %v1319, %v1388
    %v1400 = vadd.f32 %v1320, %v1390
    %v1401 = vadd.f32 %v1321, %v1392
    %v1402 = vadd.f32 %v1322, %v1394
    %s1403 = sld [smem:[#allocation5 + $0x58]]
    %v1404 = vstv %s1403
    %v1405 = vmul.f32 %v113, %v1404
    %v1406 = vmul.f32 %v114, %v1404
    %v1407 = vmul.f32 %v121, %v1404
    %v1408 = vmul.f32 %v122, %v1404
    %v1413 = vrot.slane %v1405, 2
    %v1414 = vrot.slane %v1406, 2
    %v1415 = vsel %vm594, %v1413, %v1414
    %v1416 = vrot.slane %v1407, 2
    %v1417 = vrot.slane %v1408, 2
    %v1418 = vsel %vm594, %v1416, %v1417
    %1419 = vrot.lane.b32.xlu0 %v1415, 127
    %v1420 = vpop.permute.xlu0 %1419
    %1421 = vrot.lane.b32.xlu0 %v1414, 127
    %v1422 = vpop.permute.xlu0 %1421
    %1423 = vrot.lane.b32.xlu0 %v1418, 127
    %v1424 = vpop.permute.xlu0 %1423
    %1425 = vrot.lane.b32.xlu0 %v1417, 127
    %v1426 = vpop.permute.xlu0 %1425
    %v1431 = vadd.f32 %v1343, %v1420
    %v1432 = vadd.f32 %v1344, %v1422
    %v1433 = vadd.f32 %v1345, %v1424
    %v1434 = vadd.f32 %v1346, %v1426
    %s1435 = sld [smem:[#allocation5 + $0x59]]
    %v1436 = vstv %s1435
    %v1437 = vmul.f32 %v113, %v1436
    %v1438 = vmul.f32 %v114, %v1436
    %v1439 = vmul.f32 %v121, %v1436
    %v1440 = vmul.f32 %v122, %v1436
    %v1445 = vrot.slane %v1437, 2
    %v1446 = vrot.slane %v1438, 2
    %v1447 = vsel %vm594, %v1445, %v1446
    %v1448 = vrot.slane %v1439, 2
    %v1449 = vrot.slane %v1440, 2
    %v1450 = vsel %vm594, %v1448, %v1449
    %1451 = vrot.lane.b32.xlu0 %v1447, 127
    %v1452 = vpop.permute.xlu0 %1451
    %1453 = vrot.lane.b32.xlu0 %v1446, 127
    %v1454 = vpop.permute.xlu0 %1453
    %1455 = vrot.lane.b32.xlu0 %v1450, 127
    %v1456 = vpop.permute.xlu0 %1455
    %1457 = vrot.lane.b32.xlu0 %v1449, 127
    %v1458 = vpop.permute.xlu0 %1457
    %v1463 = vadd.f32 %v1367, %v1452
    %v1464 = vadd.f32 %v1368, %v1454
    %v1465 = vadd.f32 %v1369, %v1456
    %v1466 = vadd.f32 %v1370, %v1458
    %s1467 = sld [smem:[#allocation5 + $0x63]]
    %v1468 = vstv %s1467
    %v1469 = vmul.f32 %v113, %v1468
    %v1470 = vmul.f32 %v114, %v1468
    %v1471 = vmul.f32 %v121, %v1468
    %v1472 = vmul.f32 %v122, %v1468
    %v1477 = vrot.slane %v1469, 2
    %v1478 = vrot.slane %v1470, 2
    %v1479 = vsel %vm594, %v1477, %v1478
    %v1480 = vrot.slane %v1471, 2
    %v1481 = vrot.slane %v1472, 2
    %v1482 = vsel %vm594, %v1480, %v1481
    %1483 = vrot.lane.b32.xlu0 %v1479, 126
    %v1484 = vpop.permute.xlu0 %1483
    %1485 = vrot.lane.b32.xlu0 %v1478, 126
    %v1486 = vpop.permute.xlu0 %1485
    %1487 = vrot.lane.b32.xlu0 %v1482, 126
    %v1488 = vpop.permute.xlu0 %1487
    %1489 = vrot.lane.b32.xlu0 %v1481, 126
    %v1490 = vpop.permute.xlu0 %1489
    %v1495 = vadd.f32 %v1399, %v1484
    %v1496 = vadd.f32 %v1400, %v1486
    %v1497 = vadd.f32 %v1401, %v1488
    %v1498 = vadd.f32 %v1402, %v1490
    %s1499 = sld [smem:[#allocation5 + $0x64]]
    %v1500 = vstv %s1499
    %v1501 = vmul.f32 %v113, %v1500
    %v1502 = vmul.f32 %v114, %v1500
    %v1503 = vmul.f32 %v121, %v1500
    %v1504 = vmul.f32 %v122, %v1500
    %v1509 = vrot.slane %v1501, 2
    %v1510 = vrot.slane %v1502, 2
    %v1511 = vsel %vm594, %v1509, %v1510
    %v1512 = vrot.slane %v1503, 2
    %v1513 = vrot.slane %v1504, 2
    %v1514 = vsel %vm594, %v1512, %v1513
    %1515 = vrot.lane.b32.xlu0 %v1511, 126
    %v1516 = vpop.permute.xlu0 %1515
    %1517 = vrot.lane.b32.xlu0 %v1510, 126
    %v1518 = vpop.permute.xlu0 %1517
    %1519 = vrot.lane.b32.xlu0 %v1514, 126
    %v1520 = vpop.permute.xlu0 %1519
    %1521 = vrot.lane.b32.xlu0 %v1513, 126
    %v1522 = vpop.permute.xlu0 %1521
    %v1527 = vadd.f32 %v1431, %v1516
    %v1528 = vadd.f32 %v1432, %v1518
    %v1529 = vadd.f32 %v1433, %v1520
    %v1530 = vadd.f32 %v1434, %v1522
    %s1531 = sld [smem:[#allocation5 + $0x65]]
    %v1532 = vstv %s1531
    %v1533 = vmul.f32 %v113, %v1532
    %v1534 = vmul.f32 %v114, %v1532
    %v1535 = vmul.f32 %v121, %v1532
    %v1536 = vmul.f32 %v122, %v1532
    %v1541 = vrot.slane %v1533, 2
    %v1542 = vrot.slane %v1534, 2
    %v1543 = vsel %vm594, %v1541, %v1542
    %v1544 = vrot.slane %v1535, 2
    %v1545 = vrot.slane %v1536, 2
    %v1546 = vsel %vm594, %v1544, %v1545
    %1547 = vrot.lane.b32.xlu0 %v1543, 126
    %v1548 = vpop.permute.xlu0 %1547
    %1549 = vrot.lane.b32.xlu0 %v1542, 126
    %v1550 = vpop.permute.xlu0 %1549
    %1551 = vrot.lane.b32.xlu0 %v1546, 126
    %v1552 = vpop.permute.xlu0 %1551
    %1553 = vrot.lane.b32.xlu0 %v1545, 126
    %v1554 = vpop.permute.xlu0 %1553
    %v1559 = vadd.f32 %v1463, %v1548
    %v1560 = vadd.f32 %v1464, %v1550
    %v1561 = vadd.f32 %v1465, %v1552
    %v1562 = vadd.f32 %v1466, %v1554
    %s1563 = sld [smem:[#allocation5 + $0x6]]
    %v1564 = vstv %s1563
    %v1565 = vmul.f32 %v115, %v1564
    %v1566 = vmul.f32 %v116, %v1564
    %v1567 = vmul.f32 %v123, %v1564
    %v1568 = vmul.f32 %v124, %v1564
    %v1569 = vadd.f32 %v1495, %v1565
    %v1570 = vadd.f32 %v1496, %v1566
    %v1571 = vadd.f32 %v1497, %v1567
    %v1572 = vadd.f32 %v1498, %v1568
    %s1573 = sld [smem:[#allocation5 + $0x7]]
    %v1574 = vstv %s1573
    %v1575 = vmul.f32 %v115, %v1574
    %v1576 = vmul.f32 %v116, %v1574
    %v1577 = vmul.f32 %v123, %v1574
    %v1578 = vmul.f32 %v124, %v1574
    %v1579 = vadd.f32 %v1527, %v1575
    %v1580 = vadd.f32 %v1528, %v1576
    %v1581 = vadd.f32 %v1529, %v1577
    %v1582 = vadd.f32 %v1530, %v1578
    %s1583 = sld [smem:[#allocation5 + $0x8]]
    %v1584 = vstv %s1583
    %v1585 = vmul.f32 %v115, %v1584
    %v1586 = vmul.f32 %v116, %v1584
    %v1587 = vmul.f32 %v123, %v1584
    %v1588 = vmul.f32 %v124, %v1584
    %v1589 = vadd.f32 %v1559, %v1585
    %v1590 = vadd.f32 %v1560, %v1586
    %v1591 = vadd.f32 %v1561, %v1587
    %v1592 = vadd.f32 %v1562, %v1588
    %s1593 = sld [smem:[#allocation5 + $0x12]]
    %v1594 = vstv %s1593
    %v1595 = vmul.f32 %v115, %v1594
    %v1596 = vmul.f32 %v116, %v1594
    %v1597 = vmul.f32 %v123, %v1594
    %v1598 = vmul.f32 %v124, %v1594
    %1603 = vrot.lane.b32.xlu0 %v1595, 127
    %v1604 = vpop.permute.xlu0 %1603
    %1605 = vrot.lane.b32.xlu0 %v1596, 127
    %v1606 = vpop.permute.xlu0 %1605
    %1607 = vrot.lane.b32.xlu0 %v1597, 127
    %v1608 = vpop.permute.xlu0 %1607
    %1609 = vrot.lane.b32.xlu0 %v1598, 127
    %v1610 = vpop.permute.xlu0 %1609
    %v1615 = vadd.f32 %v1569, %v1604
    %v1616 = vadd.f32 %v1570, %v1606
    %v1617 = vadd.f32 %v1571, %v1608
    %v1618 = vadd.f32 %v1572, %v1610
    %s1619 = sld [smem:[#allocation5 + $0x13]]
    %v1620 = vstv %s1619
    %v1621 = vmul.f32 %v115, %v1620
    %v1622 = vmul.f32 %v116, %v1620
    %v1623 = vmul.f32 %v123, %v1620
    %v1624 = vmul.f32 %v124, %v1620
    %1629 = vrot.lane.b32.xlu0 %v1621, 127
    %v1630 = vpop.permute.xlu0 %1629
    %1631 = vrot.lane.b32.xlu0 %v1622, 127
    %v1632 = vpop.permute.xlu0 %1631
    %1633 = vrot.lane.b32.xlu0 %v1623, 127
    %v1634 = vpop.permute.xlu0 %1633
    %1635 = vrot.lane.b32.xlu0 %v1624, 127
    %v1636 = vpop.permute.xlu0 %1635
    %v1641 = vadd.f32 %v1579, %v1630
    %v1642 = vadd.f32 %v1580, %v1632
    %v1643 = vadd.f32 %v1581, %v1634
    %v1644 = vadd.f32 %v1582, %v1636
    %s1645 = sld [smem:[#allocation5 + $0x14]]
    %v1646 = vstv %s1645
    %v1647 = vmul.f32 %v115, %v1646
    %v1648 = vmul.f32 %v116, %v1646
    %v1649 = vmul.f32 %v123, %v1646
    %v1650 = vmul.f32 %v124, %v1646
    %1655 = vrot.lane.b32.xlu0 %v1647, 127
    %v1656 = vpop.permute.xlu0 %1655
    %1657 = vrot.lane.b32.xlu0 %v1648, 127
    %v1658 = vpop.permute.xlu0 %1657
    %1659 = vrot.lane.b32.xlu0 %v1649, 127
    %v1660 = vpop.permute.xlu0 %1659
    %1661 = vrot.lane.b32.xlu0 %v1650, 127
    %v1662 = vpop.permute.xlu0 %1661
    %v1667 = vadd.f32 %v1589, %v1656
    %v1668 = vadd.f32 %v1590, %v1658
    %v1669 = vadd.f32 %v1591, %v1660
    %v1670 = vadd.f32 %v1592, %v1662
    %s1671 = sld [smem:[#allocation5 + $0x1e]]
    %v1672 = vstv %s1671
    %v1673 = vmul.f32 %v115, %v1672
    %v1674 = vmul.f32 %v116, %v1672
    %v1675 = vmul.f32 %v123, %v1672
    %v1676 = vmul.f32 %v124, %v1672
    %1681 = vrot.lane.b32.xlu0 %v1673, 126
    %v1682 = vpop.permute.xlu0 %1681
    %1683 = vrot.lane.b32.xlu0 %v1674, 126
    %v1684 = vpop.permute.xlu0 %1683
    %1685 = vrot.lane.b32.xlu0 %v1675, 126
    %v1686 = vpop.permute.xlu0 %1685
    %1687 = vrot.lane.b32.xlu0 %v1676, 126
    %v1688 = vpop.permute.xlu0 %1687
    %v1693 = vadd.f32 %v1615, %v1682
    %v1694 = vadd.f32 %v1616, %v1684
    %v1695 = vadd.f32 %v1617, %v1686
    %v1696 = vadd.f32 %v1618, %v1688
    %s1697 = sld [smem:[#allocation5 + $0x1f]]
    %v1698 = vstv %s1697
    %v1699 = vmul.f32 %v115, %v1698
    %v1700 = vmul.f32 %v116, %v1698
    %v1701 = vmul.f32 %v123, %v1698
    %v1702 = vmul.f32 %v124, %v1698
    %1707 = vrot.lane.b32.xlu0 %v1699, 126
    %v1708 = vpop.permute.xlu0 %1707
    %1709 = vrot.lane.b32.xlu0 %v1700, 126
    %v1710 = vpop.permute.xlu0 %1709
    %1711 = vrot.lane.b32.xlu0 %v1701, 126
    %v1712 = vpop.permute.xlu0 %1711
    %1713 = vrot.lane.b32.xlu0 %v1702, 126
    %v1714 = vpop.permute.xlu0 %1713
    %v1719 = vadd.f32 %v1641, %v1708
    %v1720 = vadd.f32 %v1642, %v1710
    %v1721 = vadd.f32 %v1643, %v1712
    %v1722 = vadd.f32 %v1644, %v1714
    %s1723 = sld [smem:[#allocation5 + $0x20]]
    %v1724 = vstv %s1723
    %v1725 = vmul.f32 %v115, %v1724
    %v1726 = vmul.f32 %v116, %v1724
    %v1727 = vmul.f32 %v123, %v1724
    %v1728 = vmul.f32 %v124, %v1724
    %1733 = vrot.lane.b32.xlu0 %v1725, 126
    %v1734 = vpop.permute.xlu0 %1733
    %1735 = vrot.lane.b32.xlu0 %v1726, 126
    %v1736 = vpop.permute.xlu0 %1735
    %1737 = vrot.lane.b32.xlu0 %v1727, 126
    %v1738 = vpop.permute.xlu0 %1737
    %1739 = vrot.lane.b32.xlu0 %v1728, 126
    %v1740 = vpop.permute.xlu0 %1739
    %v1745 = vadd.f32 %v1667, %v1734
    %v1746 = vadd.f32 %v1668, %v1736
    %v1747 = vadd.f32 %v1669, %v1738
    %v1748 = vadd.f32 %v1670, %v1740
    %s1749 = sld [smem:[#allocation5 + $0x2a]]
    %v1750 = vstv %s1749
    %v1751 = vmul.f32 %v115, %v1750
    %v1752 = vmul.f32 %v116, %v1750
    %v1753 = vmul.f32 %v123, %v1750
    %v1754 = vmul.f32 %v124, %v1750
    %v1759 = vrot.slane %v1751, 1
    %v1760 = vrot.slane %v1752, 1
    %v1761 = vsel %vm329, %v1759, %v1760
    %v1762 = vrot.slane %v1753, 1
    %v1763 = vrot.slane %v1754, 1
    %v1764 = vsel %vm329, %v1762, %v1763
    %v1769 = vadd.f32 %v1693, %v1761
    %v1770 = vadd.f32 %v1694, %v1760
    %v1771 = vadd.f32 %v1695, %v1764
    %v1772 = vadd.f32 %v1696, %v1763
    %s1773 = sld [smem:[#allocation5 + $0x2b]]
    %v1774 = vstv %s1773
    %v1775 = vmul.f32 %v115, %v1774
    %v1776 = vmul.f32 %v116, %v1774
    %v1777 = vmul.f32 %v123, %v1774
    %v1778 = vmul.f32 %v124, %v1774
    %v1783 = vrot.slane %v1775, 1
    %v1784 = vrot.slane %v1776, 1
    %v1785 = vsel %vm329, %v1783, %v1784
    %v1786 = vrot.slane %v1777, 1
    %v1787 = vrot.slane %v1778, 1
    %v1788 = vsel %vm329, %v1786, %v1787
    %v1793 = vadd.f32 %v1719, %v1785
    %v1794 = vadd.f32 %v1720, %v1784
    %v1795 = vadd.f32 %v1721, %v1788
    %v1796 = vadd.f32 %v1722, %v1787
    %s1797 = sld [smem:[#allocation5 + $0x2c]]
    %v1798 = vstv %s1797
    %v1799 = vmul.f32 %v115, %v1798
    %v1800 = vmul.f32 %v116, %v1798
    %v1801 = vmul.f32 %v123, %v1798
    %v1802 = vmul.f32 %v124, %v1798
    %v1807 = vrot.slane %v1799, 1
    %v1808 = vrot.slane %v1800, 1
    %v1809 = vsel %vm329, %v1807, %v1808
    %v1810 = vrot.slane %v1801, 1
    %v1811 = vrot.slane %v1802, 1
    %v1812 = vsel %vm329, %v1810, %v1811
    %v1817 = vadd.f32 %v1745, %v1809
    %v1818 = vadd.f32 %v1746, %v1808
    %v1819 = vadd.f32 %v1747, %v1812
    %v1820 = vadd.f32 %v1748, %v1811
    %s1821 = sld [smem:[#allocation5 + $0x36]]
    %v1822 = vstv %s1821
    %v1823 = vmul.f32 %v115, %v1822
    %v1824 = vmul.f32 %v116, %v1822
    %v1825 = vmul.f32 %v123, %v1822
    %v1826 = vmul.f32 %v124, %v1822
    %v1831 = vrot.slane %v1823, 1
    %v1832 = vrot.slane %v1824, 1
    %v1833 = vsel %vm329, %v1831, %v1832
    %v1834 = vrot.slane %v1825, 1
    %v1835 = vrot.slane %v1826, 1
    %v1836 = vsel %vm329, %v1834, %v1835
    %1837 = vrot.lane.b32.xlu0 %v1833, 127
    %v1838 = vpop.permute.xlu0 %1837
    %1839 = vrot.lane.b32.xlu0 %v1832, 127
    %v1840 = vpop.permute.xlu0 %1839
    %1841 = vrot.lane.b32.xlu0 %v1836, 127
    %v1842 = vpop.permute.xlu0 %1841
    %1843 = vrot.lane.b32.xlu0 %v1835, 127
    %v1844 = vpop.permute.xlu0 %1843
    %v1849 = vadd.f32 %v1769, %v1838
    %v1850 = vadd.f32 %v1770, %v1840
    %v1851 = vadd.f32 %v1771, %v1842
    %v1852 = vadd.f32 %v1772, %v1844
    %s1853 = sld [smem:[#allocation5 + $0x37]]
    %v1854 = vstv %s1853
    %v1855 = vmul.f32 %v115, %v1854
    %v1856 = vmul.f32 %v116, %v1854
    %v1857 = vmul.f32 %v123, %v1854
    %v1858 = vmul.f32 %v124, %v1854
    %v1863 = vrot.slane %v1855, 1
    %v1864 = vrot.slane %v1856, 1
    %v1865 = vsel %vm329, %v1863, %v1864
    %v1866 = vrot.slane %v1857, 1
    %v1867 = vrot.slane %v1858, 1
    %v1868 = vsel %vm329, %v1866, %v1867
    %1869 = vrot.lane.b32.xlu0 %v1865, 127
    %v1870 = vpop.permute.xlu0 %1869
    %1871 = vrot.lane.b32.xlu0 %v1864, 127
    %v1872 = vpop.permute.xlu0 %1871
    %1873 = vrot.lane.b32.xlu0 %v1868, 127
    %v1874 = vpop.permute.xlu0 %1873
    %1875 = vrot.lane.b32.xlu0 %v1867, 127
    %v1876 = vpop.permute.xlu0 %1875
    %v1881 = vadd.f32 %v1793, %v1870
    %v1882 = vadd.f32 %v1794, %v1872
    %v1883 = vadd.f32 %v1795, %v1874
    %v1884 = vadd.f32 %v1796, %v1876
    %s1885 = sld [smem:[#allocation5 + $0x38]]
    %v1886 = vstv %s1885
    %v1887 = vmul.f32 %v115, %v1886
    %v1888 = vmul.f32 %v116, %v1886
    %v1889 = vmul.f32 %v123, %v1886
    %v1890 = vmul.f32 %v124, %v1886
    %v1895 = vrot.slane %v1887, 1
    %v1896 = vrot.slane %v1888, 1
    %v1897 = vsel %vm329, %v1895, %v1896
    %v1898 = vrot.slane %v1889, 1
    %v1899 = vrot.slane %v1890, 1
    %v1900 = vsel %vm329, %v1898, %v1899
    %1901 = vrot.lane.b32.xlu0 %v1897, 127
    %v1902 = vpop.permute.xlu0 %1901
    %1903 = vrot.lane.b32.xlu0 %v1896, 127
    %v1904 = vpop.permute.xlu0 %1903
    %1905 = vrot.lane.b32.xlu0 %v1900, 127
    %v1906 = vpop.permute.xlu0 %1905
    %1907 = vrot.lane.b32.xlu0 %v1899, 127
    %v1908 = vpop.permute.xlu0 %1907
    %v1913 = vadd.f32 %v1817, %v1902
    %v1914 = vadd.f32 %v1818, %v1904
    %v1915 = vadd.f32 %v1819, %v1906
    %v1916 = vadd.f32 %v1820, %v1908
    %s1917 = sld [smem:[#allocation5 + $0x42]]
    %v1918 = vstv %s1917
    %v1919 = vmul.f32 %v115, %v1918
    %v1920 = vmul.f32 %v116, %v1918
    %v1921 = vmul.f32 %v123, %v1918
    %v1922 = vmul.f32 %v124, %v1918
    %v1927 = vrot.slane %v1919, 1
    %v1928 = vrot.slane %v1920, 1
    %v1929 = vsel %vm329, %v1927, %v1928
    %v1930 = vrot.slane %v1921, 1
    %v1931 = vrot.slane %v1922, 1
    %v1932 = vsel %vm329, %v1930, %v1931
    %1933 = vrot.lane.b32.xlu0 %v1929, 126
    %v1934 = vpop.permute.xlu0 %1933
    %1935 = vrot.lane.b32.xlu0 %v1928, 126
    %v1936 = vpop.permute.xlu0 %1935
    %1937 = vrot.lane.b32.xlu0 %v1932, 126
    %v1938 = vpop.permute.xlu0 %1937
    %1939 = vrot.lane.b32.xlu0 %v1931, 126
    %v1940 = vpop.permute.xlu0 %1939
    %v1945 = vadd.f32 %v1849, %v1934
    %v1946 = vadd.f32 %v1850, %v1936
    %v1947 = vadd.f32 %v1851, %v1938
    %v1948 = vadd.f32 %v1852, %v1940
    %s1949 = sld [smem:[#allocation5 + $0x43]]
    %v1950 = vstv %s1949
    %v1951 = vmul.f32 %v115, %v1950
    %v1952 = vmul.f32 %v116, %v1950
    %v1953 = vmul.f32 %v123, %v1950
    %v1954 = vmul.f32 %v124, %v1950
    %v1959 = vrot.slane %v1951, 1
    %v1960 = vrot.slane %v1952, 1
    %v1961 = vsel %vm329, %v1959, %v1960
    %v1962 = vrot.slane %v1953, 1
    %v1963 = vrot.slane %v1954, 1
    %v1964 = vsel %vm329, %v1962, %v1963
    %1965 = vrot.lane.b32.xlu0 %v1961, 126
    %v1966 = vpop.permute.xlu0 %1965
    %1967 = vrot.lane.b32.xlu0 %v1960, 126
    %v1968 = vpop.permute.xlu0 %1967
    %1969 = vrot.lane.b32.xlu0 %v1964, 126
    %v1970 = vpop.permute.xlu0 %1969
    %1971 = vrot.lane.b32.xlu0 %v1963, 126
    %v1972 = vpop.permute.xlu0 %1971
    %v1977 = vadd.f32 %v1881, %v1966
    %v1978 = vadd.f32 %v1882, %v1968
    %v1979 = vadd.f32 %v1883, %v1970
    %v1980 = vadd.f32 %v1884, %v1972
    %s1981 = sld [smem:[#allocation5 + $0x44]]
    %v1982 = vstv %s1981
    %v1983 = vmul.f32 %v115, %v1982
    %v1984 = vmul.f32 %v116, %v1982
    %v1985 = vmul.f32 %v123, %v1982
    %v1986 = vmul.f32 %v124, %v1982
    %v1991 = vrot.slane %v1983, 1
    %v1992 = vrot.slane %v1984, 1
    %v1993 = vsel %vm329, %v1991, %v1992
    %v1994 = vrot.slane %v1985, 1
    %v1995 = vrot.slane %v1986, 1
    %v1996 = vsel %vm329, %v1994, %v1995
    %1997 = vrot.lane.b32.xlu0 %v1993, 126
    %v1998 = vpop.permute.xlu0 %1997
    %1999 = vrot.lane.b32.xlu0 %v1992, 126
    %v2000 = vpop.permute.xlu0 %1999
    %2001 = vrot.lane.b32.xlu0 %v1996, 126
    %v2002 = vpop.permute.xlu0 %2001
    %2003 = vrot.lane.b32.xlu0 %v1995, 126
    %v2004 = vpop.permute.xlu0 %2003
    %v2009 = vadd.f32 %v1913, %v1998
    %v2010 = vadd.f32 %v1914, %v2000
    %v2011 = vadd.f32 %v1915, %v2002
    %v2012 = vadd.f32 %v1916, %v2004
    %s2013 = sld [smem:[#allocation5 + $0x4e]]
    %v2014 = vstv %s2013
    %v2015 = vmul.f32 %v115, %v2014
    %v2016 = vmul.f32 %v116, %v2014
    %v2017 = vmul.f32 %v123, %v2014
    %v2018 = vmul.f32 %v124, %v2014
    %v2023 = vrot.slane %v2015, 2
    %v2024 = vrot.slane %v2016, 2
    %v2025 = vsel %vm594, %v2023, %v2024
    %v2026 = vrot.slane %v2017, 2
    %v2027 = vrot.slane %v2018, 2
    %v2028 = vsel %vm594, %v2026, %v2027
    %v2033 = vadd.f32 %v1945, %v2025
    %v2034 = vadd.f32 %v1946, %v2024
    %v2035 = vadd.f32 %v1947, %v2028
    %v2036 = vadd.f32 %v1948, %v2027
    %s2037 = sld [smem:[#allocation5 + $0x4f]]
    %v2038 = vstv %s2037
    %v2039 = vmul.f32 %v115, %v2038
    %v2040 = vmul.f32 %v116, %v2038
    %v2041 = vmul.f32 %v123, %v2038
    %v2042 = vmul.f32 %v124, %v2038
    %v2047 = vrot.slane %v2039, 2
    %v2048 = vrot.slane %v2040, 2
    %v2049 = vsel %vm594, %v2047, %v2048
    %v2050 = vrot.slane %v2041, 2
    %v2051 = vrot.slane %v2042, 2
    %v2052 = vsel %vm594, %v2050, %v2051
    %v2057 = vadd.f32 %v1977, %v2049
    %v2058 = vadd.f32 %v1978, %v2048
    %v2059 = vadd.f32 %v1979, %v2052
    %v2060 = vadd.f32 %v1980, %v2051
    %s2061 = sld [smem:[#allocation5 + $0x50]]
    %v2062 = vstv %s2061
    %v2063 = vmul.f32 %v115, %v2062
    %v2064 = vmul.f32 %v116, %v2062
    %v2065 = vmul.f32 %v123, %v2062
    %v2066 = vmul.f32 %v124, %v2062
    %v2071 = vrot.slane %v2063, 2
    %v2072 = vrot.slane %v2064, 2
    %v2073 = vsel %vm594, %v2071, %v2072
    %v2074 = vrot.slane %v2065, 2
    %v2075 = vrot.slane %v2066, 2
    %v2076 = vsel %vm594, %v2074, %v2075
    %v2081 = vadd.f32 %v2009, %v2073
    %v2082 = vadd.f32 %v2010, %v2072
    %v2083 = vadd.f32 %v2011, %v2076
    %v2084 = vadd.f32 %v2012, %v2075
    %s2085 = sld [smem:[#allocation5 + $0x5a]]
    %v2086 = vstv %s2085
    %v2087 = vmul.f32 %v115, %v2086
    %v2088 = vmul.f32 %v116, %v2086
    %v2089 = vmul.f32 %v123, %v2086
    %v2090 = vmul.f32 %v124, %v2086
    %v2095 = vrot.slane %v2087, 2
    %v2096 = vrot.slane %v2088, 2
    %v2097 = vsel %vm594, %v2095, %v2096
    %v2098 = vrot.slane %v2089, 2
    %v2099 = vrot.slane %v2090, 2
    %v2100 = vsel %vm594, %v2098, %v2099
    %2101 = vrot.lane.b32.xlu0 %v2097, 127
    %v2102 = vpop.permute.xlu0 %2101
    %2103 = vrot.lane.b32.xlu0 %v2096, 127
    %v2104 = vpop.permute.xlu0 %2103
    %2105 = vrot.lane.b32.xlu0 %v2100, 127
    %v2106 = vpop.permute.xlu0 %2105
    %2107 = vrot.lane.b32.xlu0 %v2099, 127
    %v2108 = vpop.permute.xlu0 %2107
    %v2113 = vadd.f32 %v2033, %v2102
    %v2114 = vadd.f32 %v2034, %v2104
    %v2115 = vadd.f32 %v2035, %v2106
    %v2116 = vadd.f32 %v2036, %v2108
    %s2117 = sld [smem:[#allocation5 + $0x5b]]
    %v2118 = vstv %s2117
    %v2119 = vmul.f32 %v115, %v2118
    %v2120 = vmul.f32 %v116, %v2118
    %v2121 = vmul.f32 %v123, %v2118
    %v2122 = vmul.f32 %v124, %v2118
    %v2127 = vrot.slane %v2119, 2
    %v2128 = vrot.slane %v2120, 2
    %v2129 = vsel %vm594, %v2127, %v2128
    %v2130 = vrot.slane %v2121, 2
    %v2131 = vrot.slane %v2122, 2
    %v2132 = vsel %vm594, %v2130, %v2131
    %2133 = vrot.lane.b32.xlu0 %v2129, 127
    %v2134 = vpop.permute.xlu0 %2133
    %2135 = vrot.lane.b32.xlu0 %v2128, 127
    %v2136 = vpop.permute.xlu0 %2135
    %2137 = vrot.lane.b32.xlu0 %v2132, 127
    %v2138 = vpop.permute.xlu0 %2137
    %2139 = vrot.lane.b32.xlu0 %v2131, 127
    %v2140 = vpop.permute.xlu0 %2139
    %v2145 = vadd.f32 %v2057, %v2134
    %v2146 = vadd.f32 %v2058, %v2136
    %v2147 = vadd.f32 %v2059, %v2138
    %v2148 = vadd.f32 %v2060, %v2140
    %s2149 = sld [smem:[#allocation5 + $0x5c]]
    %v2150 = vstv %s2149
    %v2151 = vmul.f32 %v115, %v2150
    %v2152 = vmul.f32 %v116, %v2150
    %v2153 = vmul.f32 %v123, %v2150
    %v2154 = vmul.f32 %v124, %v2150
    %v2159 = vrot.slane %v2151, 2
    %v2160 = vrot.slane %v2152, 2
    %v2161 = vsel %vm594, %v2159, %v2160
    %v2162 = vrot.slane %v2153, 2
    %v2163 = vrot.slane %v2154, 2
    %v2164 = vsel %vm594, %v2162, %v2163
    %2165 = vrot.lane.b32.xlu0 %v2161, 127
    %v2166 = vpop.permute.xlu0 %2165
    %2167 = vrot.lane.b32.xlu0 %v2160, 127
    %v2168 = vpop.permute.xlu0 %2167
    %2169 = vrot.lane.b32.xlu0 %v2164, 127
    %v2170 = vpop.permute.xlu0 %2169
    %2171 = vrot.lane.b32.xlu0 %v2163, 127
    %v2172 = vpop.permute.xlu0 %2171
    %v2177 = vadd.f32 %v2081, %v2166
    %v2178 = vadd.f32 %v2082, %v2168
    %v2179 = vadd.f32 %v2083, %v2170
    %v2180 = vadd.f32 %v2084, %v2172
    %s2181 = sld [smem:[#allocation5 + $0x66]]
    %v2182 = vstv %s2181
    %v2183 = vmul.f32 %v115, %v2182
    %v2184 = vmul.f32 %v116, %v2182
    %v2185 = vmul.f32 %v123, %v2182
    %v2186 = vmul.f32 %v124, %v2182
    %v2191 = vrot.slane %v2183, 2
    %v2192 = vrot.slane %v2184, 2
    %v2193 = vsel %vm594, %v2191, %v2192
    %v2194 = vrot.slane %v2185, 2
    %v2195 = vrot.slane %v2186, 2
    %v2196 = vsel %vm594, %v2194, %v2195
    %2197 = vrot.lane.b32.xlu0 %v2193, 126
    %v2198 = vpop.permute.xlu0 %2197
    %2199 = vrot.lane.b32.xlu0 %v2192, 126
    %v2200 = vpop.permute.xlu0 %2199
    %2201 = vrot.lane.b32.xlu0 %v2196, 126
    %v2202 = vpop.permute.xlu0 %2201
    %2203 = vrot.lane.b32.xlu0 %v2195, 126
    %v2204 = vpop.permute.xlu0 %2203
    %v2209 = vadd.f32 %v2113, %v2198
    %v2210 = vadd.f32 %v2114, %v2200
    %v2211 = vadd.f32 %v2115, %v2202
    %v2212 = vadd.f32 %v2116, %v2204
    %s2213 = sld [smem:[#allocation5 + $0x67]]
    %v2214 = vstv %s2213
    %v2215 = vmul.f32 %v115, %v2214
    %v2216 = vmul.f32 %v116, %v2214
    %v2217 = vmul.f32 %v123, %v2214
    %v2218 = vmul.f32 %v124, %v2214
    %v2223 = vrot.slane %v2215, 2
    %v2224 = vrot.slane %v2216, 2
    %v2225 = vsel %vm594, %v2223, %v2224
    %v2226 = vrot.slane %v2217, 2
    %v2227 = vrot.slane %v2218, 2
    %v2228 = vsel %vm594, %v2226, %v2227
    %2229 = vrot.lane.b32.xlu0 %v2225, 126
    %v2230 = vpop.permute.xlu0 %2229
    %2231 = vrot.lane.b32.xlu0 %v2224, 126
    %v2232 = vpop.permute.xlu0 %2231
    %2233 = vrot.lane.b32.xlu0 %v2228, 126
    %v2234 = vpop.permute.xlu0 %2233
    %2235 = vrot.lane.b32.xlu0 %v2227, 126
    %v2236 = vpop.permute.xlu0 %2235
    %v2241 = vadd.f32 %v2145, %v2230
    %v2242 = vadd.f32 %v2146, %v2232
    %v2243 = vadd.f32 %v2147, %v2234
    %v2244 = vadd.f32 %v2148, %v2236
    %s2245 = sld [smem:[#allocation5 + $0x68]]
    %v2246 = vstv %s2245
    %v2247 = vmul.f32 %v115, %v2246
    %v2248 = vmul.f32 %v116, %v2246
    %v2249 = vmul.f32 %v123, %v2246
    %v2250 = vmul.f32 %v124, %v2246
    %v2255 = vrot.slane %v2247, 2
    %v2256 = vrot.slane %v2248, 2
    %v2257 = vsel %vm594, %v2255, %v2256
    %v2258 = vrot.slane %v2249, 2
    %v2259 = vrot.slane %v2250, 2
    %v2260 = vsel %vm594, %v2258, %v2259
    %2261 = vrot.lane.b32.xlu0 %v2257, 126
    %v2262 = vpop.permute.xlu0 %2261
    %2263 = vrot.lane.b32.xlu0 %v2256, 126
    %v2264 = vpop.permute.xlu0 %2263
    %2265 = vrot.lane.b32.xlu0 %v2260, 126
    %v2266 = vpop.permute.xlu0 %2265
    %2267 = vrot.lane.b32.xlu0 %v2259, 126
    %v2268 = vpop.permute.xlu0 %2267
    %v2273 = vadd.f32 %v2177, %v2262
    %v2274 = vadd.f32 %v2178, %v2264
    %v2275 = vadd.f32 %v2179, %v2266
    %v2276 = vadd.f32 %v2180, %v2268
    %s2277 = sld [smem:[#allocation5 + $0x9]]
    %v2278 = vstv %s2277
    %v2279 = vmul.f32 %v117, %v2278
    %v2280 = vmul.f32 %v118, %v2278
    %v2281 = vmul.f32 %v125, %v2278
    %v2282 = vmul.f32 %v126, %v2278
    %v2283 = vadd.f32 %v2209, %v2279
    %v2284 = vadd.f32 %v2210, %v2280
    %v2285 = vadd.f32 %v2211, %v2281
    %v2286 = vadd.f32 %v2212, %v2282
    %s2287 = sld [smem:[#allocation5 + $0xa]]
    %v2288 = vstv %s2287
    %v2289 = vmul.f32 %v117, %v2288
    %v2290 = vmul.f32 %v118, %v2288
    %v2291 = vmul.f32 %v125, %v2288
    %v2292 = vmul.f32 %v126, %v2288
    %v2293 = vadd.f32 %v2241, %v2289
    %v2294 = vadd.f32 %v2242, %v2290
    %v2295 = vadd.f32 %v2243, %v2291
    %v2296 = vadd.f32 %v2244, %v2292
    %s2297 = sld [smem:[#allocation5 + $0xb]]
    %v2298 = vstv %s2297
    %v2299 = vmul.f32 %v117, %v2298
    %v2300 = vmul.f32 %v118, %v2298
    %v2301 = vmul.f32 %v125, %v2298
    %v2302 = vmul.f32 %v126, %v2298
    %v2303 = vadd.f32 %v2273, %v2299
    %v2304 = vadd.f32 %v2274, %v2300
    %v2305 = vadd.f32 %v2275, %v2301
    %v2306 = vadd.f32 %v2276, %v2302
    %s2307 = sld [smem:[#allocation5 + $0x15]]
    %v2308 = vstv %s2307
    %v2309 = vmul.f32 %v117, %v2308
    %v2310 = vmul.f32 %v118, %v2308
    %v2311 = vmul.f32 %v125, %v2308
    %v2312 = vmul.f32 %v126, %v2308
    %2317 = vrot.lane.b32.xlu0 %v2309, 127
    %v2318 = vpop.permute.xlu0 %2317
    %2319 = vrot.lane.b32.xlu0 %v2310, 127
    %v2320 = vpop.permute.xlu0 %2319
    %2321 = vrot.lane.b32.xlu0 %v2311, 127
    %v2322 = vpop.permute.xlu0 %2321
    %2323 = vrot.lane.b32.xlu0 %v2312, 127
    %v2324 = vpop.permute.xlu0 %2323
    %v2329 = vadd.f32 %v2283, %v2318
    %v2330 = vadd.f32 %v2284, %v2320
    %v2331 = vadd.f32 %v2285, %v2322
    %v2332 = vadd.f32 %v2286, %v2324
    %s2333 = sld [smem:[#allocation5 + $0x16]]
    %v2334 = vstv %s2333
    %v2335 = vmul.f32 %v117, %v2334
    %v2336 = vmul.f32 %v118, %v2334
    %v2337 = vmul.f32 %v125, %v2334
    %v2338 = vmul.f32 %v126, %v2334
    %2343 = vrot.lane.b32.xlu0 %v2335, 127
    %v2344 = vpop.permute.xlu0 %2343
    %2345 = vrot.lane.b32.xlu0 %v2336, 127
    %v2346 = vpop.permute.xlu0 %2345
    %2347 = vrot.lane.b32.xlu0 %v2337, 127
    %v2348 = vpop.permute.xlu0 %2347
    %2349 = vrot.lane.b32.xlu0 %v2338, 127
    %v2350 = vpop.permute.xlu0 %2349
    %v2355 = vadd.f32 %v2293, %v2344
    %v2356 = vadd.f32 %v2294, %v2346
    %v2357 = vadd.f32 %v2295, %v2348
    %v2358 = vadd.f32 %v2296, %v2350
    %s2359 = sld [smem:[#allocation5 + $0x17]]
    %v2360 = vstv %s2359
    %v2361 = vmul.f32 %v117, %v2360
    %v2362 = vmul.f32 %v118, %v2360
    %v2363 = vmul.f32 %v125, %v2360
    %v2364 = vmul.f32 %v126, %v2360
    %2369 = vrot.lane.b32.xlu0 %v2361, 127
    %v2370 = vpop.permute.xlu0 %2369
    %2371 = vrot.lane.b32.xlu0 %v2362, 127
    %v2372 = vpop.permute.xlu0 %2371
    %2373 = vrot.lane.b32.xlu0 %v2363, 127
    %v2374 = vpop.permute.xlu0 %2373
    %2375 = vrot.lane.b32.xlu0 %v2364, 127
    %v2376 = vpop.permute.xlu0 %2375
    %v2381 = vadd.f32 %v2303, %v2370
    %v2382 = vadd.f32 %v2304, %v2372
    %v2383 = vadd.f32 %v2305, %v2374
    %v2384 = vadd.f32 %v2306, %v2376
    %s2385 = sld [smem:[#allocation5 + $0x21]]
    %v2386 = vstv %s2385
    %v2387 = vmul.f32 %v117, %v2386
    %v2388 = vmul.f32 %v118, %v2386
    %v2389 = vmul.f32 %v125, %v2386
    %v2390 = vmul.f32 %v126, %v2386
    %2395 = vrot.lane.b32.xlu0 %v2387, 126
    %v2396 = vpop.permute.xlu0 %2395
    %2397 = vrot.lane.b32.xlu0 %v2388, 126
    %v2398 = vpop.permute.xlu0 %2397
    %2399 = vrot.lane.b32.xlu0 %v2389, 126
    %v2400 = vpop.permute.xlu0 %2399
    %2401 = vrot.lane.b32.xlu0 %v2390, 126
    %v2402 = vpop.permute.xlu0 %2401
    %v2407 = vadd.f32 %v2329, %v2396
    %v2408 = vadd.f32 %v2330, %v2398
    %v2409 = vadd.f32 %v2331, %v2400
    %v2410 = vadd.f32 %v2332, %v2402
    %s2411 = sld [smem:[#allocation5 + $0x22]]
    %v2412 = vstv %s2411
    %v2413 = vmul.f32 %v117, %v2412
    %v2414 = vmul.f32 %v118, %v2412
    %v2415 = vmul.f32 %v125, %v2412
    %v2416 = vmul.f32 %v126, %v2412
    %2421 = vrot.lane.b32.xlu0 %v2413, 126
    %v2422 = vpop.permute.xlu0 %2421
    %2423 = vrot.lane.b32.xlu0 %v2414, 126
    %v2424 = vpop.permute.xlu0 %2423
    %2425 = vrot.lane.b32.xlu0 %v2415, 126
    %v2426 = vpop.permute.xlu0 %2425
    %2427 = vrot.lane.b32.xlu0 %v2416, 126
    %v2428 = vpop.permute.xlu0 %2427
    %v2433 = vadd.f32 %v2355, %v2422
    %v2434 = vadd.f32 %v2356, %v2424
    %v2435 = vadd.f32 %v2357, %v2426
    %v2436 = vadd.f32 %v2358, %v2428
    %s2437 = sld [smem:[#allocation5 + $0x23]]
    %v2438 = vstv %s2437
    %v2439 = vmul.f32 %v117, %v2438
    %v2440 = vmul.f32 %v118, %v2438
    %v2441 = vmul.f32 %v125, %v2438
    %v2442 = vmul.f32 %v126, %v2438
    %2447 = vrot.lane.b32.xlu0 %v2439, 126
    %v2448 = vpop.permute.xlu0 %2447
    %2449 = vrot.lane.b32.xlu0 %v2440, 126
    %v2450 = vpop.permute.xlu0 %2449
    %2451 = vrot.lane.b32.xlu0 %v2441, 126
    %v2452 = vpop.permute.xlu0 %2451
    %2453 = vrot.lane.b32.xlu0 %v2442, 126
    %v2454 = vpop.permute.xlu0 %2453
    %v2459 = vadd.f32 %v2381, %v2448
    %v2460 = vadd.f32 %v2382, %v2450
    %v2461 = vadd.f32 %v2383, %v2452
    %v2462 = vadd.f32 %v2384, %v2454
    %s2463 = sld [smem:[#allocation5 + $0x2d]]
    %v2464 = vstv %s2463
    %v2465 = vmul.f32 %v117, %v2464
    %v2466 = vmul.f32 %v118, %v2464
    %v2467 = vmul.f32 %v125, %v2464
    %v2468 = vmul.f32 %v126, %v2464
    %v2473 = vrot.slane %v2465, 1
    %v2474 = vrot.slane %v2466, 1
    %v2475 = vsel %vm329, %v2473, %v2474
    %v2476 = vrot.slane %v2467, 1
    %v2477 = vrot.slane %v2468, 1
    %v2478 = vsel %vm329, %v2476, %v2477
    %v2483 = vadd.f32 %v2407, %v2475
    %v2484 = vadd.f32 %v2408, %v2474
    %v2485 = vadd.f32 %v2409, %v2478
    %v2486 = vadd.f32 %v2410, %v2477
    %s2487 = sld [smem:[#allocation5 + $0x2e]]
    %v2488 = vstv %s2487
    %v2489 = vmul.f32 %v117, %v2488
    %v2490 = vmul.f32 %v118, %v2488
    %v2491 = vmul.f32 %v125, %v2488
    %v2492 = vmul.f32 %v126, %v2488
    %v2497 = vrot.slane %v2489, 1
    %v2498 = vrot.slane %v2490, 1
    %v2499 = vsel %vm329, %v2497, %v2498
    %v2500 = vrot.slane %v2491, 1
    %v2501 = vrot.slane %v2492, 1
    %v2502 = vsel %vm329, %v2500, %v2501
    %v2507 = vadd.f32 %v2433, %v2499
    %v2508 = vadd.f32 %v2434, %v2498
    %v2509 = vadd.f32 %v2435, %v2502
    %v2510 = vadd.f32 %v2436, %v2501
    %s2511 = sld [smem:[#allocation5 + $0x2f]]
    %v2512 = vstv %s2511
    %v2513 = vmul.f32 %v117, %v2512
    %v2514 = vmul.f32 %v118, %v2512
    %v2515 = vmul.f32 %v125, %v2512
    %v2516 = vmul.f32 %v126, %v2512
    %v2521 = vrot.slane %v2513, 1
    %v2522 = vrot.slane %v2514, 1
    %v2523 = vsel %vm329, %v2521, %v2522
    %v2524 = vrot.slane %v2515, 1
    %v2525 = vrot.slane %v2516, 1
    %v2526 = vsel %vm329, %v2524, %v2525
    %v2531 = vadd.f32 %v2459, %v2523
    %v2532 = vadd.f32 %v2460, %v2522
    %v2533 = vadd.f32 %v2461, %v2526
    %v2534 = vadd.f32 %v2462, %v2525
    %s2535 = sld [smem:[#allocation5 + $0x39]]
    %v2536 = vstv %s2535
    %v2537 = vmul.f32 %v117, %v2536
    %v2538 = vmul.f32 %v118, %v2536
    %v2539 = vmul.f32 %v125, %v2536
    %v2540 = vmul.f32 %v126, %v2536
    %v2545 = vrot.slane %v2537, 1
    %v2546 = vrot.slane %v2538, 1
    %v2547 = vsel %vm329, %v2545, %v2546
    %v2548 = vrot.slane %v2539, 1
    %v2549 = vrot.slane %v2540, 1
    %v2550 = vsel %vm329, %v2548, %v2549
    %2551 = vrot.lane.b32.xlu0 %v2547, 127
    %v2552 = vpop.permute.xlu0 %2551
    %2553 = vrot.lane.b32.xlu0 %v2546, 127
    %v2554 = vpop.permute.xlu0 %2553
    %2555 = vrot.lane.b32.xlu0 %v2550, 127
    %v2556 = vpop.permute.xlu0 %2555
    %2557 = vrot.lane.b32.xlu0 %v2549, 127
    %v2558 = vpop.permute.xlu0 %2557
    %v2563 = vadd.f32 %v2483, %v2552
    %v2564 = vadd.f32 %v2484, %v2554
    %v2565 = vadd.f32 %v2485, %v2556
    %v2566 = vadd.f32 %v2486, %v2558
    %s2567 = sld [smem:[#allocation5 + $0x3a]]
    %v2568 = vstv %s2567
    %v2569 = vmul.f32 %v117, %v2568
    %v2570 = vmul.f32 %v118, %v2568
    %v2571 = vmul.f32 %v125, %v2568
    %v2572 = vmul.f32 %v126, %v2568
    %v2577 = vrot.slane %v2569, 1
    %v2578 = vrot.slane %v2570, 1
    %v2579 = vsel %vm329, %v2577, %v2578
    %v2580 = vrot.slane %v2571, 1
    %v2581 = vrot.slane %v2572, 1
    %v2582 = vsel %vm329, %v2580, %v2581
    %2583 = vrot.lane.b32.xlu0 %v2579, 127
    %v2584 = vpop.permute.xlu0 %2583
    %2585 = vrot.lane.b32.xlu0 %v2578, 127
    %v2586 = vpop.permute.xlu0 %2585
    %2587 = vrot.lane.b32.xlu0 %v2582, 127
    %v2588 = vpop.permute.xlu0 %2587
    %2589 = vrot.lane.b32.xlu0 %v2581, 127
    %v2590 = vpop.permute.xlu0 %2589
    %v2595 = vadd.f32 %v2507, %v2584
    %v2596 = vadd.f32 %v2508, %v2586
    %v2597 = vadd.f32 %v2509, %v2588
    %v2598 = vadd.f32 %v2510, %v2590
    %s2599 = sld [smem:[#allocation5 + $0x3b]]
    %v2600 = vstv %s2599
    %v2601 = vmul.f32 %v117, %v2600
    %v2602 = vmul.f32 %v118, %v2600
    %v2603 = vmul.f32 %v125, %v2600
    %v2604 = vmul.f32 %v126, %v2600
    %v2609 = vrot.slane %v2601, 1
    %v2610 = vrot.slane %v2602, 1
    %v2611 = vsel %vm329, %v2609, %v2610
    %v2612 = vrot.slane %v2603, 1
    %v2613 = vrot.slane %v2604, 1
    %v2614 = vsel %vm329, %v2612, %v2613
    %2615 = vrot.lane.b32.xlu0 %v2611, 127
    %v2616 = vpop.permute.xlu0 %2615
    %2617 = vrot.lane.b32.xlu0 %v2610, 127
    %v2618 = vpop.permute.xlu0 %2617
    %2619 = vrot.lane.b32.xlu0 %v2614, 127
    %v2620 = vpop.permute.xlu0 %2619
    %2621 = vrot.lane.b32.xlu0 %v2613, 127
    %v2622 = vpop.permute.xlu0 %2621
    %v2627 = vadd.f32 %v2531, %v2616
    %v2628 = vadd.f32 %v2532, %v2618
    %v2629 = vadd.f32 %v2533, %v2620
    %v2630 = vadd.f32 %v2534, %v2622
    %s2631 = sld [smem:[#allocation5 + $0x45]]
    %v2632 = vstv %s2631
    %v2633 = vmul.f32 %v117, %v2632
    %v2634 = vmul.f32 %v118, %v2632
    %v2635 = vmul.f32 %v125, %v2632
    %v2636 = vmul.f32 %v126, %v2632
    %v2641 = vrot.slane %v2633, 1
    %v2642 = vrot.slane %v2634, 1
    %v2643 = vsel %vm329, %v2641, %v2642
    %v2644 = vrot.slane %v2635, 1
    %v2645 = vrot.slane %v2636, 1
    %v2646 = vsel %vm329, %v2644, %v2645
    %2647 = vrot.lane.b32.xlu0 %v2643, 126
    %v2648 = vpop.permute.xlu0 %2647
    %2649 = vrot.lane.b32.xlu0 %v2642, 126
    %v2650 = vpop.permute.xlu0 %2649
    %2651 = vrot.lane.b32.xlu0 %v2646, 126
    %v2652 = vpop.permute.xlu0 %2651
    %2653 = vrot.lane.b32.xlu0 %v2645, 126
    %v2654 = vpop.permute.xlu0 %2653
    %v2659 = vadd.f32 %v2563, %v2648
    %v2660 = vadd.f32 %v2564, %v2650
    %v2661 = vadd.f32 %v2565, %v2652
    %v2662 = vadd.f32 %v2566, %v2654
    %s2663 = sld [smem:[#allocation5 + $0x46]]
    %v2664 = vstv %s2663
    %v2665 = vmul.f32 %v117, %v2664
    %v2666 = vmul.f32 %v118, %v2664
    %v2667 = vmul.f32 %v125, %v2664
    %v2668 = vmul.f32 %v126, %v2664
    %v2673 = vrot.slane %v2665, 1
    %v2674 = vrot.slane %v2666, 1
    %v2675 = vsel %vm329, %v2673, %v2674
    %v2676 = vrot.slane %v2667, 1
    %v2677 = vrot.slane %v2668, 1
    %v2678 = vsel %vm329, %v2676, %v2677
    %2679 = vrot.lane.b32.xlu0 %v2675, 126
    %v2680 = vpop.permute.xlu0 %2679
    %2681 = vrot.lane.b32.xlu0 %v2674, 126
    %v2682 = vpop.permute.xlu0 %2681
    %2683 = vrot.lane.b32.xlu0 %v2678, 126
    %v2684 = vpop.permute.xlu0 %2683
    %2685 = vrot.lane.b32.xlu0 %v2677, 126
    %v2686 = vpop.permute.xlu0 %2685
    %v2691 = vadd.f32 %v2595, %v2680
    %v2692 = vadd.f32 %v2596, %v2682
    %v2693 = vadd.f32 %v2597, %v2684
    %v2694 = vadd.f32 %v2598, %v2686
    %s2695 = sld [smem:[#allocation5 + $0x47]]
    %v2696 = vstv %s2695
    %v2697 = vmul.f32 %v117, %v2696
    %v2698 = vmul.f32 %v118, %v2696
    %v2699 = vmul.f32 %v125, %v2696
    %v2700 = vmul.f32 %v126, %v2696
    %v2705 = vrot.slane %v2697, 1
    %v2706 = vrot.slane %v2698, 1
    %v2707 = vsel %vm329, %v2705, %v2706
    %v2708 = vrot.slane %v2699, 1
    %v2709 = vrot.slane %v2700, 1
    %v2710 = vsel %vm329, %v2708, %v2709
    %2711 = vrot.lane.b32.xlu0 %v2707, 126
    %v2712 = vpop.permute.xlu0 %2711
    %2713 = vrot.lane.b32.xlu0 %v2706, 126
    %v2714 = vpop.permute.xlu0 %2713
    %2715 = vrot.lane.b32.xlu0 %v2710, 126
    %v2716 = vpop.permute.xlu0 %2715
    %2717 = vrot.lane.b32.xlu0 %v2709, 126
    %v2718 = vpop.permute.xlu0 %2717
    %v2723 = vadd.f32 %v2627, %v2712
    %v2724 = vadd.f32 %v2628, %v2714
    %v2725 = vadd.f32 %v2629, %v2716
    %v2726 = vadd.f32 %v2630, %v2718
    %s2727 = sld [smem:[#allocation5 + $0x51]]
    %v2728 = vstv %s2727
    %v2729 = vmul.f32 %v117, %v2728
    %v2730 = vmul.f32 %v118, %v2728
    %v2731 = vmul.f32 %v125, %v2728
    %v2732 = vmul.f32 %v126, %v2728
    %v2737 = vrot.slane %v2729, 2
    %v2738 = vrot.slane %v2730, 2
    %v2739 = vsel %vm594, %v2737, %v2738
    %v2740 = vrot.slane %v2731, 2
    %v2741 = vrot.slane %v2732, 2
    %v2742 = vsel %vm594, %v2740, %v2741
    %v2747 = vadd.f32 %v2659, %v2739
    %v2748 = vadd.f32 %v2660, %v2738
    %v2749 = vadd.f32 %v2661, %v2742
    %v2750 = vadd.f32 %v2662, %v2741
    %s2751 = sld [smem:[#allocation5 + $0x52]]
    %v2752 = vstv %s2751
    %v2753 = vmul.f32 %v117, %v2752
    %v2754 = vmul.f32 %v118, %v2752
    %v2755 = vmul.f32 %v125, %v2752
    %v2756 = vmul.f32 %v126, %v2752
    %v2761 = vrot.slane %v2753, 2
    %v2762 = vrot.slane %v2754, 2
    %v2763 = vsel %vm594, %v2761, %v2762
    %v2764 = vrot.slane %v2755, 2
    %v2765 = vrot.slane %v2756, 2
    %v2766 = vsel %vm594, %v2764, %v2765
    %v2771 = vadd.f32 %v2691, %v2763
    %v2772 = vadd.f32 %v2692, %v2762
    %v2773 = vadd.f32 %v2693, %v2766
    %v2774 = vadd.f32 %v2694, %v2765
    %s2775 = sld [smem:[#allocation5 + $0x53]]
    %v2776 = vstv %s2775
    %v2777 = vmul.f32 %v117, %v2776
    %v2778 = vmul.f32 %v118, %v2776
    %v2779 = vmul.f32 %v125, %v2776
    %v2780 = vmul.f32 %v126, %v2776
    %v2785 = vrot.slane %v2777, 2
    %v2786 = vrot.slane %v2778, 2
    %v2787 = vsel %vm594, %v2785, %v2786
    %v2788 = vrot.slane %v2779, 2
    %v2789 = vrot.slane %v2780, 2
    %v2790 = vsel %vm594, %v2788, %v2789
    %v2795 = vadd.f32 %v2723, %v2787
    %v2796 = vadd.f32 %v2724, %v2786
    %v2797 = vadd.f32 %v2725, %v2790
    %v2798 = vadd.f32 %v2726, %v2789
    %s2799 = sld [smem:[#allocation5 + $0x5d]]
    %v2800 = vstv %s2799
    %v2801 = vmul.f32 %v117, %v2800
    %v2802 = vmul.f32 %v118, %v2800
    %v2803 = vmul.f32 %v125, %v2800
    %v2804 = vmul.f32 %v126, %v2800
    %v2809 = vrot.slane %v2801, 2
    %v2810 = vrot.slane %v2802, 2
    %v2811 = vsel %vm594, %v2809, %v2810
    %v2812 = vrot.slane %v2803, 2
    %v2813 = vrot.slane %v2804, 2
    %v2814 = vsel %vm594, %v2812, %v2813
    %2815 = vrot.lane.b32.xlu0 %v2811, 127
    %v2816 = vpop.permute.xlu0 %2815
    %2817 = vrot.lane.b32.xlu0 %v2810, 127
    %v2818 = vpop.permute.xlu0 %2817
    %2819 = vrot.lane.b32.xlu0 %v2814, 127
    %v2820 = vpop.permute.xlu0 %2819
    %2821 = vrot.lane.b32.xlu0 %v2813, 127
    %v2822 = vpop.permute.xlu0 %2821
    %v2827 = vadd.f32 %v2747, %v2816
    %v2828 = vadd.f32 %v2748, %v2818
    %v2829 = vadd.f32 %v2749, %v2820
    %v2830 = vadd.f32 %v2750, %v2822
    %s2831 = sld [smem:[#allocation5 + $0x5e]]
    %v2832 = vstv %s2831
    %v2833 = vmul.f32 %v117, %v2832
    %v2834 = vmul.f32 %v118, %v2832
    %v2835 = vmul.f32 %v125, %v2832
    %v2836 = vmul.f32 %v126, %v2832
    %v2841 = vrot.slane %v2833, 2
    %v2842 = vrot.slane %v2834, 2
    %v2843 = vsel %vm594, %v2841, %v2842
    %v2844 = vrot.slane %v2835, 2
    %v2845 = vrot.slane %v2836, 2
    %v2846 = vsel %vm594, %v2844, %v2845
    %2847 = vrot.lane.b32.xlu0 %v2843, 127
    %v2848 = vpop.permute.xlu0 %2847
    %2849 = vrot.lane.b32.xlu0 %v2842, 127
    %v2850 = vpop.permute.xlu0 %2849
    %2851 = vrot.lane.b32.xlu0 %v2846, 127
    %v2852 = vpop.permute.xlu0 %2851
    %2853 = vrot.lane.b32.xlu0 %v2845, 127
    %v2854 = vpop.permute.xlu0 %2853
    %v2859 = vadd.f32 %v2771, %v2848
    %v2860 = vadd.f32 %v2772, %v2850
    %v2861 = vadd.f32 %v2773, %v2852
    %v2862 = vadd.f32 %v2774, %v2854
    %s2863 = sld [smem:[#allocation5 + $0x5f]]
    %v2864 = vstv %s2863
    %v2865 = vmul.f32 %v117, %v2864
    %v2866 = vmul.f32 %v118, %v2864
    %v2867 = vmul.f32 %v125, %v2864
    %v2868 = vmul.f32 %v126, %v2864
    %v2873 = vrot.slane %v2865, 2
    %v2874 = vrot.slane %v2866, 2
    %v2875 = vsel %vm594, %v2873, %v2874
    %v2876 = vrot.slane %v2867, 2
    %v2877 = vrot.slane %v2868, 2
    %v2878 = vsel %vm594, %v2876, %v2877
    %2879 = vrot.lane.b32.xlu0 %v2875, 127
    %v2880 = vpop.permute.xlu0 %2879
    %2881 = vrot.lane.b32.xlu0 %v2874, 127
    %v2882 = vpop.permute.xlu0 %2881
    %2883 = vrot.lane.b32.xlu0 %v2878, 127
    %v2884 = vpop.permute.xlu0 %2883
    %2885 = vrot.lane.b32.xlu0 %v2877, 127
    %v2886 = vpop.permute.xlu0 %2885
    %v2891 = vadd.f32 %v2795, %v2880
    %v2892 = vadd.f32 %v2796, %v2882
    %v2893 = vadd.f32 %v2797, %v2884
    %v2894 = vadd.f32 %v2798, %v2886
    %s2895 = sld [smem:[#allocation5 + $0x69]]
    %v2896 = vstv %s2895
    %v2897 = vmul.f32 %v117, %v2896
    %v2898 = vmul.f32 %v118, %v2896
    %v2899 = vmul.f32 %v125, %v2896
    %v2900 = vmul.f32 %v126, %v2896
    %v2905 = vrot.slane %v2897, 2
    %v2906 = vrot.slane %v2898, 2
    %v2907 = vsel %vm594, %v2905, %v2906
    %v2908 = vrot.slane %v2899, 2
    %v2909 = vrot.slane %v2900, 2
    %v2910 = vsel %vm594, %v2908, %v2909
    %2911 = vrot.lane.b32.xlu0 %v2907, 126
    %v2912 = vpop.permute.xlu0 %2911
    %2913 = vrot.lane.b32.xlu0 %v2906, 126
    %v2914 = vpop.permute.xlu0 %2913
    %2915 = vrot.lane.b32.xlu0 %v2910, 126
    %v2916 = vpop.permute.xlu0 %2915
    %2917 = vrot.lane.b32.xlu0 %v2909, 126
    %v2918 = vpop.permute.xlu0 %2917
    %v2923 = vadd.f32 %v2827, %v2912
    %v2924 = vadd.f32 %v2828, %v2914
    %v2925 = vadd.f32 %v2829, %v2916
    %v2926 = vadd.f32 %v2830, %v2918
    %s2927 = sld [smem:[#allocation5 + $0x6a]]
    %v2928 = vstv %s2927
    %v2929 = vmul.f32 %v117, %v2928
    %v2930 = vmul.f32 %v118, %v2928
    %v2931 = vmul.f32 %v125, %v2928
    %v2932 = vmul.f32 %v126, %v2928
    %v2937 = vrot.slane %v2929, 2
    %v2938 = vrot.slane %v2930, 2
    %v2939 = vsel %vm594, %v2937, %v2938
    %v2940 = vrot.slane %v2931, 2
    %v2941 = vrot.slane %v2932, 2
    %v2942 = vsel %vm594, %v2940, %v2941
    %2943 = vrot.lane.b32.xlu0 %v2939, 126
    %v2944 = vpop.permute.xlu0 %2943
    %2945 = vrot.lane.b32.xlu0 %v2938, 126
    %v2946 = vpop.permute.xlu0 %2945
    %2947 = vrot.lane.b32.xlu0 %v2942, 126
    %v2948 = vpop.permute.xlu0 %2947
    %2949 = vrot.lane.b32.xlu0 %v2941, 126
    %v2950 = vpop.permute.xlu0 %2949
    %v2955 = vadd.f32 %v2859, %v2944
    %v2956 = vadd.f32 %v2860, %v2946
    %v2957 = vadd.f32 %v2861, %v2948
    %v2958 = vadd.f32 %v2862, %v2950
    %s2959 = sld [smem:[#allocation5 + $0x6b]]
    %v2960 = vstv %s2959
    %v2961 = vmul.f32 %v117, %v2960
    %v2962 = vmul.f32 %v118, %v2960
    %v2963 = vmul.f32 %v125, %v2960
    %v2964 = vmul.f32 %v126, %v2960
    %v2969 = vrot.slane %v2961, 2
    %v2970 = vrot.slane %v2962, 2
    %v2971 = vsel %vm594, %v2969, %v2970
    %v2972 = vrot.slane %v2963, 2
    %v2973 = vrot.slane %v2964, 2
    %v2974 = vsel %vm594, %v2972, %v2973
    %2975 = vrot.lane.b32.xlu0 %v2971, 126
    %v2976 = vpop.permute.xlu0 %2975
    %2977 = vrot.lane.b32.xlu0 %v2970, 126
    %v2978 = vpop.permute.xlu0 %2977
    %2979 = vrot.lane.b32.xlu0 %v2974, 126
    %v2980 = vpop.permute.xlu0 %2979
    %2981 = vrot.lane.b32.xlu0 %v2973, 126
    %v2982 = vpop.permute.xlu0 %2981
    %v2987 = vadd.f32 %v2891, %v2976
    %v2988 = vadd.f32 %v2892, %v2978
    %v2989 = vadd.f32 %v2893, %v2980
    %v2990 = vadd.f32 %v2894, %v2982
    %v2991 = vmax.f32 %v2923, 0.0
    %v2992 = vmax.f32 %v2924, 0.0
    %v2993 = vmax.f32 %v2955, 0.0
    %v2994 = vmax.f32 %v2956, 0.0
    %v2995 = vmax.f32 %v2987, 0.0
    %v2996 = vmax.f32 %v2988, 0.0
    %v2997 = vmax.f32 %v2925, 0.0
    %v2998 = vmax.f32 %v2926, 0.0
    %v2999 = vmax.f32 %v2957, 0.0
    %v3000 = vmax.f32 %v2958, 0.0
    %v3001 = vmax.f32 %v2989, 0.0
    %v3002 = vmax.f32 %v2990, 0.0
    %s3003 = sld [smem:[#allocation9]]
    %v3004 = vstv %s3003
    %s3005 = sld [smem:[#allocation9 + $0x1]]
    %v3006 = vstv %s3005
    %s3007 = sld [smem:[#allocation9 + $0x2]]
    %v3008 = vstv %s3007
    %s3009 = sld [smem:[#allocation8]]
    %v3010 = vstv %s3009
    %v3011 = vmul.f32 %v2991, %v3010
    %v3012 = vmul.f32 %v2992, %v3010
    %v3013 = vmul.f32 %v2997, %v3010
    %v3014 = vmul.f32 %v2998, %v3010
    %v3015 = vadd.f32 %v3004, %v3011
    %v3016 = vadd.f32 %v3004, %v3012
    %v3017 = vadd.f32 %v3004, %v3013
    %v3018 = vadd.f32 %v3004, %v3014
    %s3019 = sld [smem:[#allocation8 + $0x1]]
    %v3020 = vstv %s3019
    %v3021 = vmul.f32 %v2991, %v3020
    %v3022 = vmul.f32 %v2992, %v3020
    %v3023 = vmul.f32 %v2997, %v3020
    %v3024 = vmul.f32 %v2998, %v3020
    %v3025 = vadd.f32 %v3006, %v3021
    %v3026 = vadd.f32 %v3006, %v3022
    %v3027 = vadd.f32 %v3006, %v3023
    %v3028 = vadd.f32 %v3006, %v3024
    %s3029 = sld [smem:[#allocation8 + $0x2]]
    %v3030 = vstv %s3029
    %v3031 = vmul.f32 %v2991, %v3030
    %v3032 = vmul.f32 %v2992, %v3030
    %v3033 = vmul.f32 %v2997, %v3030
    %v3034 = vmul.f32 %v2998, %v3030
    %v3035 = vadd.f32 %v3008, %v3031
    %v3036 = vadd.f32 %v3008, %v3032
    %v3037 = vadd.f32 %v3008, %v3033
    %v3038 = vadd.f32 %v3008, %v3034
    %s3039 = sld [smem:[#allocation8 + $0x9]]
    %v3040 = vstv %s3039
    %v3041 = vmul.f32 %v2991, %v3040
    %v3042 = vmul.f32 %v2992, %v3040
    %v3043 = vmul.f32 %v2997, %v3040
    %v3044 = vmul.f32 %v2998, %v3040
    %3049 = vrot.lane.b32.xlu0 %v3041, 127
    %v3050 = vpop.permute.xlu0 %3049
    %3051 = vrot.lane.b32.xlu0 %v3042, 127
    %v3052 = vpop.permute.xlu0 %3051
    %3053 = vrot.lane.b32.xlu0 %v3043, 127
    %v3054 = vpop.permute.xlu0 %3053
    %3055 = vrot.lane.b32.xlu0 %v3044, 127
    %v3056 = vpop.permute.xlu0 %3055
    %v3061 = vadd.f32 %v3015, %v3050
    %v3062 = vadd.f32 %v3016, %v3052
    %v3063 = vadd.f32 %v3017, %v3054
    %v3064 = vadd.f32 %v3018, %v3056
    %s3065 = sld [smem:[#allocation8 + $0xa]]
    %v3066 = vstv %s3065
    %v3067 = vmul.f32 %v2991, %v3066
    %v3068 = vmul.f32 %v2992, %v3066
    %v3069 = vmul.f32 %v2997, %v3066
    %v3070 = vmul.f32 %v2998, %v3066
    %3075 = vrot.lane.b32.xlu0 %v3067, 127
    %v3076 = vpop.permute.xlu0 %3075
    %3077 = vrot.lane.b32.xlu0 %v3068, 127
    %v3078 = vpop.permute.xlu0 %3077
    %3079 = vrot.lane.b32.xlu0 %v3069, 127
    %v3080 = vpop.permute.xlu0 %3079
    %3081 = vrot.lane.b32.xlu0 %v3070, 127
    %v3082 = vpop.permute.xlu0 %3081
    %v3087 = vadd.f32 %v3025, %v3076
    %v3088 = vadd.f32 %v3026, %v3078
    %v3089 = vadd.f32 %v3027, %v3080
    %v3090 = vadd.f32 %v3028, %v3082
    %s3091 = sld [smem:[#allocation8 + $0xb]]
    %v3092 = vstv %s3091
    %v3093 = vmul.f32 %v2991, %v3092
    %v3094 = vmul.f32 %v2992, %v3092
    %v3095 = vmul.f32 %v2997, %v3092
    %v3096 = vmul.f32 %v2998, %v3092
    %3101 = vrot.lane.b32.xlu0 %v3093, 127
    %v3102 = vpop.permute.xlu0 %3101
    %3103 = vrot.lane.b32.xlu0 %v3094, 127
    %v3104 = vpop.permute.xlu0 %3103
    %3105 = vrot.lane.b32.xlu0 %v3095, 127
    %v3106 = vpop.permute.xlu0 %3105
    %3107 = vrot.lane.b32.xlu0 %v3096, 127
    %v3108 = vpop.permute.xlu0 %3107
    %v3113 = vadd.f32 %v3035, %v3102
    %v3114 = vadd.f32 %v3036, %v3104
    %v3115 = vadd.f32 %v3037, %v3106
    %v3116 = vadd.f32 %v3038, %v3108
    %s3117 = sld [smem:[#allocation8 + $0x12]]
    %v3118 = vstv %s3117
    %v3119 = vmul.f32 %v2991, %v3118
    %v3120 = vmul.f32 %v2992, %v3118
    %v3121 = vmul.f32 %v2997, %v3118
    %v3122 = vmul.f32 %v2998, %v3118
    %3127 = vrot.lane.b32.xlu0 %v3119, 126
    %v3128 = vpop.permute.xlu0 %3127
    %3129 = vrot.lane.b32.xlu0 %v3120, 126
    %v3130 = vpop.permute.xlu0 %3129
    %3131 = vrot.lane.b32.xlu0 %v3121, 126
    %v3132 = vpop.permute.xlu0 %3131
    %3133 = vrot.lane.b32.xlu0 %v3122, 126
    %v3134 = vpop.permute.xlu0 %3133
    %v3139 = vadd.f32 %v3061, %v3128
    %v3140 = vadd.f32 %v3062, %v3130
    %v3141 = vadd.f32 %v3063, %v3132
    %v3142 = vadd.f32 %v3064, %v3134
    %s3143 = sld [smem:[#allocation8 + $0x13]]
    %v3144 = vstv %s3143
    %v3145 = vmul.f32 %v2991, %v3144
    %v3146 = vmul.f32 %v2992, %v3144
    %v3147 = vmul.f32 %v2997, %v3144
    %v3148 = vmul.f32 %v2998, %v3144
    %3153 = vrot.lane.b32.xlu0 %v3145, 126
    %v3154 = vpop.permute.xlu0 %3153
    %3155 = vrot.lane.b32.xlu0 %v3146, 126
    %v3156 = vpop.permute.xlu0 %3155
    %3157 = vrot.lane.b32.xlu0 %v3147, 126
    %v3158 = vpop.permute.xlu0 %3157
    %3159 = vrot.lane.b32.xlu0 %v3148, 126
    %v3160 = vpop.permute.xlu0 %3159
    %v3165 = vadd.f32 %v3087, %v3154
    %v3166 = vadd.f32 %v3088, %v3156
    %v3167 = vadd.f32 %v3089, %v3158
    %v3168 = vadd.f32 %v3090, %v3160
    %s3169 = sld [smem:[#allocation8 + $0x14]]
    %v3170 = vstv %s3169
    %v3171 = vmul.f32 %v2991, %v3170
    %v3172 = vmul.f32 %v2992, %v3170
    %v3173 = vmul.f32 %v2997, %v3170
    %v3174 = vmul.f32 %v2998, %v3170
    %3179 = vrot.lane.b32.xlu0 %v3171, 126
    %v3180 = vpop.permute.xlu0 %3179
    %3181 = vrot.lane.b32.xlu0 %v3172, 126
    %v3182 = vpop.permute.xlu0 %3181
    %3183 = vrot.lane.b32.xlu0 %v3173, 126
    %v3184 = vpop.permute.xlu0 %3183
    %3185 = vrot.lane.b32.xlu0 %v3174, 126
    %v3186 = vpop.permute.xlu0 %3185
    %v3191 = vadd.f32 %v3113, %v3180
    %v3192 = vadd.f32 %v3114, %v3182
    %v3193 = vadd.f32 %v3115, %v3184
    %v3194 = vadd.f32 %v3116, %v3186
    %s3195 = sld [smem:[#allocation8 + $0x1b]]
    %v3196 = vstv %s3195
    %v3197 = vmul.f32 %v2991, %v3196
    %v3198 = vmul.f32 %v2992, %v3196
    %v3199 = vmul.f32 %v2997, %v3196
    %v3200 = vmul.f32 %v2998, %v3196
    %v3205 = vrot.slane %v3197, 1
    %v3206 = vrot.slane %v3198, 1
    %v3207 = vsel %vm329, %v3205, %v3206
    %v3208 = vrot.slane %v3199, 1
    %v3209 = vrot.slane %v3200, 1
    %v3210 = vsel %vm329, %v3208, %v3209
    %v3215 = vadd.f32 %v3139, %v3207
    %v3216 = vadd.f32 %v3140, %v3206
    %v3217 = vadd.f32 %v3141, %v3210
    %v3218 = vadd.f32 %v3142, %v3209
    %s3219 = sld [smem:[#allocation8 + $0x1c]]
    %v3220 = vstv %s3219
    %v3221 = vmul.f32 %v2991, %v3220
    %v3222 = vmul.f32 %v2992, %v3220
    %v3223 = vmul.f32 %v2997, %v3220
    %v3224 = vmul.f32 %v2998, %v3220
    %v3229 = vrot.slane %v3221, 1
    %v3230 = vrot.slane %v3222, 1
    %v3231 = vsel %vm329, %v3229, %v3230
    %v3232 = vrot.slane %v3223, 1
    %v3233 = vrot.slane %v3224, 1
    %v3234 = vsel %vm329, %v3232, %v3233
    %v3239 = vadd.f32 %v3165, %v3231
    %v3240 = vadd.f32 %v3166, %v3230
    %v3241 = vadd.f32 %v3167, %v3234
    %v3242 = vadd.f32 %v3168, %v3233
    %s3243 = sld [smem:[#allocation8 + $0x1d]]
    %v3244 = vstv %s3243
    %v3245 = vmul.f32 %v2991, %v3244
    %v3246 = vmul.f32 %v2992, %v3244
    %v3247 = vmul.f32 %v2997, %v3244
    %v3248 = vmul.f32 %v2998, %v3244
    %v3253 = vrot.slane %v3245, 1
    %v3254 = vrot.slane %v3246, 1
    %v3255 = vsel %vm329, %v3253, %v3254
    %v3256 = vrot.slane %v3247, 1
    %v3257 = vrot.slane %v3248, 1
    %v3258 = vsel %vm329, %v3256, %v3257
    %v3263 = vadd.f32 %v3191, %v3255
    %v3264 = vadd.f32 %v3192, %v3254
    %v3265 = vadd.f32 %v3193, %v3258
    %v3266 = vadd.f32 %v3194, %v3257
    %s3267 = sld [smem:[#allocation8 + $0x24]]
    %v3268 = vstv %s3267
    %v3269 = vmul.f32 %v2991, %v3268
    %v3270 = vmul.f32 %v2992, %v3268
    %v3271 = vmul.f32 %v2997, %v3268
    %v3272 = vmul.f32 %v2998, %v3268
    %v3277 = vrot.slane %v3269, 1
    %v3278 = vrot.slane %v3270, 1
    %v3279 = vsel %vm329, %v3277, %v3278
    %v3280 = vrot.slane %v3271, 1
    %v3281 = vrot.slane %v3272, 1
    %v3282 = vsel %vm329, %v3280, %v3281
    %3283 = vrot.lane.b32.xlu0 %v3279, 127
    %v3284 = vpop.permute.xlu0 %3283
    %3285 = vrot.lane.b32.xlu0 %v3278, 127
    %v3286 = vpop.permute.xlu0 %3285
    %3287 = vrot.lane.b32.xlu0 %v3282, 127
    %v3288 = vpop.permute.xlu0 %3287
    %3289 = vrot.lane.b32.xlu0 %v3281, 127
    %v3290 = vpop.permute.xlu0 %3289
    %v3295 = vadd.f32 %v3215, %v3284
    %v3296 = vadd.f32 %v3216, %v3286
    %v3297 = vadd.f32 %v3217, %v3288
    %v3298 = vadd.f32 %v3218, %v3290
    %s3299 = sld [smem:[#allocation8 + $0x25]]
    %v3300 = vstv %s3299
    %v3301 = vmul.f32 %v2991, %v3300
    %v3302 = vmul.f32 %v2992, %v3300
    %v3303 = vmul.f32 %v2997, %v3300
    %v3304 = vmul.f32 %v2998, %v3300
    %v3309 = vrot.slane %v3301, 1
    %v3310 = vrot.slane %v3302, 1
    %v3311 = vsel %vm329, %v3309, %v3310
    %v3312 = vrot.slane %v3303, 1
    %v3313 = vrot.slane %v3304, 1
    %v3314 = vsel %vm329, %v3312, %v3313
    %3315 = vrot.lane.b32.xlu0 %v3311, 127
    %v3316 = vpop.permute.xlu0 %3315
    %3317 = vrot.lane.b32.xlu0 %v3310, 127
    %v3318 = vpop.permute.xlu0 %3317
    %3319 = vrot.lane.b32.xlu0 %v3314, 127
    %v3320 = vpop.permute.xlu0 %3319
    %3321 = vrot.lane.b32.xlu0 %v3313, 127
    %v3322 = vpop.permute.xlu0 %3321
    %v3327 = vadd.f32 %v3239, %v3316
    %v3328 = vadd.f32 %v3240, %v3318
    %v3329 = vadd.f32 %v3241, %v3320
    %v3330 = vadd.f32 %v3242, %v3322
    %s3331 = sld [smem:[#allocation8 + $0x26]]
    %v3332 = vstv %s3331
    %v3333 = vmul.f32 %v2991, %v3332
    %v3334 = vmul.f32 %v2992, %v3332
    %v3335 = vmul.f32 %v2997, %v3332
    %v3336 = vmul.f32 %v2998, %v3332
    %v3341 = vrot.slane %v3333, 1
    %v3342 = vrot.slane %v3334, 1
    %v3343 = vsel %vm329, %v3341, %v3342
    %v3344 = vrot.slane %v3335, 1
    %v3345 = vrot.slane %v3336, 1
    %v3346 = vsel %vm329, %v3344, %v3345
    %3347 = vrot.lane.b32.xlu0 %v3343, 127
    %v3348 = vpop.permute.xlu0 %3347
    %3349 = vrot.lane.b32.xlu0 %v3342, 127
    %v3350 = vpop.permute.xlu0 %3349
    %3351 = vrot.lane.b32.xlu0 %v3346, 127
    %v3352 = vpop.permute.xlu0 %3351
    %3353 = vrot.lane.b32.xlu0 %v3345, 127
    %v3354 = vpop.permute.xlu0 %3353
    %v3359 = vadd.f32 %v3263, %v3348
    %v3360 = vadd.f32 %v3264, %v3350
    %v3361 = vadd.f32 %v3265, %v3352
    %v3362 = vadd.f32 %v3266, %v3354
    %s3363 = sld [smem:[#allocation8 + $0x2d]]
    %v3364 = vstv %s3363
    %v3365 = vmul.f32 %v2991, %v3364
    %v3366 = vmul.f32 %v2992, %v3364
    %v3367 = vmul.f32 %v2997, %v3364
    %v3368 = vmul.f32 %v2998, %v3364
    %v3373 = vrot.slane %v3365, 1
    %v3374 = vrot.slane %v3366, 1
    %v3375 = vsel %vm329, %v3373, %v3374
    %v3376 = vrot.slane %v3367, 1
    %v3377 = vrot.slane %v3368, 1
    %v3378 = vsel %vm329, %v3376, %v3377
    %3379 = vrot.lane.b32.xlu0 %v3375, 126
    %v3380 = vpop.permute.xlu0 %3379
    %3381 = vrot.lane.b32.xlu0 %v3374, 126
    %v3382 = vpop.permute.xlu0 %3381
    %3383 = vrot.lane.b32.xlu0 %v3378, 126
    %v3384 = vpop.permute.xlu0 %3383
    %3385 = vrot.lane.b32.xlu0 %v3377, 126
    %v3386 = vpop.permute.xlu0 %3385
    %v3391 = vadd.f32 %v3295, %v3380
    %v3392 = vadd.f32 %v3296, %v3382
    %v3393 = vadd.f32 %v3297, %v3384
    %v3394 = vadd.f32 %v3298, %v3386
    %s3395 = sld [smem:[#allocation8 + $0x2e]]
    %v3396 = vstv %s3395
    %v3397 = vmul.f32 %v2991, %v3396
    %v3398 = vmul.f32 %v2992, %v3396
    %v3399 = vmul.f32 %v2997, %v3396
    %v3400 = vmul.f32 %v2998, %v3396
    %v3405 = vrot.slane %v3397, 1
    %v3406 = vrot.slane %v3398, 1
    %v3407 = vsel %vm329, %v3405, %v3406
    %v3408 = vrot.slane %v3399, 1
    %v3409 = vrot.slane %v3400, 1
    %v3410 = vsel %vm329, %v3408, %v3409
    %3411 = vrot.lane.b32.xlu0 %v3407, 126
    %v3412 = vpop.permute.xlu0 %3411
    %3413 = vrot.lane.b32.xlu0 %v3406, 126
    %v3414 = vpop.permute.xlu0 %3413
    %3415 = vrot.lane.b32.xlu0 %v3410, 126
    %v3416 = vpop.permute.xlu0 %3415
    %3417 = vrot.lane.b32.xlu0 %v3409, 126
    %v3418 = vpop.permute.xlu0 %3417
    %v3423 = vadd.f32 %v3327, %v3412
    %v3424 = vadd.f32 %v3328, %v3414
    %v3425 = vadd.f32 %v3329, %v3416
    %v3426 = vadd.f32 %v3330, %v3418
    %s3427 = sld [smem:[#allocation8 + $0x2f]]
    %v3428 = vstv %s3427
    %v3429 = vmul.f32 %v2991, %v3428
    %v3430 = vmul.f32 %v2992, %v3428
    %v3431 = vmul.f32 %v2997, %v3428
    %v3432 = vmul.f32 %v2998, %v3428
    %v3437 = vrot.slane %v3429, 1
    %v3438 = vrot.slane %v3430, 1
    %v3439 = vsel %vm329, %v3437, %v3438
    %v3440 = vrot.slane %v3431, 1
    %v3441 = vrot.slane %v3432, 1
    %v3442 = vsel %vm329, %v3440, %v3441
    %3443 = vrot.lane.b32.xlu0 %v3439, 126
    %v3444 = vpop.permute.xlu0 %3443
    %3445 = vrot.lane.b32.xlu0 %v3438, 126
    %v3446 = vpop.permute.xlu0 %3445
    %3447 = vrot.lane.b32.xlu0 %v3442, 126
    %v3448 = vpop.permute.xlu0 %3447
    %3449 = vrot.lane.b32.xlu0 %v3441, 126
    %v3450 = vpop.permute.xlu0 %3449
    %v3455 = vadd.f32 %v3359, %v3444
    %v3456 = vadd.f32 %v3360, %v3446
    %v3457 = vadd.f32 %v3361, %v3448
    %v3458 = vadd.f32 %v3362, %v3450
    %s3459 = sld [smem:[#allocation8 + $0x36]]
    %v3460 = vstv %s3459
    %v3461 = vmul.f32 %v2991, %v3460
    %v3462 = vmul.f32 %v2992, %v3460
    %v3463 = vmul.f32 %v2997, %v3460
    %v3464 = vmul.f32 %v2998, %v3460
    %v3469 = vrot.slane %v3461, 2
    %v3470 = vrot.slane %v3462, 2
    %v3471 = vsel %vm594, %v3469, %v3470
    %v3472 = vrot.slane %v3463, 2
    %v3473 = vrot.slane %v3464, 2
    %v3474 = vsel %vm594, %v3472, %v3473
    %v3479 = vadd.f32 %v3391, %v3471
    %v3480 = vadd.f32 %v3392, %v3470
    %v3481 = vadd.f32 %v3393, %v3474
    %v3482 = vadd.f32 %v3394, %v3473
    %s3483 = sld [smem:[#allocation8 + $0x37]]
    %v3484 = vstv %s3483
    %v3485 = vmul.f32 %v2991, %v3484
    %v3486 = vmul.f32 %v2992, %v3484
    %v3487 = vmul.f32 %v2997, %v3484
    %v3488 = vmul.f32 %v2998, %v3484
    %v3493 = vrot.slane %v3485, 2
    %v3494 = vrot.slane %v3486, 2
    %v3495 = vsel %vm594, %v3493, %v3494
    %v3496 = vrot.slane %v3487, 2
    %v3497 = vrot.slane %v3488, 2
    %v3498 = vsel %vm594, %v3496, %v3497
    %v3503 = vadd.f32 %v3423, %v3495
    %v3504 = vadd.f32 %v3424, %v3494
    %v3505 = vadd.f32 %v3425, %v3498
    %v3506 = vadd.f32 %v3426, %v3497
    %s3507 = sld [smem:[#allocation8 + $0x38]]
    %v3508 = vstv %s3507
    %v3509 = vmul.f32 %v2991, %v3508
    %v3510 = vmul.f32 %v2992, %v3508
    %v3511 = vmul.f32 %v2997, %v3508
    %v3512 = vmul.f32 %v2998, %v3508
    %v3517 = vrot.slane %v3509, 2
    %v3518 = vrot.slane %v3510, 2
    %v3519 = vsel %vm594, %v3517, %v3518
    %v3520 = vrot.slane %v3511, 2
    %v3521 = vrot.slane %v3512, 2
    %v3522 = vsel %vm594, %v3520, %v3521
    %v3527 = vadd.f32 %v3455, %v3519
    %v3528 = vadd.f32 %v3456, %v3518
    %v3529 = vadd.f32 %v3457, %v3522
    %v3530 = vadd.f32 %v3458, %v3521
    %s3531 = sld [smem:[#allocation8 + $0x3f]]
    %v3532 = vstv %s3531
    %v3533 = vmul.f32 %v2991, %v3532
    %v3534 = vmul.f32 %v2992, %v3532
    %v3535 = vmul.f32 %v2997, %v3532
    %v3536 = vmul.f32 %v2998, %v3532
    %v3541 = vrot.slane %v3533, 2
    %v3542 = vrot.slane %v3534, 2
    %v3543 = vsel %vm594, %v3541, %v3542
    %v3544 = vrot.slane %v3535, 2
    %v3545 = vrot.slane %v3536, 2
    %v3546 = vsel %vm594, %v3544, %v3545
    %3547 = vrot.lane.b32.xlu0 %v3543, 127
    %v3548 = vpop.permute.xlu0 %3547
    %3549 = vrot.lane.b32.xlu0 %v3542, 127
    %v3550 = vpop.permute.xlu0 %3549
    %3551 = vrot.lane.b32.xlu0 %v3546, 127
    %v3552 = vpop.permute.xlu0 %3551
    %3553 = vrot.lane.b32.xlu0 %v3545, 127
    %v3554 = vpop.permute.xlu0 %3553
    %v3559 = vadd.f32 %v3479, %v3548
    %v3560 = vadd.f32 %v3480, %v3550
    %v3561 = vadd.f32 %v3481, %v3552
    %v3562 = vadd.f32 %v3482, %v3554
    %s3563 = sld [smem:[#allocation8 + $0x40]]
    %v3564 = vstv %s3563
    %v3565 = vmul.f32 %v2991, %v3564
    %v3566 = vmul.f32 %v2992, %v3564
    %v3567 = vmul.f32 %v2997, %v3564
    %v3568 = vmul.f32 %v2998, %v3564
    %v3573 = vrot.slane %v3565, 2
    %v3574 = vrot.slane %v3566, 2
    %v3575 = vsel %vm594, %v3573, %v3574
    %v3576 = vrot.slane %v3567, 2
    %v3577 = vrot.slane %v3568, 2
    %v3578 = vsel %vm594, %v3576, %v3577
    %3579 = vrot.lane.b32.xlu0 %v3575, 127
    %v3580 = vpop.permute.xlu0 %3579
    %3581 = vrot.lane.b32.xlu0 %v3574, 127
    %v3582 = vpop.permute.xlu0 %3581
    %3583 = vrot.lane.b32.xlu0 %v3578, 127
    %v3584 = vpop.permute.xlu0 %3583
    %3585 = vrot.lane.b32.xlu0 %v3577, 127
    %v3586 = vpop.permute.xlu0 %3585
    %v3591 = vadd.f32 %v3503, %v3580
    %v3592 = vadd.f32 %v3504, %v3582
    %v3593 = vadd.f32 %v3505, %v3584
    %v3594 = vadd.f32 %v3506, %v3586
    %s3595 = sld [smem:[#allocation8 + $0x41]]
    %v3596 = vstv %s3595
    %v3597 = vmul.f32 %v2991, %v3596
    %v3598 = vmul.f32 %v2992, %v3596
    %v3599 = vmul.f32 %v2997, %v3596
    %v3600 = vmul.f32 %v2998, %v3596
    %v3605 = vrot.slane %v3597, 2
    %v3606 = vrot.slane %v3598, 2
    %v3607 = vsel %vm594, %v3605, %v3606
    %v3608 = vrot.slane %v3599, 2
    %v3609 = vrot.slane %v3600, 2
    %v3610 = vsel %vm594, %v3608, %v3609
    %3611 = vrot.lane.b32.xlu0 %v3607, 127
    %v3612 = vpop.permute.xlu0 %3611
    %3613 = vrot.lane.b32.xlu0 %v3606, 127
    %v3614 = vpop.permute.xlu0 %3613
    %3615 = vrot.lane.b32.xlu0 %v3610, 127
    %v3616 = vpop.permute.xlu0 %3615
    %3617 = vrot.lane.b32.xlu0 %v3609, 127
    %v3618 = vpop.permute.xlu0 %3617
    %v3623 = vadd.f32 %v3527, %v3612
    %v3624 = vadd.f32 %v3528, %v3614
    %v3625 = vadd.f32 %v3529, %v3616
    %v3626 = vadd.f32 %v3530, %v3618
    %s3627 = sld [smem:[#allocation8 + $0x48]]
    %v3628 = vstv %s3627
    %v3629 = vmul.f32 %v2991, %v3628
    %v3630 = vmul.f32 %v2992, %v3628
    %v3631 = vmul.f32 %v2997, %v3628
    %v3632 = vmul.f32 %v2998, %v3628
    %v3637 = vrot.slane %v3629, 2
    %v3638 = vrot.slane %v3630, 2
    %v3639 = vsel %vm594, %v3637, %v3638
    %v3640 = vrot.slane %v3631, 2
    %v3641 = vrot.slane %v3632, 2
    %v3642 = vsel %vm594, %v3640, %v3641
    %3643 = vrot.lane.b32.xlu0 %v3639, 126
    %v3644 = vpop.permute.xlu0 %3643
    %3645 = vrot.lane.b32.xlu0 %v3638, 126
    %v3646 = vpop.permute.xlu0 %3645
    %3647 = vrot.lane.b32.xlu0 %v3642, 126
    %v3648 = vpop.permute.xlu0 %3647
    %3649 = vrot.lane.b32.xlu0 %v3641, 126
    %v3650 = vpop.permute.xlu0 %3649
    %v3655 = vadd.f32 %v3559, %v3644
    %v3656 = vadd.f32 %v3560, %v3646
    %v3657 = vadd.f32 %v3561, %v3648
    %v3658 = vadd.f32 %v3562, %v3650
    %s3659 = sld [smem:[#allocation8 + $0x49]]
    %v3660 = vstv %s3659
    %v3661 = vmul.f32 %v2991, %v3660
    %v3662 = vmul.f32 %v2992, %v3660
    %v3663 = vmul.f32 %v2997, %v3660
    %v3664 = vmul.f32 %v2998, %v3660
    %v3669 = vrot.slane %v3661, 2
    %v3670 = vrot.slane %v3662, 2
    %v3671 = vsel %vm594, %v3669, %v3670
    %v3672 = vrot.slane %v3663, 2
    %v3673 = vrot.slane %v3664, 2
    %v3674 = vsel %vm594, %v3672, %v3673
    %3675 = vrot.lane.b32.xlu0 %v3671, 126
    %v3676 = vpop.permute.xlu0 %3675
    %3677 = vrot.lane.b32.xlu0 %v3670, 126
    %v3678 = vpop.permute.xlu0 %3677
    %3679 = vrot.lane.b32.xlu0 %v3674, 126
    %v3680 = vpop.permute.xlu0 %3679
    %3681 = vrot.lane.b32.xlu0 %v3673, 126
    %v3682 = vpop.permute.xlu0 %3681
    %v3687 = vadd.f32 %v3591, %v3676
    %v3688 = vadd.f32 %v3592, %v3678
    %v3689 = vadd.f32 %v3593, %v3680
    %v3690 = vadd.f32 %v3594, %v3682
    %s3691 = sld [smem:[#allocation8 + $0x4a]]
    %v3692 = vstv %s3691
    %v3693 = vmul.f32 %v2991, %v3692
    %v3694 = vmul.f32 %v2992, %v3692
    %v3695 = vmul.f32 %v2997, %v3692
    %v3696 = vmul.f32 %v2998, %v3692
    %v3701 = vrot.slane %v3693, 2
    %v3702 = vrot.slane %v3694, 2
    %v3703 = vsel %vm594, %v3701, %v3702
    %v3704 = vrot.slane %v3695, 2
    %v3705 = vrot.slane %v3696, 2
    %v3706 = vsel %vm594, %v3704, %v3705
    %3707 = vrot.lane.b32.xlu0 %v3703, 126
    %v3708 = vpop.permute.xlu0 %3707
    %3709 = vrot.lane.b32.xlu0 %v3702, 126
    %v3710 = vpop.permute.xlu0 %3709
    %3711 = vrot.lane.b32.xlu0 %v3706, 126
    %v3712 = vpop.permute.xlu0 %3711
    %3713 = vrot.lane.b32.xlu0 %v3705, 126
    %v3714 = vpop.permute.xlu0 %3713
    %v3719 = vadd.f32 %v3623, %v3708
    %v3720 = vadd.f32 %v3624, %v3710
    %v3721 = vadd.f32 %v3625, %v3712
    %v3722 = vadd.f32 %v3626, %v3714
    %s3723 = sld [smem:[#allocation8 + $0x3]]
    %v3724 = vstv %s3723
    %v3725 = vmul.f32 %v2993, %v3724
    %v3726 = vmul.f32 %v2994, %v3724
    %v3727 = vmul.f32 %v2999, %v3724
    %v3728 = vmul.f32 %v3000, %v3724
    %v3729 = vadd.f32 %v3655, %v3725
    %v3730 = vadd.f32 %v3656, %v3726
    %v3731 = vadd.f32 %v3657, %v3727
    %v3732 = vadd.f32 %v3658, %v3728
    %s3733 = sld [smem:[#allocation8 + $0x4]]
    %v3734 = vstv %s3733
    %v3735 = vmul.f32 %v2993, %v3734
    %v3736 = vmul.f32 %v2994, %v3734
    %v3737 = vmul.f32 %v2999, %v3734
    %v3738 = vmul.f32 %v3000, %v3734
    %v3739 = vadd.f32 %v3687, %v3735
    %v3740 = vadd.f32 %v3688, %v3736
    %v3741 = vadd.f32 %v3689, %v3737
    %v3742 = vadd.f32 %v3690, %v3738
    %s3743 = sld [smem:[#allocation8 + $0x5]]
    %v3744 = vstv %s3743
    %v3745 = vmul.f32 %v2993, %v3744
    %v3746 = vmul.f32 %v2994, %v3744
    %v3747 = vmul.f32 %v2999, %v3744
    %v3748 = vmul.f32 %v3000, %v3744
    %v3749 = vadd.f32 %v3719, %v3745
    %v3750 = vadd.f32 %v3720, %v3746
    %v3751 = vadd.f32 %v3721, %v3747
    %v3752 = vadd.f32 %v3722, %v3748
    %s3753 = sld [smem:[#allocation8 + $0xc]]
    %v3754 = vstv %s3753
    %v3755 = vmul.f32 %v2993, %v3754
    %v3756 = vmul.f32 %v2994, %v3754
    %v3757 = vmul.f32 %v2999, %v3754
    %v3758 = vmul.f32 %v3000, %v3754
    %3763 = vrot.lane.b32.xlu0 %v3755, 127
    %v3764 = vpop.permute.xlu0 %3763
    %3765 = vrot.lane.b32.xlu0 %v3756, 127
    %v3766 = vpop.permute.xlu0 %3765
    %3767 = vrot.lane.b32.xlu0 %v3757, 127
    %v3768 = vpop.permute.xlu0 %3767
    %3769 = vrot.lane.b32.xlu0 %v3758, 127
    %v3770 = vpop.permute.xlu0 %3769
    %v3775 = vadd.f32 %v3729, %v3764
    %v3776 = vadd.f32 %v3730, %v3766
    %v3777 = vadd.f32 %v3731, %v3768
    %v3778 = vadd.f32 %v3732, %v3770
    %s3779 = sld [smem:[#allocation8 + $0xd]]
    %v3780 = vstv %s3779
    %v3781 = vmul.f32 %v2993, %v3780
    %v3782 = vmul.f32 %v2994, %v3780
    %v3783 = vmul.f32 %v2999, %v3780
    %v3784 = vmul.f32 %v3000, %v3780
    %3789 = vrot.lane.b32.xlu0 %v3781, 127
    %v3790 = vpop.permute.xlu0 %3789
    %3791 = vrot.lane.b32.xlu0 %v3782, 127
    %v3792 = vpop.permute.xlu0 %3791
    %3793 = vrot.lane.b32.xlu0 %v3783, 127
    %v3794 = vpop.permute.xlu0 %3793
    %3795 = vrot.lane.b32.xlu0 %v3784, 127
    %v3796 = vpop.permute.xlu0 %3795
    %v3801 = vadd.f32 %v3739, %v3790
    %v3802 = vadd.f32 %v3740, %v3792
    %v3803 = vadd.f32 %v3741, %v3794
    %v3804 = vadd.f32 %v3742, %v3796
    %s3805 = sld [smem:[#allocation8 + $0xe]]
    %v3806 = vstv %s3805
    %v3807 = vmul.f32 %v2993, %v3806
    %v3808 = vmul.f32 %v2994, %v3806
    %v3809 = vmul.f32 %v2999, %v3806
    %v3810 = vmul.f32 %v3000, %v3806
    %3815 = vrot.lane.b32.xlu0 %v3807, 127
    %v3816 = vpop.permute.xlu0 %3815
    %3817 = vrot.lane.b32.xlu0 %v3808, 127
    %v3818 = vpop.permute.xlu0 %3817
    %3819 = vrot.lane.b32.xlu0 %v3809, 127
    %v3820 = vpop.permute.xlu0 %3819
    %3821 = vrot.lane.b32.xlu0 %v3810, 127
    %v3822 = vpop.permute.xlu0 %3821
    %v3827 = vadd.f32 %v3749, %v3816
    %v3828 = vadd.f32 %v3750, %v3818
    %v3829 = vadd.f32 %v3751, %v3820
    %v3830 = vadd.f32 %v3752, %v3822
    %s3831 = sld [smem:[#allocation8 + $0x15]]
    %v3832 = vstv %s3831
    %v3833 = vmul.f32 %v2993, %v3832
    %v3834 = vmul.f32 %v2994, %v3832
    %v3835 = vmul.f32 %v2999, %v3832
    %v3836 = vmul.f32 %v3000, %v3832
    %3841 = vrot.lane.b32.xlu0 %v3833, 126
    %v3842 = vpop.permute.xlu0 %3841
    %3843 = vrot.lane.b32.xlu0 %v3834, 126
    %v3844 = vpop.permute.xlu0 %3843
    %3845 = vrot.lane.b32.xlu0 %v3835, 126
    %v3846 = vpop.permute.xlu0 %3845
    %3847 = vrot.lane.b32.xlu0 %v3836, 126
    %v3848 = vpop.permute.xlu0 %3847
    %v3853 = vadd.f32 %v3775, %v3842
    %v3854 = vadd.f32 %v3776, %v3844
    %v3855 = vadd.f32 %v3777, %v3846
    %v3856 = vadd.f32 %v3778, %v3848
    %s3857 = sld [smem:[#allocation8 + $0x16]]
    %v3858 = vstv %s3857
    %v3859 = vmul.f32 %v2993, %v3858
    %v3860 = vmul.f32 %v2994, %v3858
    %v3861 = vmul.f32 %v2999, %v3858
    %v3862 = vmul.f32 %v3000, %v3858
    %3867 = vrot.lane.b32.xlu0 %v3859, 126
    %v3868 = vpop.permute.xlu0 %3867
    %3869 = vrot.lane.b32.xlu0 %v3860, 126
    %v3870 = vpop.permute.xlu0 %3869
    %3871 = vrot.lane.b32.xlu0 %v3861, 126
    %v3872 = vpop.permute.xlu0 %3871
    %3873 = vrot.lane.b32.xlu0 %v3862, 126
    %v3874 = vpop.permute.xlu0 %3873
    %v3879 = vadd.f32 %v3801, %v3868
    %v3880 = vadd.f32 %v3802, %v3870
    %v3881 = vadd.f32 %v3803, %v3872
    %v3882 = vadd.f32 %v3804, %v3874
    %s3883 = sld [smem:[#allocation8 + $0x17]]
    %v3884 = vstv %s3883
    %v3885 = vmul.f32 %v2993, %v3884
    %v3886 = vmul.f32 %v2994, %v3884
    %v3887 = vmul.f32 %v2999, %v3884
    %v3888 = vmul.f32 %v3000, %v3884
    %3893 = vrot.lane.b32.xlu0 %v3885, 126
    %v3894 = vpop.permute.xlu0 %3893
    %3895 = vrot.lane.b32.xlu0 %v3886, 126
    %v3896 = vpop.permute.xlu0 %3895
    %3897 = vrot.lane.b32.xlu0 %v3887, 126
    %v3898 = vpop.permute.xlu0 %3897
    %3899 = vrot.lane.b32.xlu0 %v3888, 126
    %v3900 = vpop.permute.xlu0 %3899
    %v3905 = vadd.f32 %v3827, %v3894
    %v3906 = vadd.f32 %v3828, %v3896
    %v3907 = vadd.f32 %v3829, %v3898
    %v3908 = vadd.f32 %v3830, %v3900
    %s3909 = sld [smem:[#allocation8 + $0x1e]]
    %v3910 = vstv %s3909
    %v3911 = vmul.f32 %v2993, %v3910
    %v3912 = vmul.f32 %v2994, %v3910
    %v3913 = vmul.f32 %v2999, %v3910
    %v3914 = vmul.f32 %v3000, %v3910
    %v3919 = vrot.slane %v3911, 1
    %v3920 = vrot.slane %v3912, 1
    %v3921 = vsel %vm329, %v3919, %v3920
    %v3922 = vrot.slane %v3913, 1
    %v3923 = vrot.slane %v3914, 1
    %v3924 = vsel %vm329, %v3922, %v3923
    %v3929 = vadd.f32 %v3853, %v3921
    %v3930 = vadd.f32 %v3854, %v3920
    %v3931 = vadd.f32 %v3855, %v3924
    %v3932 = vadd.f32 %v3856, %v3923
    %s3933 = sld [smem:[#allocation8 + $0x1f]]
    %v3934 = vstv %s3933
    %v3935 = vmul.f32 %v2993, %v3934
    %v3936 = vmul.f32 %v2994, %v3934
    %v3937 = vmul.f32 %v2999, %v3934
    %v3938 = vmul.f32 %v3000, %v3934
    %v3943 = vrot.slane %v3935, 1
    %v3944 = vrot.slane %v3936, 1
    %v3945 = vsel %vm329, %v3943, %v3944
    %v3946 = vrot.slane %v3937, 1
    %v3947 = vrot.slane %v3938, 1
    %v3948 = vsel %vm329, %v3946, %v3947
    %v3953 = vadd.f32 %v3879, %v3945
    %v3954 = vadd.f32 %v3880, %v3944
    %v3955 = vadd.f32 %v3881, %v3948
    %v3956 = vadd.f32 %v3882, %v3947
    %s3957 = sld [smem:[#allocation8 + $0x20]]
    %v3958 = vstv %s3957
    %v3959 = vmul.f32 %v2993, %v3958
    %v3960 = vmul.f32 %v2994, %v3958
    %v3961 = vmul.f32 %v2999, %v3958
    %v3962 = vmul.f32 %v3000, %v3958
    %v3967 = vrot.slane %v3959, 1
    %v3968 = vrot.slane %v3960, 1
    %v3969 = vsel %vm329, %v3967, %v3968
    %v3970 = vrot.slane %v3961, 1
    %v3971 = vrot.slane %v3962, 1
    %v3972 = vsel %vm329, %v3970, %v3971
    %v3977 = vadd.f32 %v3905, %v3969
    %v3978 = vadd.f32 %v3906, %v3968
    %v3979 = vadd.f32 %v3907, %v3972
    %v3980 = vadd.f32 %v3908, %v3971
    %s3981 = sld [smem:[#allocation8 + $0x27]]
    %v3982 = vstv %s3981
    %v3983 = vmul.f32 %v2993, %v3982
    %v3984 = vmul.f32 %v2994, %v3982
    %v3985 = vmul.f32 %v2999, %v3982
    %v3986 = vmul.f32 %v3000, %v3982
    %v3991 = vrot.slane %v3983, 1
    %v3992 = vrot.slane %v3984, 1
    %v3993 = vsel %vm329, %v3991, %v3992
    %v3994 = vrot.slane %v3985, 1
    %v3995 = vrot.slane %v3986, 1
    %v3996 = vsel %vm329, %v3994, %v3995
    %3997 = vrot.lane.b32.xlu0 %v3993, 127
    %v3998 = vpop.permute.xlu0 %3997
    %3999 = vrot.lane.b32.xlu0 %v3992, 127
    %v4000 = vpop.permute.xlu0 %3999
    %4001 = vrot.lane.b32.xlu0 %v3996, 127
    %v4002 = vpop.permute.xlu0 %4001
    %4003 = vrot.lane.b32.xlu0 %v3995, 127
    %v4004 = vpop.permute.xlu0 %4003
    %v4009 = vadd.f32 %v3929, %v3998
    %v4010 = vadd.f32 %v3930, %v4000
    %v4011 = vadd.f32 %v3931, %v4002
    %v4012 = vadd.f32 %v3932, %v4004
    %s4013 = sld [smem:[#allocation8 + $0x28]]
    %v4014 = vstv %s4013
    %v4015 = vmul.f32 %v2993, %v4014
    %v4016 = vmul.f32 %v2994, %v4014
    %v4017 = vmul.f32 %v2999, %v4014
    %v4018 = vmul.f32 %v3000, %v4014
    %v4023 = vrot.slane %v4015, 1
    %v4024 = vrot.slane %v4016, 1
    %v4025 = vsel %vm329, %v4023, %v4024
    %v4026 = vrot.slane %v4017, 1
    %v4027 = vrot.slane %v4018, 1
    %v4028 = vsel %vm329, %v4026, %v4027
    %4029 = vrot.lane.b32.xlu0 %v4025, 127
    %v4030 = vpop.permute.xlu0 %4029
    %4031 = vrot.lane.b32.xlu0 %v4024, 127
    %v4032 = vpop.permute.xlu0 %4031
    %4033 = vrot.lane.b32.xlu0 %v4028, 127
    %v4034 = vpop.permute.xlu0 %4033
    %4035 = vrot.lane.b32.xlu0 %v4027, 127
    %v4036 = vpop.permute.xlu0 %4035
    %v4041 = vadd.f32 %v3953, %v4030
    %v4042 = vadd.f32 %v3954, %v4032
    %v4043 = vadd.f32 %v3955, %v4034
    %v4044 = vadd.f32 %v3956, %v4036
    %s4045 = sld [smem:[#allocation8 + $0x29]]
    %v4046 = vstv %s4045
    %v4047 = vmul.f32 %v2993, %v4046
    %v4048 = vmul.f32 %v2994, %v4046
    %v4049 = vmul.f32 %v2999, %v4046
    %v4050 = vmul.f32 %v3000, %v4046
    %v4055 = vrot.slane %v4047, 1
    %v4056 = vrot.slane %v4048, 1
    %v4057 = vsel %vm329, %v4055, %v4056
    %v4058 = vrot.slane %v4049, 1
    %v4059 = vrot.slane %v4050, 1
    %v4060 = vsel %vm329, %v4058, %v4059
    %4061 = vrot.lane.b32.xlu0 %v4057, 127
    %v4062 = vpop.permute.xlu0 %4061
    %4063 = vrot.lane.b32.xlu0 %v4056, 127
    %v4064 = vpop.permute.xlu0 %4063
    %4065 = vrot.lane.b32.xlu0 %v4060, 127
    %v4066 = vpop.permute.xlu0 %4065
    %4067 = vrot.lane.b32.xlu0 %v4059, 127
    %v4068 = vpop.permute.xlu0 %4067
    %v4073 = vadd.f32 %v3977, %v4062
    %v4074 = vadd.f32 %v3978, %v4064
    %v4075 = vadd.f32 %v3979, %v4066
    %v4076 = vadd.f32 %v3980, %v4068
    %s4077 = sld [smem:[#allocation8 + $0x30]]
    %v4078 = vstv %s4077
    %v4079 = vmul.f32 %v2993, %v4078
    %v4080 = vmul.f32 %v2994, %v4078
    %v4081 = vmul.f32 %v2999, %v4078
    %v4082 = vmul.f32 %v3000, %v4078
    %v4087 = vrot.slane %v4079, 1
    %v4088 = vrot.slane %v4080, 1
    %v4089 = vsel %vm329, %v4087, %v4088
    %v4090 = vrot.slane %v4081, 1
    %v4091 = vrot.slane %v4082, 1
    %v4092 = vsel %vm329, %v4090, %v4091
    %4093 = vrot.lane.b32.xlu0 %v4089, 126
    %v4094 = vpop.permute.xlu0 %4093
    %4095 = vrot.lane.b32.xlu0 %v4088, 126
    %v4096 = vpop.permute.xlu0 %4095
    %4097 = vrot.lane.b32.xlu0 %v4092, 126
    %v4098 = vpop.permute.xlu0 %4097
    %4099 = vrot.lane.b32.xlu0 %v4091, 126
    %v4100 = vpop.permute.xlu0 %4099
    %v4105 = vadd.f32 %v4009, %v4094
    %v4106 = vadd.f32 %v4010, %v4096
    %v4107 = vadd.f32 %v4011, %v4098
    %v4108 = vadd.f32 %v4012, %v4100
    %s4109 = sld [smem:[#allocation8 + $0x31]]
    %v4110 = vstv %s4109
    %v4111 = vmul.f32 %v2993, %v4110
    %v4112 = vmul.f32 %v2994, %v4110
    %v4113 = vmul.f32 %v2999, %v4110
    %v4114 = vmul.f32 %v3000, %v4110
    %v4119 = vrot.slane %v4111, 1
    %v4120 = vrot.slane %v4112, 1
    %v4121 = vsel %vm329, %v4119, %v4120
    %v4122 = vrot.slane %v4113, 1
    %v4123 = vrot.slane %v4114, 1
    %v4124 = vsel %vm329, %v4122, %v4123
    %4125 = vrot.lane.b32.xlu0 %v4121, 126
    %v4126 = vpop.permute.xlu0 %4125
    %4127 = vrot.lane.b32.xlu0 %v4120, 126
    %v4128 = vpop.permute.xlu0 %4127
    %4129 = vrot.lane.b32.xlu0 %v4124, 126
    %v4130 = vpop.permute.xlu0 %4129
    %4131 = vrot.lane.b32.xlu0 %v4123, 126
    %v4132 = vpop.permute.xlu0 %4131
    %v4137 = vadd.f32 %v4041, %v4126
    %v4138 = vadd.f32 %v4042, %v4128
    %v4139 = vadd.f32 %v4043, %v4130
    %v4140 = vadd.f32 %v4044, %v4132
    %s4141 = sld [smem:[#allocation8 + $0x32]]
    %v4142 = vstv %s4141
    %v4143 = vmul.f32 %v2993, %v4142
    %v4144 = vmul.f32 %v2994, %v4142
    %v4145 = vmul.f32 %v2999, %v4142
    %v4146 = vmul.f32 %v3000, %v4142
    %v4151 = vrot.slane %v4143, 1
    %v4152 = vrot.slane %v4144, 1
    %v4153 = vsel %vm329, %v4151, %v4152
    %v4154 = vrot.slane %v4145, 1
    %v4155 = vrot.slane %v4146, 1
    %v4156 = vsel %vm329, %v4154, %v4155
    %4157 = vrot.lane.b32.xlu0 %v4153, 126
    %v4158 = vpop.permute.xlu0 %4157
    %4159 = vrot.lane.b32.xlu0 %v4152, 126
    %v4160 = vpop.permute.xlu0 %4159
    %4161 = vrot.lane.b32.xlu0 %v4156, 126
    %v4162 = vpop.permute.xlu0 %4161
    %4163 = vrot.lane.b32.xlu0 %v4155, 126
    %v4164 = vpop.permute.xlu0 %4163
    %v4169 = vadd.f32 %v4073, %v4158
    %v4170 = vadd.f32 %v4074, %v4160
    %v4171 = vadd.f32 %v4075, %v4162
    %v4172 = vadd.f32 %v4076, %v4164
    %s4173 = sld [smem:[#allocation8 + $0x39]]
    %v4174 = vstv %s4173
    %v4175 = vmul.f32 %v2993, %v4174
    %v4176 = vmul.f32 %v2994, %v4174
    %v4177 = vmul.f32 %v2999, %v4174
    %v4178 = vmul.f32 %v3000, %v4174
    %v4183 = vrot.slane %v4175, 2
    %v4184 = vrot.slane %v4176, 2
    %v4185 = vsel %vm594, %v4183, %v4184
    %v4186 = vrot.slane %v4177, 2
    %v4187 = vrot.slane %v4178, 2
    %v4188 = vsel %vm594, %v4186, %v4187
    %v4193 = vadd.f32 %v4105, %v4185
    %v4194 = vadd.f32 %v4106, %v4184
    %v4195 = vadd.f32 %v4107, %v4188
    %v4196 = vadd.f32 %v4108, %v4187
    %s4197 = sld [smem:[#allocation8 + $0x3a]]
    %v4198 = vstv %s4197
    %v4199 = vmul.f32 %v2993, %v4198
    %v4200 = vmul.f32 %v2994, %v4198
    %v4201 = vmul.f32 %v2999, %v4198
    %v4202 = vmul.f32 %v3000, %v4198
    %v4207 = vrot.slane %v4199, 2
    %v4208 = vrot.slane %v4200, 2
    %v4209 = vsel %vm594, %v4207, %v4208
    %v4210 = vrot.slane %v4201, 2
    %v4211 = vrot.slane %v4202, 2
    %v4212 = vsel %vm594, %v4210, %v4211
    %v4217 = vadd.f32 %v4137, %v4209
    %v4218 = vadd.f32 %v4138, %v4208
    %v4219 = vadd.f32 %v4139, %v4212
    %v4220 = vadd.f32 %v4140, %v4211
    %s4221 = sld [smem:[#allocation8 + $0x3b]]
    %v4222 = vstv %s4221
    %v4223 = vmul.f32 %v2993, %v4222
    %v4224 = vmul.f32 %v2994, %v4222
    %v4225 = vmul.f32 %v2999, %v4222
    %v4226 = vmul.f32 %v3000, %v4222
    %v4231 = vrot.slane %v4223, 2
    %v4232 = vrot.slane %v4224, 2
    %v4233 = vsel %vm594, %v4231, %v4232
    %v4234 = vrot.slane %v4225, 2
    %v4235 = vrot.slane %v4226, 2
    %v4236 = vsel %vm594, %v4234, %v4235
    %v4241 = vadd.f32 %v4169, %v4233
    %v4242 = vadd.f32 %v4170, %v4232
    %v4243 = vadd.f32 %v4171, %v4236
    %v4244 = vadd.f32 %v4172, %v4235
    %s4245 = sld [smem:[#allocation8 + $0x42]]
    %v4246 = vstv %s4245
    %v4247 = vmul.f32 %v2993, %v4246
    %v4248 = vmul.f32 %v2994, %v4246
    %v4249 = vmul.f32 %v2999, %v4246
    %v4250 = vmul.f32 %v3000, %v4246
    %v4255 = vrot.slane %v4247, 2
    %v4256 = vrot.slane %v4248, 2
    %v4257 = vsel %vm594, %v4255, %v4256
    %v4258 = vrot.slane %v4249, 2
    %v4259 = vrot.slane %v4250, 2
    %v4260 = vsel %vm594, %v4258, %v4259
    %4261 = vrot.lane.b32.xlu0 %v4257, 127
    %v4262 = vpop.permute.xlu0 %4261
    %4263 = vrot.lane.b32.xlu0 %v4256, 127
    %v4264 = vpop.permute.xlu0 %4263
    %4265 = vrot.lane.b32.xlu0 %v4260, 127
    %v4266 = vpop.permute.xlu0 %4265
    %4267 = vrot.lane.b32.xlu0 %v4259, 127
    %v4268 = vpop.permute.xlu0 %4267
    %v4273 = vadd.f32 %v4193, %v4262
    %v4274 = vadd.f32 %v4194, %v4264
    %v4275 = vadd.f32 %v4195, %v4266
    %v4276 = vadd.f32 %v4196, %v4268
    %s4277 = sld [smem:[#allocation8 + $0x43]]
    %v4278 = vstv %s4277
    %v4279 = vmul.f32 %v2993, %v4278
    %v4280 = vmul.f32 %v2994, %v4278
    %v4281 = vmul.f32 %v2999, %v4278
    %v4282 = vmul.f32 %v3000, %v4278
    %v4287 = vrot.slane %v4279, 2
    %v4288 = vrot.slane %v4280, 2
    %v4289 = vsel %vm594, %v4287, %v4288
    %v4290 = vrot.slane %v4281, 2
    %v4291 = vrot.slane %v4282, 2
    %v4292 = vsel %vm594, %v4290, %v4291
    %4293 = vrot.lane.b32.xlu0 %v4289, 127
    %v4294 = vpop.permute.xlu0 %4293
    %4295 = vrot.lane.b32.xlu0 %v4288, 127
    %v4296 = vpop.permute.xlu0 %4295
    %4297 = vrot.lane.b32.xlu0 %v4292, 127
    %v4298 = vpop.permute.xlu0 %4297
    %4299 = vrot.lane.b32.xlu0 %v4291, 127
    %v4300 = vpop.permute.xlu0 %4299
    %v4305 = vadd.f32 %v4217, %v4294
    %v4306 = vadd.f32 %v4218, %v4296
    %v4307 = vadd.f32 %v4219, %v4298
    %v4308 = vadd.f32 %v4220, %v4300
    %s4309 = sld [smem:[#allocation8 + $0x44]]
    %v4310 = vstv %s4309
    %v4311 = vmul.f32 %v2993, %v4310
    %v4312 = vmul.f32 %v2994, %v4310
    %v4313 = vmul.f32 %v2999, %v4310
    %v4314 = vmul.f32 %v3000, %v4310
    %v4319 = vrot.slane %v4311, 2
    %v4320 = vrot.slane %v4312, 2
    %v4321 = vsel %vm594, %v4319, %v4320
    %v4322 = vrot.slane %v4313, 2
    %v4323 = vrot.slane %v4314, 2
    %v4324 = vsel %vm594, %v4322, %v4323
    %4325 = vrot.lane.b32.xlu0 %v4321, 127
    %v4326 = vpop.permute.xlu0 %4325
    %4327 = vrot.lane.b32.xlu0 %v4320, 127
    %v4328 = vpop.permute.xlu0 %4327
    %4329 = vrot.lane.b32.xlu0 %v4324, 127
    %v4330 = vpop.permute.xlu0 %4329
    %4331 = vrot.lane.b32.xlu0 %v4323, 127
    %v4332 = vpop.permute.xlu0 %4331
    %v4337 = vadd.f32 %v4241, %v4326
    %v4338 = vadd.f32 %v4242, %v4328
    %v4339 = vadd.f32 %v4243, %v4330
    %v4340 = vadd.f32 %v4244, %v4332
    %s4341 = sld [smem:[#allocation8 + $0x4b]]
    %v4342 = vstv %s4341
    %v4343 = vmul.f32 %v2993, %v4342
    %v4344 = vmul.f32 %v2994, %v4342
    %v4345 = vmul.f32 %v2999, %v4342
    %v4346 = vmul.f32 %v3000, %v4342
    %v4351 = vrot.slane %v4343, 2
    %v4352 = vrot.slane %v4344, 2
    %v4353 = vsel %vm594, %v4351, %v4352
    %v4354 = vrot.slane %v4345, 2
    %v4355 = vrot.slane %v4346, 2
    %v4356 = vsel %vm594, %v4354, %v4355
    %4357 = vrot.lane.b32.xlu0 %v4353, 126
    %v4358 = vpop.permute.xlu0 %4357
    %4359 = vrot.lane.b32.xlu0 %v4352, 126
    %v4360 = vpop.permute.xlu0 %4359
    %4361 = vrot.lane.b32.xlu0 %v4356, 126
    %v4362 = vpop.permute.xlu0 %4361
    %4363 = vrot.lane.b32.xlu0 %v4355, 126
    %v4364 = vpop.permute.xlu0 %4363
    %v4369 = vadd.f32 %v4273, %v4358
    %v4370 = vadd.f32 %v4274, %v4360
    %v4371 = vadd.f32 %v4275, %v4362
    %v4372 = vadd.f32 %v4276, %v4364
    %s4373 = sld [smem:[#allocation8 + $0x4c]]
    %v4374 = vstv %s4373
    %v4375 = vmul.f32 %v2993, %v4374
    %v4376 = vmul.f32 %v2994, %v4374
    %v4377 = vmul.f32 %v2999, %v4374
    %v4378 = vmul.f32 %v3000, %v4374
    %v4383 = vrot.slane %v4375, 2
    %v4384 = vrot.slane %v4376, 2
    %v4385 = vsel %vm594, %v4383, %v4384
    %v4386 = vrot.slane %v4377, 2
    %v4387 = vrot.slane %v4378, 2
    %v4388 = vsel %vm594, %v4386, %v4387
    %4389 = vrot.lane.b32.xlu0 %v4385, 126
    %v4390 = vpop.permute.xlu0 %4389
    %4391 = vrot.lane.b32.xlu0 %v4384, 126
    %v4392 = vpop.permute.xlu0 %4391
    %4393 = vrot.lane.b32.xlu0 %v4388, 126
    %v4394 = vpop.permute.xlu0 %4393
    %4395 = vrot.lane.b32.xlu0 %v4387, 126
    %v4396 = vpop.permute.xlu0 %4395
    %v4401 = vadd.f32 %v4305, %v4390
    %v4402 = vadd.f32 %v4306, %v4392
    %v4403 = vadd.f32 %v4307, %v4394
    %v4404 = vadd.f32 %v4308, %v4396
    %s4405 = sld [smem:[#allocation8 + $0x4d]]
    %v4406 = vstv %s4405
    %v4407 = vmul.f32 %v2993, %v4406
    %v4408 = vmul.f32 %v2994, %v4406
    %v4409 = vmul.f32 %v2999, %v4406
    %v4410 = vmul.f32 %v3000, %v4406
    %v4415 = vrot.slane %v4407, 2
    %v4416 = vrot.slane %v4408, 2
    %v4417 = vsel %vm594, %v4415, %v4416
    %v4418 = vrot.slane %v4409, 2
    %v4419 = vrot.slane %v4410, 2
    %v4420 = vsel %vm594, %v4418, %v4419
    %4421 = vrot.lane.b32.xlu0 %v4417, 126
    %v4422 = vpop.permute.xlu0 %4421
    %4423 = vrot.lane.b32.xlu0 %v4416, 126
    %v4424 = vpop.permute.xlu0 %4423
    %4425 = vrot.lane.b32.xlu0 %v4420, 126
    %v4426 = vpop.permute.xlu0 %4425
    %4427 = vrot.lane.b32.xlu0 %v4419, 126
    %v4428 = vpop.permute.xlu0 %4427
    %v4433 = vadd.f32 %v4337, %v4422
    %v4434 = vadd.f32 %v4338, %v4424
    %v4435 = vadd.f32 %v4339, %v4426
    %v4436 = vadd.f32 %v4340, %v4428
    %s4437 = sld [smem:[#allocation8 + $0x6]]
    %v4438 = vstv %s4437
    %v4439 = vmul.f32 %v2995, %v4438
    %v4440 = vmul.f32 %v2996, %v4438
    %v4441 = vmul.f32 %v3001, %v4438
    %v4442 = vmul.f32 %v3002, %v4438
    %v4443 = vadd.f32 %v4369, %v4439
    %v4444 = vadd.f32 %v4370, %v4440
    %v4445 = vadd.f32 %v4371, %v4441
    %v4446 = vadd.f32 %v4372, %v4442
    %s4447 = sld [smem:[#allocation8 + $0x7]]
    %v4448 = vstv %s4447
    %v4449 = vmul.f32 %v2995, %v4448
    %v4450 = vmul.f32 %v2996, %v4448
    %v4451 = vmul.f32 %v3001, %v4448
    %v4452 = vmul.f32 %v3002, %v4448
    %v4453 = vadd.f32 %v4401, %v4449
    %v4454 = vadd.f32 %v4402, %v4450
    %v4455 = vadd.f32 %v4403, %v4451
    %v4456 = vadd.f32 %v4404, %v4452
    %s4457 = sld [smem:[#allocation8 + $0x8]]
    %v4458 = vstv %s4457
    %v4459 = vmul.f32 %v2995, %v4458
    %v4460 = vmul.f32 %v2996, %v4458
    %v4461 = vmul.f32 %v3001, %v4458
    %v4462 = vmul.f32 %v3002, %v4458
    %v4463 = vadd.f32 %v4433, %v4459
    %v4464 = vadd.f32 %v4434, %v4460
    %v4465 = vadd.f32 %v4435, %v4461
    %v4466 = vadd.f32 %v4436, %v4462
    %s4467 = sld [smem:[#allocation8 + $0xf]]
    %v4468 = vstv %s4467
    %v4469 = vmul.f32 %v2995, %v4468
    %v4470 = vmul.f32 %v2996, %v4468
    %v4471 = vmul.f32 %v3001, %v4468
    %v4472 = vmul.f32 %v3002, %v4468
    %4477 = vrot.lane.b32.xlu0 %v4469, 127
    %v4478 = vpop.permute.xlu0 %4477
    %4479 = vrot.lane.b32.xlu0 %v4470, 127
    %v4480 = vpop.permute.xlu0 %4479
    %4481 = vrot.lane.b32.xlu0 %v4471, 127
    %v4482 = vpop.permute.xlu0 %4481
    %4483 = vrot.lane.b32.xlu0 %v4472, 127
    %v4484 = vpop.permute.xlu0 %4483
    %v4489 = vadd.f32 %v4443, %v4478
    %v4490 = vadd.f32 %v4444, %v4480
    %v4491 = vadd.f32 %v4445, %v4482
    %v4492 = vadd.f32 %v4446, %v4484
    %s4493 = sld [smem:[#allocation8 + $0x10]]
    %v4494 = vstv %s4493
    %v4495 = vmul.f32 %v2995, %v4494
    %v4496 = vmul.f32 %v2996, %v4494
    %v4497 = vmul.f32 %v3001, %v4494
    %v4498 = vmul.f32 %v3002, %v4494
    %4503 = vrot.lane.b32.xlu0 %v4495, 127
    %v4504 = vpop.permute.xlu0 %4503
    %4505 = vrot.lane.b32.xlu0 %v4496, 127
    %v4506 = vpop.permute.xlu0 %4505
    %4507 = vrot.lane.b32.xlu0 %v4497, 127
    %v4508 = vpop.permute.xlu0 %4507
    %4509 = vrot.lane.b32.xlu0 %v4498, 127
    %v4510 = vpop.permute.xlu0 %4509
    %v4515 = vadd.f32 %v4453, %v4504
    %v4516 = vadd.f32 %v4454, %v4506
    %v4517 = vadd.f32 %v4455, %v4508
    %v4518 = vadd.f32 %v4456, %v4510
    %s4519 = sld [smem:[#allocation8 + $0x11]]
    %v4520 = vstv %s4519
    %v4521 = vmul.f32 %v2995, %v4520
    %v4522 = vmul.f32 %v2996, %v4520
    %v4523 = vmul.f32 %v3001, %v4520
    %v4524 = vmul.f32 %v3002, %v4520
    %4529 = vrot.lane.b32.xlu0 %v4521, 127
    %v4530 = vpop.permute.xlu0 %4529
    %4531 = vrot.lane.b32.xlu0 %v4522, 127
    %v4532 = vpop.permute.xlu0 %4531
    %4533 = vrot.lane.b32.xlu0 %v4523, 127
    %v4534 = vpop.permute.xlu0 %4533
    %4535 = vrot.lane.b32.xlu0 %v4524, 127
    %v4536 = vpop.permute.xlu0 %4535
    %v4541 = vadd.f32 %v4463, %v4530
    %v4542 = vadd.f32 %v4464, %v4532
    %v4543 = vadd.f32 %v4465, %v4534
    %v4544 = vadd.f32 %v4466, %v4536
    %s4545 = sld [smem:[#allocation8 + $0x18]]
    %v4546 = vstv %s4545
    %v4547 = vmul.f32 %v2995, %v4546
    %v4548 = vmul.f32 %v2996, %v4546
    %v4549 = vmul.f32 %v3001, %v4546
    %v4550 = vmul.f32 %v3002, %v4546
    %4555 = vrot.lane.b32.xlu0 %v4547, 126
    %v4556 = vpop.permute.xlu0 %4555
    %4557 = vrot.lane.b32.xlu0 %v4548, 126
    %v4558 = vpop.permute.xlu0 %4557
    %4559 = vrot.lane.b32.xlu0 %v4549, 126
    %v4560 = vpop.permute.xlu0 %4559
    %4561 = vrot.lane.b32.xlu0 %v4550, 126
    %v4562 = vpop.permute.xlu0 %4561
    %v4567 = vadd.f32 %v4489, %v4556
    %v4568 = vadd.f32 %v4490, %v4558
    %v4569 = vadd.f32 %v4491, %v4560
    %v4570 = vadd.f32 %v4492, %v4562
    %s4571 = sld [smem:[#allocation8 + $0x19]]
    %v4572 = vstv %s4571
    %v4573 = vmul.f32 %v2995, %v4572
    %v4574 = vmul.f32 %v2996, %v4572
    %v4575 = vmul.f32 %v3001, %v4572
    %v4576 = vmul.f32 %v3002, %v4572
    %4581 = vrot.lane.b32.xlu0 %v4573, 126
    %v4582 = vpop.permute.xlu0 %4581
    %4583 = vrot.lane.b32.xlu0 %v4574, 126
    %v4584 = vpop.permute.xlu0 %4583
    %4585 = vrot.lane.b32.xlu0 %v4575, 126
    %v4586 = vpop.permute.xlu0 %4585
    %4587 = vrot.lane.b32.xlu0 %v4576, 126
    %v4588 = vpop.permute.xlu0 %4587
    %v4593 = vadd.f32 %v4515, %v4582
    %v4594 = vadd.f32 %v4516, %v4584
    %v4595 = vadd.f32 %v4517, %v4586
    %v4596 = vadd.f32 %v4518, %v4588
    %s4597 = sld [smem:[#allocation8 + $0x1a]]
    %v4598 = vstv %s4597
    %v4599 = vmul.f32 %v2995, %v4598
    %v4600 = vmul.f32 %v2996, %v4598
    %v4601 = vmul.f32 %v3001, %v4598
    %v4602 = vmul.f32 %v3002, %v4598
    %4607 = vrot.lane.b32.xlu0 %v4599, 126
    %v4608 = vpop.permute.xlu0 %4607
    %4609 = vrot.lane.b32.xlu0 %v4600, 126
    %v4610 = vpop.permute.xlu0 %4609
    %4611 = vrot.lane.b32.xlu0 %v4601, 126
    %v4612 = vpop.permute.xlu0 %4611
    %4613 = vrot.lane.b32.xlu0 %v4602, 126
    %v4614 = vpop.permute.xlu0 %4613
    %v4619 = vadd.f32 %v4541, %v4608
    %v4620 = vadd.f32 %v4542, %v4610
    %v4621 = vadd.f32 %v4543, %v4612
    %v4622 = vadd.f32 %v4544, %v4614
    %s4623 = sld [smem:[#allocation8 + $0x21]]
    %v4624 = vstv %s4623
    %v4625 = vmul.f32 %v2995, %v4624
    %v4626 = vmul.f32 %v2996, %v4624
    %v4627 = vmul.f32 %v3001, %v4624
    %v4628 = vmul.f32 %v3002, %v4624
    %v4633 = vrot.slane %v4625, 1
    %v4634 = vrot.slane %v4626, 1
    %v4635 = vsel %vm329, %v4633, %v4634
    %v4636 = vrot.slane %v4627, 1
    %v4637 = vrot.slane %v4628, 1
    %v4638 = vsel %vm329, %v4636, %v4637
    %v4643 = vadd.f32 %v4567, %v4635
    %v4644 = vadd.f32 %v4568, %v4634
    %v4645 = vadd.f32 %v4569, %v4638
    %v4646 = vadd.f32 %v4570, %v4637
    %s4647 = sld [smem:[#allocation8 + $0x22]]
    %v4648 = vstv %s4647
    %v4649 = vmul.f32 %v2995, %v4648
    %v4650 = vmul.f32 %v2996, %v4648
    %v4651 = vmul.f32 %v3001, %v4648
    %v4652 = vmul.f32 %v3002, %v4648
    %v4657 = vrot.slane %v4649, 1
    %v4658 = vrot.slane %v4650, 1
    %v4659 = vsel %vm329, %v4657, %v4658
    %v4660 = vrot.slane %v4651, 1
    %v4661 = vrot.slane %v4652, 1
    %v4662 = vsel %vm329, %v4660, %v4661
    %v4667 = vadd.f32 %v4593, %v4659
    %v4668 = vadd.f32 %v4594, %v4658
    %v4669 = vadd.f32 %v4595, %v4662
    %v4670 = vadd.f32 %v4596, %v4661
    %s4671 = sld [smem:[#allocation8 + $0x23]]
    %v4672 = vstv %s4671
    %v4673 = vmul.f32 %v2995, %v4672
    %v4674 = vmul.f32 %v2996, %v4672
    %v4675 = vmul.f32 %v3001, %v4672
    %v4676 = vmul.f32 %v3002, %v4672
    %v4681 = vrot.slane %v4673, 1
    %v4682 = vrot.slane %v4674, 1
    %v4683 = vsel %vm329, %v4681, %v4682
    %v4684 = vrot.slane %v4675, 1
    %v4685 = vrot.slane %v4676, 1
    %v4686 = vsel %vm329, %v4684, %v4685
    %v4691 = vadd.f32 %v4619, %v4683
    %v4692 = vadd.f32 %v4620, %v4682
    %v4693 = vadd.f32 %v4621, %v4686
    %v4694 = vadd.f32 %v4622, %v4685
    %s4695 = sld [smem:[#allocation8 + $0x2a]]
    %v4696 = vstv %s4695
    %v4697 = vmul.f32 %v2995, %v4696
    %v4698 = vmul.f32 %v2996, %v4696
    %v4699 = vmul.f32 %v3001, %v4696
    %v4700 = vmul.f32 %v3002, %v4696
    %v4705 = vrot.slane %v4697, 1
    %v4706 = vrot.slane %v4698, 1
    %v4707 = vsel %vm329, %v4705, %v4706
    %v4708 = vrot.slane %v4699, 1
    %v4709 = vrot.slane %v4700, 1
    %v4710 = vsel %vm329, %v4708, %v4709
    %4711 = vrot.lane.b32.xlu0 %v4707, 127
    %v4712 = vpop.permute.xlu0 %4711
    %4713 = vrot.lane.b32.xlu0 %v4706, 127
    %v4714 = vpop.permute.xlu0 %4713
    %4715 = vrot.lane.b32.xlu0 %v4710, 127
    %v4716 = vpop.permute.xlu0 %4715
    %4717 = vrot.lane.b32.xlu0 %v4709, 127
    %v4718 = vpop.permute.xlu0 %4717
    %v4723 = vadd.f32 %v4643, %v4712
    %v4724 = vadd.f32 %v4644, %v4714
    %v4725 = vadd.f32 %v4645, %v4716
    %v4726 = vadd.f32 %v4646, %v4718
    %s4727 = sld [smem:[#allocation8 + $0x2b]]
    %v4728 = vstv %s4727
    %v4729 = vmul.f32 %v2995, %v4728
    %v4730 = vmul.f32 %v2996, %v4728
    %v4731 = vmul.f32 %v3001, %v4728
    %v4732 = vmul.f32 %v3002, %v4728
    %v4737 = vrot.slane %v4729, 1
    %v4738 = vrot.slane %v4730, 1
    %v4739 = vsel %vm329, %v4737, %v4738
    %v4740 = vrot.slane %v4731, 1
    %v4741 = vrot.slane %v4732, 1
    %v4742 = vsel %vm329, %v4740, %v4741
    %4743 = vrot.lane.b32.xlu0 %v4739, 127
    %v4744 = vpop.permute.xlu0 %4743
    %4745 = vrot.lane.b32.xlu0 %v4738, 127
    %v4746 = vpop.permute.xlu0 %4745
    %4747 = vrot.lane.b32.xlu0 %v4742, 127
    %v4748 = vpop.permute.xlu0 %4747
    %4749 = vrot.lane.b32.xlu0 %v4741, 127
    %v4750 = vpop.permute.xlu0 %4749
    %v4755 = vadd.f32 %v4667, %v4744
    %v4756 = vadd.f32 %v4668, %v4746
    %v4757 = vadd.f32 %v4669, %v4748
    %v4758 = vadd.f32 %v4670, %v4750
    %s4759 = sld [smem:[#allocation8 + $0x2c]]
    %v4760 = vstv %s4759
    %v4761 = vmul.f32 %v2995, %v4760
    %v4762 = vmul.f32 %v2996, %v4760
    %v4763 = vmul.f32 %v3001, %v4760
    %v4764 = vmul.f32 %v3002, %v4760
    %v4769 = vrot.slane %v4761, 1
    %v4770 = vrot.slane %v4762, 1
    %v4771 = vsel %vm329, %v4769, %v4770
    %v4772 = vrot.slane %v4763, 1
    %v4773 = vrot.slane %v4764, 1
    %v4774 = vsel %vm329, %v4772, %v4773
    %4775 = vrot.lane.b32.xlu0 %v4771, 127
    %v4776 = vpop.permute.xlu0 %4775
    %4777 = vrot.lane.b32.xlu0 %v4770, 127
    %v4778 = vpop.permute.xlu0 %4777
    %4779 = vrot.lane.b32.xlu0 %v4774, 127
    %v4780 = vpop.permute.xlu0 %4779
    %4781 = vrot.lane.b32.xlu0 %v4773, 127
    %v4782 = vpop.permute.xlu0 %4781
    %v4787 = vadd.f32 %v4691, %v4776
    %v4788 = vadd.f32 %v4692, %v4778
    %v4789 = vadd.f32 %v4693, %v4780
    %v4790 = vadd.f32 %v4694, %v4782
    %s4791 = sld [smem:[#allocation8 + $0x33]]
    %v4792 = vstv %s4791
    %v4793 = vmul.f32 %v2995, %v4792
    %v4794 = vmul.f32 %v2996, %v4792
    %v4795 = vmul.f32 %v3001, %v4792
    %v4796 = vmul.f32 %v3002, %v4792
    %v4801 = vrot.slane %v4793, 1
    %v4802 = vrot.slane %v4794, 1
    %v4803 = vsel %vm329, %v4801, %v4802
    %v4804 = vrot.slane %v4795, 1
    %v4805 = vrot.slane %v4796, 1
    %v4806 = vsel %vm329, %v4804, %v4805
    %4807 = vrot.lane.b32.xlu0 %v4803, 126
    %v4808 = vpop.permute.xlu0 %4807
    %4809 = vrot.lane.b32.xlu0 %v4802, 126
    %v4810 = vpop.permute.xlu0 %4809
    %4811 = vrot.lane.b32.xlu0 %v4806, 126
    %v4812 = vpop.permute.xlu0 %4811
    %4813 = vrot.lane.b32.xlu0 %v4805, 126
    %v4814 = vpop.permute.xlu0 %4813
    %v4819 = vadd.f32 %v4723, %v4808
    %v4820 = vadd.f32 %v4724, %v4810
    %v4821 = vadd.f32 %v4725, %v4812
    %v4822 = vadd.f32 %v4726, %v4814
    %s4823 = sld [smem:[#allocation8 + $0x34]]
    %v4824 = vstv %s4823
    %v4825 = vmul.f32 %v2995, %v4824
    %v4826 = vmul.f32 %v2996, %v4824
    %v4827 = vmul.f32 %v3001, %v4824
    %v4828 = vmul.f32 %v3002, %v4824
    %v4833 = vrot.slane %v4825, 1
    %v4834 = vrot.slane %v4826, 1
    %v4835 = vsel %vm329, %v4833, %v4834
    %v4836 = vrot.slane %v4827, 1
    %v4837 = vrot.slane %v4828, 1
    %v4838 = vsel %vm329, %v4836, %v4837
    %4839 = vrot.lane.b32.xlu0 %v4835, 126
    %v4840 = vpop.permute.xlu0 %4839
    %4841 = vrot.lane.b32.xlu0 %v4834, 126
    %v4842 = vpop.permute.xlu0 %4841
    %4843 = vrot.lane.b32.xlu0 %v4838, 126
    %v4844 = vpop.permute.xlu0 %4843
    %4845 = vrot.lane.b32.xlu0 %v4837, 126
    %v4846 = vpop.permute.xlu0 %4845
    %v4851 = vadd.f32 %v4755, %v4840
    %v4852 = vadd.f32 %v4756, %v4842
    %v4853 = vadd.f32 %v4757, %v4844
    %v4854 = vadd.f32 %v4758, %v4846
    %s4855 = sld [smem:[#allocation8 + $0x35]]
    %v4856 = vstv %s4855
    %v4857 = vmul.f32 %v2995, %v4856
    %v4858 = vmul.f32 %v2996, %v4856
    %v4859 = vmul.f32 %v3001, %v4856
    %v4860 = vmul.f32 %v3002, %v4856
    %v4865 = vrot.slane %v4857, 1
    %v4866 = vrot.slane %v4858, 1
    %v4867 = vsel %vm329, %v4865, %v4866
    %v4868 = vrot.slane %v4859, 1
    %v4869 = vrot.slane %v4860, 1
    %v4870 = vsel %vm329, %v4868, %v4869
    %4871 = vrot.lane.b32.xlu0 %v4867, 126
    %v4872 = vpop.permute.xlu0 %4871
    %4873 = vrot.lane.b32.xlu0 %v4866, 126
    %v4874 = vpop.permute.xlu0 %4873
    %4875 = vrot.lane.b32.xlu0 %v4870, 126
    %v4876 = vpop.permute.xlu0 %4875
    %4877 = vrot.lane.b32.xlu0 %v4869, 126
    %v4878 = vpop.permute.xlu0 %4877
    %v4883 = vadd.f32 %v4787, %v4872
    %v4884 = vadd.f32 %v4788, %v4874
    %v4885 = vadd.f32 %v4789, %v4876
    %v4886 = vadd.f32 %v4790, %v4878
    %s4887 = sld [smem:[#allocation8 + $0x3c]]
    %v4888 = vstv %s4887
    %v4889 = vmul.f32 %v2995, %v4888
    %v4890 = vmul.f32 %v2996, %v4888
    %v4891 = vmul.f32 %v3001, %v4888
    %v4892 = vmul.f32 %v3002, %v4888
    %v4897 = vrot.slane %v4889, 2
    %v4898 = vrot.slane %v4890, 2
    %v4899 = vsel %vm594, %v4897, %v4898
    %v4900 = vrot.slane %v4891, 2
    %v4901 = vrot.slane %v4892, 2
    %v4902 = vsel %vm594, %v4900, %v4901
    %v4907 = vadd.f32 %v4819, %v4899
    %v4908 = vadd.f32 %v4820, %v4898
    %v4909 = vadd.f32 %v4821, %v4902
    %v4910 = vadd.f32 %v4822, %v4901
    %s4911 = sld [smem:[#allocation8 + $0x3d]]
    %v4912 = vstv %s4911
    %v4913 = vmul.f32 %v2995, %v4912
    %v4914 = vmul.f32 %v2996, %v4912
    %v4915 = vmul.f32 %v3001, %v4912
    %v4916 = vmul.f32 %v3002, %v4912
    %v4921 = vrot.slane %v4913, 2
    %v4922 = vrot.slane %v4914, 2
    %v4923 = vsel %vm594, %v4921, %v4922
    %v4924 = vrot.slane %v4915, 2
    %v4925 = vrot.slane %v4916, 2
    %v4926 = vsel %vm594, %v4924, %v4925
    %v4931 = vadd.f32 %v4851, %v4923
    %v4932 = vadd.f32 %v4852, %v4922
    %v4933 = vadd.f32 %v4853, %v4926
    %v4934 = vadd.f32 %v4854, %v4925
    %s4935 = sld [smem:[#allocation8 + $0x3e]]
    %v4936 = vstv %s4935
    %v4937 = vmul.f32 %v2995, %v4936
    %v4938 = vmul.f32 %v2996, %v4936
    %v4939 = vmul.f32 %v3001, %v4936
    %v4940 = vmul.f32 %v3002, %v4936
    %v4945 = vrot.slane %v4937, 2
    %v4946 = vrot.slane %v4938, 2
    %v4947 = vsel %vm594, %v4945, %v4946
    %v4948 = vrot.slane %v4939, 2
    %v4949 = vrot.slane %v4940, 2
    %v4950 = vsel %vm594, %v4948, %v4949
    %v4955 = vadd.f32 %v4883, %v4947
    %v4956 = vadd.f32 %v4884, %v4946
    %v4957 = vadd.f32 %v4885, %v4950
    %v4958 = vadd.f32 %v4886, %v4949
    %s4959 = sld [smem:[#allocation8 + $0x45]]
    %v4960 = vstv %s4959
    %v4961 = vmul.f32 %v2995, %v4960
    %v4962 = vmul.f32 %v2996, %v4960
    %v4963 = vmul.f32 %v3001, %v4960
    %v4964 = vmul.f32 %v3002, %v4960
    %v4969 = vrot.slane %v4961, 2
    %v4970 = vrot.slane %v4962, 2
    %v4971 = vsel %vm594, %v4969, %v4970
    %v4972 = vrot.slane %v4963, 2
    %v4973 = vrot.slane %v4964, 2
    %v4974 = vsel %vm594, %v4972, %v4973
    %4975 = vrot.lane.b32.xlu0 %v4971, 127
    %v4976 = vpop.permute.xlu0 %4975
    %4977 = vrot.lane.b32.xlu0 %v4970, 127
    %v4978 = vpop.permute.xlu0 %4977
    %4979 = vrot.lane.b32.xlu0 %v4974, 127
    %v4980 = vpop.permute.xlu0 %4979
    %4981 = vrot.lane.b32.xlu0 %v4973, 127
    %v4982 = vpop.permute.xlu0 %4981
    %v4987 = vadd.f32 %v4907, %v4976
    %v4988 = vadd.f32 %v4908, %v4978
    %v4989 = vadd.f32 %v4909, %v4980
    %v4990 = vadd.f32 %v4910, %v4982
    %s4991 = sld [smem:[#allocation8 + $0x46]]
    %v4992 = vstv %s4991
    %v4993 = vmul.f32 %v2995, %v4992
    %v4994 = vmul.f32 %v2996, %v4992
    %v4995 = vmul.f32 %v3001, %v4992
    %v4996 = vmul.f32 %v3002, %v4992
    %v5001 = vrot.slane %v4993, 2
    %v5002 = vrot.slane %v4994, 2
    %v5003 = vsel %vm594, %v5001, %v5002
    %v5004 = vrot.slane %v4995, 2
    %v5005 = vrot.slane %v4996, 2
    %v5006 = vsel %vm594, %v5004, %v5005
    %5007 = vrot.lane.b32.xlu0 %v5003, 127
    %v5008 = vpop.permute.xlu0 %5007
    %5009 = vrot.lane.b32.xlu0 %v5002, 127
    %v5010 = vpop.permute.xlu0 %5009
    %5011 = vrot.lane.b32.xlu0 %v5006, 127
    %v5012 = vpop.permute.xlu0 %5011
    %5013 = vrot.lane.b32.xlu0 %v5005, 127
    %v5014 = vpop.permute.xlu0 %5013
    %v5019 = vadd.f32 %v4931, %v5008
    %v5020 = vadd.f32 %v4932, %v5010
    %v5021 = vadd.f32 %v4933, %v5012
    %v5022 = vadd.f32 %v4934, %v5014
    %s5023 = sld [smem:[#allocation8 + $0x47]]
    %v5024 = vstv %s5023
    %v5025 = vmul.f32 %v2995, %v5024
    %v5026 = vmul.f32 %v2996, %v5024
    %v5027 = vmul.f32 %v3001, %v5024
    %v5028 = vmul.f32 %v3002, %v5024
    %v5033 = vrot.slane %v5025, 2
    %v5034 = vrot.slane %v5026, 2
    %v5035 = vsel %vm594, %v5033, %v5034
    %v5036 = vrot.slane %v5027, 2
    %v5037 = vrot.slane %v5028, 2
    %v5038 = vsel %vm594, %v5036, %v5037
    %5039 = vrot.lane.b32.xlu0 %v5035, 127
    %v5040 = vpop.permute.xlu0 %5039
    %5041 = vrot.lane.b32.xlu0 %v5034, 127
    %v5042 = vpop.permute.xlu0 %5041
    %5043 = vrot.lane.b32.xlu0 %v5038, 127
    %v5044 = vpop.permute.xlu0 %5043
    %5045 = vrot.lane.b32.xlu0 %v5037, 127
    %v5046 = vpop.permute.xlu0 %5045
    %v5051 = vadd.f32 %v4955, %v5040
    %v5052 = vadd.f32 %v4956, %v5042
    %v5053 = vadd.f32 %v4957, %v5044
    %v5054 = vadd.f32 %v4958, %v5046
    %s5055 = sld [smem:[#allocation8 + $0x4e]]
    %v5056 = vstv %s5055
    %v5057 = vmul.f32 %v2995, %v5056
    %v5058 = vmul.f32 %v2996, %v5056
    %v5059 = vmul.f32 %v3001, %v5056
    %v5060 = vmul.f32 %v3002, %v5056
    %v5065 = vrot.slane %v5057, 2
    %v5066 = vrot.slane %v5058, 2
    %v5067 = vsel %vm594, %v5065, %v5066
    %v5068 = vrot.slane %v5059, 2
    %v5069 = vrot.slane %v5060, 2
    %v5070 = vsel %vm594, %v5068, %v5069
    %5071 = vrot.lane.b32.xlu0 %v5067, 126
    %v5072 = vpop.permute.xlu0 %5071
    %5073 = vrot.lane.b32.xlu0 %v5066, 126
    %v5074 = vpop.permute.xlu0 %5073
    %5075 = vrot.lane.b32.xlu0 %v5070, 126
    %v5076 = vpop.permute.xlu0 %5075
    %5077 = vrot.lane.b32.xlu0 %v5069, 126
    %v5078 = vpop.permute.xlu0 %5077
    %v5083 = vadd.f32 %v4987, %v5072
    %v5084 = vadd.f32 %v4988, %v5074
    %v5085 = vadd.f32 %v4989, %v5076
    %v5086 = vadd.f32 %v4990, %v5078
    %s5087 = sld [smem:[#allocation8 + $0x4f]]
    %v5088 = vstv %s5087
    %v5089 = vmul.f32 %v2995, %v5088
    %v5090 = vmul.f32 %v2996, %v5088
    %v5091 = vmul.f32 %v3001, %v5088
    %v5092 = vmul.f32 %v3002, %v5088
    %v5097 = vrot.slane %v5089, 2
    %v5098 = vrot.slane %v5090, 2
    %v5099 = vsel %vm594, %v5097, %v5098
    %v5100 = vrot.slane %v5091, 2
    %v5101 = vrot.slane %v5092, 2
    %v5102 = vsel %vm594, %v5100, %v5101
    %5103 = vrot.lane.b32.xlu0 %v5099, 126
    %v5104 = vpop.permute.xlu0 %5103
    %5105 = vrot.lane.b32.xlu0 %v5098, 126
    %v5106 = vpop.permute.xlu0 %5105
    %5107 = vrot.lane.b32.xlu0 %v5102, 126
    %v5108 = vpop.permute.xlu0 %5107
    %5109 = vrot.lane.b32.xlu0 %v5101, 126
    %v5110 = vpop.permute.xlu0 %5109
    %v5115 = vadd.f32 %v5019, %v5104
    %v5116 = vadd.f32 %v5020, %v5106
    %v5117 = vadd.f32 %v5021, %v5108
    %v5118 = vadd.f32 %v5022, %v5110
    %s5119 = sld [smem:[#allocation8 + $0x50]]
    %v5120 = vstv %s5119
    %v5121 = vmul.f32 %v2995, %v5120
    %v5122 = vmul.f32 %v2996, %v5120
    %v5123 = vmul.f32 %v3001, %v5120
    %v5124 = vmul.f32 %v3002, %v5120
    %v5129 = vrot.slane %v5121, 2
    %v5130 = vrot.slane %v5122, 2
    %v5131 = vsel %vm594, %v5129, %v5130
    %v5132 = vrot.slane %v5123, 2
    %v5133 = vrot.slane %v5124, 2
    %v5134 = vsel %vm594, %v5132, %v5133
    %5135 = vrot.lane.b32.xlu0 %v5131, 126
    %v5136 = vpop.permute.xlu0 %5135
    %5137 = vrot.lane.b32.xlu0 %v5130, 126
    %v5138 = vpop.permute.xlu0 %5137
    %5139 = vrot.lane.b32.xlu0 %v5134, 126
    %v5140 = vpop.permute.xlu0 %5139
    %5141 = vrot.lane.b32.xlu0 %v5133, 126
    %v5142 = vpop.permute.xlu0 %5141
    %v5147 = vadd.f32 %v5051, %v5136
    %v5148 = vadd.f32 %v5052, %v5138
    %v5149 = vadd.f32 %v5053, %v5140
    %v5150 = vadd.f32 %v5054, %v5142
    %v5151 = vmax.f32 %v5083, 0.0
    %v5152 = vmax.f32 %v5084, 0.0
    %v5153 = vmax.f32 %v5115, 0.0
    %v5154 = vmax.f32 %v5116, 0.0
    %v5155 = vmax.f32 %v5147, 0.0
    %v5156 = vmax.f32 %v5148, 0.0
    %v5157 = vmax.f32 %v5085, 0.0
    %v5158 = vmax.f32 %v5086, 0.0
    %v5159 = vmax.f32 %v5117, 0.0
    %v5160 = vmax.f32 %v5118, 0.0
    %v5161 = vmax.f32 %v5149, 0.0
    %v5162 = vmax.f32 %v5150, 0.0
    %v5175 = vrot.slane %v5151, 1
    %v5176 = vrot.slane %v5152, 1
    %v5177 = vsel %vm329, %v5175, %v5176
    %v5178 = vrot.slane %v5153, 1
    %v5179 = vrot.slane %v5154, 1
    %v5180 = vsel %vm329, %v5178, %v5179
    %v5181 = vrot.slane %v5155, 1
    %v5182 = vrot.slane %v5156, 1
    %v5183 = vsel %vm329, %v5181, %v5182
    %v5184 = vrot.slane %v5157, 1
    %v5185 = vrot.slane %v5158, 1
    %v5186 = vsel %vm329, %v5184, %v5185
    %v5187 = vrot.slane %v5159, 1
    %v5188 = vrot.slane %v5160, 1
    %v5189 = vsel %vm329, %v5187, %v5188
    %v5190 = vrot.slane %v5161, 1
    %v5191 = vrot.slane %v5162, 1
    %v5192 = vsel %vm329, %v5190, %v5191
    %v5205 = vmax.f32 %v5151, %v5177
    %v5206 = vmax.f32 %v5152, %v5176
    %v5207 = vmax.f32 %v5153, %v5180
    %v5208 = vmax.f32 %v5154, %v5179
    %v5209 = vmax.f32 %v5155, %v5183
    %v5210 = vmax.f32 %v5156, %v5182
    %v5211 = vmax.f32 %v5157, %v5186
    %v5212 = vmax.f32 %v5158, %v5185
    %v5213 = vmax.f32 %v5159, %v5189
    %v5214 = vmax.f32 %v5160, %v5188
    %v5215 = vmax.f32 %v5161, %v5192
    %v5216 = vmax.f32 %v5162, %v5191
    %5229 = vrot.lane.b32.xlu0 %v5205, 127
    %v5230 = vpop.permute.xlu0 %5229
    %5231 = vrot.lane.b32.xlu0 %v5206, 127
    %v5232 = vpop.permute.xlu0 %5231
    %5233 = vrot.lane.b32.xlu0 %v5207, 127
    %v5234 = vpop.permute.xlu0 %5233
    %5235 = vrot.lane.b32.xlu0 %v5208, 127
    %v5236 = vpop.permute.xlu0 %5235
    %5237 = vrot.lane.b32.xlu0 %v5209, 127
    %v5238 = vpop.permute.xlu0 %5237
    %5239 = vrot.lane.b32.xlu0 %v5210, 127
    %v5240 = vpop.permute.xlu0 %5239
    %5241 = vrot.lane.b32.xlu0 %v5211, 127
    %v5242 = vpop.permute.xlu0 %5241
    %5243 = vrot.lane.b32.xlu0 %v5212, 127
    %v5244 = vpop.permute.xlu0 %5243
    %5245 = vrot.lane.b32.xlu0 %v5213, 127
    %v5246 = vpop.permute.xlu0 %5245
    %5247 = vrot.lane.b32.xlu0 %v5214, 127
    %v5248 = vpop.permute.xlu0 %5247
    %5249 = vrot.lane.b32.xlu0 %v5215, 127
    %v5250 = vpop.permute.xlu0 %5249
    %5251 = vrot.lane.b32.xlu0 %v5216, 127
    %v5252 = vpop.permute.xlu0 %5251
    %v5265 = vmax.f32 %v5205, %v5230
    %v5266 = vmax.f32 %v5206, %v5232
    %v5267 = vmax.f32 %v5207, %v5234
    %v5268 = vmax.f32 %v5208, %v5236
    %v5269 = vmax.f32 %v5209, %v5238
    %v5270 = vmax.f32 %v5210, %v5240
    %v5271 = vmax.f32 %v5211, %v5242
    %v5272 = vmax.f32 %v5212, %v5244
    %v5273 = vmax.f32 %v5213, %v5246
    %v5274 = vmax.f32 %v5214, %v5248
    %v5275 = vmax.f32 %v5215, %v5250
    %v5276 = vmax.f32 %v5216, %v5252
    %v5277 = vlaneseq
    %v5278 = vshrl.u32 %v5277, 7
    %vm5279 = vcmp.eq.s32.totalorder %v5278, 1
    %v5286 = vrot.slane %v5265, 1
    %v5287 = vrot.slane %v5267, 1
    %v5288 = vrot.slane %v5269, 1
    %v5289 = vrot.slane %v5271, 1
    %v5290 = vrot.slane %v5273, 1
    %v5291 = vrot.slane %v5275, 1
    %v5298 = vsel %vm5279, %v5286, %v5265
    %v5299 = vsel %vm5279, %v5287, %v5267
    %v5300 = vsel %vm5279, %v5288, %v5269
    %v5301 = vsel %vm5279, %v5289, %v5271
    %v5302 = vsel %vm5279, %v5290, %v5273
    %v5303 = vsel %vm5279, %v5291, %v5275
    %vm5304 = vcmp.eq.s32.totalorder %v5278, 2
    %v5305 = vrot.slane %v5265, 2
    %v5306 = vrot.slane %v5267, 2
    %v5307 = vrot.slane %v5269, 2
    %v5308 = vrot.slane %v5271, 2
    %v5309 = vrot.slane %v5273, 2
    %v5310 = vrot.slane %v5275, 2
    %v5317 = vsel %vm5304, %v5305, %v5298
    %v5318 = vsel %vm5304, %v5306, %v5299
    %v5319 = vsel %vm5304, %v5307, %v5300
    %v5320 = vsel %vm5304, %v5308, %v5301
    %v5321 = vsel %vm5304, %v5309, %v5302
    %v5322 = vsel %vm5304, %v5310, %v5303
    %vm5323 = vcmp.eq.s32.totalorder %v5278, 3
    %vm5330 = vcmask 1044480
    %v5331 = vrot.slane %v5265, 3
    %v5332 = vrot.slane %v5266, 3
    %v5333 = vsel %vm5330, %v5331, %v5332
    %v5334 = vrot.slane %v5267, 3
    %v5335 = vrot.slane %v5268, 3
    %v5336 = vsel %vm5330, %v5334, %v5335
    %v5337 = vrot.slane %v5269, 3
    %v5338 = vrot.slane %v5270, 3
    %v5339 = vsel %vm5330, %v5337, %v5338
    %v5340 = vrot.slane %v5271, 3
    %v5341 = vrot.slane %v5272, 3
    %v5342 = vsel %vm5330, %v5340, %v5341
    %v5343 = vrot.slane %v5273, 3
    %v5344 = vrot.slane %v5274, 3
    %v5345 = vsel %vm5330, %v5343, %v5344
    %v5346 = vrot.slane %v5275, 3
    %v5347 = vrot.slane %v5276, 3
    %v5348 = vsel %vm5330, %v5346, %v5347
    %v5355 = vsel %vm5323, %v5333, %v5317
    %v5356 = vsel %vm5323, %v5336, %v5318
    %v5357 = vsel %vm5323, %v5339, %v5319
    %v5358 = vsel %vm5323, %v5342, %v5320
    %v5359 = vsel %vm5323, %v5345, %v5321
    %v5360 = vsel %vm5323, %v5348, %v5322
    %vm5361 = vcmp.eq.s32.totalorder %v5278, 4
    %vm5362 = vcmask 1043456
    %v5363 = vrot.slane %v5265, 4
    %v5364 = vrot.slane %v5266, 4
    %v5365 = vsel %vm5362, %v5363, %v5364
    %v5366 = vrot.slane %v5267, 4
    %v5367 = vrot.slane %v5268, 4
    %v5368 = vsel %vm5362, %v5366, %v5367
    %v5369 = vrot.slane %v5269, 4
    %v5370 = vrot.slane %v5270, 4
    %v5371 = vsel %vm5362, %v5369, %v5370
    %v5372 = vrot.slane %v5271, 4
    %v5373 = vrot.slane %v5272, 4
    %v5374 = vsel %vm5362, %v5372, %v5373
    %v5375 = vrot.slane %v5273, 4
    %v5376 = vrot.slane %v5274, 4
    %v5377 = vsel %vm5362, %v5375, %v5376
    %v5378 = vrot.slane %v5275, 4
    %v5379 = vrot.slane %v5276, 4
    %v5380 = vsel %vm5362, %v5378, %v5379
    %v5387 = vsel %vm5361, %v5365, %v5355
    %v5388 = vsel %vm5361, %v5368, %v5356
    %v5389 = vsel %vm5361, %v5371, %v5357
    %v5390 = vsel %vm5361, %v5374, %v5358
    %v5391 = vsel %vm5361, %v5377, %v5359
    %v5392 = vsel %vm5361, %v5380, %v5360
    %vm5393 = vcmp.eq.s32.totalorder %v5278, 5
    %vm5394 = vcmask 1042432
    %v5395 = vrot.slane %v5265, 5
    %v5396 = vrot.slane %v5266, 5
    %v5397 = vsel %vm5394, %v5395, %v5396
    %v5398 = vrot.slane %v5267, 5
    %v5399 = vrot.slane %v5268, 5
    %v5400 = vsel %vm5394, %v5398, %v5399
    %v5401 = vrot.slane %v5269, 5
    %v5402 = vrot.slane %v5270, 5
    %v5403 = vsel %vm5394, %v5401, %v5402
    %v5404 = vrot.slane %v5271, 5
    %v5405 = vrot.slane %v5272, 5
    %v5406 = vsel %vm5394, %v5404, %v5405
    %v5407 = vrot.slane %v5273, 5
    %v5408 = vrot.slane %v5274, 5
    %v5409 = vsel %vm5394, %v5407, %v5408
    %v5410 = vrot.slane %v5275, 5
    %v5411 = vrot.slane %v5276, 5
    %v5412 = vsel %vm5394, %v5410, %v5411
    %v5419 = vsel %vm5393, %v5397, %v5387
    %v5420 = vsel %vm5393, %v5400, %v5388
    %v5421 = vsel %vm5393, %v5403, %v5389
    %v5422 = vsel %vm5393, %v5406, %v5390
    %v5423 = vsel %vm5393, %v5409, %v5391
    %v5424 = vsel %vm5393, %v5412, %v5392
    %v5425 = vlaneseq
    %v5426 = vand.u32 %v5425, 127
    %vm5427 = vcmp.eq.s32.totalorder %v5426, 1
    %5434 = vrot.lane.b32.xlu0 %v5419, 127
    %v5435 = vpop.permute.xlu0 %5434
    %5436 = vrot.lane.b32.xlu0 %v5420, 127
    %v5437 = vpop.permute.xlu0 %5436
    %5438 = vrot.lane.b32.xlu0 %v5421, 127
    %v5439 = vpop.permute.xlu0 %5438
    %5440 = vrot.lane.b32.xlu0 %v5422, 127
    %v5441 = vpop.permute.xlu0 %5440
    %5442 = vrot.lane.b32.xlu0 %v5423, 127
    %v5443 = vpop.permute.xlu0 %5442
    %5444 = vrot.lane.b32.xlu0 %v5424, 127
    %v5445 = vpop.permute.xlu0 %5444
    %v5452 = vsel %vm5427, %v5435, %v5419
    %v5453 = vsel %vm5427, %v5437, %v5420
    %v5454 = vsel %vm5427, %v5439, %v5421
    %v5455 = vsel %vm5427, %v5441, %v5422
    %v5456 = vsel %vm5427, %v5443, %v5423
    %v5457 = vsel %vm5427, %v5445, %v5424
    %vm5458 = vcmp.eq.s32.totalorder %v5426, 2
    %5459 = vrot.lane.b32.xlu0 %v5419, 126
    %v5460 = vpop.permute.xlu0 %5459
    %5461 = vrot.lane.b32.xlu0 %v5420, 126
    %v5462 = vpop.permute.xlu0 %5461
    %5463 = vrot.lane.b32.xlu0 %v5421, 126
    %v5464 = vpop.permute.xlu0 %5463
    %5465 = vrot.lane.b32.xlu0 %v5422, 126
    %v5466 = vpop.permute.xlu0 %5465
    %5467 = vrot.lane.b32.xlu0 %v5423, 126
    %v5468 = vpop.permute.xlu0 %5467
    %5469 = vrot.lane.b32.xlu0 %v5424, 126
    %v5470 = vpop.permute.xlu0 %5469
    %v5477 = vsel %vm5458, %v5460, %v5452
    %v5478 = vsel %vm5458, %v5462, %v5453
    %v5479 = vsel %vm5458, %v5464, %v5454
    %v5480 = vsel %vm5458, %v5466, %v5455
    %v5481 = vsel %vm5458, %v5468, %v5456
    %v5482 = vsel %vm5458, %v5470, %v5457
    %vm5483 = vcmp.eq.s32.totalorder %v5426, 3
    %5484 = vrot.lane.b32.xlu0 %v5419, 125
    %v5485 = vpop.permute.xlu0 %5484
    %5486 = vrot.lane.b32.xlu0 %v5420, 125
    %v5487 = vpop.permute.xlu0 %5486
    %5488 = vrot.lane.b32.xlu0 %v5421, 125
    %v5489 = vpop.permute.xlu0 %5488
    %5490 = vrot.lane.b32.xlu0 %v5422, 125
    %v5491 = vpop.permute.xlu0 %5490
    %5492 = vrot.lane.b32.xlu0 %v5423, 125
    %v5493 = vpop.permute.xlu0 %5492
    %5494 = vrot.lane.b32.xlu0 %v5424, 125
    %v5495 = vpop.permute.xlu0 %5494
    %v5502 = vsel %vm5483, %v5485, %v5477
    %v5503 = vsel %vm5483, %v5487, %v5478
    %v5504 = vsel %vm5483, %v5489, %v5479
    %v5505 = vsel %vm5483, %v5491, %v5480
    %v5506 = vsel %vm5483, %v5493, %v5481
    %v5507 = vsel %vm5483, %v5495, %v5482
    %vm5508 = vcmp.eq.s32.totalorder %v5426, 4
    %5509 = vrot.lane.b32.xlu0 %v5419, 124
    %v5510 = vpop.permute.xlu0 %5509
    %5511 = vrot.lane.b32.xlu0 %v5420, 124
    %v5512 = vpop.permute.xlu0 %5511
    %5513 = vrot.lane.b32.xlu0 %v5421, 124
    %v5514 = vpop.permute.xlu0 %5513
    %5515 = vrot.lane.b32.xlu0 %v5422, 124
    %v5516 = vpop.permute.xlu0 %5515
    %5517 = vrot.lane.b32.xlu0 %v5423, 124
    %v5518 = vpop.permute.xlu0 %5517
    %5519 = vrot.lane.b32.xlu0 %v5424, 124
    %v5520 = vpop.permute.xlu0 %5519
    %v5527 = vsel %vm5508, %v5510, %v5502
    %v5528 = vsel %vm5508, %v5512, %v5503
    %v5529 = vsel %vm5508, %v5514, %v5504
    %v5530 = vsel %vm5508, %v5516, %v5505
    %v5531 = vsel %vm5508, %v5518, %v5506
    %v5532 = vsel %vm5508, %v5520, %v5507
    %vm5533 = vcmp.eq.s32.totalorder %v5426, 5
    %5534 = vrot.lane.b32.xlu0 %v5419, 123
    %v5535 = vpop.permute.xlu0 %5534
    %5536 = vrot.lane.b32.xlu0 %v5420, 123
    %v5537 = vpop.permute.xlu0 %5536
    %5538 = vrot.lane.b32.xlu0 %v5421, 123
    %v5539 = vpop.permute.xlu0 %5538
    %5540 = vrot.lane.b32.xlu0 %v5422, 123
    %v5541 = vpop.permute.xlu0 %5540
    %5542 = vrot.lane.b32.xlu0 %v5423, 123
    %v5543 = vpop.permute.xlu0 %5542
    %5544 = vrot.lane.b32.xlu0 %v5424, 123
    %v5545 = vpop.permute.xlu0 %5544
    %v5552 = vsel %vm5533, %v5535, %v5527
    %v5553 = vsel %vm5533, %v5537, %v5528
    %v5554 = vsel %vm5533, %v5539, %v5529
    %v5555 = vsel %vm5533, %v5541, %v5530
    %v5556 = vsel %vm5533, %v5543, %v5531
    %v5557 = vsel %vm5533, %v5545, %v5532
    %v5558 = vmul.f32 %v5552, %v3010
    %v5559 = vmul.f32 %v5555, %v3010
    %v5560 = vadd.f32 %v3004, %v5558
    %v5561 = vadd.f32 %v3004, %v5559
    %v5562 = vmul.f32 %v5552, %v3020
    %v5563 = vmul.f32 %v5555, %v3020
    %v5564 = vadd.f32 %v3006, %v5562
    %v5565 = vadd.f32 %v3006, %v5563
    %v5566 = vmul.f32 %v5552, %v3030
    %v5567 = vmul.f32 %v5555, %v3030
    %v5568 = vadd.f32 %v3008, %v5566
    %v5569 = vadd.f32 %v3008, %v5567
    %v5570 = vmul.f32 %v5552, %v3040
    %v5571 = vmul.f32 %v5555, %v3040
    %5574 = vrot.lane.b32.xlu0 %v5570, 127
    %v5575 = vpop.permute.xlu0 %5574
    %5576 = vrot.lane.b32.xlu0 %v5571, 127
    %v5577 = vpop.permute.xlu0 %5576
    %v5580 = vadd.f32 %v5560, %v5575
    %v5581 = vadd.f32 %v5561, %v5577
    %v5582 = vmul.f32 %v5552, %v3066
    %v5583 = vmul.f32 %v5555, %v3066
    %5586 = vrot.lane.b32.xlu0 %v5582, 127
    %v5587 = vpop.permute.xlu0 %5586
    %5588 = vrot.lane.b32.xlu0 %v5583, 127
    %v5589 = vpop.permute.xlu0 %5588
    %v5592 = vadd.f32 %v5564, %v5587
    %v5593 = vadd.f32 %v5565, %v5589
    %v5594 = vmul.f32 %v5552, %v3092
    %v5595 = vmul.f32 %v5555, %v3092
    %5598 = vrot.lane.b32.xlu0 %v5594, 127
    %v5599 = vpop.permute.xlu0 %5598
    %5600 = vrot.lane.b32.xlu0 %v5595, 127
    %v5601 = vpop.permute.xlu0 %5600
    %v5604 = vadd.f32 %v5568, %v5599
    %v5605 = vadd.f32 %v5569, %v5601
    %v5606 = vmul.f32 %v5552, %v3118
    %v5607 = vmul.f32 %v5555, %v3118
    %5610 = vrot.lane.b32.xlu0 %v5606, 126
    %v5611 = vpop.permute.xlu0 %5610
    %5612 = vrot.lane.b32.xlu0 %v5607, 126
    %v5613 = vpop.permute.xlu0 %5612
    %v5616 = vadd.f32 %v5580, %v5611
    %v5617 = vadd.f32 %v5581, %v5613
    %v5618 = vmul.f32 %v5552, %v3144
    %v5619 = vmul.f32 %v5555, %v3144
    %5622 = vrot.lane.b32.xlu0 %v5618, 126
    %v5623 = vpop.permute.xlu0 %5622
    %5624 = vrot.lane.b32.xlu0 %v5619, 126
    %v5625 = vpop.permute.xlu0 %5624
    %v5628 = vadd.f32 %v5592, %v5623
    %v5629 = vadd.f32 %v5593, %v5625
    %v5630 = vmul.f32 %v5552, %v3170
    %v5631 = vmul.f32 %v5555, %v3170
    %5634 = vrot.lane.b32.xlu0 %v5630, 126
    %v5635 = vpop.permute.xlu0 %5634
    %5636 = vrot.lane.b32.xlu0 %v5631, 126
    %v5637 = vpop.permute.xlu0 %5636
    %v5640 = vadd.f32 %v5604, %v5635
    %v5641 = vadd.f32 %v5605, %v5637
    %v5642 = vmul.f32 %v5552, %v3196
    %v5643 = vmul.f32 %v5555, %v3196
    %v5646 = vrot.slane %v5642, 1
    %v5647 = vrot.slane %v5643, 1
    %v5650 = vadd.f32 %v5616, %v5646
    %v5651 = vadd.f32 %v5617, %v5647
    %v5652 = vmul.f32 %v5552, %v3220
    %v5653 = vmul.f32 %v5555, %v3220
    %v5656 = vrot.slane %v5652, 1
    %v5657 = vrot.slane %v5653, 1
    %v5660 = vadd.f32 %v5628, %v5656
    %v5661 = vadd.f32 %v5629, %v5657
    %v5662 = vmul.f32 %v5552, %v3244
    %v5663 = vmul.f32 %v5555, %v3244
    %v5666 = vrot.slane %v5662, 1
    %v5667 = vrot.slane %v5663, 1
    %v5670 = vadd.f32 %v5640, %v5666
    %v5671 = vadd.f32 %v5641, %v5667
    %v5672 = vmul.f32 %v5552, %v3268
    %v5673 = vmul.f32 %v5555, %v3268
    %v5676 = vrot.slane %v5672, 1
    %v5677 = vrot.slane %v5673, 1
    %5678 = vrot.lane.b32.xlu0 %v5676, 127
    %v5679 = vpop.permute.xlu0 %5678
    %5680 = vrot.lane.b32.xlu0 %v5677, 127
    %v5681 = vpop.permute.xlu0 %5680
    %v5684 = vadd.f32 %v5650, %v5679
    %v5685 = vadd.f32 %v5651, %v5681
    %v5686 = vmul.f32 %v5552, %v3300
    %v5687 = vmul.f32 %v5555, %v3300
    %v5690 = vrot.slane %v5686, 1
    %v5691 = vrot.slane %v5687, 1
    %5692 = vrot.lane.b32.xlu0 %v5690, 127
    %v5693 = vpop.permute.xlu0 %5692
    %5694 = vrot.lane.b32.xlu0 %v5691, 127
    %v5695 = vpop.permute.xlu0 %5694
    %v5698 = vadd.f32 %v5660, %v5693
    %v5699 = vadd.f32 %v5661, %v5695
    %v5700 = vmul.f32 %v5552, %v3332
    %v5701 = vmul.f32 %v5555, %v3332
    %v5704 = vrot.slane %v5700, 1
    %v5705 = vrot.slane %v5701, 1
    %5706 = vrot.lane.b32.xlu0 %v5704, 127
    %v5707 = vpop.permute.xlu0 %5706
    %5708 = vrot.lane.b32.xlu0 %v5705, 127
    %v5709 = vpop.permute.xlu0 %5708
    %v5712 = vadd.f32 %v5670, %v5707
    %v5713 = vadd.f32 %v5671, %v5709
    %v5714 = vmul.f32 %v5552, %v3364
    %v5715 = vmul.f32 %v5555, %v3364
    %v5718 = vrot.slane %v5714, 1
    %v5719 = vrot.slane %v5715, 1
    %5720 = vrot.lane.b32.xlu0 %v5718, 126
    %v5721 = vpop.permute.xlu0 %5720
    %5722 = vrot.lane.b32.xlu0 %v5719, 126
    %v5723 = vpop.permute.xlu0 %5722
    %v5726 = vadd.f32 %v5684, %v5721
    %v5727 = vadd.f32 %v5685, %v5723
    %v5728 = vmul.f32 %v5552, %v3396
    %v5729 = vmul.f32 %v5555, %v3396
    %v5732 = vrot.slane %v5728, 1
    %v5733 = vrot.slane %v5729, 1
    %5734 = vrot.lane.b32.xlu0 %v5732, 126
    %v5735 = vpop.permute.xlu0 %5734
    %5736 = vrot.lane.b32.xlu0 %v5733, 126
    %v5737 = vpop.permute.xlu0 %5736
    %v5740 = vadd.f32 %v5698, %v5735
    %v5741 = vadd.f32 %v5699, %v5737
    %v5742 = vmul.f32 %v5552, %v3428
    %v5743 = vmul.f32 %v5555, %v3428
    %v5746 = vrot.slane %v5742, 1
    %v5747 = vrot.slane %v5743, 1
    %5748 = vrot.lane.b32.xlu0 %v5746, 126
    %v5749 = vpop.permute.xlu0 %5748
    %5750 = vrot.lane.b32.xlu0 %v5747, 126
    %v5751 = vpop.permute.xlu0 %5750
    %v5754 = vadd.f32 %v5712, %v5749
    %v5755 = vadd.f32 %v5713, %v5751
    %v5756 = vmul.f32 %v5552, %v3460
    %v5757 = vmul.f32 %v5555, %v3460
    %v5760 = vrot.slane %v5756, 2
    %v5761 = vrot.slane %v5757, 2
    %v5764 = vadd.f32 %v5726, %v5760
    %v5765 = vadd.f32 %v5727, %v5761
    %v5766 = vmul.f32 %v5552, %v3484
    %v5767 = vmul.f32 %v5555, %v3484
    %v5770 = vrot.slane %v5766, 2
    %v5771 = vrot.slane %v5767, 2
    %v5774 = vadd.f32 %v5740, %v5770
    %v5775 = vadd.f32 %v5741, %v5771
    %v5776 = vmul.f32 %v5552, %v3508
    %v5777 = vmul.f32 %v5555, %v3508
    %v5780 = vrot.slane %v5776, 2
    %v5781 = vrot.slane %v5777, 2
    %v5784 = vadd.f32 %v5754, %v5780
    %v5785 = vadd.f32 %v5755, %v5781
    %v5786 = vmul.f32 %v5552, %v3532
    %v5787 = vmul.f32 %v5555, %v3532
    %v5790 = vrot.slane %v5786, 2
    %v5791 = vrot.slane %v5787, 2
    %5792 = vrot.lane.b32.xlu0 %v5790, 127
    %v5793 = vpop.permute.xlu0 %5792
    %5794 = vrot.lane.b32.xlu0 %v5791, 127
    %v5795 = vpop.permute.xlu0 %5794
    %v5798 = vadd.f32 %v5764, %v5793
    %v5799 = vadd.f32 %v5765, %v5795
    %v5800 = vmul.f32 %v5552, %v3564
    %v5801 = vmul.f32 %v5555, %v3564
    %v5804 = vrot.slane %v5800, 2
    %v5805 = vrot.slane %v5801, 2
    %5806 = vrot.lane.b32.xlu0 %v5804, 127
    %v5807 = vpop.permute.xlu0 %5806
    %5808 = vrot.lane.b32.xlu0 %v5805, 127
    %v5809 = vpop.permute.xlu0 %5808
    %v5812 = vadd.f32 %v5774, %v5807
    %v5813 = vadd.f32 %v5775, %v5809
    %v5814 = vmul.f32 %v5552, %v3596
    %v5815 = vmul.f32 %v5555, %v3596
    %v5818 = vrot.slane %v5814, 2
    %v5819 = vrot.slane %v5815, 2
    %5820 = vrot.lane.b32.xlu0 %v5818, 127
    %v5821 = vpop.permute.xlu0 %5820
    %5822 = vrot.lane.b32.xlu0 %v5819, 127
    %v5823 = vpop.permute.xlu0 %5822
    %v5826 = vadd.f32 %v5784, %v5821
    %v5827 = vadd.f32 %v5785, %v5823
    %v5828 = vmul.f32 %v5552, %v3628
    %v5829 = vmul.f32 %v5555, %v3628
    %v5832 = vrot.slane %v5828, 2
    %v5833 = vrot.slane %v5829, 2
    %5834 = vrot.lane.b32.xlu0 %v5832, 126
    %v5835 = vpop.permute.xlu0 %5834
    %5836 = vrot.lane.b32.xlu0 %v5833, 126
    %v5837 = vpop.permute.xlu0 %5836
    %v5840 = vadd.f32 %v5798, %v5835
    %v5841 = vadd.f32 %v5799, %v5837
    %v5842 = vmul.f32 %v5552, %v3660
    %v5843 = vmul.f32 %v5555, %v3660
    %v5846 = vrot.slane %v5842, 2
    %v5847 = vrot.slane %v5843, 2
    %5848 = vrot.lane.b32.xlu0 %v5846, 126
    %v5849 = vpop.permute.xlu0 %5848
    %5850 = vrot.lane.b32.xlu0 %v5847, 126
    %v5851 = vpop.permute.xlu0 %5850
    %v5854 = vadd.f32 %v5812, %v5849
    %v5855 = vadd.f32 %v5813, %v5851
    %v5856 = vmul.f32 %v5552, %v3692
    %v5857 = vmul.f32 %v5555, %v3692
    %v5860 = vrot.slane %v5856, 2
    %v5861 = vrot.slane %v5857, 2
    %5862 = vrot.lane.b32.xlu0 %v5860, 126
    %v5863 = vpop.permute.xlu0 %5862
    %5864 = vrot.lane.b32.xlu0 %v5861, 126
    %v5865 = vpop.permute.xlu0 %5864
    %v5868 = vadd.f32 %v5826, %v5863
    %v5869 = vadd.f32 %v5827, %v5865
    %v5870 = vmul.f32 %v5553, %v3724
    %v5871 = vmul.f32 %v5556, %v3724
    %v5872 = vadd.f32 %v5840, %v5870
    %v5873 = vadd.f32 %v5841, %v5871
    %v5874 = vmul.f32 %v5553, %v3734
    %v5875 = vmul.f32 %v5556, %v3734
    %v5876 = vadd.f32 %v5854, %v5874
    %v5877 = vadd.f32 %v5855, %v5875
    %v5878 = vmul.f32 %v5553, %v3744
    %v5879 = vmul.f32 %v5556, %v3744
    %v5880 = vadd.f32 %v5868, %v5878
    %v5881 = vadd.f32 %v5869, %v5879
    %v5882 = vmul.f32 %v5553, %v3754
    %v5883 = vmul.f32 %v5556, %v3754
    %5886 = vrot.lane.b32.xlu0 %v5882, 127
    %v5887 = vpop.permute.xlu0 %5886
    %5888 = vrot.lane.b32.xlu0 %v5883, 127
    %v5889 = vpop.permute.xlu0 %5888
    %v5892 = vadd.f32 %v5872, %v5887
    %v5893 = vadd.f32 %v5873, %v5889
    %v5894 = vmul.f32 %v5553, %v3780
    %v5895 = vmul.f32 %v5556, %v3780
    %5898 = vrot.lane.b32.xlu0 %v5894, 127
    %v5899 = vpop.permute.xlu0 %5898
    %5900 = vrot.lane.b32.xlu0 %v5895, 127
    %v5901 = vpop.permute.xlu0 %5900
    %v5904 = vadd.f32 %v5876, %v5899
    %v5905 = vadd.f32 %v5877, %v5901
    %v5906 = vmul.f32 %v5553, %v3806
    %v5907 = vmul.f32 %v5556, %v3806
    %5910 = vrot.lane.b32.xlu0 %v5906, 127
    %v5911 = vpop.permute.xlu0 %5910
    %5912 = vrot.lane.b32.xlu0 %v5907, 127
    %v5913 = vpop.permute.xlu0 %5912
    %v5916 = vadd.f32 %v5880, %v5911
    %v5917 = vadd.f32 %v5881, %v5913
    %v5918 = vmul.f32 %v5553, %v3832
    %v5919 = vmul.f32 %v5556, %v3832
    %5922 = vrot.lane.b32.xlu0 %v5918, 126
    %v5923 = vpop.permute.xlu0 %5922
    %5924 = vrot.lane.b32.xlu0 %v5919, 126
    %v5925 = vpop.permute.xlu0 %5924
    %v5928 = vadd.f32 %v5892, %v5923
    %v5929 = vadd.f32 %v5893, %v5925
    %v5930 = vmul.f32 %v5553, %v3858
    %v5931 = vmul.f32 %v5556, %v3858
    %5934 = vrot.lane.b32.xlu0 %v5930, 126
    %v5935 = vpop.permute.xlu0 %5934
    %5936 = vrot.lane.b32.xlu0 %v5931, 126
    %v5937 = vpop.permute.xlu0 %5936
    %v5940 = vadd.f32 %v5904, %v5935
    %v5941 = vadd.f32 %v5905, %v5937
    %v5942 = vmul.f32 %v5553, %v3884
    %v5943 = vmul.f32 %v5556, %v3884
    %5946 = vrot.lane.b32.xlu0 %v5942, 126
    %v5947 = vpop.permute.xlu0 %5946
    %5948 = vrot.lane.b32.xlu0 %v5943, 126
    %v5949 = vpop.permute.xlu0 %5948
    %v5952 = vadd.f32 %v5916, %v5947
    %v5953 = vadd.f32 %v5917, %v5949
    %v5954 = vmul.f32 %v5553, %v3910
    %v5955 = vmul.f32 %v5556, %v3910
    %v5958 = vrot.slane %v5954, 1
    %v5959 = vrot.slane %v5955, 1
    %v5962 = vadd.f32 %v5928, %v5958
    %v5963 = vadd.f32 %v5929, %v5959
    %v5964 = vmul.f32 %v5553, %v3934
    %v5965 = vmul.f32 %v5556, %v3934
    %v5968 = vrot.slane %v5964, 1
    %v5969 = vrot.slane %v5965, 1
    %v5972 = vadd.f32 %v5940, %v5968
    %v5973 = vadd.f32 %v5941, %v5969
    %v5974 = vmul.f32 %v5553, %v3958
    %v5975 = vmul.f32 %v5556, %v3958
    %v5978 = vrot.slane %v5974, 1
    %v5979 = vrot.slane %v5975, 1
    %v5982 = vadd.f32 %v5952, %v5978
    %v5983 = vadd.f32 %v5953, %v5979
    %v5984 = vmul.f32 %v5553, %v3982
    %v5985 = vmul.f32 %v5556, %v3982
    %v5988 = vrot.slane %v5984, 1
    %v5989 = vrot.slane %v5985, 1
    %5990 = vrot.lane.b32.xlu0 %v5988, 127
    %v5991 = vpop.permute.xlu0 %5990
    %5992 = vrot.lane.b32.xlu0 %v5989, 127
    %v5993 = vpop.permute.xlu0 %5992
    %v5996 = vadd.f32 %v5962, %v5991
    %v5997 = vadd.f32 %v5963, %v5993
    %v5998 = vmul.f32 %v5553, %v4014
    %v5999 = vmul.f32 %v5556, %v4014
    %v6002 = vrot.slane %v5998, 1
    %v6003 = vrot.slane %v5999, 1
    %6004 = vrot.lane.b32.xlu0 %v6002, 127
    %v6005 = vpop.permute.xlu0 %6004
    %6006 = vrot.lane.b32.xlu0 %v6003, 127
    %v6007 = vpop.permute.xlu0 %6006
    %v6010 = vadd.f32 %v5972, %v6005
    %v6011 = vadd.f32 %v5973, %v6007
    %v6012 = vmul.f32 %v5553, %v4046
    %v6013 = vmul.f32 %v5556, %v4046
    %v6016 = vrot.slane %v6012, 1
    %v6017 = vrot.slane %v6013, 1
    %6018 = vrot.lane.b32.xlu0 %v6016, 127
    %v6019 = vpop.permute.xlu0 %6018
    %6020 = vrot.lane.b32.xlu0 %v6017, 127
    %v6021 = vpop.permute.xlu0 %6020
    %v6024 = vadd.f32 %v5982, %v6019
    %v6025 = vadd.f32 %v5983, %v6021
    %v6026 = vmul.f32 %v5553, %v4078
    %v6027 = vmul.f32 %v5556, %v4078
    %v6030 = vrot.slane %v6026, 1
    %v6031 = vrot.slane %v6027, 1
    %6032 = vrot.lane.b32.xlu0 %v6030, 126
    %v6033 = vpop.permute.xlu0 %6032
    %6034 = vrot.lane.b32.xlu0 %v6031, 126
    %v6035 = vpop.permute.xlu0 %6034
    %v6038 = vadd.f32 %v5996, %v6033
    %v6039 = vadd.f32 %v5997, %v6035
    %v6040 = vmul.f32 %v5553, %v4110
    %v6041 = vmul.f32 %v5556, %v4110
    %v6044 = vrot.slane %v6040, 1
    %v6045 = vrot.slane %v6041, 1
    %6046 = vrot.lane.b32.xlu0 %v6044, 126
    %v6047 = vpop.permute.xlu0 %6046
    %6048 = vrot.lane.b32.xlu0 %v6045, 126
    %v6049 = vpop.permute.xlu0 %6048
    %v6052 = vadd.f32 %v6010, %v6047
    %v6053 = vadd.f32 %v6011, %v6049
    %v6054 = vmul.f32 %v5553, %v4142
    %v6055 = vmul.f32 %v5556, %v4142
    %v6058 = vrot.slane %v6054, 1
    %v6059 = vrot.slane %v6055, 1
    %6060 = vrot.lane.b32.xlu0 %v6058, 126
    %v6061 = vpop.permute.xlu0 %6060
    %6062 = vrot.lane.b32.xlu0 %v6059, 126
    %v6063 = vpop.permute.xlu0 %6062
    %v6066 = vadd.f32 %v6024, %v6061
    %v6067 = vadd.f32 %v6025, %v6063
    %v6068 = vmul.f32 %v5553, %v4174
    %v6069 = vmul.f32 %v5556, %v4174
    %v6072 = vrot.slane %v6068, 2
    %v6073 = vrot.slane %v6069, 2
    %v6076 = vadd.f32 %v6038, %v6072
    %v6077 = vadd.f32 %v6039, %v6073
    %v6078 = vmul.f32 %v5553, %v4198
    %v6079 = vmul.f32 %v5556, %v4198
    %v6082 = vrot.slane %v6078, 2
    %v6083 = vrot.slane %v6079, 2
    %v6086 = vadd.f32 %v6052, %v6082
    %v6087 = vadd.f32 %v6053, %v6083
    %v6088 = vmul.f32 %v5553, %v4222
    %v6089 = vmul.f32 %v5556, %v4222
    %v6092 = vrot.slane %v6088, 2
    %v6093 = vrot.slane %v6089, 2
    %v6096 = vadd.f32 %v6066, %v6092
    %v6097 = vadd.f32 %v6067, %v6093
    %v6098 = vmul.f32 %v5553, %v4246
    %v6099 = vmul.f32 %v5556, %v4246
    %v6102 = vrot.slane %v6098, 2
    %v6103 = vrot.slane %v6099, 2
    %6104 = vrot.lane.b32.xlu0 %v6102, 127
    %v6105 = vpop.permute.xlu0 %6104
    %6106 = vrot.lane.b32.xlu0 %v6103, 127
    %v6107 = vpop.permute.xlu0 %6106
    %v6110 = vadd.f32 %v6076, %v6105
    %v6111 = vadd.f32 %v6077, %v6107
    %v6112 = vmul.f32 %v5553, %v4278
    %v6113 = vmul.f32 %v5556, %v4278
    %v6116 = vrot.slane %v6112, 2
    %v6117 = vrot.slane %v6113, 2
    %6118 = vrot.lane.b32.xlu0 %v6116, 127
    %v6119 = vpop.permute.xlu0 %6118
    %6120 = vrot.lane.b32.xlu0 %v6117, 127
    %v6121 = vpop.permute.xlu0 %6120
    %v6124 = vadd.f32 %v6086, %v6119
    %v6125 = vadd.f32 %v6087, %v6121
    %v6126 = vmul.f32 %v5553, %v4310
    %v6127 = vmul.f32 %v5556, %v4310
    %v6130 = vrot.slane %v6126, 2
    %v6131 = vrot.slane %v6127, 2
    %6132 = vrot.lane.b32.xlu0 %v6130, 127
    %v6133 = vpop.permute.xlu0 %6132
    %6134 = vrot.lane.b32.xlu0 %v6131, 127
    %v6135 = vpop.permute.xlu0 %6134
    %v6138 = vadd.f32 %v6096, %v6133
    %v6139 = vadd.f32 %v6097, %v6135
    %v6140 = vmul.f32 %v5553, %v4342
    %v6141 = vmul.f32 %v5556, %v4342
    %v6144 = vrot.slane %v6140, 2
    %v6145 = vrot.slane %v6141, 2
    %6146 = vrot.lane.b32.xlu0 %v6144, 126
    %v6147 = vpop.permute.xlu0 %6146
    %6148 = vrot.lane.b32.xlu0 %v6145, 126
    %v6149 = vpop.permute.xlu0 %6148
    %v6152 = vadd.f32 %v6110, %v6147
    %v6153 = vadd.f32 %v6111, %v6149
    %v6154 = vmul.f32 %v5553, %v4374
    %v6155 = vmul.f32 %v5556, %v4374
    %v6158 = vrot.slane %v6154, 2
    %v6159 = vrot.slane %v6155, 2
    %6160 = vrot.lane.b32.xlu0 %v6158, 126
    %v6161 = vpop.permute.xlu0 %6160
    %6162 = vrot.lane.b32.xlu0 %v6159, 126
    %v6163 = vpop.permute.xlu0 %6162
    %v6166 = vadd.f32 %v6124, %v6161
    %v6167 = vadd.f32 %v6125, %v6163
    %v6168 = vmul.f32 %v5553, %v4406
    %v6169 = vmul.f32 %v5556, %v4406
    %v6172 = vrot.slane %v6168, 2
    %v6173 = vrot.slane %v6169, 2
    %6174 = vrot.lane.b32.xlu0 %v6172, 126
    %v6175 = vpop.permute.xlu0 %6174
    %6176 = vrot.lane.b32.xlu0 %v6173, 126
    %v6177 = vpop.permute.xlu0 %6176
    %v6180 = vadd.f32 %v6138, %v6175
    %v6181 = vadd.f32 %v6139, %v6177
    %v6182 = vmul.f32 %v5554, %v4438
    %v6183 = vmul.f32 %v5557, %v4438
    %v6184 = vadd.f32 %v6152, %v6182
    %v6185 = vadd.f32 %v6153, %v6183
    %v6186 = vmul.f32 %v5554, %v4448
    %v6187 = vmul.f32 %v5557, %v4448
    %v6188 = vadd.f32 %v6166, %v6186
    %v6189 = vadd.f32 %v6167, %v6187
    %v6190 = vmul.f32 %v5554, %v4458
    %v6191 = vmul.f32 %v5557, %v4458
    %v6192 = vadd.f32 %v6180, %v6190
    %v6193 = vadd.f32 %v6181, %v6191
    %v6194 = vmul.f32 %v5554, %v4468
    %v6195 = vmul.f32 %v5557, %v4468
    %6198 = vrot.lane.b32.xlu0 %v6194, 127
    %v6199 = vpop.permute.xlu0 %6198
    %6200 = vrot.lane.b32.xlu0 %v6195, 127
    %v6201 = vpop.permute.xlu0 %6200
    %v6204 = vadd.f32 %v6184, %v6199
    %v6205 = vadd.f32 %v6185, %v6201
    %v6206 = vmul.f32 %v5554, %v4494
    %v6207 = vmul.f32 %v5557, %v4494
    %6210 = vrot.lane.b32.xlu0 %v6206, 127
    %v6211 = vpop.permute.xlu0 %6210
    %6212 = vrot.lane.b32.xlu0 %v6207, 127
    %v6213 = vpop.permute.xlu0 %6212
    %v6216 = vadd.f32 %v6188, %v6211
    %v6217 = vadd.f32 %v6189, %v6213
    %v6218 = vmul.f32 %v5554, %v4520
    %v6219 = vmul.f32 %v5557, %v4520
    %6222 = vrot.lane.b32.xlu0 %v6218, 127
    %v6223 = vpop.permute.xlu0 %6222
    %6224 = vrot.lane.b32.xlu0 %v6219, 127
    %v6225 = vpop.permute.xlu0 %6224
    %v6228 = vadd.f32 %v6192, %v6223
    %v6229 = vadd.f32 %v6193, %v6225
    %v6230 = vmul.f32 %v5554, %v4546
    %v6231 = vmul.f32 %v5557, %v4546
    %6234 = vrot.lane.b32.xlu0 %v6230, 126
    %v6235 = vpop.permute.xlu0 %6234
    %6236 = vrot.lane.b32.xlu0 %v6231, 126
    %v6237 = vpop.permute.xlu0 %6236
    %v6240 = vadd.f32 %v6204, %v6235
    %v6241 = vadd.f32 %v6205, %v6237
    %v6242 = vmul.f32 %v5554, %v4572
    %v6243 = vmul.f32 %v5557, %v4572
    %6246 = vrot.lane.b32.xlu0 %v6242, 126
    %v6247 = vpop.permute.xlu0 %6246
    %6248 = vrot.lane.b32.xlu0 %v6243, 126
    %v6249 = vpop.permute.xlu0 %6248
    %v6252 = vadd.f32 %v6216, %v6247
    %v6253 = vadd.f32 %v6217, %v6249
    %v6254 = vmul.f32 %v5554, %v4598
    %v6255 = vmul.f32 %v5557, %v4598
    %6258 = vrot.lane.b32.xlu0 %v6254, 126
    %v6259 = vpop.permute.xlu0 %6258
    %6260 = vrot.lane.b32.xlu0 %v6255, 126
    %v6261 = vpop.permute.xlu0 %6260
    %v6264 = vadd.f32 %v6228, %v6259
    %v6265 = vadd.f32 %v6229, %v6261
    %v6266 = vmul.f32 %v5554, %v4624
    %v6267 = vmul.f32 %v5557, %v4624
    %v6270 = vrot.slane %v6266, 1
    %v6271 = vrot.slane %v6267, 1
    %v6274 = vadd.f32 %v6240, %v6270
    %v6275 = vadd.f32 %v6241, %v6271
    %v6276 = vmul.f32 %v5554, %v4648
    %v6277 = vmul.f32 %v5557, %v4648
    %v6280 = vrot.slane %v6276, 1
    %v6281 = vrot.slane %v6277, 1
    %v6284 = vadd.f32 %v6252, %v6280
    %v6285 = vadd.f32 %v6253, %v6281
    %v6286 = vmul.f32 %v5554, %v4672
    %v6287 = vmul.f32 %v5557, %v4672
    %v6290 = vrot.slane %v6286, 1
    %v6291 = vrot.slane %v6287, 1
    %v6294 = vadd.f32 %v6264, %v6290
    %v6295 = vadd.f32 %v6265, %v6291
    %v6296 = vmul.f32 %v5554, %v4696
    %v6297 = vmul.f32 %v5557, %v4696
    %v6300 = vrot.slane %v6296, 1
    %v6301 = vrot.slane %v6297, 1
    %6302 = vrot.lane.b32.xlu0 %v6300, 127
    %v6303 = vpop.permute.xlu0 %6302
    %6304 = vrot.lane.b32.xlu0 %v6301, 127
    %v6305 = vpop.permute.xlu0 %6304
    %v6308 = vadd.f32 %v6274, %v6303
    %v6309 = vadd.f32 %v6275, %v6305
    %v6310 = vmul.f32 %v5554, %v4728
    %v6311 = vmul.f32 %v5557, %v4728
    %v6314 = vrot.slane %v6310, 1
    %v6315 = vrot.slane %v6311, 1
    %6316 = vrot.lane.b32.xlu0 %v6314, 127
    %v6317 = vpop.permute.xlu0 %6316
    %6318 = vrot.lane.b32.xlu0 %v6315, 127
    %v6319 = vpop.permute.xlu0 %6318
    %v6322 = vadd.f32 %v6284, %v6317
    %v6323 = vadd.f32 %v6285, %v6319
    %v6324 = vmul.f32 %v5554, %v4760
    %v6325 = vmul.f32 %v5557, %v4760
    %v6328 = vrot.slane %v6324, 1
    %v6329 = vrot.slane %v6325, 1
    %6330 = vrot.lane.b32.xlu0 %v6328, 127
    %v6331 = vpop.permute.xlu0 %6330
    %6332 = vrot.lane.b32.xlu0 %v6329, 127
    %v6333 = vpop.permute.xlu0 %6332
    %v6336 = vadd.f32 %v6294, %v6331
    %v6337 = vadd.f32 %v6295, %v6333
    %v6338 = vmul.f32 %v5554, %v4792
    %v6339 = vmul.f32 %v5557, %v4792
    %v6342 = vrot.slane %v6338, 1
    %v6343 = vrot.slane %v6339, 1
    %6344 = vrot.lane.b32.xlu0 %v6342, 126
    %v6345 = vpop.permute.xlu0 %6344
    %6346 = vrot.lane.b32.xlu0 %v6343, 126
    %v6347 = vpop.permute.xlu0 %6346
    %v6350 = vadd.f32 %v6308, %v6345
    %v6351 = vadd.f32 %v6309, %v6347
    %v6352 = vmul.f32 %v5554, %v4824
    %v6353 = vmul.f32 %v5557, %v4824
    %v6356 = vrot.slane %v6352, 1
    %v6357 = vrot.slane %v6353, 1
    %6358 = vrot.lane.b32.xlu0 %v6356, 126
    %v6359 = vpop.permute.xlu0 %6358
    %6360 = vrot.lane.b32.xlu0 %v6357, 126
    %v6361 = vpop.permute.xlu0 %6360
    %v6364 = vadd.f32 %v6322, %v6359
    %v6365 = vadd.f32 %v6323, %v6361
    %v6366 = vmul.f32 %v5554, %v4856
    %v6367 = vmul.f32 %v5557, %v4856
    %v6370 = vrot.slane %v6366, 1
    %v6371 = vrot.slane %v6367, 1
    %6372 = vrot.lane.b32.xlu0 %v6370, 126
    %v6373 = vpop.permute.xlu0 %6372
    %6374 = vrot.lane.b32.xlu0 %v6371, 126
    %v6375 = vpop.permute.xlu0 %6374
    %v6378 = vadd.f32 %v6336, %v6373
    %v6379 = vadd.f32 %v6337, %v6375
    %v6380 = vmul.f32 %v5554, %v4888
    %v6381 = vmul.f32 %v5557, %v4888
    %v6384 = vrot.slane %v6380, 2
    %v6385 = vrot.slane %v6381, 2
    %v6388 = vadd.f32 %v6350, %v6384
    %v6389 = vadd.f32 %v6351, %v6385
    %v6390 = vmul.f32 %v5554, %v4912
    %v6391 = vmul.f32 %v5557, %v4912
    %v6394 = vrot.slane %v6390, 2
    %v6395 = vrot.slane %v6391, 2
    %v6398 = vadd.f32 %v6364, %v6394
    %v6399 = vadd.f32 %v6365, %v6395
    %v6400 = vmul.f32 %v5554, %v4936
    %v6401 = vmul.f32 %v5557, %v4936
    %v6404 = vrot.slane %v6400, 2
    %v6405 = vrot.slane %v6401, 2
    %v6408 = vadd.f32 %v6378, %v6404
    %v6409 = vadd.f32 %v6379, %v6405
    %v6410 = vmul.f32 %v5554, %v4960
    %v6411 = vmul.f32 %v5557, %v4960
    %v6414 = vrot.slane %v6410, 2
    %v6415 = vrot.slane %v6411, 2
    %6416 = vrot.lane.b32.xlu0 %v6414, 127
    %v6417 = vpop.permute.xlu0 %6416
    %6418 = vrot.lane.b32.xlu0 %v6415, 127
    %v6419 = vpop.permute.xlu0 %6418
    %v6422 = vadd.f32 %v6388, %v6417
    %v6423 = vadd.f32 %v6389, %v6419
    %v6424 = vmul.f32 %v5554, %v4992
    %v6425 = vmul.f32 %v5557, %v4992
    %v6428 = vrot.slane %v6424, 2
    %v6429 = vrot.slane %v6425, 2
    %6430 = vrot.lane.b32.xlu0 %v6428, 127
    %v6431 = vpop.permute.xlu0 %6430
    %6432 = vrot.lane.b32.xlu0 %v6429, 127
    %v6433 = vpop.permute.xlu0 %6432
    %v6436 = vadd.f32 %v6398, %v6431
    %v6437 = vadd.f32 %v6399, %v6433
    %v6438 = vmul.f32 %v5554, %v5024
    %v6439 = vmul.f32 %v5557, %v5024
    %v6442 = vrot.slane %v6438, 2
    %v6443 = vrot.slane %v6439, 2
    %6444 = vrot.lane.b32.xlu0 %v6442, 127
    %v6445 = vpop.permute.xlu0 %6444
    %6446 = vrot.lane.b32.xlu0 %v6443, 127
    %v6447 = vpop.permute.xlu0 %6446
    %v6450 = vadd.f32 %v6408, %v6445
    %v6451 = vadd.f32 %v6409, %v6447
    %v6452 = vmul.f32 %v5554, %v5056
    %v6453 = vmul.f32 %v5557, %v5056
    %v6456 = vrot.slane %v6452, 2
    %v6457 = vrot.slane %v6453, 2
    %6458 = vrot.lane.b32.xlu0 %v6456, 126
    %v6459 = vpop.permute.xlu0 %6458
    %6460 = vrot.lane.b32.xlu0 %v6457, 126
    %v6461 = vpop.permute.xlu0 %6460
    %v6464 = vadd.f32 %v6422, %v6459
    %v6465 = vadd.f32 %v6423, %v6461
    %v6466 = vmul.f32 %v5554, %v5088
    %v6467 = vmul.f32 %v5557, %v5088
    %v6470 = vrot.slane %v6466, 2
    %v6471 = vrot.slane %v6467, 2
    %6472 = vrot.lane.b32.xlu0 %v6470, 126
    %v6473 = vpop.permute.xlu0 %6472
    %6474 = vrot.lane.b32.xlu0 %v6471, 126
    %v6475 = vpop.permute.xlu0 %6474
    %v6478 = vadd.f32 %v6436, %v6473
    %v6479 = vadd.f32 %v6437, %v6475
    %v6480 = vmul.f32 %v5554, %v5120
    %v6481 = vmul.f32 %v5557, %v5120
    %v6484 = vrot.slane %v6480, 2
    %v6485 = vrot.slane %v6481, 2
    %6486 = vrot.lane.b32.xlu0 %v6484, 126
    %v6487 = vpop.permute.xlu0 %6486
    %6488 = vrot.lane.b32.xlu0 %v6485, 126
    %v6489 = vpop.permute.xlu0 %6488
    %v6492 = vadd.f32 %v6450, %v6487
    %v6493 = vadd.f32 %v6451, %v6489
    %v6494 = vmax.f32 %v6464, 0.0
    %v6495 = vmax.f32 %v6478, 0.0
    %v6496 = vmax.f32 %v6492, 0.0
    %v6497 = vmax.f32 %v6465, 0.0
    %v6498 = vmax.f32 %v6479, 0.0
    %v6499 = vmax.f32 %v6493, 0.0
    %s6500 = sld [smem:[#allocation12]]
    %v6501 = vstv %s6500
    %s6502 = sld [smem:[#allocation12 + $0x1]]
    %v6503 = vstv %s6502
    %s6504 = sld [smem:[#allocation11]]
    %v6505 = vstv %s6504
    %v6506 = vmul.f32 %v6494, %v6505
    %v6507 = vmul.f32 %v6497, %v6505
    %v6508 = vadd.f32 %v6501, %v6506
    %v6509 = vadd.f32 %v6501, %v6507
    %s6510 = sld [smem:[#allocation11 + $0x1]]
    %v6511 = vstv %s6510
    %v6512 = vmul.f32 %v6494, %v6511
    %v6513 = vmul.f32 %v6497, %v6511
    %v6514 = vadd.f32 %v6503, %v6512
    %v6515 = vadd.f32 %v6503, %v6513
    %s6516 = sld [smem:[#allocation11 + $0x6]]
    %v6517 = vstv %s6516
    %v6518 = vmul.f32 %v6494, %v6517
    %v6519 = vmul.f32 %v6497, %v6517
    %6522 = vrot.lane.b32.xlu0 %v6518, 127
    %v6523 = vpop.permute.xlu0 %6522
    %6524 = vrot.lane.b32.xlu0 %v6519, 127
    %v6525 = vpop.permute.xlu0 %6524
    %v6528 = vadd.f32 %v6508, %v6523
    %v6529 = vadd.f32 %v6509, %v6525
    %s6530 = sld [smem:[#allocation11 + $0x7]]
    %v6531 = vstv %s6530
    %v6532 = vmul.f32 %v6494, %v6531
    %v6533 = vmul.f32 %v6497, %v6531
    %6536 = vrot.lane.b32.xlu0 %v6532, 127
    %v6537 = vpop.permute.xlu0 %6536
    %6538 = vrot.lane.b32.xlu0 %v6533, 127
    %v6539 = vpop.permute.xlu0 %6538
    %v6542 = vadd.f32 %v6514, %v6537
    %v6543 = vadd.f32 %v6515, %v6539
    %s6544 = sld [smem:[#allocation11 + $0xc]]
    %v6545 = vstv %s6544
    %v6546 = vmul.f32 %v6494, %v6545
    %v6547 = vmul.f32 %v6497, %v6545
    %6550 = vrot.lane.b32.xlu0 %v6546, 126
    %v6551 = vpop.permute.xlu0 %6550
    %6552 = vrot.lane.b32.xlu0 %v6547, 126
    %v6553 = vpop.permute.xlu0 %6552
    %v6556 = vadd.f32 %v6528, %v6551
    %v6557 = vadd.f32 %v6529, %v6553
    %s6558 = sld [smem:[#allocation11 + $0xd]]
    %v6559 = vstv %s6558
    %v6560 = vmul.f32 %v6494, %v6559
    %v6561 = vmul.f32 %v6497, %v6559
    %6564 = vrot.lane.b32.xlu0 %v6560, 126
    %v6565 = vpop.permute.xlu0 %6564
    %6566 = vrot.lane.b32.xlu0 %v6561, 126
    %v6567 = vpop.permute.xlu0 %6566
    %v6570 = vadd.f32 %v6542, %v6565
    %v6571 = vadd.f32 %v6543, %v6567
    %s6572 = sld [smem:[#allocation11 + $0x12]]
    %v6573 = vstv %s6572
    %v6574 = vmul.f32 %v6494, %v6573
    %v6575 = vmul.f32 %v6497, %v6573
    %v6578 = vrot.slane %v6574, 1
    %v6579 = vrot.slane %v6575, 1
    %v6582 = vadd.f32 %v6556, %v6578
    %v6583 = vadd.f32 %v6557, %v6579
    %s6584 = sld [smem:[#allocation11 + $0x13]]
    %v6585 = vstv %s6584
    %v6586 = vmul.f32 %v6494, %v6585
    %v6587 = vmul.f32 %v6497, %v6585
    %v6590 = vrot.slane %v6586, 1
    %v6591 = vrot.slane %v6587, 1
    %v6594 = vadd.f32 %v6570, %v6590
    %v6595 = vadd.f32 %v6571, %v6591
    %s6596 = sld [smem:[#allocation11 + $0x18]]
    %v6597 = vstv %s6596
    %v6598 = vmul.f32 %v6494, %v6597
    %v6599 = vmul.f32 %v6497, %v6597
    %v6602 = vrot.slane %v6598, 1
    %v6603 = vrot.slane %v6599, 1
    %6604 = vrot.lane.b32.xlu0 %v6602, 127
    %v6605 = vpop.permute.xlu0 %6604
    %6606 = vrot.lane.b32.xlu0 %v6603, 127
    %v6607 = vpop.permute.xlu0 %6606
    %v6610 = vadd.f32 %v6582, %v6605
    %v6611 = vadd.f32 %v6583, %v6607
    %s6612 = sld [smem:[#allocation11 + $0x19]]
    %v6613 = vstv %s6612
    %v6614 = vmul.f32 %v6494, %v6613
    %v6615 = vmul.f32 %v6497, %v6613
    %v6618 = vrot.slane %v6614, 1
    %v6619 = vrot.slane %v6615, 1
    %6620 = vrot.lane.b32.xlu0 %v6618, 127
    %v6621 = vpop.permute.xlu0 %6620
    %6622 = vrot.lane.b32.xlu0 %v6619, 127
    %v6623 = vpop.permute.xlu0 %6622
    %v6626 = vadd.f32 %v6594, %v6621
    %v6627 = vadd.f32 %v6595, %v6623
    %s6628 = sld [smem:[#allocation11 + $0x1e]]
    %v6629 = vstv %s6628
    %v6630 = vmul.f32 %v6494, %v6629
    %v6631 = vmul.f32 %v6497, %v6629
    %v6634 = vrot.slane %v6630, 1
    %v6635 = vrot.slane %v6631, 1
    %6636 = vrot.lane.b32.xlu0 %v6634, 126
    %v6637 = vpop.permute.xlu0 %6636
    %6638 = vrot.lane.b32.xlu0 %v6635, 126
    %v6639 = vpop.permute.xlu0 %6638
    %v6642 = vadd.f32 %v6610, %v6637
    %v6643 = vadd.f32 %v6611, %v6639
    %s6644 = sld [smem:[#allocation11 + $0x1f]]
    %v6645 = vstv %s6644
    %v6646 = vmul.f32 %v6494, %v6645
    %v6647 = vmul.f32 %v6497, %v6645
    %v6650 = vrot.slane %v6646, 1
    %v6651 = vrot.slane %v6647, 1
    %6652 = vrot.lane.b32.xlu0 %v6650, 126
    %v6653 = vpop.permute.xlu0 %6652
    %6654 = vrot.lane.b32.xlu0 %v6651, 126
    %v6655 = vpop.permute.xlu0 %6654
    %v6658 = vadd.f32 %v6626, %v6653
    %v6659 = vadd.f32 %v6627, %v6655
    %s6660 = sld [smem:[#allocation11 + $0x24]]
    %v6661 = vstv %s6660
    %v6662 = vmul.f32 %v6494, %v6661
    %v6663 = vmul.f32 %v6497, %v6661
    %v6666 = vrot.slane %v6662, 2
    %v6667 = vrot.slane %v6663, 2
    %v6670 = vadd.f32 %v6642, %v6666
    %v6671 = vadd.f32 %v6643, %v6667
    %s6672 = sld [smem:[#allocation11 + $0x25]]
    %v6673 = vstv %s6672
    %v6674 = vmul.f32 %v6494, %v6673
    %v6675 = vmul.f32 %v6497, %v6673
    %v6678 = vrot.slane %v6674, 2
    %v6679 = vrot.slane %v6675, 2
    %v6682 = vadd.f32 %v6658, %v6678
    %v6683 = vadd.f32 %v6659, %v6679
    %s6684 = sld [smem:[#allocation11 + $0x2a]]
    %v6685 = vstv %s6684
    %v6686 = vmul.f32 %v6494, %v6685
    %v6687 = vmul.f32 %v6497, %v6685
    %v6690 = vrot.slane %v6686, 2
    %v6691 = vrot.slane %v6687, 2
    %6692 = vrot.lane.b32.xlu0 %v6690, 127
    %v6693 = vpop.permute.xlu0 %6692
    %6694 = vrot.lane.b32.xlu0 %v6691, 127
    %v6695 = vpop.permute.xlu0 %6694
    %v6698 = vadd.f32 %v6670, %v6693
    %v6699 = vadd.f32 %v6671, %v6695
    %s6700 = sld [smem:[#allocation11 + $0x2b]]
    %v6701 = vstv %s6700
    %v6702 = vmul.f32 %v6494, %v6701
    %v6703 = vmul.f32 %v6497, %v6701
    %v6706 = vrot.slane %v6702, 2
    %v6707 = vrot.slane %v6703, 2
    %6708 = vrot.lane.b32.xlu0 %v6706, 127
    %v6709 = vpop.permute.xlu0 %6708
    %6710 = vrot.lane.b32.xlu0 %v6707, 127
    %v6711 = vpop.permute.xlu0 %6710
    %v6714 = vadd.f32 %v6682, %v6709
    %v6715 = vadd.f32 %v6683, %v6711
    %s6716 = sld [smem:[#allocation11 + $0x30]]
    %v6717 = vstv %s6716
    %v6718 = vmul.f32 %v6494, %v6717
    %v6719 = vmul.f32 %v6497, %v6717
    %v6722 = vrot.slane %v6718, 2
    %v6723 = vrot.slane %v6719, 2
    %6724 = vrot.lane.b32.xlu0 %v6722, 126
    %v6725 = vpop.permute.xlu0 %6724
    %6726 = vrot.lane.b32.xlu0 %v6723, 126
    %v6727 = vpop.permute.xlu0 %6726
    %v6730 = vadd.f32 %v6698, %v6725
    %v6731 = vadd.f32 %v6699, %v6727
    %s6732 = sld [smem:[#allocation11 + $0x31]]
    %v6733 = vstv %s6732
    %v6734 = vmul.f32 %v6494, %v6733
    %v6735 = vmul.f32 %v6497, %v6733
    %v6738 = vrot.slane %v6734, 2
    %v6739 = vrot.slane %v6735, 2
    %6740 = vrot.lane.b32.xlu0 %v6738, 126
    %v6741 = vpop.permute.xlu0 %6740
    %6742 = vrot.lane.b32.xlu0 %v6739, 126
    %v6743 = vpop.permute.xlu0 %6742
    %v6746 = vadd.f32 %v6714, %v6741
    %v6747 = vadd.f32 %v6715, %v6743
    %s6748 = sld [smem:[#allocation11 + $0x2]]
    %v6749 = vstv %s6748
    %v6750 = vmul.f32 %v6495, %v6749
    %v6751 = vmul.f32 %v6498, %v6749
    %v6752 = vadd.f32 %v6730, %v6750
    %v6753 = vadd.f32 %v6731, %v6751
    %s6754 = sld [smem:[#allocation11 + $0x3]]
    %v6755 = vstv %s6754
    %v6756 = vmul.f32 %v6495, %v6755
    %v6757 = vmul.f32 %v6498, %v6755
    %v6758 = vadd.f32 %v6746, %v6756
    %v6759 = vadd.f32 %v6747, %v6757
    %s6760 = sld [smem:[#allocation11 + $0x8]]
    %v6761 = vstv %s6760
    %v6762 = vmul.f32 %v6495, %v6761
    %v6763 = vmul.f32 %v6498, %v6761
    %6766 = vrot.lane.b32.xlu0 %v6762, 127
    %v6767 = vpop.permute.xlu0 %6766
    %6768 = vrot.lane.b32.xlu0 %v6763, 127
    %v6769 = vpop.permute.xlu0 %6768
    %v6772 = vadd.f32 %v6752, %v6767
    %v6773 = vadd.f32 %v6753, %v6769
    %s6774 = sld [smem:[#allocation11 + $0x9]]
    %v6775 = vstv %s6774
    %v6776 = vmul.f32 %v6495, %v6775
    %v6777 = vmul.f32 %v6498, %v6775
    %6780 = vrot.lane.b32.xlu0 %v6776, 127
    %v6781 = vpop.permute.xlu0 %6780
    %6782 = vrot.lane.b32.xlu0 %v6777, 127
    %v6783 = vpop.permute.xlu0 %6782
    %v6786 = vadd.f32 %v6758, %v6781
    %v6787 = vadd.f32 %v6759, %v6783
    %s6788 = sld [smem:[#allocation11 + $0xe]]
    %v6789 = vstv %s6788
    %v6790 = vmul.f32 %v6495, %v6789
    %v6791 = vmul.f32 %v6498, %v6789
    %6794 = vrot.lane.b32.xlu0 %v6790, 126
    %v6795 = vpop.permute.xlu0 %6794
    %6796 = vrot.lane.b32.xlu0 %v6791, 126
    %v6797 = vpop.permute.xlu0 %6796
    %v6800 = vadd.f32 %v6772, %v6795
    %v6801 = vadd.f32 %v6773, %v6797
    %s6802 = sld [smem:[#allocation11 + $0xf]]
    %v6803 = vstv %s6802
    %v6804 = vmul.f32 %v6495, %v6803
    %v6805 = vmul.f32 %v6498, %v6803
    %6808 = vrot.lane.b32.xlu0 %v6804, 126
    %v6809 = vpop.permute.xlu0 %6808
    %6810 = vrot.lane.b32.xlu0 %v6805, 126
    %v6811 = vpop.permute.xlu0 %6810
    %v6814 = vadd.f32 %v6786, %v6809
    %v6815 = vadd.f32 %v6787, %v6811
    %s6816 = sld [smem:[#allocation11 + $0x14]]
    %v6817 = vstv %s6816
    %v6818 = vmul.f32 %v6495, %v6817
    %v6819 = vmul.f32 %v6498, %v6817
    %v6822 = vrot.slane %v6818, 1
    %v6823 = vrot.slane %v6819, 1
    %v6826 = vadd.f32 %v6800, %v6822
    %v6827 = vadd.f32 %v6801, %v6823
    %s6828 = sld [smem:[#allocation11 + $0x15]]
    %v6829 = vstv %s6828
    %v6830 = vmul.f32 %v6495, %v6829
    %v6831 = vmul.f32 %v6498, %v6829
    %v6834 = vrot.slane %v6830, 1
    %v6835 = vrot.slane %v6831, 1
    %v6838 = vadd.f32 %v6814, %v6834
    %v6839 = vadd.f32 %v6815, %v6835
    %s6840 = sld [smem:[#allocation11 + $0x1a]]
    %v6841 = vstv %s6840
    %v6842 = vmul.f32 %v6495, %v6841
    %v6843 = vmul.f32 %v6498, %v6841
    %v6846 = vrot.slane %v6842, 1
    %v6847 = vrot.slane %v6843, 1
    %6848 = vrot.lane.b32.xlu0 %v6846, 127
    %v6849 = vpop.permute.xlu0 %6848
    %6850 = vrot.lane.b32.xlu0 %v6847, 127
    %v6851 = vpop.permute.xlu0 %6850
    %v6854 = vadd.f32 %v6826, %v6849
    %v6855 = vadd.f32 %v6827, %v6851
    %s6856 = sld [smem:[#allocation11 + $0x1b]]
    %v6857 = vstv %s6856
    %v6858 = vmul.f32 %v6495, %v6857
    %v6859 = vmul.f32 %v6498, %v6857
    %v6862 = vrot.slane %v6858, 1
    %v6863 = vrot.slane %v6859, 1
    %6864 = vrot.lane.b32.xlu0 %v6862, 127
    %v6865 = vpop.permute.xlu0 %6864
    %6866 = vrot.lane.b32.xlu0 %v6863, 127
    %v6867 = vpop.permute.xlu0 %6866
    %v6870 = vadd.f32 %v6838, %v6865
    %v6871 = vadd.f32 %v6839, %v6867
    %s6872 = sld [smem:[#allocation11 + $0x20]]
    %v6873 = vstv %s6872
    %v6874 = vmul.f32 %v6495, %v6873
    %v6875 = vmul.f32 %v6498, %v6873
    %v6878 = vrot.slane %v6874, 1
    %v6879 = vrot.slane %v6875, 1
    %6880 = vrot.lane.b32.xlu0 %v6878, 126
    %v6881 = vpop.permute.xlu0 %6880
    %6882 = vrot.lane.b32.xlu0 %v6879, 126
    %v6883 = vpop.permute.xlu0 %6882
    %v6886 = vadd.f32 %v6854, %v6881
    %v6887 = vadd.f32 %v6855, %v6883
    %s6888 = sld [smem:[#allocation11 + $0x21]]
    %v6889 = vstv %s6888
    %v6890 = vmul.f32 %v6495, %v6889
    %v6891 = vmul.f32 %v6498, %v6889
    %v6894 = vrot.slane %v6890, 1
    %v6895 = vrot.slane %v6891, 1
    %6896 = vrot.lane.b32.xlu0 %v6894, 126
    %v6897 = vpop.permute.xlu0 %6896
    %6898 = vrot.lane.b32.xlu0 %v6895, 126
    %v6899 = vpop.permute.xlu0 %6898
    %v6902 = vadd.f32 %v6870, %v6897
    %v6903 = vadd.f32 %v6871, %v6899
    %s6904 = sld [smem:[#allocation11 + $0x26]]
    %v6905 = vstv %s6904
    %v6906 = vmul.f32 %v6495, %v6905
    %v6907 = vmul.f32 %v6498, %v6905
    %v6910 = vrot.slane %v6906, 2
    %v6911 = vrot.slane %v6907, 2
    %v6914 = vadd.f32 %v6886, %v6910
    %v6915 = vadd.f32 %v6887, %v6911
    %s6916 = sld [smem:[#allocation11 + $0x27]]
    %v6917 = vstv %s6916
    %v6918 = vmul.f32 %v6495, %v6917
    %v6919 = vmul.f32 %v6498, %v6917
    %v6922 = vrot.slane %v6918, 2
    %v6923 = vrot.slane %v6919, 2
    %v6926 = vadd.f32 %v6902, %v6922
    %v6927 = vadd.f32 %v6903, %v6923
    %s6928 = sld [smem:[#allocation11 + $0x2c]]
    %v6929 = vstv %s6928
    %v6930 = vmul.f32 %v6495, %v6929
    %v6931 = vmul.f32 %v6498, %v6929
    %v6934 = vrot.slane %v6930, 2
    %v6935 = vrot.slane %v6931, 2
    %6936 = vrot.lane.b32.xlu0 %v6934, 127
    %v6937 = vpop.permute.xlu0 %6936
    %6938 = vrot.lane.b32.xlu0 %v6935, 127
    %v6939 = vpop.permute.xlu0 %6938
    %v6942 = vadd.f32 %v6914, %v6937
    %v6943 = vadd.f32 %v6915, %v6939
    %s6944 = sld [smem:[#allocation11 + $0x2d]]
    %v6945 = vstv %s6944
    %v6946 = vmul.f32 %v6495, %v6945
    %v6947 = vmul.f32 %v6498, %v6945
    %v6950 = vrot.slane %v6946, 2
    %v6951 = vrot.slane %v6947, 2
    %6952 = vrot.lane.b32.xlu0 %v6950, 127
    %v6953 = vpop.permute.xlu0 %6952
    %6954 = vrot.lane.b32.xlu0 %v6951, 127
    %v6955 = vpop.permute.xlu0 %6954
    %v6958 = vadd.f32 %v6926, %v6953
    %v6959 = vadd.f32 %v6927, %v6955
    %s6960 = sld [smem:[#allocation11 + $0x32]]
    %v6961 = vstv %s6960
    %v6962 = vmul.f32 %v6495, %v6961
    %v6963 = vmul.f32 %v6498, %v6961
    %v6966 = vrot.slane %v6962, 2
    %v6967 = vrot.slane %v6963, 2
    %6968 = vrot.lane.b32.xlu0 %v6966, 126
    %v6969 = vpop.permute.xlu0 %6968
    %6970 = vrot.lane.b32.xlu0 %v6967, 126
    %v6971 = vpop.permute.xlu0 %6970
    %v6974 = vadd.f32 %v6942, %v6969
    %v6975 = vadd.f32 %v6943, %v6971
    %s6976 = sld [smem:[#allocation11 + $0x33]]
    %v6977 = vstv %s6976
    %v6978 = vmul.f32 %v6495, %v6977
    %v6979 = vmul.f32 %v6498, %v6977
    %v6982 = vrot.slane %v6978, 2
    %v6983 = vrot.slane %v6979, 2
    %6984 = vrot.lane.b32.xlu0 %v6982, 126
    %v6985 = vpop.permute.xlu0 %6984
    %6986 = vrot.lane.b32.xlu0 %v6983, 126
    %v6987 = vpop.permute.xlu0 %6986
    %v6990 = vadd.f32 %v6958, %v6985
    %v6991 = vadd.f32 %v6959, %v6987
    %s6992 = sld [smem:[#allocation11 + $0x4]]
    %v6993 = vstv %s6992
    %v6994 = vmul.f32 %v6496, %v6993
    %v6995 = vmul.f32 %v6499, %v6993
    %v6996 = vadd.f32 %v6974, %v6994
    %v6997 = vadd.f32 %v6975, %v6995
    %s6998 = sld [smem:[#allocation11 + $0x5]]
    %v6999 = vstv %s6998
    %v7000 = vmul.f32 %v6496, %v6999
    %v7001 = vmul.f32 %v6499, %v6999
    %v7002 = vadd.f32 %v6990, %v7000
    %v7003 = vadd.f32 %v6991, %v7001
    %s7004 = sld [smem:[#allocation11 + $0xa]]
    %v7005 = vstv %s7004
    %v7006 = vmul.f32 %v6496, %v7005
    %v7007 = vmul.f32 %v6499, %v7005
    %7010 = vrot.lane.b32.xlu0 %v7006, 127
    %v7011 = vpop.permute.xlu0 %7010
    %7012 = vrot.lane.b32.xlu0 %v7007, 127
    %v7013 = vpop.permute.xlu0 %7012
    %v7016 = vadd.f32 %v6996, %v7011
    %v7017 = vadd.f32 %v6997, %v7013
    %s7018 = sld [smem:[#allocation11 + $0xb]]
    %v7019 = vstv %s7018
    %v7020 = vmul.f32 %v6496, %v7019
    %v7021 = vmul.f32 %v6499, %v7019
    %7024 = vrot.lane.b32.xlu0 %v7020, 127
    %v7025 = vpop.permute.xlu0 %7024
    %7026 = vrot.lane.b32.xlu0 %v7021, 127
    %v7027 = vpop.permute.xlu0 %7026
    %v7030 = vadd.f32 %v7002, %v7025
    %v7031 = vadd.f32 %v7003, %v7027
    %s7032 = sld [smem:[#allocation11 + $0x10]]
    %v7033 = vstv %s7032
    %v7034 = vmul.f32 %v6496, %v7033
    %v7035 = vmul.f32 %v6499, %v7033
    %7038 = vrot.lane.b32.xlu0 %v7034, 126
    %v7039 = vpop.permute.xlu0 %7038
    %7040 = vrot.lane.b32.xlu0 %v7035, 126
    %v7041 = vpop.permute.xlu0 %7040
    %v7044 = vadd.f32 %v7016, %v7039
    %v7045 = vadd.f32 %v7017, %v7041
    %s7046 = sld [smem:[#allocation11 + $0x11]]
    %v7047 = vstv %s7046
    %v7048 = vmul.f32 %v6496, %v7047
    %v7049 = vmul.f32 %v6499, %v7047
    %7052 = vrot.lane.b32.xlu0 %v7048, 126
    %v7053 = vpop.permute.xlu0 %7052
    %7054 = vrot.lane.b32.xlu0 %v7049, 126
    %v7055 = vpop.permute.xlu0 %7054
    %v7058 = vadd.f32 %v7030, %v7053
    %v7059 = vadd.f32 %v7031, %v7055
    %s7060 = sld [smem:[#allocation11 + $0x16]]
    %v7061 = vstv %s7060
    %v7062 = vmul.f32 %v6496, %v7061
    %v7063 = vmul.f32 %v6499, %v7061
    %v7066 = vrot.slane %v7062, 1
    %v7067 = vrot.slane %v7063, 1
    %v7070 = vadd.f32 %v7044, %v7066
    %v7071 = vadd.f32 %v7045, %v7067
    %s7072 = sld [smem:[#allocation11 + $0x17]]
    %v7073 = vstv %s7072
    %v7074 = vmul.f32 %v6496, %v7073
    %v7075 = vmul.f32 %v6499, %v7073
    %v7078 = vrot.slane %v7074, 1
    %v7079 = vrot.slane %v7075, 1
    %v7082 = vadd.f32 %v7058, %v7078
    %v7083 = vadd.f32 %v7059, %v7079
    %s7084 = sld [smem:[#allocation11 + $0x1c]]
    %v7085 = vstv %s7084
    %v7086 = vmul.f32 %v6496, %v7085
    %v7087 = vmul.f32 %v6499, %v7085
    %v7090 = vrot.slane %v7086, 1
    %v7091 = vrot.slane %v7087, 1
    %7092 = vrot.lane.b32.xlu0 %v7090, 127
    %v7093 = vpop.permute.xlu0 %7092
    %7094 = vrot.lane.b32.xlu0 %v7091, 127
    %v7095 = vpop.permute.xlu0 %7094
    %v7098 = vadd.f32 %v7070, %v7093
    %v7099 = vadd.f32 %v7071, %v7095
    %s7100 = sld [smem:[#allocation11 + $0x1d]]
    %v7101 = vstv %s7100
    %v7102 = vmul.f32 %v6496, %v7101
    %v7103 = vmul.f32 %v6499, %v7101
    %v7106 = vrot.slane %v7102, 1
    %v7107 = vrot.slane %v7103, 1
    %7108 = vrot.lane.b32.xlu0 %v7106, 127
    %v7109 = vpop.permute.xlu0 %7108
    %7110 = vrot.lane.b32.xlu0 %v7107, 127
    %v7111 = vpop.permute.xlu0 %7110
    %v7114 = vadd.f32 %v7082, %v7109
    %v7115 = vadd.f32 %v7083, %v7111
    %s7116 = sld [smem:[#allocation11 + $0x22]]
    %v7117 = vstv %s7116
    %v7118 = vmul.f32 %v6496, %v7117
    %v7119 = vmul.f32 %v6499, %v7117
    %v7122 = vrot.slane %v7118, 1
    %v7123 = vrot.slane %v7119, 1
    %7124 = vrot.lane.b32.xlu0 %v7122, 126
    %v7125 = vpop.permute.xlu0 %7124
    %7126 = vrot.lane.b32.xlu0 %v7123, 126
    %v7127 = vpop.permute.xlu0 %7126
    %v7130 = vadd.f32 %v7098, %v7125
    %v7131 = vadd.f32 %v7099, %v7127
    %s7132 = sld [smem:[#allocation11 + $0x23]]
    %v7133 = vstv %s7132
    %v7134 = vmul.f32 %v6496, %v7133
    %v7135 = vmul.f32 %v6499, %v7133
    %v7138 = vrot.slane %v7134, 1
    %v7139 = vrot.slane %v7135, 1
    %7140 = vrot.lane.b32.xlu0 %v7138, 126
    %v7141 = vpop.permute.xlu0 %7140
    %7142 = vrot.lane.b32.xlu0 %v7139, 126
    %v7143 = vpop.permute.xlu0 %7142
    %v7146 = vadd.f32 %v7114, %v7141
    %v7147 = vadd.f32 %v7115, %v7143
    %s7148 = sld [smem:[#allocation11 + $0x28]]
    %v7149 = vstv %s7148
    %v7150 = vmul.f32 %v6496, %v7149
    %v7151 = vmul.f32 %v6499, %v7149
    %v7154 = vrot.slane %v7150, 2
    %v7155 = vrot.slane %v7151, 2
    %v7158 = vadd.f32 %v7130, %v7154
    %v7159 = vadd.f32 %v7131, %v7155
    %s7160 = sld [smem:[#allocation11 + $0x29]]
    %v7161 = vstv %s7160
    %v7162 = vmul.f32 %v6496, %v7161
    %v7163 = vmul.f32 %v6499, %v7161
    %v7166 = vrot.slane %v7162, 2
    %v7167 = vrot.slane %v7163, 2
    %v7170 = vadd.f32 %v7146, %v7166
    %v7171 = vadd.f32 %v7147, %v7167
    %s7172 = sld [smem:[#allocation11 + $0x2e]]
    %v7173 = vstv %s7172
    %v7174 = vmul.f32 %v6496, %v7173
    %v7175 = vmul.f32 %v6499, %v7173
    %v7178 = vrot.slane %v7174, 2
    %v7179 = vrot.slane %v7175, 2
    %7180 = vrot.lane.b32.xlu0 %v7178, 127
    %v7181 = vpop.permute.xlu0 %7180
    %7182 = vrot.lane.b32.xlu0 %v7179, 127
    %v7183 = vpop.permute.xlu0 %7182
    %v7186 = vadd.f32 %v7158, %v7181
    %v7187 = vadd.f32 %v7159, %v7183
    %s7188 = sld [smem:[#allocation11 + $0x2f]]
    %v7189 = vstv %s7188
    %v7190 = vmul.f32 %v6496, %v7189
    %v7191 = vmul.f32 %v6499, %v7189
    %v7194 = vrot.slane %v7190, 2
    %v7195 = vrot.slane %v7191, 2
    %7196 = vrot.lane.b32.xlu0 %v7194, 127
    %v7197 = vpop.permute.xlu0 %7196
    %7198 = vrot.lane.b32.xlu0 %v7195, 127
    %v7199 = vpop.permute.xlu0 %7198
    %v7202 = vadd.f32 %v7170, %v7197
    %v7203 = vadd.f32 %v7171, %v7199
    %s7204 = sld [smem:[#allocation11 + $0x34]]
    %v7205 = vstv %s7204
    %v7206 = vmul.f32 %v6496, %v7205
    %v7207 = vmul.f32 %v6499, %v7205
    %v7210 = vrot.slane %v7206, 2
    %v7211 = vrot.slane %v7207, 2
    %7212 = vrot.lane.b32.xlu0 %v7210, 126
    %v7213 = vpop.permute.xlu0 %7212
    %7214 = vrot.lane.b32.xlu0 %v7211, 126
    %v7215 = vpop.permute.xlu0 %7214
    %v7218 = vadd.f32 %v7186, %v7213
    %v7219 = vadd.f32 %v7187, %v7215
    %s7220 = sld [smem:[#allocation11 + $0x35]]
    %v7221 = vstv %s7220
    %v7222 = vmul.f32 %v6496, %v7221
    %v7223 = vmul.f32 %v6499, %v7221
    %v7226 = vrot.slane %v7222, 2
    %v7227 = vrot.slane %v7223, 2
    %7228 = vrot.lane.b32.xlu0 %v7226, 126
    %v7229 = vpop.permute.xlu0 %7228
    %7230 = vrot.lane.b32.xlu0 %v7227, 126
    %v7231 = vpop.permute.xlu0 %7230
    %v7234 = vadd.f32 %v7202, %v7229
    %v7235 = vadd.f32 %v7203, %v7231
    %v7240 = vrot.slane %v7218, 1
    %v7241 = vrot.slane %v7234, 1
    %v7242 = vrot.slane %v7219, 1
    %v7243 = vrot.slane %v7235, 1
    %v7248 = vmax.f32 %v7218, %v7240
    %v7249 = vmax.f32 %v7234, %v7241
    %v7250 = vmax.f32 %v7219, %v7242
    %v7251 = vmax.f32 %v7235, %v7243
    %7256 = vrot.lane.b32.xlu0 %v7248, 127
    %v7257 = vpop.permute.xlu0 %7256
    %7258 = vrot.lane.b32.xlu0 %v7249, 127
    %v7259 = vpop.permute.xlu0 %7258
    %7260 = vrot.lane.b32.xlu0 %v7250, 127
    %v7261 = vpop.permute.xlu0 %7260
    %7262 = vrot.lane.b32.xlu0 %v7251, 127
    %v7263 = vpop.permute.xlu0 %7262
    %v7268 = vmax.f32 %v7248, %v7257
    %v7269 = vmax.f32 %v7249, %v7259
    %v7270 = vmax.f32 %v7250, %v7261
    %v7271 = vmax.f32 %v7251, %v7263
    %vm7272 = vcmask 0
    %7273 = vst.msk [vmem:[%s7] sm:$0x1] %vm7272, %v7268
    %7274 = vst.msk [vmem:[%s7 + $0x1] sm:$0x1] %vm7272, %v7269
    %7275 = vst.msk [vmem:[%s7 + $0x2] sm:$0x1] %vm7272, %v7270
    %7276 = vst.msk [vmem:[%s7 + $0x3] sm:$0x1] %vm7272, %v7271
    // Predicated region
    $region58: #{tpu_custom_call.1} parent=1 // pred_check
      _
    $region59: #{tpu_custom_call.1} parent=1 // pred_check_branch
      %7278 = sbr.rel (0) target = $region61
    $region60: #{tpu_custom_call.1} parent=1 // pred_region
      _
    $region61: #{tpu_custom_call.1} parent=1 // pred_fallthru
      _
    // Predicated region
    $region62: #{tpu_custom_call.1} parent=1 // pred_check
      _
    $region63: #{tpu_custom_call.1} parent=1 // pred_check_branch
      %7280 = sbr.rel (0) target = $region65
    $region64: #{tpu_custom_call.1} parent=1 // pred_region
      _
    $region65: #{tpu_custom_call.1} parent=1 // pred_fallthru
      _
    %7281 = vsyncpa [#allocation3], 1
    %7282 = vsyncpa [#allocation4], 1
    %7283 = vsyncpa [#allocation7], 1
    %7284 = vsyncpa [#allocation10], 1
    %7285 = vsyncpa [#allocation13], 1

</llo_original>
